<compile_context>
chip_gen: v6e
topology: v6e:2x2x1
jax: 0.10.0
libtpu: 0.0.40
codegen_flags: <defaults>
</compile_context>

<pallas_src>
import jax
import jax.numpy as jnp
from jax import lax
from jax.experimental import pallas as pl
from jax.experimental.pallas import tpu as pltpu


H = 16
W = 16
HW = H * W          # 256 output pixels per image
K1 = 32             # conv1 im2col contraction (27 real + 5 zero pad)
PAD = 24            # sublane-aligned zero halo (rows) on each side of the flat activation
FLAT = HW + 2 * PAD  # 304


# ----------------------------------------------------------------------------
# The single fused kernel: conv stack + GAP + 4x Ultimus + classifier
# ----------------------------------------------------------------------------
def fused_kernel(p1_ref, w1_ref, s1_ref, b1_ref,
                 w2_ref, s2_ref, b2_ref,
                 w3_ref, s3_ref, b3_ref,
                 uw_ref, ub_ref, fw_ref, fb_ref,
                 wo_ref, bo_ref,
                 o_ref,
                 pad_a_ref, pad_b_ref):
    f32 = jnp.float32
    bf16 = jnp.bfloat16

    # ---- conv1: one im2col matmul (patches prebuilt in the wrapper, bf16, K padded to 32)
    y = jnp.dot(p1_ref[0], w1_ref[...], preferred_element_type=f32)        # (256, 16)
    y = jnp.maximum(y * s1_ref[0, :] + b1_ref[0, :], 0.0)                  # BN(eval)+ReLU, f32

    # column index of every flat output pixel (for the column-validity masks of the 9 taps)
    col = lax.broadcasted_iota(jnp.int32, (HW, 1), 0) % W

    def conv3x3(y_in, pad_ref, w_ref, s_ref, b_ref):
        cin = y_in.shape[1]
        cout = w_ref.shape[2]
        # Stash the activation into a zero-haloed flat scratch.  All stores are
        # sublane-aligned (offsets/sizes multiples of 8); row out-of-bounds taps
        # then read zeros from the halo automatically.
        pad_ref[0:PAD, :] = jnp.zeros((PAD, cin), f32)
        pad_ref[PAD + HW:FLAT, :] = jnp.zeros((PAD, cin), f32)
        pad_ref[PAD:PAD + HW, :] = y_in

        acc = jnp.zeros((HW, cout), f32)
        t = 0
        for dh in (-1, 0, 1):
            for dw in (-1, 0, 1):
                start = PAD + dh * W + dw
                patch = pad_ref[start:start + HW, :]        # contiguous offset read, (256, cin)
                if dw != 0:                                  # mask column wrap-around
                    ok = (col + dw >= 0) & (col + dw < W)
                    patch = jnp.where(ok, patch, 0.0)
                acc = acc + jnp.dot(patch.astype(bf16), w_ref[t],
                                    preferred_element_type=f32)
                t += 1
        return jnp.maximum(acc * s_ref[0, :] + b_ref[0, :], 0.0)          # f32 epilogue

    y = conv3x3(y, pad_a_ref, w2_ref, s2_ref, b2_ref)        # (256, 32)
    y = conv3x3(y, pad_b_ref, w3_ref, s3_ref, b3_ref)        # (256, 48)

    # ---- global average pool (AdaptiveAvgPool2d(1))
    x = jnp.sum(y, axis=0, keepdims=True) * (1.0 / HW)        # (1, 48)

    # ---- 4 Ultimus blocks (this program handles one batch element; weights stacked (4,3,48,8))
    for blk in range(4):
        k = jnp.dot(x, uw_ref[blk, 0], preferred_element_type=jnp.float32) + ub_ref[blk, 0]
        q = jnp.dot(x, uw_ref[blk, 1], preferred_element_type=jnp.float32) + ub_ref[blk, 1]
        v = jnp.dot(x, uw_ref[blk, 2], preferred_element_type=jnp.float32) + ub_ref[blk, 2]
        # q is pre-scaled by 1/sqrt(8) in the wrapper, so s = q^T k / sqrt(d)
        s = jnp.transpose(q) * k                              # (8, 8): s[i, j] = q[i] * k[j]
        e = jnp.exp(s - jnp.max(s, axis=0, keepdims=True))    # softmax over dim=1 of torch == rows
        am = e * pl.reciprocal(jnp.sum(e, axis=0, keepdims=True), approx=True)
        z = jnp.dot(v, am, preferred_element_type=jnp.float32)               # (1, 8) = v @ am
        x = jnp.dot(z, fw_ref[blk], preferred_element_type=jnp.float32) + fb_ref[blk]  # (1, 48)

    # ---- final classifier Linear(48 -> 10)
    out = jnp.dot(x, wo_ref[...], preferred_element_type=jnp.float32) + bo_ref[...]    # (1, 10)
    o_ref[...] = out.reshape(1, 1, 10)


# ----------------------------------------------------------------------------
# Wrapper: parameter packing, conv1 im2col, one pallas_call
# ----------------------------------------------------------------------------
def prepare_kernel_params(params):
    (w1, s1, b1), (w2, s2, b2), (w3, s3, b3) = params["convs"]
    w1c = jnp.pad(w1.reshape(27, 16), ((0, K1 - 27), (0, 0))).astype(jnp.bfloat16)
    w2c = w2.reshape(9, 16, 32).astype(jnp.bfloat16)
    w3c = w3.reshape(9, 32, 48).astype(jnp.bfloat16)

    inv_sqrt_d = 1.0 / (8.0 ** 0.5)
    uw, ub, fw, fb = [], [], [], []
    for (wk, bk, wq, bq, wv, bv, wfc, bfc) in params["ultimus"]:
        uw.append(jnp.stack([wk, wq * inv_sqrt_d, wv]))       # fold 1/sqrt(d) into q
        ub.append(jnp.stack([bk, bq * inv_sqrt_d, bv]))
        fw.append(wfc)
        fb.append(bfc)
    return dict(
        w1=w1c, s1=s1, b1=b1,
        w2=w2c, s2=s2, b2=b2,
        w3=w3c, s3=s3, b3=b3,
        uw=jnp.stack(uw),            # (4, 3, 48, 8)
        ub=jnp.stack(ub),            # (4, 3, 1, 8)
        fw=jnp.stack(fw),            # (4, 8, 48)
        fb=jnp.stack(fb),            # (4, 1, 48)
        wo=params["ffc_w"], bo=params["ffc_b"])


def _im2col_input(x_nhwc):
    """(B, 16, 16, 3) -> (B, 256, 32) bf16 patch matrix for conv1 (K padded 27 -> 32)."""
    B = x_nhwc.shape[0]
    xp = jnp.pad(x_nhwc, ((0, 0), (1, 1), (1, 1), (0, 0)))
    taps = [xp[:, kh:kh + H, kw:kw + W, :] for kh in range(3) for kw in range(3)]
    p = jnp.concatenate(taps, axis=-1).reshape(B, HW, 27)
    return jnp.pad(p, ((0, 0), (0, 0), (0, K1 - 27))).astype(jnp.bfloat16)


@jax.jit
def basic_transformer(params, x_nchw):
    assert x_nchw.shape[2] == H and x_nchw.shape[3] == W
    kp = prepare_kernel_params(params)
    x = jnp.transpose(x_nchw, (0, 2, 3, 1))                   # NCHW -> NHWC
    B = x.shape[0]
    p1 = _im2col_input(x)

    out = pl.pallas_call(
        fused_kernel,
        out_shape=jax.ShapeDtypeStruct((B, 1, 10), jnp.float32),
        grid=(B,),
        in_specs=[
            pl.BlockSpec((1, HW, K1), lambda b: (b, 0, 0)),         # conv1 patches
            pl.BlockSpec((K1, 16), lambda b: (0, 0)),               # conv1 weight
            pl.BlockSpec((1, 16), lambda b: (0, 0)),                # conv1 BN scale
            pl.BlockSpec((1, 16), lambda b: (0, 0)),                # conv1 BN bias
            pl.BlockSpec((9, 16, 32), lambda b: (0, 0, 0)),         # conv2 weight (per tap)
            pl.BlockSpec((1, 32), lambda b: (0, 0)),
            pl.BlockSpec((1, 32), lambda b: (0, 0)),
            pl.BlockSpec((9, 32, 48), lambda b: (0, 0, 0)),         # conv3 weight (per tap)
            pl.BlockSpec((1, 48), lambda b: (0, 0)),
            pl.BlockSpec((1, 48), lambda b: (0, 0)),
            pl.BlockSpec((4, 3, 48, 8), lambda b: (0, 0, 0, 0)),    # ultimus k/q/v weights
            pl.BlockSpec((4, 3, 1, 8), lambda b: (0, 0, 0, 0)),     # ultimus k/q/v biases
            pl.BlockSpec((4, 8, 48), lambda b: (0, 0, 0)),          # ultimus fc weights
            pl.BlockSpec((4, 1, 48), lambda b: (0, 0, 0)),          # ultimus fc biases
            pl.BlockSpec((48, 10), lambda b: (0, 0)),               # final linear
            pl.BlockSpec((1, 10), lambda b: (0, 0)),
        ],
        out_specs=pl.BlockSpec((1, 1, 10), lambda b: (b, 0, 0)),
        scratch_shapes=[pltpu.VMEM((FLAT, 16), jnp.float32),        # haloed conv2 input
                        pltpu.VMEM((FLAT, 32), jnp.float32)],       # haloed conv3 input
        compiler_params=pltpu.CompilerParams(
            dimension_semantics=("parallel",)),
    )(p1, kp["w1"], kp["s1"], kp["b1"],
      kp["w2"], kp["s2"], kp["b2"],
      kp["w3"], kp["s3"], kp["b3"],
      kp["uw"], kp["ub"], kp["fw"], kp["fb"],
      kp["wo"], kp["bo"])
    return out[:, 0, :]


# ----------------------------------------------------------------------------
# Parameter construction (deterministic, synthetic, eval-mode BN folded)
# ----------------------------------------------------------------------------
def init_params(key):
    keys = iter(jax.random.split(key, 64))

    def nrm(shape, scale=0.1):
        return scale * jax.random.normal(next(keys), shape, dtype=jnp.float32)

    params = {"convs": [], "ultimus": []}
    eps = 1e-5
    for cin, cout in [(3, 16), (16, 32), (32, 48)]:
        w = nrm((3, 3, cin, cout))
        b_conv = nrm((cout,))
        gamma = 1.0 + nrm((cout,), 0.05)
        beta = nrm((cout,), 0.05)
        rmean = nrm((cout,), 0.05)
        rvar = 1.0 + jnp.abs(nrm((cout,), 0.05))
        scale = gamma / jnp.sqrt(rvar + eps)
        bias = (b_conv - rmean) * scale + beta
        params["convs"].append((w, scale.reshape(1, cout), bias.reshape(1, cout)))

    for _ in range(4):   # UltimusBlock(in_feat=48, out_feat=8), fc: Linear(8, 48)
        blk = (nrm((48, 8)), nrm((1, 8)),      # k_fc
               nrm((48, 8)), nrm((1, 8)),      # q_fc
               nrm((48, 8)), nrm((1, 8)),      # v_fc
               nrm((8, 48)), nrm((1, 48)))     # fc
        params["ultimus"].append(blk)

    params["ffc_w"] = nrm((48, 10))
    params["ffc_b"] = nrm((1, 10))
    return params


# ----------------------------------------------------------------------------
# Pure-JAX reference (f32 throughout) for a sanity check
# ----------------------------------------------------------------------------
def reference_forward(params, x_nchw):
    x = jnp.transpose(x_nchw, (0, 2, 3, 1))
    for (w, scale, bias) in params["convs"]:
        y = lax.conv_general_dilated(
            x, w, window_strides=(1, 1), padding=((1, 1), (1, 1)),
            dimension_numbers=("NHWC", "HWIO", "NHWC"))
        x = jnp.maximum(y * scale[0] + bias[0], 0.0)
    x = jnp.mean(x, axis=(1, 2))                              # (B, 48)
    for (wk, bk, wq, bq, wv, bv, wfc, bfc) in params["ultimus"]:
        k = x @ wk + bk
        q = x @ wq + bq
        v = x @ wv + bv
        s = (q[:, :, None] * k[:, None, :]) / (8.0 ** 0.5)    # (B, 8, 8)
        am = jax.nn.softmax(s, axis=1)
        z = jnp.einsum("bi,bij->bj", v, am)
        x = z @ wfc + bfc
    return x @ params["ffc_w"] + params["ffc_b"]


if __name__ == "__main__":
    key = jax.random.PRNGKey(0)
    pkey, xkey = jax.random.split(key)
    params = init_params(pkey)
    x = jax.random.normal(xkey, (2, 3, 16, 16), dtype=jnp.float32)  # NCHW like PyTorch

    out = jax.block_until_ready(basic_transformer(params, x))
    assert out.shape == (2, 10), out.shape

    ref = reference_forward(params, x)
    # conv matmul inputs are bf16 on the MXU -> relaxed tolerance vs the f32 reference
    assert jnp.allclose(out, ref, atol=5e-2, rtol=5e-2), (out, ref)

    print("KERNEL_OK")
</pallas_src>

<mosaic_0001>
module attributes {stable_mosaic.version = 11 : i64} {
  func.func @fused_kernel(%arg0: i32, %arg1: memref<1x256x32xbf16, #tpu.memory_space<vmem>>, %arg2: memref<32x16xbf16, #tpu.memory_space<vmem>>, %arg3: memref<1x16xf32, #tpu.memory_space<vmem>>, %arg4: memref<1x16xf32, #tpu.memory_space<vmem>>, %arg5: memref<9x16x32xbf16, #tpu.memory_space<vmem>>, %arg6: memref<1x32xf32, #tpu.memory_space<vmem>>, %arg7: memref<1x32xf32, #tpu.memory_space<vmem>>, %arg8: memref<9x32x48xbf16, #tpu.memory_space<vmem>>, %arg9: memref<1x48xf32, #tpu.memory_space<vmem>>, %arg10: memref<1x48xf32, #tpu.memory_space<vmem>>, %arg11: memref<4x3x48x8xf32, #tpu.memory_space<vmem>>, %arg12: memref<4x3x1x8xf32, #tpu.memory_space<vmem>>, %arg13: memref<4x8x48xf32, #tpu.memory_space<vmem>>, %arg14: memref<4x1x48xf32, #tpu.memory_space<vmem>>, %arg15: memref<48x10xf32, #tpu.memory_space<vmem>>, %arg16: memref<1x10xf32, #tpu.memory_space<vmem>>, %arg17: memref<1x1x10xf32, #tpu.memory_space<vmem>>, %arg18: memref<304x16xf32, #tpu.memory_space<vmem>>, %arg19: memref<304x32xf32, #tpu.memory_space<vmem>>) attributes {dimension_semantics = [#tpu.dimension_semantics<parallel>], iteration_bounds = array<i64: 2>, scalar_prefetch = 0 : i64, scratch_operands = 2 : i64, tpu.core_type = #tpu.core_type<tc>, window_params = [{transform_indices = @transform_0, window_bounds = array<i64: 1, 256, 32>}, {pipeline_mode = #tpu.pipeline_mode<synchronous>, transform_indices = @transform_1, window_bounds = array<i64: 32, 16>}, {pipeline_mode = #tpu.pipeline_mode<synchronous>, transform_indices = @transform_2, window_bounds = array<i64: 1, 16>}, {pipeline_mode = #tpu.pipeline_mode<synchronous>, transform_indices = @transform_3, window_bounds = array<i64: 1, 16>}, {pipeline_mode = #tpu.pipeline_mode<synchronous>, transform_indices = @transform_4, window_bounds = array<i64: 9, 16, 32>}, {pipeline_mode = #tpu.pipeline_mode<synchronous>, transform_indices = @transform_5, window_bounds = array<i64: 1, 32>}, {pipeline_mode = #tpu.pipeline_mode<synchronous>, transform_indices = @transform_6, window_bounds = array<i64: 1, 32>}, {pipeline_mode = #tpu.pipeline_mode<synchronous>, transform_indices = @transform_7, window_bounds = array<i64: 9, 32, 48>}, {pipeline_mode = #tpu.pipeline_mode<synchronous>, transform_indices = @transform_8, window_bounds = array<i64: 1, 48>}, {pipeline_mode = #tpu.pipeline_mode<synchronous>, transform_indices = @transform_9, window_bounds = array<i64: 1, 48>}, {pipeline_mode = #tpu.pipeline_mode<synchronous>, transform_indices = @transform_10, window_bounds = array<i64: 4, 3, 48, 8>}, {pipeline_mode = #tpu.pipeline_mode<synchronous>, transform_indices = @transform_11, window_bounds = array<i64: 4, 3, 1, 8>}, {pipeline_mode = #tpu.pipeline_mode<synchronous>, transform_indices = @transform_12, window_bounds = array<i64: 4, 8, 48>}, {pipeline_mode = #tpu.pipeline_mode<synchronous>, transform_indices = @transform_13, window_bounds = array<i64: 4, 1, 48>}, {pipeline_mode = #tpu.pipeline_mode<synchronous>, transform_indices = @transform_14, window_bounds = array<i64: 48, 10>}, {pipeline_mode = #tpu.pipeline_mode<synchronous>, transform_indices = @transform_15, window_bounds = array<i64: 1, 10>}, {transform_indices = @transform_16, window_bounds = array<i64: 1, 1, 10>}]} {
    %c0 = arith.constant 0 : index
    %c0_0 = arith.constant 0 : index
    %c0_1 = arith.constant 0 : index
    %0 = vector.load %arg1[%c0, %c0_0, %c0_1] : memref<1x256x32xbf16, #tpu.memory_space<vmem>>, vector<1x256x32xbf16>
    %1 = vector.shape_cast %0 : vector<1x256x32xbf16> to vector<256x32xbf16>
    %c0_2 = arith.constant 0 : index
    %c0_3 = arith.constant 0 : index
    %2 = vector.load %arg2[%c0_2, %c0_3] : memref<32x16xbf16, #tpu.memory_space<vmem>>, vector<32x16xbf16>
    %cst = arith.constant dense<0.000000e+00> : vector<256x16xf32>
    %3 = tpu.matmul %1, %2, %cst {dimension_numbers = #tpu.dot_dimension_numbers<[1], [0], [0], [1], [0, 0, 1, 1], [], []>} : vector<256x32xbf16>, vector<32x16xbf16>, vector<256x16xf32> -> vector<256x16xf32>
    %c0_4 = arith.constant 0 : index
    %c0_5 = arith.constant 0 : index
    %4 = vector.load %arg3[%c0_4, %c0_5] : memref<1x16xf32, #tpu.memory_space<vmem>>, vector<1x16xf32>
    %5 = vector.shape_cast %4 : vector<1x16xf32> to vector<16xf32>
    %6 = vector.shape_cast %5 : vector<16xf32> to vector<1x16xf32>
    %7 = vector.broadcast %6 : vector<1x16xf32> to vector<256x16xf32>
    %8 = arith.mulf %3, %7 : vector<256x16xf32>
    %c0_6 = arith.constant 0 : index
    %c0_7 = arith.constant 0 : index
    %9 = vector.load %arg4[%c0_6, %c0_7] : memref<1x16xf32, #tpu.memory_space<vmem>>, vector<1x16xf32>
    %10 = vector.shape_cast %9 : vector<1x16xf32> to vector<16xf32>
    %11 = vector.shape_cast %10 : vector<16xf32> to vector<1x16xf32>
    %12 = vector.broadcast %11 : vector<1x16xf32> to vector<256x16xf32>
    %13 = arith.addf %8, %12 : vector<256x16xf32>
    %cst_8 = arith.constant 0.000000e+00 : f32
    %14 = vector.broadcast %cst_8 : f32 to vector<256x16xf32>
    %15 = arith.maximumf %13, %14 : vector<256x16xf32>
    %16 = tpu.iota {dimensions = array<i32: 0>} : vector<256x1xi32>
    %c16_i32 = arith.constant 16 : i32
    %c0_i32 = arith.constant 0 : i32
    %17 = arith.cmpi eq, %c16_i32, %c0_i32 : i32
    %c1_i32 = arith.constant 1 : i32
    %18 = arith.select %17, %c1_i32, %c16_i32 : i32
    %19 = vector.broadcast %18 : i32 to vector<256x1xi32>
    %20 = arith.remsi %16, %19 : vector<256x1xi32>
    %c0_i32_9 = arith.constant 0 : i32
    %21 = vector.broadcast %c0_i32_9 : i32 to vector<256x1xi32>
    %22 = arith.cmpi ne, %20, %21 : vector<256x1xi32>
    %c0_i32_10 = arith.constant 0 : i32
    %23 = vector.broadcast %c0_i32_10 : i32 to vector<256x1xi32>
    %24 = arith.cmpi slt, %20, %23 : vector<256x1xi32>
    %c0_i32_11 = arith.constant 0 : i32
    %25 = arith.cmpi slt, %18, %c0_i32_11 : i32
    %26 = vector.broadcast %25 : i1 to vector<256x1xi1>
    %27 = vector.broadcast %26 : vector<256x1xi1> to vector<256x1xi1>
    %28 = arith.xori %24, %27 : vector<256x1xi1>
    %29 = arith.andi %28, %22 : vector<256x1xi1>
    %30 = vector.broadcast %18 : i32 to vector<256x1xi32>
    %31 = arith.addi %20, %30 : vector<256x1xi32>
    %32 = arith.select %29, %31, %20 : vector<256x1xi1>, vector<256x1xi32>
    %cst_12 = arith.constant 0.000000e+00 : f32
    %33 = vector.broadcast %cst_12 : f32 to vector<24x16xf32>
    %c0_13 = arith.constant 0 : index
    %c0_14 = arith.constant 0 : index
    %34 = vector.load %arg18[%c0_13, %c0_14] : memref<304x16xf32, #tpu.memory_space<vmem>>, vector<24x16xf32>
    tpu.vector_store %arg18[%c0_13, %c0_14], %33 {strides = array<i32>} : memref<304x16xf32, #tpu.memory_space<vmem>>, vector<24x16xf32>,
    %cst_15 = arith.constant 0.000000e+00 : f32
    %35 = vector.broadcast %cst_15 : f32 to vector<24x16xf32>
    %c280 = arith.constant 280 : index
    %c0_16 = arith.constant 0 : index
    %36 = vector.load %arg18[%c280, %c0_16] : memref<304x16xf32, #tpu.memory_space<vmem>>, vector<24x16xf32>
    tpu.vector_store %arg18[%c280, %c0_16], %35 {strides = array<i32>} : memref<304x16xf32, #tpu.memory_space<vmem>>, vector<24x16xf32>,
    %c24 = arith.constant 24 : index
    %c0_17 = arith.constant 0 : index
    %37 = vector.load %arg18[%c24, %c0_17] : memref<304x16xf32, #tpu.memory_space<vmem>>, vector<256x16xf32>
    tpu.vector_store %arg18[%c24, %c0_17], %15 {strides = array<i32>} : memref<304x16xf32, #tpu.memory_space<vmem>>, vector<256x16xf32>,
    %cst_18 = arith.constant 0.000000e+00 : f32
    %38 = vector.broadcast %cst_18 : f32 to vector<256x32xf32>
    %c7 = arith.constant 7 : index
    %c0_19 = arith.constant 0 : index
    %39 = vector.load %arg18[%c7, %c0_19] : memref<304x16xf32, #tpu.memory_space<vmem>>, vector<256x16xf32>
    %c-1_i32 = arith.constant -1 : i32
    %40 = vector.broadcast %c-1_i32 : i32 to vector<256x1xi32>
    %41 = arith.addi %32, %40 : vector<256x1xi32>
    %c0_i32_20 = arith.constant 0 : i32
    %42 = vector.broadcast %c0_i32_20 : i32 to vector<256x1xi32>
    %43 = arith.cmpi sge, %41, %42 : vector<256x1xi32>
    %c-1_i32_21 = arith.constant -1 : i32
    %44 = vector.broadcast %c-1_i32_21 : i32 to vector<256x1xi32>
    %45 = arith.addi %32, %44 : vector<256x1xi32>
    %c16_i32_22 = arith.constant 16 : i32
    %46 = vector.broadcast %c16_i32_22 : i32 to vector<256x1xi32>
    %47 = arith.cmpi slt, %45, %46 : vector<256x1xi32>
    %48 = arith.andi %43, %47 : vector<256x1xi1>
    %cst_23 = arith.constant 0.000000e+00 : f32
    %49 = vector.shape_cast %48 : vector<256x1xi1> to vector<256x1xi1>
    %50 = vector.broadcast %49 : vector<256x1xi1> to vector<256x16xi1>
    %51 = vector.broadcast %cst_23 : f32 to vector<256x16xf32>
    %52 = arith.select %50, %39, %51 : vector<256x16xi1>, vector<256x16xf32>
    %53 = arith.truncf %52 : vector<256x16xf32> to vector<256x16xbf16>
    %c0_24 = arith.constant 0 : index
    %c0_25 = arith.constant 0 : index
    %c0_26 = arith.constant 0 : index
    %54 = vector.load %arg5[%c0_24, %c0_25, %c0_26] : memref<9x16x32xbf16, #tpu.memory_space<vmem>>, vector<1x16x32xbf16>
    %55 = vector.shape_cast %54 : vector<1x16x32xbf16> to vector<16x32xbf16>
    %cst_27 = arith.constant dense<0.000000e+00> : vector<256x32xf32>
    %56 = tpu.matmul %53, %55, %cst_27 {dimension_numbers = #tpu.dot_dimension_numbers<[1], [0], [0], [1], [0, 0, 1, 1], [], []>} : vector<256x16xbf16>, vector<16x32xbf16>, vector<256x32xf32> -> vector<256x32xf32>
    %57 = arith.addf %38, %56 : vector<256x32xf32>
    %c8 = arith.constant 8 : index
    %c0_28 = arith.constant 0 : index
    %58 = vector.load %arg18[%c8, %c0_28] : memref<304x16xf32, #tpu.memory_space<vmem>>, vector<256x16xf32>
    %59 = arith.truncf %58 : vector<256x16xf32> to vector<256x16xbf16>
    %c1 = arith.constant 1 : index
    %c0_29 = arith.constant 0 : index
    %c0_30 = arith.constant 0 : index
    %60 = vector.load %arg5[%c1, %c0_29, %c0_30] : memref<9x16x32xbf16, #tpu.memory_space<vmem>>, vector<1x16x32xbf16>
    %61 = vector.shape_cast %60 : vector<1x16x32xbf16> to vector<16x32xbf16>
    %cst_31 = arith.constant dense<0.000000e+00> : vector<256x32xf32>
    %62 = tpu.matmul %59, %61, %cst_31 {dimension_numbers = #tpu.dot_dimension_numbers<[1], [0], [0], [1], [0, 0, 1, 1], [], []>} : vector<256x16xbf16>, vector<16x32xbf16>, vector<256x32xf32> -> vector<256x32xf32>
    %63 = arith.addf %57, %62 : vector<256x32xf32>
    %c9 = arith.constant 9 : index
    %c0_32 = arith.constant 0 : index
    %64 = vector.load %arg18[%c9, %c0_32] : memref<304x16xf32, #tpu.memory_space<vmem>>, vector<256x16xf32>
    %c1_i32_33 = arith.constant 1 : i32
    %65 = vector.broadcast %c1_i32_33 : i32 to vector<256x1xi32>
    %66 = arith.addi %32, %65 : vector<256x1xi32>
    %c0_i32_34 = arith.constant 0 : i32
    %67 = vector.broadcast %c0_i32_34 : i32 to vector<256x1xi32>
    %68 = arith.cmpi sge, %66, %67 : vector<256x1xi32>
    %c1_i32_35 = arith.constant 1 : i32
    %69 = vector.broadcast %c1_i32_35 : i32 to vector<256x1xi32>
    %70 = arith.addi %32, %69 : vector<256x1xi32>
    %c16_i32_36 = arith.constant 16 : i32
    %71 = vector.broadcast %c16_i32_36 : i32 to vector<256x1xi32>
    %72 = arith.cmpi slt, %70, %71 : vector<256x1xi32>
    %73 = arith.andi %68, %72 : vector<256x1xi1>
    %cst_37 = arith.constant 0.000000e+00 : f32
    %74 = vector.shape_cast %73 : vector<256x1xi1> to vector<256x1xi1>
    %75 = vector.broadcast %74 : vector<256x1xi1> to vector<256x16xi1>
    %76 = vector.broadcast %cst_37 : f32 to vector<256x16xf32>
    %77 = arith.select %75, %64, %76 : vector<256x16xi1>, vector<256x16xf32>
    %78 = arith.truncf %77 : vector<256x16xf32> to vector<256x16xbf16>
    %c2 = arith.constant 2 : index
    %c0_38 = arith.constant 0 : index
    %c0_39 = arith.constant 0 : index
    %79 = vector.load %arg5[%c2, %c0_38, %c0_39] : memref<9x16x32xbf16, #tpu.memory_space<vmem>>, vector<1x16x32xbf16>
    %80 = vector.shape_cast %79 : vector<1x16x32xbf16> to vector<16x32xbf16>
    %cst_40 = arith.constant dense<0.000000e+00> : vector<256x32xf32>
    %81 = tpu.matmul %78, %80, %cst_40 {dimension_numbers = #tpu.dot_dimension_numbers<[1], [0], [0], [1], [0, 0, 1, 1], [], []>} : vector<256x16xbf16>, vector<16x32xbf16>, vector<256x32xf32> -> vector<256x32xf32>
    %82 = arith.addf %63, %81 : vector<256x32xf32>
    %c23 = arith.constant 23 : index
    %c0_41 = arith.constant 0 : index
    %83 = vector.load %arg18[%c23, %c0_41] : memref<304x16xf32, #tpu.memory_space<vmem>>, vector<256x16xf32>
    %c-1_i32_42 = arith.constant -1 : i32
    %84 = vector.broadcast %c-1_i32_42 : i32 to vector<256x1xi32>
    %85 = arith.addi %32, %84 : vector<256x1xi32>
    %c0_i32_43 = arith.constant 0 : i32
    %86 = vector.broadcast %c0_i32_43 : i32 to vector<256x1xi32>
    %87 = arith.cmpi sge, %85, %86 : vector<256x1xi32>
    %c-1_i32_44 = arith.constant -1 : i32
    %88 = vector.broadcast %c-1_i32_44 : i32 to vector<256x1xi32>
    %89 = arith.addi %32, %88 : vector<256x1xi32>
    %c16_i32_45 = arith.constant 16 : i32
    %90 = vector.broadcast %c16_i32_45 : i32 to vector<256x1xi32>
    %91 = arith.cmpi slt, %89, %90 : vector<256x1xi32>
    %92 = arith.andi %87, %91 : vector<256x1xi1>
    %cst_46 = arith.constant 0.000000e+00 : f32
    %93 = vector.shape_cast %92 : vector<256x1xi1> to vector<256x1xi1>
    %94 = vector.broadcast %93 : vector<256x1xi1> to vector<256x16xi1>
    %95 = vector.broadcast %cst_46 : f32 to vector<256x16xf32>
    %96 = arith.select %94, %83, %95 : vector<256x16xi1>, vector<256x16xf32>
    %97 = arith.truncf %96 : vector<256x16xf32> to vector<256x16xbf16>
    %c3 = arith.constant 3 : index
    %c0_47 = arith.constant 0 : index
    %c0_48 = arith.constant 0 : index
    %98 = vector.load %arg5[%c3, %c0_47, %c0_48] : memref<9x16x32xbf16, #tpu.memory_space<vmem>>, vector<1x16x32xbf16>
    %99 = vector.shape_cast %98 : vector<1x16x32xbf16> to vector<16x32xbf16>
    %cst_49 = arith.constant dense<0.000000e+00> : vector<256x32xf32>
    %100 = tpu.matmul %97, %99, %cst_49 {dimension_numbers = #tpu.dot_dimension_numbers<[1], [0], [0], [1], [0, 0, 1, 1], [], []>} : vector<256x16xbf16>, vector<16x32xbf16>, vector<256x32xf32> -> vector<256x32xf32>
    %101 = arith.addf %82, %100 : vector<256x32xf32>
    %c24_50 = arith.constant 24 : index
    %c0_51 = arith.constant 0 : index
    %102 = vector.load %arg18[%c24_50, %c0_51] : memref<304x16xf32, #tpu.memory_space<vmem>>, vector<256x16xf32>
    %103 = arith.truncf %102 : vector<256x16xf32> to vector<256x16xbf16>
    %c4 = arith.constant 4 : index
    %c0_52 = arith.constant 0 : index
    %c0_53 = arith.constant 0 : index
    %104 = vector.load %arg5[%c4, %c0_52, %c0_53] : memref<9x16x32xbf16, #tpu.memory_space<vmem>>, vector<1x16x32xbf16>
    %105 = vector.shape_cast %104 : vector<1x16x32xbf16> to vector<16x32xbf16>
    %cst_54 = arith.constant dense<0.000000e+00> : vector<256x32xf32>
    %106 = tpu.matmul %103, %105, %cst_54 {dimension_numbers = #tpu.dot_dimension_numbers<[1], [0], [0], [1], [0, 0, 1, 1], [], []>} : vector<256x16xbf16>, vector<16x32xbf16>, vector<256x32xf32> -> vector<256x32xf32>
    %107 = arith.addf %101, %106 : vector<256x32xf32>
    %c25 = arith.constant 25 : index
    %c0_55 = arith.constant 0 : index
    %108 = vector.load %arg18[%c25, %c0_55] : memref<304x16xf32, #tpu.memory_space<vmem>>, vector<256x16xf32>
    %c1_i32_56 = arith.constant 1 : i32
    %109 = vector.broadcast %c1_i32_56 : i32 to vector<256x1xi32>
    %110 = arith.addi %32, %109 : vector<256x1xi32>
    %c0_i32_57 = arith.constant 0 : i32
    %111 = vector.broadcast %c0_i32_57 : i32 to vector<256x1xi32>
    %112 = arith.cmpi sge, %110, %111 : vector<256x1xi32>
    %c1_i32_58 = arith.constant 1 : i32
    %113 = vector.broadcast %c1_i32_58 : i32 to vector<256x1xi32>
    %114 = arith.addi %32, %113 : vector<256x1xi32>
    %c16_i32_59 = arith.constant 16 : i32
    %115 = vector.broadcast %c16_i32_59 : i32 to vector<256x1xi32>
    %116 = arith.cmpi slt, %114, %115 : vector<256x1xi32>
    %117 = arith.andi %112, %116 : vector<256x1xi1>
    %cst_60 = arith.constant 0.000000e+00 : f32
    %118 = vector.shape_cast %117 : vector<256x1xi1> to vector<256x1xi1>
    %119 = vector.broadcast %118 : vector<256x1xi1> to vector<256x16xi1>
    %120 = vector.broadcast %cst_60 : f32 to vector<256x16xf32>
    %121 = arith.select %119, %108, %120 : vector<256x16xi1>, vector<256x16xf32>
    %122 = arith.truncf %121 : vector<256x16xf32> to vector<256x16xbf16>
    %c5 = arith.constant 5 : index
    %c0_61 = arith.constant 0 : index
    %c0_62 = arith.constant 0 : index
    %123 = vector.load %arg5[%c5, %c0_61, %c0_62] : memref<9x16x32xbf16, #tpu.memory_space<vmem>>, vector<1x16x32xbf16>
    %124 = vector.shape_cast %123 : vector<1x16x32xbf16> to vector<16x32xbf16>
    %cst_63 = arith.constant dense<0.000000e+00> : vector<256x32xf32>
    %125 = tpu.matmul %122, %124, %cst_63 {dimension_numbers = #tpu.dot_dimension_numbers<[1], [0], [0], [1], [0, 0, 1, 1], [], []>} : vector<256x16xbf16>, vector<16x32xbf16>, vector<256x32xf32> -> vector<256x32xf32>
    %126 = arith.addf %107, %125 : vector<256x32xf32>
    %c39 = arith.constant 39 : index
    %c0_64 = arith.constant 0 : index
    %127 = vector.load %arg18[%c39, %c0_64] : memref<304x16xf32, #tpu.memory_space<vmem>>, vector<256x16xf32>
    %c-1_i32_65 = arith.constant -1 : i32
    %128 = vector.broadcast %c-1_i32_65 : i32 to vector<256x1xi32>
    %129 = arith.addi %32, %128 : vector<256x1xi32>
    %c0_i32_66 = arith.constant 0 : i32
    %130 = vector.broadcast %c0_i32_66 : i32 to vector<256x1xi32>
    %131 = arith.cmpi sge, %129, %130 : vector<256x1xi32>
    %c-1_i32_67 = arith.constant -1 : i32
    %132 = vector.broadcast %c-1_i32_67 : i32 to vector<256x1xi32>
    %133 = arith.addi %32, %132 : vector<256x1xi32>
    %c16_i32_68 = arith.constant 16 : i32
    %134 = vector.broadcast %c16_i32_68 : i32 to vector<256x1xi32>
    %135 = arith.cmpi slt, %133, %134 : vector<256x1xi32>
    %136 = arith.andi %131, %135 : vector<256x1xi1>
    %cst_69 = arith.constant 0.000000e+00 : f32
    %137 = vector.shape_cast %136 : vector<256x1xi1> to vector<256x1xi1>
    %138 = vector.broadcast %137 : vector<256x1xi1> to vector<256x16xi1>
    %139 = vector.broadcast %cst_69 : f32 to vector<256x16xf32>
    %140 = arith.select %138, %127, %139 : vector<256x16xi1>, vector<256x16xf32>
    %141 = arith.truncf %140 : vector<256x16xf32> to vector<256x16xbf16>
    %c6 = arith.constant 6 : index
    %c0_70 = arith.constant 0 : index
    %c0_71 = arith.constant 0 : index
    %142 = vector.load %arg5[%c6, %c0_70, %c0_71] : memref<9x16x32xbf16, #tpu.memory_space<vmem>>, vector<1x16x32xbf16>
    %143 = vector.shape_cast %142 : vector<1x16x32xbf16> to vector<16x32xbf16>
    %cst_72 = arith.constant dense<0.000000e+00> : vector<256x32xf32>
    %144 = tpu.matmul %141, %143, %cst_72 {dimension_numbers = #tpu.dot_dimension_numbers<[1], [0], [0], [1], [0, 0, 1, 1], [], []>} : vector<256x16xbf16>, vector<16x32xbf16>, vector<256x32xf32> -> vector<256x32xf32>
    %145 = arith.addf %126, %144 : vector<256x32xf32>
    %c40 = arith.constant 40 : index
    %c0_73 = arith.constant 0 : index
    %146 = vector.load %arg18[%c40, %c0_73] : memref<304x16xf32, #tpu.memory_space<vmem>>, vector<256x16xf32>
    %147 = arith.truncf %146 : vector<256x16xf32> to vector<256x16xbf16>
    %c7_74 = arith.constant 7 : index
    %c0_75 = arith.constant 0 : index
    %c0_76 = arith.constant 0 : index
    %148 = vector.load %arg5[%c7_74, %c0_75, %c0_76] : memref<9x16x32xbf16, #tpu.memory_space<vmem>>, vector<1x16x32xbf16>
    %149 = vector.shape_cast %148 : vector<1x16x32xbf16> to vector<16x32xbf16>
    %cst_77 = arith.constant dense<0.000000e+00> : vector<256x32xf32>
    %150 = tpu.matmul %147, %149, %cst_77 {dimension_numbers = #tpu.dot_dimension_numbers<[1], [0], [0], [1], [0, 0, 1, 1], [], []>} : vector<256x16xbf16>, vector<16x32xbf16>, vector<256x32xf32> -> vector<256x32xf32>
    %151 = arith.addf %145, %150 : vector<256x32xf32>
    %c41 = arith.constant 41 : index
    %c0_78 = arith.constant 0 : index
    %152 = vector.load %arg18[%c41, %c0_78] : memref<304x16xf32, #tpu.memory_space<vmem>>, vector<256x16xf32>
    %c1_i32_79 = arith.constant 1 : i32
    %153 = vector.broadcast %c1_i32_79 : i32 to vector<256x1xi32>
    %154 = arith.addi %32, %153 : vector<256x1xi32>
    %c0_i32_80 = arith.constant 0 : i32
    %155 = vector.broadcast %c0_i32_80 : i32 to vector<256x1xi32>
    %156 = arith.cmpi sge, %154, %155 : vector<256x1xi32>
    %c1_i32_81 = arith.constant 1 : i32
    %157 = vector.broadcast %c1_i32_81 : i32 to vector<256x1xi32>
    %158 = arith.addi %32, %157 : vector<256x1xi32>
    %c16_i32_82 = arith.constant 16 : i32
    %159 = vector.broadcast %c16_i32_82 : i32 to vector<256x1xi32>
    %160 = arith.cmpi slt, %158, %159 : vector<256x1xi32>
    %161 = arith.andi %156, %160 : vector<256x1xi1>
    %cst_83 = arith.constant 0.000000e+00 : f32
    %162 = vector.shape_cast %161 : vector<256x1xi1> to vector<256x1xi1>
    %163 = vector.broadcast %162 : vector<256x1xi1> to vector<256x16xi1>
    %164 = vector.broadcast %cst_83 : f32 to vector<256x16xf32>
    %165 = arith.select %163, %152, %164 : vector<256x16xi1>, vector<256x16xf32>
    %166 = arith.truncf %165 : vector<256x16xf32> to vector<256x16xbf16>
    %c8_84 = arith.constant 8 : index
    %c0_85 = arith.constant 0 : index
    %c0_86 = arith.constant 0 : index
    %167 = vector.load %arg5[%c8_84, %c0_85, %c0_86] : memref<9x16x32xbf16, #tpu.memory_space<vmem>>, vector<1x16x32xbf16>
    %168 = vector.shape_cast %167 : vector<1x16x32xbf16> to vector<16x32xbf16>
    %cst_87 = arith.constant dense<0.000000e+00> : vector<256x32xf32>
    %169 = tpu.matmul %166, %168, %cst_87 {dimension_numbers = #tpu.dot_dimension_numbers<[1], [0], [0], [1], [0, 0, 1, 1], [], []>} : vector<256x16xbf16>, vector<16x32xbf16>, vector<256x32xf32> -> vector<256x32xf32>
    %170 = arith.addf %151, %169 : vector<256x32xf32>
    %c0_88 = arith.constant 0 : index
    %c0_89 = arith.constant 0 : index
    %171 = vector.load %arg6[%c0_88, %c0_89] : memref<1x32xf32, #tpu.memory_space<vmem>>, vector<1x32xf32>
    %172 = vector.shape_cast %171 : vector<1x32xf32> to vector<32xf32>
    %173 = vector.shape_cast %172 : vector<32xf32> to vector<1x32xf32>
    %174 = vector.broadcast %173 : vector<1x32xf32> to vector<256x32xf32>
    %175 = arith.mulf %170, %174 : vector<256x32xf32>
    %c0_90 = arith.constant 0 : index
    %c0_91 = arith.constant 0 : index
    %176 = vector.load %arg7[%c0_90, %c0_91] : memref<1x32xf32, #tpu.memory_space<vmem>>, vector<1x32xf32>
    %177 = vector.shape_cast %176 : vector<1x32xf32> to vector<32xf32>
    %178 = vector.shape_cast %177 : vector<32xf32> to vector<1x32xf32>
    %179 = vector.broadcast %178 : vector<1x32xf32> to vector<256x32xf32>
    %180 = arith.addf %175, %179 : vector<256x32xf32>
    %cst_92 = arith.constant 0.000000e+00 : f32
    %181 = vector.broadcast %cst_92 : f32 to vector<256x32xf32>
    %182 = arith.maximumf %180, %181 : vector<256x32xf32>
    %cst_93 = arith.constant 0.000000e+00 : f32
    %183 = vector.broadcast %cst_93 : f32 to vector<24x32xf32>
    %c0_94 = arith.constant 0 : index
    %c0_95 = arith.constant 0 : index
    %184 = vector.load %arg19[%c0_94, %c0_95] : memref<304x32xf32, #tpu.memory_space<vmem>>, vector<24x32xf32>
    tpu.vector_store %arg19[%c0_94, %c0_95], %183 {strides = array<i32>} : memref<304x32xf32, #tpu.memory_space<vmem>>, vector<24x32xf32>,
    %cst_96 = arith.constant 0.000000e+00 : f32
    %185 = vector.broadcast %cst_96 : f32 to vector<24x32xf32>
    %c280_97 = arith.constant 280 : index
    %c0_98 = arith.constant 0 : index
    %186 = vector.load %arg19[%c280_97, %c0_98] : memref<304x32xf32, #tpu.memory_space<vmem>>, vector<24x32xf32>
    tpu.vector_store %arg19[%c280_97, %c0_98], %185 {strides = array<i32>} : memref<304x32xf32, #tpu.memory_space<vmem>>, vector<24x32xf32>,
    %c24_99 = arith.constant 24 : index
    %c0_100 = arith.constant 0 : index
    %187 = vector.load %arg19[%c24_99, %c0_100] : memref<304x32xf32, #tpu.memory_space<vmem>>, vector<256x32xf32>
    tpu.vector_store %arg19[%c24_99, %c0_100], %182 {strides = array<i32>} : memref<304x32xf32, #tpu.memory_space<vmem>>, vector<256x32xf32>,
    %cst_101 = arith.constant 0.000000e+00 : f32
    %188 = vector.broadcast %cst_101 : f32 to vector<256x48xf32>
    %c7_102 = arith.constant 7 : index
    %c0_103 = arith.constant 0 : index
    %189 = vector.load %arg19[%c7_102, %c0_103] : memref<304x32xf32, #tpu.memory_space<vmem>>, vector<256x32xf32>
    %c-1_i32_104 = arith.constant -1 : i32
    %190 = vector.broadcast %c-1_i32_104 : i32 to vector<256x1xi32>
    %191 = arith.addi %32, %190 : vector<256x1xi32>
    %c0_i32_105 = arith.constant 0 : i32
    %192 = vector.broadcast %c0_i32_105 : i32 to vector<256x1xi32>
    %193 = arith.cmpi sge, %191, %192 : vector<256x1xi32>
    %c-1_i32_106 = arith.constant -1 : i32
    %194 = vector.broadcast %c-1_i32_106 : i32 to vector<256x1xi32>
    %195 = arith.addi %32, %194 : vector<256x1xi32>
    %c16_i32_107 = arith.constant 16 : i32
    %196 = vector.broadcast %c16_i32_107 : i32 to vector<256x1xi32>
    %197 = arith.cmpi slt, %195, %196 : vector<256x1xi32>
    %198 = arith.andi %193, %197 : vector<256x1xi1>
    %cst_108 = arith.constant 0.000000e+00 : f32
    %199 = vector.shape_cast %198 : vector<256x1xi1> to vector<256x1xi1>
    %200 = vector.broadcast %199 : vector<256x1xi1> to vector<256x32xi1>
    %201 = vector.broadcast %cst_108 : f32 to vector<256x32xf32>
    %202 = arith.select %200, %189, %201 : vector<256x32xi1>, vector<256x32xf32>
    %203 = arith.truncf %202 : vector<256x32xf32> to vector<256x32xbf16>
    %c0_109 = arith.constant 0 : index
    %c0_110 = arith.constant 0 : index
    %c0_111 = arith.constant 0 : index
    %204 = vector.load %arg8[%c0_109, %c0_110, %c0_111] : memref<9x32x48xbf16, #tpu.memory_space<vmem>>, vector<1x32x48xbf16>
    %205 = vector.shape_cast %204 : vector<1x32x48xbf16> to vector<32x48xbf16>
    %cst_112 = arith.constant dense<0.000000e+00> : vector<256x48xf32>
    %206 = tpu.matmul %203, %205, %cst_112 {dimension_numbers = #tpu.dot_dimension_numbers<[1], [0], [0], [1], [0, 0, 1, 1], [], []>} : vector<256x32xbf16>, vector<32x48xbf16>, vector<256x48xf32> -> vector<256x48xf32>
    %207 = arith.addf %188, %206 : vector<256x48xf32>
    %c8_113 = arith.constant 8 : index
    %c0_114 = arith.constant 0 : index
    %208 = vector.load %arg19[%c8_113, %c0_114] : memref<304x32xf32, #tpu.memory_space<vmem>>, vector<256x32xf32>
    %209 = arith.truncf %208 : vector<256x32xf32> to vector<256x32xbf16>
    %c1_115 = arith.constant 1 : index
    %c0_116 = arith.constant 0 : index
    %c0_117 = arith.constant 0 : index
    %210 = vector.load %arg8[%c1_115, %c0_116, %c0_117] : memref<9x32x48xbf16, #tpu.memory_space<vmem>>, vector<1x32x48xbf16>
    %211 = vector.shape_cast %210 : vector<1x32x48xbf16> to vector<32x48xbf16>
    %cst_118 = arith.constant dense<0.000000e+00> : vector<256x48xf32>
    %212 = tpu.matmul %209, %211, %cst_118 {dimension_numbers = #tpu.dot_dimension_numbers<[1], [0], [0], [1], [0, 0, 1, 1], [], []>} : vector<256x32xbf16>, vector<32x48xbf16>, vector<256x48xf32> -> vector<256x48xf32>
    %213 = arith.addf %207, %212 : vector<256x48xf32>
    %c9_119 = arith.constant 9 : index
    %c0_120 = arith.constant 0 : index
    %214 = vector.load %arg19[%c9_119, %c0_120] : memref<304x32xf32, #tpu.memory_space<vmem>>, vector<256x32xf32>
    %c1_i32_121 = arith.constant 1 : i32
    %215 = vector.broadcast %c1_i32_121 : i32 to vector<256x1xi32>
    %216 = arith.addi %32, %215 : vector<256x1xi32>
    %c0_i32_122 = arith.constant 0 : i32
    %217 = vector.broadcast %c0_i32_122 : i32 to vector<256x1xi32>
    %218 = arith.cmpi sge, %216, %217 : vector<256x1xi32>
    %c1_i32_123 = arith.constant 1 : i32
    %219 = vector.broadcast %c1_i32_123 : i32 to vector<256x1xi32>
    %220 = arith.addi %32, %219 : vector<256x1xi32>
    %c16_i32_124 = arith.constant 16 : i32
    %221 = vector.broadcast %c16_i32_124 : i32 to vector<256x1xi32>
    %222 = arith.cmpi slt, %220, %221 : vector<256x1xi32>
    %223 = arith.andi %218, %222 : vector<256x1xi1>
    %cst_125 = arith.constant 0.000000e+00 : f32
    %224 = vector.shape_cast %223 : vector<256x1xi1> to vector<256x1xi1>
    %225 = vector.broadcast %224 : vector<256x1xi1> to vector<256x32xi1>
    %226 = vector.broadcast %cst_125 : f32 to vector<256x32xf32>
    %227 = arith.select %225, %214, %226 : vector<256x32xi1>, vector<256x32xf32>
    %228 = arith.truncf %227 : vector<256x32xf32> to vector<256x32xbf16>
    %c2_126 = arith.constant 2 : index
    %c0_127 = arith.constant 0 : index
    %c0_128 = arith.constant 0 : index
    %229 = vector.load %arg8[%c2_126, %c0_127, %c0_128] : memref<9x32x48xbf16, #tpu.memory_space<vmem>>, vector<1x32x48xbf16>
    %230 = vector.shape_cast %229 : vector<1x32x48xbf16> to vector<32x48xbf16>
    %cst_129 = arith.constant dense<0.000000e+00> : vector<256x48xf32>
    %231 = tpu.matmul %228, %230, %cst_129 {dimension_numbers = #tpu.dot_dimension_numbers<[1], [0], [0], [1], [0, 0, 1, 1], [], []>} : vector<256x32xbf16>, vector<32x48xbf16>, vector<256x48xf32> -> vector<256x48xf32>
    %232 = arith.addf %213, %231 : vector<256x48xf32>
    %c23_130 = arith.constant 23 : index
    %c0_131 = arith.constant 0 : index
    %233 = vector.load %arg19[%c23_130, %c0_131] : memref<304x32xf32, #tpu.memory_space<vmem>>, vector<256x32xf32>
    %c-1_i32_132 = arith.constant -1 : i32
    %234 = vector.broadcast %c-1_i32_132 : i32 to vector<256x1xi32>
    %235 = arith.addi %32, %234 : vector<256x1xi32>
    %c0_i32_133 = arith.constant 0 : i32
    %236 = vector.broadcast %c0_i32_133 : i32 to vector<256x1xi32>
    %237 = arith.cmpi sge, %235, %236 : vector<256x1xi32>
    %c-1_i32_134 = arith.constant -1 : i32
    %238 = vector.broadcast %c-1_i32_134 : i32 to vector<256x1xi32>
    %239 = arith.addi %32, %238 : vector<256x1xi32>
    %c16_i32_135 = arith.constant 16 : i32
    %240 = vector.broadcast %c16_i32_135 : i32 to vector<256x1xi32>
    %241 = arith.cmpi slt, %239, %240 : vector<256x1xi32>
    %242 = arith.andi %237, %241 : vector<256x1xi1>
    %cst_136 = arith.constant 0.000000e+00 : f32
    %243 = vector.shape_cast %242 : vector<256x1xi1> to vector<256x1xi1>
    %244 = vector.broadcast %243 : vector<256x1xi1> to vector<256x32xi1>
    %245 = vector.broadcast %cst_136 : f32 to vector<256x32xf32>
    %246 = arith.select %244, %233, %245 : vector<256x32xi1>, vector<256x32xf32>
    %247 = arith.truncf %246 : vector<256x32xf32> to vector<256x32xbf16>
    %c3_137 = arith.constant 3 : index
    %c0_138 = arith.constant 0 : index
    %c0_139 = arith.constant 0 : index
    %248 = vector.load %arg8[%c3_137, %c0_138, %c0_139] : memref<9x32x48xbf16, #tpu.memory_space<vmem>>, vector<1x32x48xbf16>
    %249 = vector.shape_cast %248 : vector<1x32x48xbf16> to vector<32x48xbf16>
    %cst_140 = arith.constant dense<0.000000e+00> : vector<256x48xf32>
    %250 = tpu.matmul %247, %249, %cst_140 {dimension_numbers = #tpu.dot_dimension_numbers<[1], [0], [0], [1], [0, 0, 1, 1], [], []>} : vector<256x32xbf16>, vector<32x48xbf16>, vector<256x48xf32> -> vector<256x48xf32>
    %251 = arith.addf %232, %250 : vector<256x48xf32>
    %c24_141 = arith.constant 24 : index
    %c0_142 = arith.constant 0 : index
    %252 = vector.load %arg19[%c24_141, %c0_142] : memref<304x32xf32, #tpu.memory_space<vmem>>, vector<256x32xf32>
    %253 = arith.truncf %252 : vector<256x32xf32> to vector<256x32xbf16>
    %c4_143 = arith.constant 4 : index
    %c0_144 = arith.constant 0 : index
    %c0_145 = arith.constant 0 : index
    %254 = vector.load %arg8[%c4_143, %c0_144, %c0_145] : memref<9x32x48xbf16, #tpu.memory_space<vmem>>, vector<1x32x48xbf16>
    %255 = vector.shape_cast %254 : vector<1x32x48xbf16> to vector<32x48xbf16>
    %cst_146 = arith.constant dense<0.000000e+00> : vector<256x48xf32>
    %256 = tpu.matmul %253, %255, %cst_146 {dimension_numbers = #tpu.dot_dimension_numbers<[1], [0], [0], [1], [0, 0, 1, 1], [], []>} : vector<256x32xbf16>, vector<32x48xbf16>, vector<256x48xf32> -> vector<256x48xf32>
    %257 = arith.addf %251, %256 : vector<256x48xf32>
    %c25_147 = arith.constant 25 : index
    %c0_148 = arith.constant 0 : index
    %258 = vector.load %arg19[%c25_147, %c0_148] : memref<304x32xf32, #tpu.memory_space<vmem>>, vector<256x32xf32>
    %c1_i32_149 = arith.constant 1 : i32
    %259 = vector.broadcast %c1_i32_149 : i32 to vector<256x1xi32>
    %260 = arith.addi %32, %259 : vector<256x1xi32>
    %c0_i32_150 = arith.constant 0 : i32
    %261 = vector.broadcast %c0_i32_150 : i32 to vector<256x1xi32>
    %262 = arith.cmpi sge, %260, %261 : vector<256x1xi32>
    %c1_i32_151 = arith.constant 1 : i32
    %263 = vector.broadcast %c1_i32_151 : i32 to vector<256x1xi32>
    %264 = arith.addi %32, %263 : vector<256x1xi32>
    %c16_i32_152 = arith.constant 16 : i32
    %265 = vector.broadcast %c16_i32_152 : i32 to vector<256x1xi32>
    %266 = arith.cmpi slt, %264, %265 : vector<256x1xi32>
    %267 = arith.andi %262, %266 : vector<256x1xi1>
    %cst_153 = arith.constant 0.000000e+00 : f32
    %268 = vector.shape_cast %267 : vector<256x1xi1> to vector<256x1xi1>
    %269 = vector.broadcast %268 : vector<256x1xi1> to vector<256x32xi1>
    %270 = vector.broadcast %cst_153 : f32 to vector<256x32xf32>
    %271 = arith.select %269, %258, %270 : vector<256x32xi1>, vector<256x32xf32>
    %272 = arith.truncf %271 : vector<256x32xf32> to vector<256x32xbf16>
    %c5_154 = arith.constant 5 : index
    %c0_155 = arith.constant 0 : index
    %c0_156 = arith.constant 0 : index
    %273 = vector.load %arg8[%c5_154, %c0_155, %c0_156] : memref<9x32x48xbf16, #tpu.memory_space<vmem>>, vector<1x32x48xbf16>
    %274 = vector.shape_cast %273 : vector<1x32x48xbf16> to vector<32x48xbf16>
    %cst_157 = arith.constant dense<0.000000e+00> : vector<256x48xf32>
    %275 = tpu.matmul %272, %274, %cst_157 {dimension_numbers = #tpu.dot_dimension_numbers<[1], [0], [0], [1], [0, 0, 1, 1], [], []>} : vector<256x32xbf16>, vector<32x48xbf16>, vector<256x48xf32> -> vector<256x48xf32>
    %276 = arith.addf %257, %275 : vector<256x48xf32>
    %c39_158 = arith.constant 39 : index
    %c0_159 = arith.constant 0 : index
    %277 = vector.load %arg19[%c39_158, %c0_159] : memref<304x32xf32, #tpu.memory_space<vmem>>, vector<256x32xf32>
    %c-1_i32_160 = arith.constant -1 : i32
    %278 = vector.broadcast %c-1_i32_160 : i32 to vector<256x1xi32>
    %279 = arith.addi %32, %278 : vector<256x1xi32>
    %c0_i32_161 = arith.constant 0 : i32
    %280 = vector.broadcast %c0_i32_161 : i32 to vector<256x1xi32>
    %281 = arith.cmpi sge, %279, %280 : vector<256x1xi32>
    %c-1_i32_162 = arith.constant -1 : i32
    %282 = vector.broadcast %c-1_i32_162 : i32 to vector<256x1xi32>
    %283 = arith.addi %32, %282 : vector<256x1xi32>
    %c16_i32_163 = arith.constant 16 : i32
    %284 = vector.broadcast %c16_i32_163 : i32 to vector<256x1xi32>
    %285 = arith.cmpi slt, %283, %284 : vector<256x1xi32>
    %286 = arith.andi %281, %285 : vector<256x1xi1>
    %cst_164 = arith.constant 0.000000e+00 : f32
    %287 = vector.shape_cast %286 : vector<256x1xi1> to vector<256x1xi1>
    %288 = vector.broadcast %287 : vector<256x1xi1> to vector<256x32xi1>
    %289 = vector.broadcast %cst_164 : f32 to vector<256x32xf32>
    %290 = arith.select %288, %277, %289 : vector<256x32xi1>, vector<256x32xf32>
    %291 = arith.truncf %290 : vector<256x32xf32> to vector<256x32xbf16>
    %c6_165 = arith.constant 6 : index
    %c0_166 = arith.constant 0 : index
    %c0_167 = arith.constant 0 : index
    %292 = vector.load %arg8[%c6_165, %c0_166, %c0_167] : memref<9x32x48xbf16, #tpu.memory_space<vmem>>, vector<1x32x48xbf16>
    %293 = vector.shape_cast %292 : vector<1x32x48xbf16> to vector<32x48xbf16>
    %cst_168 = arith.constant dense<0.000000e+00> : vector<256x48xf32>
    %294 = tpu.matmul %291, %293, %cst_168 {dimension_numbers = #tpu.dot_dimension_numbers<[1], [0], [0], [1], [0, 0, 1, 1], [], []>} : vector<256x32xbf16>, vector<32x48xbf16>, vector<256x48xf32> -> vector<256x48xf32>
    %295 = arith.addf %276, %294 : vector<256x48xf32>
    %c40_169 = arith.constant 40 : index
    %c0_170 = arith.constant 0 : index
    %296 = vector.load %arg19[%c40_169, %c0_170] : memref<304x32xf32, #tpu.memory_space<vmem>>, vector<256x32xf32>
    %297 = arith.truncf %296 : vector<256x32xf32> to vector<256x32xbf16>
    %c7_171 = arith.constant 7 : index
    %c0_172 = arith.constant 0 : index
    %c0_173 = arith.constant 0 : index
    %298 = vector.load %arg8[%c7_171, %c0_172, %c0_173] : memref<9x32x48xbf16, #tpu.memory_space<vmem>>, vector<1x32x48xbf16>
    %299 = vector.shape_cast %298 : vector<1x32x48xbf16> to vector<32x48xbf16>
    %cst_174 = arith.constant dense<0.000000e+00> : vector<256x48xf32>
    %300 = tpu.matmul %297, %299, %cst_174 {dimension_numbers = #tpu.dot_dimension_numbers<[1], [0], [0], [1], [0, 0, 1, 1], [], []>} : vector<256x32xbf16>, vector<32x48xbf16>, vector<256x48xf32> -> vector<256x48xf32>
    %301 = arith.addf %295, %300 : vector<256x48xf32>
    %c41_175 = arith.constant 41 : index
    %c0_176 = arith.constant 0 : index
    %302 = vector.load %arg19[%c41_175, %c0_176] : memref<304x32xf32, #tpu.memory_space<vmem>>, vector<256x32xf32>
    %c1_i32_177 = arith.constant 1 : i32
    %303 = vector.broadcast %c1_i32_177 : i32 to vector<256x1xi32>
    %304 = arith.addi %32, %303 : vector<256x1xi32>
    %c0_i32_178 = arith.constant 0 : i32
    %305 = vector.broadcast %c0_i32_178 : i32 to vector<256x1xi32>
    %306 = arith.cmpi sge, %304, %305 : vector<256x1xi32>
    %c1_i32_179 = arith.constant 1 : i32
    %307 = vector.broadcast %c1_i32_179 : i32 to vector<256x1xi32>
    %308 = arith.addi %32, %307 : vector<256x1xi32>
    %c16_i32_180 = arith.constant 16 : i32
    %309 = vector.broadcast %c16_i32_180 : i32 to vector<256x1xi32>
    %310 = arith.cmpi slt, %308, %309 : vector<256x1xi32>
    %311 = arith.andi %306, %310 : vector<256x1xi1>
    %cst_181 = arith.constant 0.000000e+00 : f32
    %312 = vector.shape_cast %311 : vector<256x1xi1> to vector<256x1xi1>
    %313 = vector.broadcast %312 : vector<256x1xi1> to vector<256x32xi1>
    %314 = vector.broadcast %cst_181 : f32 to vector<256x32xf32>
    %315 = arith.select %313, %302, %314 : vector<256x32xi1>, vector<256x32xf32>
    %316 = arith.truncf %315 : vector<256x32xf32> to vector<256x32xbf16>
    %c8_182 = arith.constant 8 : index
    %c0_183 = arith.constant 0 : index
    %c0_184 = arith.constant 0 : index
    %317 = vector.load %arg8[%c8_182, %c0_183, %c0_184] : memref<9x32x48xbf16, #tpu.memory_space<vmem>>, vector<1x32x48xbf16>
    %318 = vector.shape_cast %317 : vector<1x32x48xbf16> to vector<32x48xbf16>
    %cst_185 = arith.constant dense<0.000000e+00> : vector<256x48xf32>
    %319 = tpu.matmul %316, %318, %cst_185 {dimension_numbers = #tpu.dot_dimension_numbers<[1], [0], [0], [1], [0, 0, 1, 1], [], []>} : vector<256x32xbf16>, vector<32x48xbf16>, vector<256x48xf32> -> vector<256x48xf32>
    %320 = arith.addf %301, %319 : vector<256x48xf32>
    %c0_186 = arith.constant 0 : index
    %c0_187 = arith.constant 0 : index
    %321 = vector.load %arg9[%c0_186, %c0_187] : memref<1x48xf32, #tpu.memory_space<vmem>>, vector<1x48xf32>
    %322 = vector.shape_cast %321 : vector<1x48xf32> to vector<48xf32>
    %323 = vector.shape_cast %322 : vector<48xf32> to vector<1x48xf32>
    %324 = vector.broadcast %323 : vector<1x48xf32> to vector<256x48xf32>
    %325 = arith.mulf %320, %324 : vector<256x48xf32>
    %c0_188 = arith.constant 0 : index
    %c0_189 = arith.constant 0 : index
    %326 = vector.load %arg10[%c0_188, %c0_189] : memref<1x48xf32, #tpu.memory_space<vmem>>, vector<1x48xf32>
    %327 = vector.shape_cast %326 : vector<1x48xf32> to vector<48xf32>
    %328 = vector.shape_cast %327 : vector<48xf32> to vector<1x48xf32>
    %329 = vector.broadcast %328 : vector<1x48xf32> to vector<256x48xf32>
    %330 = arith.addf %325, %329 : vector<256x48xf32>
    %cst_190 = arith.constant 0.000000e+00 : f32
    %331 = vector.broadcast %cst_190 : f32 to vector<256x48xf32>
    %332 = arith.maximumf %330, %331 : vector<256x48xf32>
    %cst_191 = arith.constant dense<0.000000e+00> : vector<48xf32>
    %333 = vector.multi_reduction <add>, %332, %cst_191 [0] : vector<256x48xf32> to vector<48xf32>
    %334 = vector.shape_cast %333 : vector<48xf32> to vector<1x48xf32>
    %cst_192 = arith.constant 3.906250e-03 : f32
    %335 = vector.broadcast %cst_192 : f32 to vector<1x48xf32>
    %336 = arith.mulf %334, %335 : vector<1x48xf32>
    %c0_193 = arith.constant 0 : index
    %c0_194 = arith.constant 0 : index
    %c0_195 = arith.constant 0 : index
    %c0_196 = arith.constant 0 : index
    %337 = vector.load %arg11[%c0_193, %c0_194, %c0_195, %c0_196] : memref<4x3x48x8xf32, #tpu.memory_space<vmem>>, vector<1x1x48x8xf32>
    %338 = vector.shape_cast %337 : vector<1x1x48x8xf32> to vector<48x8xf32>
    %cst_197 = arith.constant dense<0.000000e+00> : vector<1x8xf32>
    %339 = tpu.matmul %336, %338, %cst_197 {dimension_numbers = #tpu.dot_dimension_numbers<[1], [0], [0], [1], [0, 0, 1, 1], [], []>} : vector<1x48xf32>, vector<48x8xf32>, vector<1x8xf32> -> vector<1x8xf32>
    %c0_198 = arith.constant 0 : index
    %c0_199 = arith.constant 0 : index
    %c0_200 = arith.constant 0 : index
    %c0_201 = arith.constant 0 : index
    %340 = vector.load %arg12[%c0_198, %c0_199, %c0_200, %c0_201] : memref<4x3x1x8xf32, #tpu.memory_space<vmem>>, vector<1x1x1x8xf32>
    %341 = vector.shape_cast %340 : vector<1x1x1x8xf32> to vector<1x8xf32>
    %342 = arith.addf %339, %341 : vector<1x8xf32>
    %c0_202 = arith.constant 0 : index
    %c1_203 = arith.constant 1 : index
    %c0_204 = arith.constant 0 : index
    %c0_205 = arith.constant 0 : index
    %343 = vector.load %arg11[%c0_202, %c1_203, %c0_204, %c0_205] : memref<4x3x48x8xf32, #tpu.memory_space<vmem>>, vector<1x1x48x8xf32>
    %344 = vector.shape_cast %343 : vector<1x1x48x8xf32> to vector<48x8xf32>
    %cst_206 = arith.constant dense<0.000000e+00> : vector<1x8xf32>
    %345 = tpu.matmul %336, %344, %cst_206 {dimension_numbers = #tpu.dot_dimension_numbers<[1], [0], [0], [1], [0, 0, 1, 1], [], []>} : vector<1x48xf32>, vector<48x8xf32>, vector<1x8xf32> -> vector<1x8xf32>
    %c0_207 = arith.constant 0 : index
    %c1_208 = arith.constant 1 : index
    %c0_209 = arith.constant 0 : index
    %c0_210 = arith.constant 0 : index
    %346 = vector.load %arg12[%c0_207, %c1_208, %c0_209, %c0_210] : memref<4x3x1x8xf32, #tpu.memory_space<vmem>>, vector<1x1x1x8xf32>
    %347 = vector.shape_cast %346 : vector<1x1x1x8xf32> to vector<1x8xf32>
    %348 = arith.addf %345, %347 : vector<1x8xf32>
    %c0_211 = arith.constant 0 : index
    %c2_212 = arith.constant 2 : index
    %c0_213 = arith.constant 0 : index
    %c0_214 = arith.constant 0 : index
    %349 = vector.load %arg11[%c0_211, %c2_212, %c0_213, %c0_214] : memref<4x3x48x8xf32, #tpu.memory_space<vmem>>, vector<1x1x48x8xf32>
    %350 = vector.shape_cast %349 : vector<1x1x48x8xf32> to vector<48x8xf32>
    %cst_215 = arith.constant dense<0.000000e+00> : vector<1x8xf32>
    %351 = tpu.matmul %336, %350, %cst_215 {dimension_numbers = #tpu.dot_dimension_numbers<[1], [0], [0], [1], [0, 0, 1, 1], [], []>} : vector<1x48xf32>, vector<48x8xf32>, vector<1x8xf32> -> vector<1x8xf32>
    %c0_216 = arith.constant 0 : index
    %c2_217 = arith.constant 2 : index
    %c0_218 = arith.constant 0 : index
    %c0_219 = arith.constant 0 : index
    %352 = vector.load %arg12[%c0_216, %c2_217, %c0_218, %c0_219] : memref<4x3x1x8xf32, #tpu.memory_space<vmem>>, vector<1x1x1x8xf32>
    %353 = vector.shape_cast %352 : vector<1x1x1x8xf32> to vector<1x8xf32>
    %354 = arith.addf %351, %353 : vector<1x8xf32>
    %355 = tpu.transpose %348, [1, 0] : vector<1x8xf32> -> vector<8x1xf32>
    %356 = vector.broadcast %355 : vector<8x1xf32> to vector<8x8xf32>
    %357 = vector.broadcast %342 : vector<1x8xf32> to vector<8x8xf32>
    %358 = arith.mulf %356, %357 : vector<8x8xf32>
    %cst_220 = arith.constant dense<0xFF800000> : vector<8xf32>
    %359 = vector.multi_reduction <maximumf>, %358, %cst_220 [0] : vector<8x8xf32> to vector<8xf32>
    %360 = vector.shape_cast %359 : vector<8xf32> to vector<1x8xf32>
    %361 = vector.broadcast %360 : vector<1x8xf32> to vector<8x8xf32>
    %362 = arith.subf %358, %361 : vector<8x8xf32>
    %363 = math.exp %362 : vector<8x8xf32>
    %cst_221 = arith.constant dense<0.000000e+00> : vector<8xf32>
    %364 = vector.multi_reduction <add>, %363, %cst_221 [0] : vector<8x8xf32> to vector<8xf32>
    %365 = vector.shape_cast %364 : vector<8xf32> to vector<1x8xf32>
    %366 = tpu.reciprocal %365 {approx = true} : vector<1x8xf32> -> vector<1x8xf32>
    %367 = vector.broadcast %366 : vector<1x8xf32> to vector<8x8xf32>
    %368 = arith.mulf %363, %367 : vector<8x8xf32>
    %cst_222 = arith.constant dense<0.000000e+00> : vector<1x8xf32>
    %369 = tpu.matmul %354, %368, %cst_222 {dimension_numbers = #tpu.dot_dimension_numbers<[1], [0], [0], [1], [0, 0, 1, 1], [], []>} : vector<1x8xf32>, vector<8x8xf32>, vector<1x8xf32> -> vector<1x8xf32>
    %c0_223 = arith.constant 0 : index
    %c0_224 = arith.constant 0 : index
    %c0_225 = arith.constant 0 : index
    %370 = vector.load %arg13[%c0_223, %c0_224, %c0_225] : memref<4x8x48xf32, #tpu.memory_space<vmem>>, vector<1x8x48xf32>
    %371 = vector.shape_cast %370 : vector<1x8x48xf32> to vector<8x48xf32>
    %cst_226 = arith.constant dense<0.000000e+00> : vector<1x48xf32>
    %372 = tpu.matmul %369, %371, %cst_226 {dimension_numbers = #tpu.dot_dimension_numbers<[1], [0], [0], [1], [0, 0, 1, 1], [], []>} : vector<1x8xf32>, vector<8x48xf32>, vector<1x48xf32> -> vector<1x48xf32>
    %c0_227 = arith.constant 0 : index
    %c0_228 = arith.constant 0 : index
    %c0_229 = arith.constant 0 : index
    %373 = vector.load %arg14[%c0_227, %c0_228, %c0_229] : memref<4x1x48xf32, #tpu.memory_space<vmem>>, vector<1x1x48xf32>
    %374 = vector.shape_cast %373 : vector<1x1x48xf32> to vector<1x48xf32>
    %375 = arith.addf %372, %374 : vector<1x48xf32>
    %c1_230 = arith.constant 1 : index
    %c0_231 = arith.constant 0 : index
    %c0_232 = arith.constant 0 : index
    %c0_233 = arith.constant 0 : index
    %376 = vector.load %arg11[%c1_230, %c0_231, %c0_232, %c0_233] : memref<4x3x48x8xf32, #tpu.memory_space<vmem>>, vector<1x1x48x8xf32>
    %377 = vector.shape_cast %376 : vector<1x1x48x8xf32> to vector<48x8xf32>
    %cst_234 = arith.constant dense<0.000000e+00> : vector<1x8xf32>
    %378 = tpu.matmul %375, %377, %cst_234 {dimension_numbers = #tpu.dot_dimension_numbers<[1], [0], [0], [1], [0, 0, 1, 1], [], []>} : vector<1x48xf32>, vector<48x8xf32>, vector<1x8xf32> -> vector<1x8xf32>
    %c1_235 = arith.constant 1 : index
    %c0_236 = arith.constant 0 : index
    %c0_237 = arith.constant 0 : index
    %c0_238 = arith.constant 0 : index
    %379 = vector.load %arg12[%c1_235, %c0_236, %c0_237, %c0_238] : memref<4x3x1x8xf32, #tpu.memory_space<vmem>>, vector<1x1x1x8xf32>
    %380 = vector.shape_cast %379 : vector<1x1x1x8xf32> to vector<1x8xf32>
    %381 = arith.addf %378, %380 : vector<1x8xf32>
    %c1_239 = arith.constant 1 : index
    %c1_240 = arith.constant 1 : index
    %c0_241 = arith.constant 0 : index
    %c0_242 = arith.constant 0 : index
    %382 = vector.load %arg11[%c1_239, %c1_240, %c0_241, %c0_242] : memref<4x3x48x8xf32, #tpu.memory_space<vmem>>, vector<1x1x48x8xf32>
    %383 = vector.shape_cast %382 : vector<1x1x48x8xf32> to vector<48x8xf32>
    %cst_243 = arith.constant dense<0.000000e+00> : vector<1x8xf32>
    %384 = tpu.matmul %375, %383, %cst_243 {dimension_numbers = #tpu.dot_dimension_numbers<[1], [0], [0], [1], [0, 0, 1, 1], [], []>} : vector<1x48xf32>, vector<48x8xf32>, vector<1x8xf32> -> vector<1x8xf32>
    %c1_244 = arith.constant 1 : index
    %c1_245 = arith.constant 1 : index
    %c0_246 = arith.constant 0 : index
    %c0_247 = arith.constant 0 : index
    %385 = vector.load %arg12[%c1_244, %c1_245, %c0_246, %c0_247] : memref<4x3x1x8xf32, #tpu.memory_space<vmem>>, vector<1x1x1x8xf32>
    %386 = vector.shape_cast %385 : vector<1x1x1x8xf32> to vector<1x8xf32>
    %387 = arith.addf %384, %386 : vector<1x8xf32>
    %c1_248 = arith.constant 1 : index
    %c2_249 = arith.constant 2 : index
    %c0_250 = arith.constant 0 : index
    %c0_251 = arith.constant 0 : index
    %388 = vector.load %arg11[%c1_248, %c2_249, %c0_250, %c0_251] : memref<4x3x48x8xf32, #tpu.memory_space<vmem>>, vector<1x1x48x8xf32>
    %389 = vector.shape_cast %388 : vector<1x1x48x8xf32> to vector<48x8xf32>
    %cst_252 = arith.constant dense<0.000000e+00> : vector<1x8xf32>
    %390 = tpu.matmul %375, %389, %cst_252 {dimension_numbers = #tpu.dot_dimension_numbers<[1], [0], [0], [1], [0, 0, 1, 1], [], []>} : vector<1x48xf32>, vector<48x8xf32>, vector<1x8xf32> -> vector<1x8xf32>
    %c1_253 = arith.constant 1 : index
    %c2_254 = arith.constant 2 : index
    %c0_255 = arith.constant 0 : index
    %c0_256 = arith.constant 0 : index
    %391 = vector.load %arg12[%c1_253, %c2_254, %c0_255, %c0_256] : memref<4x3x1x8xf32, #tpu.memory_space<vmem>>, vector<1x1x1x8xf32>
    %392 = vector.shape_cast %391 : vector<1x1x1x8xf32> to vector<1x8xf32>
    %393 = arith.addf %390, %392 : vector<1x8xf32>
    %394 = tpu.transpose %387, [1, 0] : vector<1x8xf32> -> vector<8x1xf32>
    %395 = vector.broadcast %394 : vector<8x1xf32> to vector<8x8xf32>
    %396 = vector.broadcast %381 : vector<1x8xf32> to vector<8x8xf32>
    %397 = arith.mulf %395, %396 : vector<8x8xf32>
    %cst_257 = arith.constant dense<0xFF800000> : vector<8xf32>
    %398 = vector.multi_reduction <maximumf>, %397, %cst_257 [0] : vector<8x8xf32> to vector<8xf32>
    %399 = vector.shape_cast %398 : vector<8xf32> to vector<1x8xf32>
    %400 = vector.broadcast %399 : vector<1x8xf32> to vector<8x8xf32>
    %401 = arith.subf %397, %400 : vector<8x8xf32>
    %402 = math.exp %401 : vector<8x8xf32>
    %cst_258 = arith.constant dense<0.000000e+00> : vector<8xf32>
    %403 = vector.multi_reduction <add>, %402, %cst_258 [0] : vector<8x8xf32> to vector<8xf32>
    %404 = vector.shape_cast %403 : vector<8xf32> to vector<1x8xf32>
    %405 = tpu.reciprocal %404 {approx = true} : vector<1x8xf32> -> vector<1x8xf32>
    %406 = vector.broadcast %405 : vector<1x8xf32> to vector<8x8xf32>
    %407 = arith.mulf %402, %406 : vector<8x8xf32>
    %cst_259 = arith.constant dense<0.000000e+00> : vector<1x8xf32>
    %408 = tpu.matmul %393, %407, %cst_259 {dimension_numbers = #tpu.dot_dimension_numbers<[1], [0], [0], [1], [0, 0, 1, 1], [], []>} : vector<1x8xf32>, vector<8x8xf32>, vector<1x8xf32> -> vector<1x8xf32>
    %c1_260 = arith.constant 1 : index
    %c0_261 = arith.constant 0 : index
    %c0_262 = arith.constant 0 : index
    %409 = vector.load %arg13[%c1_260, %c0_261, %c0_262] : memref<4x8x48xf32, #tpu.memory_space<vmem>>, vector<1x8x48xf32>
    %410 = vector.shape_cast %409 : vector<1x8x48xf32> to vector<8x48xf32>
    %cst_263 = arith.constant dense<0.000000e+00> : vector<1x48xf32>
    %411 = tpu.matmul %408, %410, %cst_263 {dimension_numbers = #tpu.dot_dimension_numbers<[1], [0], [0], [1], [0, 0, 1, 1], [], []>} : vector<1x8xf32>, vector<8x48xf32>, vector<1x48xf32> -> vector<1x48xf32>
    %c1_264 = arith.constant 1 : index
    %c0_265 = arith.constant 0 : index
    %c0_266 = arith.constant 0 : index
    %412 = vector.load %arg14[%c1_264, %c0_265, %c0_266] : memref<4x1x48xf32, #tpu.memory_space<vmem>>, vector<1x1x48xf32>
    %413 = vector.shape_cast %412 : vector<1x1x48xf32> to vector<1x48xf32>
    %414 = arith.addf %411, %413 : vector<1x48xf32>
    %c2_267 = arith.constant 2 : index
    %c0_268 = arith.constant 0 : index
    %c0_269 = arith.constant 0 : index
    %c0_270 = arith.constant 0 : index
    %415 = vector.load %arg11[%c2_267, %c0_268, %c0_269, %c0_270] : memref<4x3x48x8xf32, #tpu.memory_space<vmem>>, vector<1x1x48x8xf32>
    %416 = vector.shape_cast %415 : vector<1x1x48x8xf32> to vector<48x8xf32>
    %cst_271 = arith.constant dense<0.000000e+00> : vector<1x8xf32>
    %417 = tpu.matmul %414, %416, %cst_271 {dimension_numbers = #tpu.dot_dimension_numbers<[1], [0], [0], [1], [0, 0, 1, 1], [], []>} : vector<1x48xf32>, vector<48x8xf32>, vector<1x8xf32> -> vector<1x8xf32>
    %c2_272 = arith.constant 2 : index
    %c0_273 = arith.constant 0 : index
    %c0_274 = arith.constant 0 : index
    %c0_275 = arith.constant 0 : index
    %418 = vector.load %arg12[%c2_272, %c0_273, %c0_274, %c0_275] : memref<4x3x1x8xf32, #tpu.memory_space<vmem>>, vector<1x1x1x8xf32>
    %419 = vector.shape_cast %418 : vector<1x1x1x8xf32> to vector<1x8xf32>
    %420 = arith.addf %417, %419 : vector<1x8xf32>
    %c2_276 = arith.constant 2 : index
    %c1_277 = arith.constant 1 : index
    %c0_278 = arith.constant 0 : index
    %c0_279 = arith.constant 0 : index
    %421 = vector.load %arg11[%c2_276, %c1_277, %c0_278, %c0_279] : memref<4x3x48x8xf32, #tpu.memory_space<vmem>>, vector<1x1x48x8xf32>
    %422 = vector.shape_cast %421 : vector<1x1x48x8xf32> to vector<48x8xf32>
    %cst_280 = arith.constant dense<0.000000e+00> : vector<1x8xf32>
    %423 = tpu.matmul %414, %422, %cst_280 {dimension_numbers = #tpu.dot_dimension_numbers<[1], [0], [0], [1], [0, 0, 1, 1], [], []>} : vector<1x48xf32>, vector<48x8xf32>, vector<1x8xf32> -> vector<1x8xf32>
    %c2_281 = arith.constant 2 : index
    %c1_282 = arith.constant 1 : index
    %c0_283 = arith.constant 0 : index
    %c0_284 = arith.constant 0 : index
    %424 = vector.load %arg12[%c2_281, %c1_282, %c0_283, %c0_284] : memref<4x3x1x8xf32, #tpu.memory_space<vmem>>, vector<1x1x1x8xf32>
    %425 = vector.shape_cast %424 : vector<1x1x1x8xf32> to vector<1x8xf32>
    %426 = arith.addf %423, %425 : vector<1x8xf32>
    %c2_285 = arith.constant 2 : index
    %c2_286 = arith.constant 2 : index
    %c0_287 = arith.constant 0 : index
    %c0_288 = arith.constant 0 : index
    %427 = vector.load %arg11[%c2_285, %c2_286, %c0_287, %c0_288] : memref<4x3x48x8xf32, #tpu.memory_space<vmem>>, vector<1x1x48x8xf32>
    %428 = vector.shape_cast %427 : vector<1x1x48x8xf32> to vector<48x8xf32>
    %cst_289 = arith.constant dense<0.000000e+00> : vector<1x8xf32>
    %429 = tpu.matmul %414, %428, %cst_289 {dimension_numbers = #tpu.dot_dimension_numbers<[1], [0], [0], [1], [0, 0, 1, 1], [], []>} : vector<1x48xf32>, vector<48x8xf32>, vector<1x8xf32> -> vector<1x8xf32>
    %c2_290 = arith.constant 2 : index
    %c2_291 = arith.constant 2 : index
    %c0_292 = arith.constant 0 : index
    %c0_293 = arith.constant 0 : index
    %430 = vector.load %arg12[%c2_290, %c2_291, %c0_292, %c0_293] : memref<4x3x1x8xf32, #tpu.memory_space<vmem>>, vector<1x1x1x8xf32>
    %431 = vector.shape_cast %430 : vector<1x1x1x8xf32> to vector<1x8xf32>
    %432 = arith.addf %429, %431 : vector<1x8xf32>
    %433 = tpu.transpose %426, [1, 0] : vector<1x8xf32> -> vector<8x1xf32>
    %434 = vector.broadcast %433 : vector<8x1xf32> to vector<8x8xf32>
    %435 = vector.broadcast %420 : vector<1x8xf32> to vector<8x8xf32>
    %436 = arith.mulf %434, %435 : vector<8x8xf32>
    %cst_294 = arith.constant dense<0xFF800000> : vector<8xf32>
    %437 = vector.multi_reduction <maximumf>, %436, %cst_294 [0] : vector<8x8xf32> to vector<8xf32>
    %438 = vector.shape_cast %437 : vector<8xf32> to vector<1x8xf32>
    %439 = vector.broadcast %438 : vector<1x8xf32> to vector<8x8xf32>
    %440 = arith.subf %436, %439 : vector<8x8xf32>
    %441 = math.exp %440 : vector<8x8xf32>
    %cst_295 = arith.constant dense<0.000000e+00> : vector<8xf32>
    %442 = vector.multi_reduction <add>, %441, %cst_295 [0] : vector<8x8xf32> to vector<8xf32>
    %443 = vector.shape_cast %442 : vector<8xf32> to vector<1x8xf32>
    %444 = tpu.reciprocal %443 {approx = true} : vector<1x8xf32> -> vector<1x8xf32>
    %445 = vector.broadcast %444 : vector<1x8xf32> to vector<8x8xf32>
    %446 = arith.mulf %441, %445 : vector<8x8xf32>
    %cst_296 = arith.constant dense<0.000000e+00> : vector<1x8xf32>
    %447 = tpu.matmul %432, %446, %cst_296 {dimension_numbers = #tpu.dot_dimension_numbers<[1], [0], [0], [1], [0, 0, 1, 1], [], []>} : vector<1x8xf32>, vector<8x8xf32>, vector<1x8xf32> -> vector<1x8xf32>
    %c2_297 = arith.constant 2 : index
    %c0_298 = arith.constant 0 : index
    %c0_299 = arith.constant 0 : index
    %448 = vector.load %arg13[%c2_297, %c0_298, %c0_299] : memref<4x8x48xf32, #tpu.memory_space<vmem>>, vector<1x8x48xf32>
    %449 = vector.shape_cast %448 : vector<1x8x48xf32> to vector<8x48xf32>
    %cst_300 = arith.constant dense<0.000000e+00> : vector<1x48xf32>
    %450 = tpu.matmul %447, %449, %cst_300 {dimension_numbers = #tpu.dot_dimension_numbers<[1], [0], [0], [1], [0, 0, 1, 1], [], []>} : vector<1x8xf32>, vector<8x48xf32>, vector<1x48xf32> -> vector<1x48xf32>
    %c2_301 = arith.constant 2 : index
    %c0_302 = arith.constant 0 : index
    %c0_303 = arith.constant 0 : index
    %451 = vector.load %arg14[%c2_301, %c0_302, %c0_303] : memref<4x1x48xf32, #tpu.memory_space<vmem>>, vector<1x1x48xf32>
    %452 = vector.shape_cast %451 : vector<1x1x48xf32> to vector<1x48xf32>
    %453 = arith.addf %450, %452 : vector<1x48xf32>
    %c3_304 = arith.constant 3 : index
    %c0_305 = arith.constant 0 : index
    %c0_306 = arith.constant 0 : index
    %c0_307 = arith.constant 0 : index
    %454 = vector.load %arg11[%c3_304, %c0_305, %c0_306, %c0_307] : memref<4x3x48x8xf32, #tpu.memory_space<vmem>>, vector<1x1x48x8xf32>
    %455 = vector.shape_cast %454 : vector<1x1x48x8xf32> to vector<48x8xf32>
    %cst_308 = arith.constant dense<0.000000e+00> : vector<1x8xf32>
    %456 = tpu.matmul %453, %455, %cst_308 {dimension_numbers = #tpu.dot_dimension_numbers<[1], [0], [0], [1], [0, 0, 1, 1], [], []>} : vector<1x48xf32>, vector<48x8xf32>, vector<1x8xf32> -> vector<1x8xf32>
    %c3_309 = arith.constant 3 : index
    %c0_310 = arith.constant 0 : index
    %c0_311 = arith.constant 0 : index
    %c0_312 = arith.constant 0 : index
    %457 = vector.load %arg12[%c3_309, %c0_310, %c0_311, %c0_312] : memref<4x3x1x8xf32, #tpu.memory_space<vmem>>, vector<1x1x1x8xf32>
    %458 = vector.shape_cast %457 : vector<1x1x1x8xf32> to vector<1x8xf32>
    %459 = arith.addf %456, %458 : vector<1x8xf32>
    %c3_313 = arith.constant 3 : index
    %c1_314 = arith.constant 1 : index
    %c0_315 = arith.constant 0 : index
    %c0_316 = arith.constant 0 : index
    %460 = vector.load %arg11[%c3_313, %c1_314, %c0_315, %c0_316] : memref<4x3x48x8xf32, #tpu.memory_space<vmem>>, vector<1x1x48x8xf32>
    %461 = vector.shape_cast %460 : vector<1x1x48x8xf32> to vector<48x8xf32>
    %cst_317 = arith.constant dense<0.000000e+00> : vector<1x8xf32>
    %462 = tpu.matmul %453, %461, %cst_317 {dimension_numbers = #tpu.dot_dimension_numbers<[1], [0], [0], [1], [0, 0, 1, 1], [], []>} : vector<1x48xf32>, vector<48x8xf32>, vector<1x8xf32> -> vector<1x8xf32>
    %c3_318 = arith.constant 3 : index
    %c1_319 = arith.constant 1 : index
    %c0_320 = arith.constant 0 : index
    %c0_321 = arith.constant 0 : index
    %463 = vector.load %arg12[%c3_318, %c1_319, %c0_320, %c0_321] : memref<4x3x1x8xf32, #tpu.memory_space<vmem>>, vector<1x1x1x8xf32>
    %464 = vector.shape_cast %463 : vector<1x1x1x8xf32> to vector<1x8xf32>
    %465 = arith.addf %462, %464 : vector<1x8xf32>
    %c3_322 = arith.constant 3 : index
    %c2_323 = arith.constant 2 : index
    %c0_324 = arith.constant 0 : index
    %c0_325 = arith.constant 0 : index
    %466 = vector.load %arg11[%c3_322, %c2_323, %c0_324, %c0_325] : memref<4x3x48x8xf32, #tpu.memory_space<vmem>>, vector<1x1x48x8xf32>
    %467 = vector.shape_cast %466 : vector<1x1x48x8xf32> to vector<48x8xf32>
    %cst_326 = arith.constant dense<0.000000e+00> : vector<1x8xf32>
    %468 = tpu.matmul %453, %467, %cst_326 {dimension_numbers = #tpu.dot_dimension_numbers<[1], [0], [0], [1], [0, 0, 1, 1], [], []>} : vector<1x48xf32>, vector<48x8xf32>, vector<1x8xf32> -> vector<1x8xf32>
    %c3_327 = arith.constant 3 : index
    %c2_328 = arith.constant 2 : index
    %c0_329 = arith.constant 0 : index
    %c0_330 = arith.constant 0 : index
    %469 = vector.load %arg12[%c3_327, %c2_328, %c0_329, %c0_330] : memref<4x3x1x8xf32, #tpu.memory_space<vmem>>, vector<1x1x1x8xf32>
    %470 = vector.shape_cast %469 : vector<1x1x1x8xf32> to vector<1x8xf32>
    %471 = arith.addf %468, %470 : vector<1x8xf32>
    %472 = tpu.transpose %465, [1, 0] : vector<1x8xf32> -> vector<8x1xf32>
    %473 = vector.broadcast %472 : vector<8x1xf32> to vector<8x8xf32>
    %474 = vector.broadcast %459 : vector<1x8xf32> to vector<8x8xf32>
    %475 = arith.mulf %473, %474 : vector<8x8xf32>
    %cst_331 = arith.constant dense<0xFF800000> : vector<8xf32>
    %476 = vector.multi_reduction <maximumf>, %475, %cst_331 [0] : vector<8x8xf32> to vector<8xf32>
    %477 = vector.shape_cast %476 : vector<8xf32> to vector<1x8xf32>
    %478 = vector.broadcast %477 : vector<1x8xf32> to vector<8x8xf32>
    %479 = arith.subf %475, %478 : vector<8x8xf32>
    %480 = math.exp %479 : vector<8x8xf32>
    %cst_332 = arith.constant dense<0.000000e+00> : vector<8xf32>
    %481 = vector.multi_reduction <add>, %480, %cst_332 [0] : vector<8x8xf32> to vector<8xf32>
    %482 = vector.shape_cast %481 : vector<8xf32> to vector<1x8xf32>
    %483 = tpu.reciprocal %482 {approx = true} : vector<1x8xf32> -> vector<1x8xf32>
    %484 = vector.broadcast %483 : vector<1x8xf32> to vector<8x8xf32>
    %485 = arith.mulf %480, %484 : vector<8x8xf32>
    %cst_333 = arith.constant dense<0.000000e+00> : vector<1x8xf32>
    %486 = tpu.matmul %471, %485, %cst_333 {dimension_numbers = #tpu.dot_dimension_numbers<[1], [0], [0], [1], [0, 0, 1, 1], [], []>} : vector<1x8xf32>, vector<8x8xf32>, vector<1x8xf32> -> vector<1x8xf32>
    %c3_334 = arith.constant 3 : index
    %c0_335 = arith.constant 0 : index
    %c0_336 = arith.constant 0 : index
    %487 = vector.load %arg13[%c3_334, %c0_335, %c0_336] : memref<4x8x48xf32, #tpu.memory_space<vmem>>, vector<1x8x48xf32>
    %488 = vector.shape_cast %487 : vector<1x8x48xf32> to vector<8x48xf32>
    %cst_337 = arith.constant dense<0.000000e+00> : vector<1x48xf32>
    %489 = tpu.matmul %486, %488, %cst_337 {dimension_numbers = #tpu.dot_dimension_numbers<[1], [0], [0], [1], [0, 0, 1, 1], [], []>} : vector<1x8xf32>, vector<8x48xf32>, vector<1x48xf32> -> vector<1x48xf32>
    %c3_338 = arith.constant 3 : index
    %c0_339 = arith.constant 0 : index
    %c0_340 = arith.constant 0 : index
    %490 = vector.load %arg14[%c3_338, %c0_339, %c0_340] : memref<4x1x48xf32, #tpu.memory_space<vmem>>, vector<1x1x48xf32>
    %491 = vector.shape_cast %490 : vector<1x1x48xf32> to vector<1x48xf32>
    %492 = arith.addf %489, %491 : vector<1x48xf32>
    %c0_341 = arith.constant 0 : index
    %c0_342 = arith.constant 0 : index
    %493 = vector.load %arg15[%c0_341, %c0_342] : memref<48x10xf32, #tpu.memory_space<vmem>>, vector<48x10xf32>
    %cst_343 = arith.constant dense<0.000000e+00> : vector<1x10xf32>
    %494 = tpu.matmul %492, %493, %cst_343 {dimension_numbers = #tpu.dot_dimension_numbers<[1], [0], [0], [1], [0, 0, 1, 1], [], []>} : vector<1x48xf32>, vector<48x10xf32>, vector<1x10xf32> -> vector<1x10xf32>
    %c0_344 = arith.constant 0 : index
    %c0_345 = arith.constant 0 : index
    %495 = vector.load %arg16[%c0_344, %c0_345] : memref<1x10xf32, #tpu.memory_space<vmem>>, vector<1x10xf32>
    %496 = arith.addf %494, %495 : vector<1x10xf32>
    %497 = vector.shape_cast %496 : vector<1x10xf32> to vector<1x1x10xf32>
    %c0_346 = arith.constant 0 : index
    %c0_347 = arith.constant 0 : index
    %c0_348 = arith.constant 0 : index
    %498 = vector.load %arg17[%c0_346, %c0_347, %c0_348] : memref<1x1x10xf32, #tpu.memory_space<vmem>>, vector<1x1x10xf32>
    tpu.vector_store %arg17[%c0_346, %c0_347, %c0_348], %497 {strides = array<i32>} : memref<1x1x10xf32, #tpu.memory_space<vmem>>, vector<1x1x10xf32>,
    return
  }
  func.func @transform_0(%arg0: i32) -> (i32, i32, i32) {
    %c0_i32 = arith.constant 0 : i32
    %c0_i32_0 = arith.constant 0 : i32
    %c0_i32_1 = arith.constant 0 : i32
    return %arg0, %c0_i32, %c0_i32_0 : i32, i32, i32
  }
  func.func @transform_1(%arg0: i32) -> (i32, i32) {
    %c0_i32 = arith.constant 0 : i32
    %c0_i32_0 = arith.constant 0 : i32
    %c0_i32_1 = arith.constant 0 : i32
    return %c0_i32, %c0_i32_0 : i32, i32
  }
  func.func @transform_2(%arg0: i32) -> (i32, i32) {
    %c0_i32 = arith.constant 0 : i32
    %c0_i32_0 = arith.constant 0 : i32
    %c0_i32_1 = arith.constant 0 : i32
    return %c0_i32, %c0_i32_0 : i32, i32
  }
  func.func @transform_3(%arg0: i32) -> (i32, i32) {
    %c0_i32 = arith.constant 0 : i32
    %c0_i32_0 = arith.constant 0 : i32
    %c0_i32_1 = arith.constant 0 : i32
    return %c0_i32, %c0_i32_0 : i32, i32
  }
  func.func @transform_4(%arg0: i32) -> (i32, i32, i32) {
    %c0_i32 = arith.constant 0 : i32
    %c0_i32_0 = arith.constant 0 : i32
    %c0_i32_1 = arith.constant 0 : i32
    %c0_i32_2 = arith.constant 0 : i32
    return %c0_i32, %c0_i32_0, %c0_i32_1 : i32, i32, i32
  }
  func.func @transform_5(%arg0: i32) -> (i32, i32) {
    %c0_i32 = arith.constant 0 : i32
    %c0_i32_0 = arith.constant 0 : i32
    %c0_i32_1 = arith.constant 0 : i32
    return %c0_i32, %c0_i32_0 : i32, i32
  }
  func.func @transform_6(%arg0: i32) -> (i32, i32) {
    %c0_i32 = arith.constant 0 : i32
    %c0_i32_0 = arith.constant 0 : i32
    %c0_i32_1 = arith.constant 0 : i32
    return %c0_i32, %c0_i32_0 : i32, i32
  }
  func.func @transform_7(%arg0: i32) -> (i32, i32, i32) {
    %c0_i32 = arith.constant 0 : i32
    %c0_i32_0 = arith.constant 0 : i32
    %c0_i32_1 = arith.constant 0 : i32
    %c0_i32_2 = arith.constant 0 : i32
    return %c0_i32, %c0_i32_0, %c0_i32_1 : i32, i32, i32
  }
  func.func @transform_8(%arg0: i32) -> (i32, i32) {
    %c0_i32 = arith.constant 0 : i32
    %c0_i32_0 = arith.constant 0 : i32
    %c0_i32_1 = arith.constant 0 : i32
    return %c0_i32, %c0_i32_0 : i32, i32
  }
  func.func @transform_9(%arg0: i32) -> (i32, i32) {
    %c0_i32 = arith.constant 0 : i32
    %c0_i32_0 = arith.constant 0 : i32
    %c0_i32_1 = arith.constant 0 : i32
    return %c0_i32, %c0_i32_0 : i32, i32
  }
  func.func @transform_10(%arg0: i32) -> (i32, i32, i32, i32) {
    %c0_i32 = arith.constant 0 : i32
    %c0_i32_0 = arith.constant 0 : i32
    %c0_i32_1 = arith.constant 0 : i32
    %c0_i32_2 = arith.constant 0 : i32
    %c0_i32_3 = arith.constant 0 : i32
    return %c0_i32, %c0_i32_0, %c0_i32_1, %c0_i32_2 : i32, i32, i32, i32
  }
  func.func @transform_11(%arg0: i32) -> (i32, i32, i32, i32) {
    %c0_i32 = arith.constant 0 : i32
    %c0_i32_0 = arith.constant 0 : i32
    %c0_i32_1 = arith.constant 0 : i32
    %c0_i32_2 = arith.constant 0 : i32
    %c0_i32_3 = arith.constant 0 : i32
    return %c0_i32, %c0_i32_0, %c0_i32_1, %c0_i32_2 : i32, i32, i32, i32
  }
  func.func @transform_12(%arg0: i32) -> (i32, i32, i32) {
    %c0_i32 = arith.constant 0 : i32
    %c0_i32_0 = arith.constant 0 : i32
    %c0_i32_1 = arith.constant 0 : i32
    %c0_i32_2 = arith.constant 0 : i32
    return %c0_i32, %c0_i32_0, %c0_i32_1 : i32, i32, i32
  }
  func.func @transform_13(%arg0: i32) -> (i32, i32, i32) {
    %c0_i32 = arith.constant 0 : i32
    %c0_i32_0 = arith.constant 0 : i32
    %c0_i32_1 = arith.constant 0 : i32
    %c0_i32_2 = arith.constant 0 : i32
    return %c0_i32, %c0_i32_0, %c0_i32_1 : i32, i32, i32
  }
  func.func @transform_14(%arg0: i32) -> (i32, i32) {
    %c0_i32 = arith.constant 0 : i32
    %c0_i32_0 = arith.constant 0 : i32
    %c0_i32_1 = arith.constant 0 : i32
    return %c0_i32, %c0_i32_0 : i32, i32
  }
  func.func @transform_15(%arg0: i32) -> (i32, i32) {
    %c0_i32 = arith.constant 0 : i32
    %c0_i32_0 = arith.constant 0 : i32
    %c0_i32_1 = arith.constant 0 : i32
    return %c0_i32, %c0_i32_0 : i32, i32
  }
  func.func @transform_16(%arg0: i32) -> (i32, i32, i32) {
    %c0_i32 = arith.constant 0 : i32
    %c0_i32_0 = arith.constant 0 : i32
    %c0_i32_1 = arith.constant 0 : i32
    return %arg0, %c0_i32, %c0_i32_0 : i32, i32, i32
  }
}

</mosaic_0001>

<llo_original>
// kernel: basic_transformer.1
$region0: #{basic_transformer.1}
  #allocation0 [shape = 'u32[]', space=smem, size = 0x4, offset = 0x4, fixed_abs, tag = 'smem constant byte address 0x4 - core index']
  #allocation1 [shape = 'u32[144,128]{1,0:T(1,128)}', space=vmem, size = 0x12000, scoped, tag = 'internal scratch']
  #allocation2 [shape = 'f32[304,16]{1,0:T(8,128)}', space=vmem, size = 0x26000, scoped, tag = 'scratch operand']
  #allocation3 [shape = 'f32[304,32]{1,0:T(8,128)}', space=vmem, size = 0x26000, scoped, tag = 'scratch operand']
  %s0 = inlined_call_operand.vmem [shape: bf16[2,256,32], index: 0, kind: input, shape index: {}]
  %s1 = inlined_call_operand.vmem [shape: bf16[32,16], index: 1, kind: input, shape index: {}]
  %s2 = inlined_call_operand.vmem [shape: f32[1,16], index: 2, kind: input, shape index: {}]
  %s3 = inlined_call_operand.vmem [shape: f32[1,16], index: 3, kind: input, shape index: {}]
  %s4 = inlined_call_operand.vmem [shape: bf16[9,16,32], index: 4, kind: input, shape index: {}]
  %s5 = inlined_call_operand.vmem [shape: f32[1,32], index: 5, kind: input, shape index: {}]
  %s6 = inlined_call_operand.vmem [shape: f32[1,32], index: 6, kind: input, shape index: {}]
  %s7 = inlined_call_operand.vmem [shape: bf16[9,32,48], index: 7, kind: input, shape index: {}]
  %s8 = inlined_call_operand.vmem [shape: f32[1,48], index: 8, kind: input, shape index: {}]
  %s9 = inlined_call_operand.vmem [shape: f32[1,48], index: 9, kind: input, shape index: {}]
  %s10 = inlined_call_operand.vmem [shape: f32[4,3,48,8], index: 10, kind: input, shape index: {}]
  %s11 = inlined_call_operand.vmem [shape: f32[4,3,1,8], index: 11, kind: input, shape index: {}]
  %s12 = inlined_call_operand.vmem [shape: f32[4,8,48], index: 12, kind: input, shape index: {}]
  %s13 = inlined_call_operand.vmem [shape: f32[4,1,48], index: 13, kind: input, shape index: {}]
  %s14 = inlined_call_operand.vmem [shape: f32[48,10], index: 14, kind: input, shape index: {}]
  %s15 = inlined_call_operand.vmem [shape: f32[1,10], index: 15, kind: input, shape index: {}]
  %s16 = inlined_call_operand.hbm [shape: f32[2,1,10], index: 16, kind: output, shape index: {}]
  %s17 = sld [smem:[#allocation0]]
  $region97: #{basic_transformer.1} parent=0
    _
  %s19 = ssub.s32 1, %s17
  %s20 = scalar_select 0, %s19, %s17
  $region1: #{basic_transformer.1} parent=0
    #allocation4 [shape = 'u8[1024]{0}', space=vmem, size = 0x400, scoped, tag = 'output window, operand 0']
    #allocation5 [shape = 's32[2]{0}', space=sflag, size = 0x8, scoped, tag = 'scoped memory for basic_transformer.1']
    %21 = vsyncpa [#allocation5], 0
    %s22 = scalar_lea.sflag [#allocation5], 1
    %23 = vsyncpa %s22, 0
    loop: start=0, step=1, limit=4
    $region2: #{basic_transformer.1} parent=1 // loop_pre_header
      _
    $region3: #{basic_transformer.1} parent=1 // loop_header
      %s25 = sphi 0, %s29
      %p26 = scmp.ge.s32.totalorder %s25, 4
      %s35 = sphi 0, %s37
      %s38 = sphi 0, %s35
      %s39 = sphi 0, %s38
      %s55 = sphi 0, %s39
      %s59 = sphi 0, %s59
      %s61 = sphi 0, %s59
      %s62 = sphi 0, %s61
      %s76 = sphi 0, %s62
      %s80 = sphi 0, %s80
      %s82 = sphi 0, %s80
      %s83 = sphi 0, %s82
      %s97 = sphi 0, %s83
      %s101 = sphi 0, %s101
      %s103 = sphi 0, %s101
      %s104 = sphi 0, %s103
      %s118 = sphi 0, %s104
      %s122 = sphi 0, %s122
      %s124 = sphi 0, %s122
      %s125 = sphi 0, %s124
      %s139 = sphi 0, %s125
      %s143 = sphi 0, %s143
      %s145 = sphi 0, %s143
      %s146 = sphi 0, %s145
      %s160 = sphi 0, %s146
      %s164 = sphi 0, %s164
      %s166 = sphi 0, %s164
      %s167 = sphi 0, %s166
      %s181 = sphi 0, %s167
      %s185 = sphi 0, %s185
      %s187 = sphi 0, %s185
      %s188 = sphi 0, %s187
      %s202 = sphi 0, %s188
      %s206 = sphi 0, %s206
      %s208 = sphi 0, %s206
      %s209 = sphi 0, %s208
      %s223 = sphi 0, %s209
      %s227 = sphi 0, %s227
      %s229 = sphi 0, %s227
      %s230 = sphi 0, %s229
      %s244 = sphi 0, %s230
      %s248 = sphi 0, %s248
      %s250 = sphi 0, %s248
      %s251 = sphi 0, %s250
      %s265 = sphi 0, %s251
      %s269 = sphi 0, %s269
      %s271 = sphi 0, %s269
      %s272 = sphi 0, %s271
      %s286 = sphi 0, %s272
      %s290 = sphi 0, %s290
      %s292 = sphi 0, %s290
      %s293 = sphi 0, %s292
      %s307 = sphi 0, %s293
      %s311 = sphi 0, %s311
      %s313 = sphi 0, %s311
      %s314 = sphi 0, %s313
      %s328 = sphi 0, %s314
      %s332 = sphi 0, %s332
      %s334 = sphi 0, %s332
      %s335 = sphi 0, %s334
      %s349 = sphi 0, %s335
      %s353 = sphi 0, %s353
      %s355 = sphi 0, %s353
      %s356 = sphi 0, %s355
      %s370 = sphi 0, %s356
      %s376 = sphi 0, %s378
      %s379 = sphi 0, %s376
      %s380 = sphi 0, %s379
      %s396 = sphi 0, %s380
    $region4: #{basic_transformer.1} parent=1 // loop_header_branch
      %28 = sbr.rel (%p26) target = $region8
    $region5: #{basic_transformer.1} parent=1 // loop_body
      %s30 = ssub.s32 %s25, 1
      %s31 = ssub.s32 %s25, 2
      %s32 = sadd.s32 %s25, 1
      %s33 = ssub.s32 %s25, %s32
      %p34 = scmp.eq.s32.totalorder %s33, 0
      %s36 = sadd.s32 %s35, 1
      %s37 = scalar_select %p34, %s35, %s36
      %p40 = pneg %p34
      %p41 = scmp.eq.s32.totalorder %s25, 1
      %p42 = por %p40, %p41
      %p43 = scmp.ne.s32.totalorder %s35, %s38
      %p44 = scmp.eq.s32.totalorder %s25, 0
      %p45 = por %p43, %p44
      %p46 = scmp.ne.s32.totalorder %s35, %s38
      %p47 = scmp.eq.s32.totalorder %s30, 1
      %p48 = por %p46, %p47
      %p49 = scmp.ne.s32.totalorder %s38, %s39
      %p50 = scmp.eq.s32.totalorder %s30, 0
      %p51 = por %p49, %p50
      %p52 = scmp.ne.s32.totalorder %s38, %s39
      %p53 = scmp.eq.s32.totalorder %s31, 1
      %p54 = por %p52, %p53
      %p56 = scmp.ne.s32.totalorder %s39, %s55
      %p57 = scmp.eq.s32.totalorder %s31, 0
      %p58 = por %p56, %p57
      %s60 = sadd.s32 %s59, 1
      %p63 = scmp.eq.s32.totalorder %s25, 1
      %p64 = scmp.ne.s32.totalorder %s59, %s61
      %p65 = scmp.eq.s32.totalorder %s25, 0
      %p66 = por %p64, %p65
      %p67 = scmp.ne.s32.totalorder %s59, %s61
      %p68 = scmp.eq.s32.totalorder %s30, 1
      %p69 = por %p67, %p68
      %p70 = scmp.ne.s32.totalorder %s61, %s62
      %p71 = scmp.eq.s32.totalorder %s30, 0
      %p72 = por %p70, %p71
      %p73 = scmp.ne.s32.totalorder %s61, %s62
      %p74 = scmp.eq.s32.totalorder %s31, 1
      %p75 = por %p73, %p74
      %p77 = scmp.ne.s32.totalorder %s62, %s76
      %p78 = scmp.eq.s32.totalorder %s31, 0
      %p79 = por %p77, %p78
      %s81 = sadd.s32 %s80, 1
      %p84 = scmp.eq.s32.totalorder %s25, 1
      %p85 = scmp.ne.s32.totalorder %s80, %s82
      %p86 = scmp.eq.s32.totalorder %s25, 0
      %p87 = por %p85, %p86
      %p88 = scmp.ne.s32.totalorder %s80, %s82
      %p89 = scmp.eq.s32.totalorder %s30, 1
      %p90 = por %p88, %p89
      %p91 = scmp.ne.s32.totalorder %s82, %s83
      %p92 = scmp.eq.s32.totalorder %s30, 0
      %p93 = por %p91, %p92
      %p94 = scmp.ne.s32.totalorder %s82, %s83
      %p95 = scmp.eq.s32.totalorder %s31, 1
      %p96 = por %p94, %p95
      %p98 = scmp.ne.s32.totalorder %s83, %s97
      %p99 = scmp.eq.s32.totalorder %s31, 0
      %p100 = por %p98, %p99
      %s102 = sadd.s32 %s101, 1
      %p105 = scmp.eq.s32.totalorder %s25, 1
      %p106 = scmp.ne.s32.totalorder %s101, %s103
      %p107 = scmp.eq.s32.totalorder %s25, 0
      %p108 = por %p106, %p107
      %p109 = scmp.ne.s32.totalorder %s101, %s103
      %p110 = scmp.eq.s32.totalorder %s30, 1
      %p111 = por %p109, %p110
      %p112 = scmp.ne.s32.totalorder %s103, %s104
      %p113 = scmp.eq.s32.totalorder %s30, 0
      %p114 = por %p112, %p113
      %p115 = scmp.ne.s32.totalorder %s103, %s104
      %p116 = scmp.eq.s32.totalorder %s31, 1
      %p117 = por %p115, %p116
      %p119 = scmp.ne.s32.totalorder %s104, %s118
      %p120 = scmp.eq.s32.totalorder %s31, 0
      %p121 = por %p119, %p120
      %s123 = sadd.s32 %s122, 1
      %p126 = scmp.eq.s32.totalorder %s25, 1
      %p127 = scmp.ne.s32.totalorder %s122, %s124
      %p128 = scmp.eq.s32.totalorder %s25, 0
      %p129 = por %p127, %p128
      %p130 = scmp.ne.s32.totalorder %s122, %s124
      %p131 = scmp.eq.s32.totalorder %s30, 1
      %p132 = por %p130, %p131
      %p133 = scmp.ne.s32.totalorder %s124, %s125
      %p134 = scmp.eq.s32.totalorder %s30, 0
      %p135 = por %p133, %p134
      %p136 = scmp.ne.s32.totalorder %s124, %s125
      %p137 = scmp.eq.s32.totalorder %s31, 1
      %p138 = por %p136, %p137
      %p140 = scmp.ne.s32.totalorder %s125, %s139
      %p141 = scmp.eq.s32.totalorder %s31, 0
      %p142 = por %p140, %p141
      %s144 = sadd.s32 %s143, 1
      %p147 = scmp.eq.s32.totalorder %s25, 1
      %p148 = scmp.ne.s32.totalorder %s143, %s145
      %p149 = scmp.eq.s32.totalorder %s25, 0
      %p150 = por %p148, %p149
      %p151 = scmp.ne.s32.totalorder %s143, %s145
      %p152 = scmp.eq.s32.totalorder %s30, 1
      %p153 = por %p151, %p152
      %p154 = scmp.ne.s32.totalorder %s145, %s146
      %p155 = scmp.eq.s32.totalorder %s30, 0
      %p156 = por %p154, %p155
      %p157 = scmp.ne.s32.totalorder %s145, %s146
      %p158 = scmp.eq.s32.totalorder %s31, 1
      %p159 = por %p157, %p158
      %p161 = scmp.ne.s32.totalorder %s146, %s160
      %p162 = scmp.eq.s32.totalorder %s31, 0
      %p163 = por %p161, %p162
      %s165 = sadd.s32 %s164, 1
      %p168 = scmp.eq.s32.totalorder %s25, 1
      %p169 = scmp.ne.s32.totalorder %s164, %s166
      %p170 = scmp.eq.s32.totalorder %s25, 0
      %p171 = por %p169, %p170
      %p172 = scmp.ne.s32.totalorder %s164, %s166
      %p173 = scmp.eq.s32.totalorder %s30, 1
      %p174 = por %p172, %p173
      %p175 = scmp.ne.s32.totalorder %s166, %s167
      %p176 = scmp.eq.s32.totalorder %s30, 0
      %p177 = por %p175, %p176
      %p178 = scmp.ne.s32.totalorder %s166, %s167
      %p179 = scmp.eq.s32.totalorder %s31, 1
      %p180 = por %p178, %p179
      %p182 = scmp.ne.s32.totalorder %s167, %s181
      %p183 = scmp.eq.s32.totalorder %s31, 0
      %p184 = por %p182, %p183
      %s186 = sadd.s32 %s185, 1
      %p189 = scmp.eq.s32.totalorder %s25, 1
      %p190 = scmp.ne.s32.totalorder %s185, %s187
      %p191 = scmp.eq.s32.totalorder %s25, 0
      %p192 = por %p190, %p191
      %p193 = scmp.ne.s32.totalorder %s185, %s187
      %p194 = scmp.eq.s32.totalorder %s30, 1
      %p195 = por %p193, %p194
      %p196 = scmp.ne.s32.totalorder %s187, %s188
      %p197 = scmp.eq.s32.totalorder %s30, 0
      %p198 = por %p196, %p197
      %p199 = scmp.ne.s32.totalorder %s187, %s188
      %p200 = scmp.eq.s32.totalorder %s31, 1
      %p201 = por %p199, %p200
      %p203 = scmp.ne.s32.totalorder %s188, %s202
      %p204 = scmp.eq.s32.totalorder %s31, 0
      %p205 = por %p203, %p204
      %s207 = sadd.s32 %s206, 1
      %p210 = scmp.eq.s32.totalorder %s25, 1
      %p211 = scmp.ne.s32.totalorder %s206, %s208
      %p212 = scmp.eq.s32.totalorder %s25, 0
      %p213 = por %p211, %p212
      %p214 = scmp.ne.s32.totalorder %s206, %s208
      %p215 = scmp.eq.s32.totalorder %s30, 1
      %p216 = por %p214, %p215
      %p217 = scmp.ne.s32.totalorder %s208, %s209
      %p218 = scmp.eq.s32.totalorder %s30, 0
      %p219 = por %p217, %p218
      %p220 = scmp.ne.s32.totalorder %s208, %s209
      %p221 = scmp.eq.s32.totalorder %s31, 1
      %p222 = por %p220, %p221
      %p224 = scmp.ne.s32.totalorder %s209, %s223
      %p225 = scmp.eq.s32.totalorder %s31, 0
      %p226 = por %p224, %p225
      %s228 = sadd.s32 %s227, 1
      %p231 = scmp.eq.s32.totalorder %s25, 1
      %p232 = scmp.ne.s32.totalorder %s227, %s229
      %p233 = scmp.eq.s32.totalorder %s25, 0
      %p234 = por %p232, %p233
      %p235 = scmp.ne.s32.totalorder %s227, %s229
      %p236 = scmp.eq.s32.totalorder %s30, 1
      %p237 = por %p235, %p236
      %p238 = scmp.ne.s32.totalorder %s229, %s230
      %p239 = scmp.eq.s32.totalorder %s30, 0
      %p240 = por %p238, %p239
      %p241 = scmp.ne.s32.totalorder %s229, %s230
      %p242 = scmp.eq.s32.totalorder %s31, 1
      %p243 = por %p241, %p242
      %p245 = scmp.ne.s32.totalorder %s230, %s244
      %p246 = scmp.eq.s32.totalorder %s31, 0
      %p247 = por %p245, %p246
      %s249 = sadd.s32 %s248, 1
      %p252 = scmp.eq.s32.totalorder %s25, 1
      %p253 = scmp.ne.s32.totalorder %s248, %s250
      %p254 = scmp.eq.s32.totalorder %s25, 0
      %p255 = por %p253, %p254
      %p256 = scmp.ne.s32.totalorder %s248, %s250
      %p257 = scmp.eq.s32.totalorder %s30, 1
      %p258 = por %p256, %p257
      %p259 = scmp.ne.s32.totalorder %s250, %s251
      %p260 = scmp.eq.s32.totalorder %s30, 0
      %p261 = por %p259, %p260
      %p262 = scmp.ne.s32.totalorder %s250, %s251
      %p263 = scmp.eq.s32.totalorder %s31, 1
      %p264 = por %p262, %p263
      %p266 = scmp.ne.s32.totalorder %s251, %s265
      %p267 = scmp.eq.s32.totalorder %s31, 0
      %p268 = por %p266, %p267
      %s270 = sadd.s32 %s269, 1
      %p273 = scmp.eq.s32.totalorder %s25, 1
      %p274 = scmp.ne.s32.totalorder %s269, %s271
      %p275 = scmp.eq.s32.totalorder %s25, 0
      %p276 = por %p274, %p275
      %p277 = scmp.ne.s32.totalorder %s269, %s271
      %p278 = scmp.eq.s32.totalorder %s30, 1
      %p279 = por %p277, %p278
      %p280 = scmp.ne.s32.totalorder %s271, %s272
      %p281 = scmp.eq.s32.totalorder %s30, 0
      %p282 = por %p280, %p281
      %p283 = scmp.ne.s32.totalorder %s271, %s272
      %p284 = scmp.eq.s32.totalorder %s31, 1
      %p285 = por %p283, %p284
      %p287 = scmp.ne.s32.totalorder %s272, %s286
      %p288 = scmp.eq.s32.totalorder %s31, 0
      %p289 = por %p287, %p288
      %s291 = sadd.s32 %s290, 1
      %p294 = scmp.eq.s32.totalorder %s25, 1
      %p295 = scmp.ne.s32.totalorder %s290, %s292
      %p296 = scmp.eq.s32.totalorder %s25, 0
      %p297 = por %p295, %p296
      %p298 = scmp.ne.s32.totalorder %s290, %s292
      %p299 = scmp.eq.s32.totalorder %s30, 1
      %p300 = por %p298, %p299
      %p301 = scmp.ne.s32.totalorder %s292, %s293
      %p302 = scmp.eq.s32.totalorder %s30, 0
      %p303 = por %p301, %p302
      %p304 = scmp.ne.s32.totalorder %s292, %s293
      %p305 = scmp.eq.s32.totalorder %s31, 1
      %p306 = por %p304, %p305
      %p308 = scmp.ne.s32.totalorder %s293, %s307
      %p309 = scmp.eq.s32.totalorder %s31, 0
      %p310 = por %p308, %p309
      %s312 = sadd.s32 %s311, 1
      %p315 = scmp.eq.s32.totalorder %s25, 1
      %p316 = scmp.ne.s32.totalorder %s311, %s313
      %p317 = scmp.eq.s32.totalorder %s25, 0
      %p318 = por %p316, %p317
      %p319 = scmp.ne.s32.totalorder %s311, %s313
      %p320 = scmp.eq.s32.totalorder %s30, 1
      %p321 = por %p319, %p320
      %p322 = scmp.ne.s32.totalorder %s313, %s314
      %p323 = scmp.eq.s32.totalorder %s30, 0
      %p324 = por %p322, %p323
      %p325 = scmp.ne.s32.totalorder %s313, %s314
      %p326 = scmp.eq.s32.totalorder %s31, 1
      %p327 = por %p325, %p326
      %p329 = scmp.ne.s32.totalorder %s314, %s328
      %p330 = scmp.eq.s32.totalorder %s31, 0
      %p331 = por %p329, %p330
      %s333 = sadd.s32 %s332, 1
      %p336 = scmp.eq.s32.totalorder %s25, 1
      %p337 = scmp.ne.s32.totalorder %s332, %s334
      %p338 = scmp.eq.s32.totalorder %s25, 0
      %p339 = por %p337, %p338
      %p340 = scmp.ne.s32.totalorder %s332, %s334
      %p341 = scmp.eq.s32.totalorder %s30, 1
      %p342 = por %p340, %p341
      %p343 = scmp.ne.s32.totalorder %s334, %s335
      %p344 = scmp.eq.s32.totalorder %s30, 0
      %p345 = por %p343, %p344
      %p346 = scmp.ne.s32.totalorder %s334, %s335
      %p347 = scmp.eq.s32.totalorder %s31, 1
      %p348 = por %p346, %p347
      %p350 = scmp.ne.s32.totalorder %s335, %s349
      %p351 = scmp.eq.s32.totalorder %s31, 0
      %p352 = por %p350, %p351
      %s354 = sadd.s32 %s353, 1
      %p357 = scmp.eq.s32.totalorder %s25, 1
      %p358 = scmp.ne.s32.totalorder %s353, %s355
      %p359 = scmp.eq.s32.totalorder %s25, 0
      %p360 = por %p358, %p359
      %p361 = scmp.ne.s32.totalorder %s353, %s355
      %p362 = scmp.eq.s32.totalorder %s30, 1
      %p363 = por %p361, %p362
      %p364 = scmp.ne.s32.totalorder %s355, %s356
      %p365 = scmp.eq.s32.totalorder %s30, 0
      %p366 = por %p364, %p365
      %p367 = scmp.ne.s32.totalorder %s355, %s356
      %p368 = scmp.eq.s32.totalorder %s31, 1
      %p369 = por %p367, %p368
      %p371 = scmp.ne.s32.totalorder %s356, %s370
      %p372 = scmp.eq.s32.totalorder %s31, 0
      %p373 = por %p371, %p372
      %s374 = ssub.s32 %s25, %s32
      %p375 = scmp.eq.s32.totalorder %s374, 0
      %s377 = sadd.s32 %s376, 1
      %s378 = scalar_select %p375, %s376, %s377
      %p381 = pneg %p375
      %p382 = scmp.eq.s32.totalorder %s25, 1
      %p383 = por %p381, %p382
      %p384 = scmp.ne.s32.totalorder %s376, %s379
      %p385 = scmp.eq.s32.totalorder %s25, 0
      %p386 = por %p384, %p385
      %p387 = scmp.ne.s32.totalorder %s376, %s379
      %p388 = scmp.eq.s32.totalorder %s30, 1
      %p389 = por %p387, %p388
      %p390 = scmp.ne.s32.totalorder %s379, %s380
      %p391 = scmp.eq.s32.totalorder %s30, 0
      %p392 = por %p390, %p391
      %p393 = scmp.ne.s32.totalorder %s379, %s380
      %p394 = scmp.eq.s32.totalorder %s31, 1
      %p395 = por %p393, %p394
      %p397 = scmp.ne.s32.totalorder %s380, %s396
      %p398 = scmp.eq.s32.totalorder %s31, 0
      %p399 = por %p397, %p398
      %p400 = scmp.le.s32.totalorder 1, %s25
      %p401 = scmp.lt.s32.totalorder %s25, 3
      %p402 = pnand %p400, %p401
      %p403 = pneg %p402
      // Predicated region
      $region9: #{basic_transformer.1} parent=5 // pred_check
        _
      $region10: #{basic_transformer.1} parent=5 // pred_check_branch
        %405 = sbr.rel (%p402) target = $region12
      $region11: #{basic_transformer.1} parent=5 // pred_region
        %s406 = ssub.s32 %s25, 1
        // Predicated region
        $region13: #{basic_transformer.1} parent=11 // pred_check
          %p407 = pneg %p72
        $region14: #{basic_transformer.1} parent=11 // pred_check_branch
          %409 = sbr.rel (%p407) target = $region16
        $region15: #{basic_transformer.1} parent=11 // pred_region
          _
        $region16: #{basic_transformer.1} parent=11 // pred_fallthru
          _
        // Predicated region
        $region17: #{basic_transformer.1} parent=11 // pred_check
          %p410 = pneg %p93
        $region18: #{basic_transformer.1} parent=11 // pred_check_branch
          %412 = sbr.rel (%p410) target = $region20
        $region19: #{basic_transformer.1} parent=11 // pred_region
          _
        $region20: #{basic_transformer.1} parent=11 // pred_fallthru
          _
        // Predicated region
        $region21: #{basic_transformer.1} parent=11 // pred_check
          %p413 = pneg %p114
        $region22: #{basic_transformer.1} parent=11 // pred_check_branch
          %415 = sbr.rel (%p413) target = $region24
        $region23: #{basic_transformer.1} parent=11 // pred_region
          _
        $region24: #{basic_transformer.1} parent=11 // pred_fallthru
          _
        // Predicated region
        $region25: #{basic_transformer.1} parent=11 // pred_check
          %p416 = pneg %p135
        $region26: #{basic_transformer.1} parent=11 // pred_check_branch
          %418 = sbr.rel (%p416) target = $region28
        $region27: #{basic_transformer.1} parent=11 // pred_region
          _
        $region28: #{basic_transformer.1} parent=11 // pred_fallthru
          _
        // Predicated region
        $region29: #{basic_transformer.1} parent=11 // pred_check
          %p419 = pneg %p156
        $region30: #{basic_transformer.1} parent=11 // pred_check_branch
          %421 = sbr.rel (%p419) target = $region32
        $region31: #{basic_transformer.1} parent=11 // pred_region
          _
        $region32: #{basic_transformer.1} parent=11 // pred_fallthru
          _
        // Predicated region
        $region33: #{basic_transformer.1} parent=11 // pred_check
          %p422 = pneg %p177
        $region34: #{basic_transformer.1} parent=11 // pred_check_branch
          %424 = sbr.rel (%p422) target = $region36
        $region35: #{basic_transformer.1} parent=11 // pred_region
          _
        $region36: #{basic_transformer.1} parent=11 // pred_fallthru
          _
        // Predicated region
        $region37: #{basic_transformer.1} parent=11 // pred_check
          %p425 = pneg %p198
        $region38: #{basic_transformer.1} parent=11 // pred_check_branch
          %427 = sbr.rel (%p425) target = $region40
        $region39: #{basic_transformer.1} parent=11 // pred_region
          _
        $region40: #{basic_transformer.1} parent=11 // pred_fallthru
          _
        // Predicated region
        $region41: #{basic_transformer.1} parent=11 // pred_check
          %p428 = pneg %p219
        $region42: #{basic_transformer.1} parent=11 // pred_check_branch
          %430 = sbr.rel (%p428) target = $region44
        $region43: #{basic_transformer.1} parent=11 // pred_region
          _
        $region44: #{basic_transformer.1} parent=11 // pred_fallthru
          _
        // Predicated region
        $region45: #{basic_transformer.1} parent=11 // pred_check
          %p431 = pneg %p240
        $region46: #{basic_transformer.1} parent=11 // pred_check_branch
          %433 = sbr.rel (%p431) target = $region48
        $region47: #{basic_transformer.1} parent=11 // pred_region
          _
        $region48: #{basic_transformer.1} parent=11 // pred_fallthru
          _
        // Predicated region
        $region49: #{basic_transformer.1} parent=11 // pred_check
          %p434 = pneg %p261
        $region50: #{basic_transformer.1} parent=11 // pred_check_branch
          %436 = sbr.rel (%p434) target = $region52
        $region51: #{basic_transformer.1} parent=11 // pred_region
          _
        $region52: #{basic_transformer.1} parent=11 // pred_fallthru
          _
        // Predicated region
        $region53: #{basic_transformer.1} parent=11 // pred_check
          %p437 = pneg %p282
        $region54: #{basic_transformer.1} parent=11 // pred_check_branch
          %439 = sbr.rel (%p437) target = $region56
        $region55: #{basic_transformer.1} parent=11 // pred_region
          _
        $region56: #{basic_transformer.1} parent=11 // pred_fallthru
          _
        // Predicated region
        $region57: #{basic_transformer.1} parent=11 // pred_check
          %p440 = pneg %p303
        $region58: #{basic_transformer.1} parent=11 // pred_check_branch
          %442 = sbr.rel (%p440) target = $region60
        $region59: #{basic_transformer.1} parent=11 // pred_region
          _
        $region60: #{basic_transformer.1} parent=11 // pred_fallthru
          _
        // Predicated region
        $region61: #{basic_transformer.1} parent=11 // pred_check
          %p443 = pneg %p324
        $region62: #{basic_transformer.1} parent=11 // pred_check_branch
          %445 = sbr.rel (%p443) target = $region64
        $region63: #{basic_transformer.1} parent=11 // pred_region
          _
        $region64: #{basic_transformer.1} parent=11 // pred_fallthru
          _
        // Predicated region
        $region65: #{basic_transformer.1} parent=11 // pred_check
          %p446 = pneg %p345
        $region66: #{basic_transformer.1} parent=11 // pred_check_branch
          %448 = sbr.rel (%p446) target = $region68
        $region67: #{basic_transformer.1} parent=11 // pred_region
          _
        $region68: #{basic_transformer.1} parent=11 // pred_fallthru
          _
        // Predicated region
        $region69: #{basic_transformer.1} parent=11 // pred_check
          %p449 = pneg %p366
        $region70: #{basic_transformer.1} parent=11 // pred_check_branch
          %451 = sbr.rel (%p449) target = $region72
        $region71: #{basic_transformer.1} parent=11 // pred_region
          _
        $region72: #{basic_transformer.1} parent=11 // pred_fallthru
          _
      $region12: #{basic_transformer.1} parent=5 // pred_fallthru
        _
      %p452 = scmp.lt.s32.totalorder %s25, 2
      // Predicated region
      $region73: #{basic_transformer.1} parent=5 // pred_check
        %p453 = pneg %p452
      $region74: #{basic_transformer.1} parent=5 // pred_check_branch
        %455 = sbr.rel (%p453) target = $region76
      $region75: #{basic_transformer.1} parent=5 // pred_region
        // Predicated region
        $region77: #{basic_transformer.1} parent=75 // pred_check
          %p456 = pneg %p45
        $region78: #{basic_transformer.1} parent=75 // pred_check_branch
          %458 = sbr.rel (%p456) target = $region80
        $region79: #{basic_transformer.1} parent=75 // pred_region
          %p459 = scmp.lt.s32.totalorder %s25, 1
          %s460 = scalar_select %p459, %s25, 1
          %s461 = smul.addr %s460, 32
          %s462 = smul.addr %s461, 4
          %s463 = scalar_lea.vmem %s0, %s462
        $region80: #{basic_transformer.1} parent=75 // pred_fallthru
          _
      $region76: #{basic_transformer.1} parent=5 // pred_fallthru
        _
      %p464 = scmp.le.s32.totalorder 1, %s25
      %p465 = scmp.lt.s32.totalorder %s25, 3
      %p466 = pnand %p464, %p465
      %p467 = pneg %p466
      // Predicated region
      $region81: #{basic_transformer.1} parent=5 // pred_check
        _
      $region82: #{basic_transformer.1} parent=5 // pred_check_branch
        %469 = sbr.rel (%p466) target = $region84
      $region83: #{basic_transformer.1} parent=5 // pred_region
        %s470 = ssub.s32 %s25, 1
        %p471 = scmp.lt.s32.totalorder %s30, 1
        %s472 = scalar_select %p471, %s30, 1
        %s473 = smul.addr %s472, 32
        %s474 = smul.addr %s473, 4
        %s475 = scalar_lea.vmem %s0, %s474
        %p476 = pneg %p51
        %p477 = pneg %p48
        %p478 = pneg %p72
        %p479 = pneg %p69
        %p480 = pneg %p93
        %p481 = pneg %p90
        %p482 = pneg %p114
        %p483 = pneg %p111
        %p484 = pneg %p135
        %p485 = pneg %p132
        %p486 = pneg %p156
        %p487 = pneg %p153
        %p488 = pneg %p177
        %p489 = pneg %p174
        %p490 = pneg %p198
        %p491 = pneg %p195
        %p492 = pneg %p219
        %p493 = pneg %p216
        %p494 = pneg %p240
        %p495 = pneg %p237
        %p496 = pneg %p261
        %p497 = pneg %p258
        %p498 = pneg %p282
        %p499 = pneg %p279
        %p500 = pneg %p303
        %p501 = pneg %p300
        %p502 = pneg %p324
        %p503 = pneg %p321
        %p504 = pneg %p345
        %p505 = pneg %p342
        %p506 = pneg %p366
        %p507 = pneg %p363
        %p508 = pneg %p392
        %p509 = pneg %p389
        %s510 = sand.u32 %s379, 1
        %s511 = scalar_lea.sflag [#allocation5], %s510
        %s512 = sand.u32 %s379, 1
        %s513 = scalar_lea.vmem [#allocation4], %s512
        %p514 = scmp.lt.s32.totalorder %s30, 1
        %s515 = scalar_select %p514, %s30, 1
        %s516 = smul.addr %s515, 32
        %s517 = smul.addr %s516, 4
        %s518 = scalar_lea.vmem %s0, %s517
        %v520 = vld [vmem:[%s518] sm:$0xf]
        %v521 = vld [vmem:[%s518 + $0x4] sm:$0xf]
        %v522 = vld [vmem:[%s518 + $0x8] sm:$0xf]
        %v523 = vld [vmem:[%s518 + $0xc] sm:$0xf]
        %v524 = vld [vmem:[%s518 + $0x10] sm:$0xf]
        %v525 = vld [vmem:[%s518 + $0x14] sm:$0xf]
        %v526 = vld [vmem:[%s518 + $0x18] sm:$0xf]
        %v527 = vld [vmem:[%s518 + $0x1c] sm:$0xf]
        %v528 = vld [vmem:[%s518 + $0x20] sm:$0xf]
        %v529 = vld [vmem:[%s518 + $0x24] sm:$0xf]
        %v530 = vld [vmem:[%s518 + $0x28] sm:$0xf]
        %v531 = vld [vmem:[%s518 + $0x2c] sm:$0xf]
        %v532 = vld [vmem:[%s518 + $0x30] sm:$0xf]
        %v533 = vld [vmem:[%s518 + $0x34] sm:$0xf]
        %v534 = vld [vmem:[%s518 + $0x38] sm:$0xf]
        %v535 = vld [vmem:[%s518 + $0x3c] sm:$0xf]
        %v536 = vld [vmem:[%s518 + $0x40] sm:$0xf]
        %v537 = vld [vmem:[%s518 + $0x44] sm:$0xf]
        %v538 = vld [vmem:[%s518 + $0x48] sm:$0xf]
        %v539 = vld [vmem:[%s518 + $0x4c] sm:$0xf]
        %v540 = vld [vmem:[%s518 + $0x50] sm:$0xf]
        %v541 = vld [vmem:[%s518 + $0x54] sm:$0xf]
        %v542 = vld [vmem:[%s518 + $0x58] sm:$0xf]
        %v543 = vld [vmem:[%s518 + $0x5c] sm:$0xf]
        %v544 = vld [vmem:[%s518 + $0x60] sm:$0xf]
        %v545 = vld [vmem:[%s518 + $0x64] sm:$0xf]
        %v546 = vld [vmem:[%s518 + $0x68] sm:$0xf]
        %v547 = vld [vmem:[%s518 + $0x6c] sm:$0xf]
        %v548 = vld [vmem:[%s518 + $0x70] sm:$0xf]
        %v549 = vld [vmem:[%s518 + $0x74] sm:$0xf]
        %v550 = vld [vmem:[%s518 + $0x78] sm:$0xf]
        %v551 = vld [vmem:[%s518 + $0x7c] sm:$0xf]
        %v552 = vld [vmem:[%s1] sm:$0xf]
        %v553 = vld [vmem:[%s1 + $0x4] sm:$0xf]
        %v554 = vld [vmem:[%s1 + $0x8] sm:$0xf]
        %v555 = vld [vmem:[%s1 + $0xc] sm:$0xf]
        %v588 = vunpack.c.l.b16 %v520
        %v589 = vunpack.c.l.b16 %v521
        %v590 = vunpack.c.l.b16 %v522
        %v591 = vunpack.c.l.b16 %v523
        %v592 = vunpack.c.l.b16 %v524
        %v593 = vunpack.c.l.b16 %v525
        %v594 = vunpack.c.l.b16 %v526
        %v595 = vunpack.c.l.b16 %v527
        %v596 = vunpack.c.l.b16 %v528
        %v597 = vunpack.c.l.b16 %v529
        %v598 = vunpack.c.l.b16 %v530
        %v599 = vunpack.c.l.b16 %v531
        %v600 = vunpack.c.l.b16 %v532
        %v601 = vunpack.c.l.b16 %v533
        %v602 = vunpack.c.l.b16 %v534
        %v603 = vunpack.c.l.b16 %v535
        %v604 = vunpack.c.l.b16 %v536
        %v605 = vunpack.c.l.b16 %v537
        %v606 = vunpack.c.l.b16 %v538
        %v607 = vunpack.c.l.b16 %v539
        %v608 = vunpack.c.l.b16 %v540
        %v609 = vunpack.c.l.b16 %v541
        %v610 = vunpack.c.l.b16 %v542
        %v611 = vunpack.c.l.b16 %v543
        %v612 = vunpack.c.l.b16 %v544
        %v613 = vunpack.c.l.b16 %v545
        %v614 = vunpack.c.l.b16 %v546
        %v615 = vunpack.c.l.b16 %v547
        %v616 = vunpack.c.l.b16 %v548
        %v617 = vunpack.c.l.b16 %v549
        %v618 = vunpack.c.l.b16 %v550
        %v619 = vunpack.c.l.b16 %v551
        %v620 = vpack.c.b16 %v589, %v588
        %v621 = vpack.c.b16 %v591, %v590
        %v622 = vpack.c.b16 %v593, %v592
        %v623 = vpack.c.b16 %v595, %v594
        %v624 = vpack.c.b16 %v597, %v596
        %v625 = vpack.c.b16 %v599, %v598
        %v626 = vpack.c.b16 %v601, %v600
        %v627 = vpack.c.b16 %v603, %v602
        %v628 = vpack.c.b16 %v605, %v604
        %v629 = vpack.c.b16 %v607, %v606
        %v630 = vpack.c.b16 %v609, %v608
        %v631 = vpack.c.b16 %v611, %v610
        %v632 = vpack.c.b16 %v613, %v612
        %v633 = vpack.c.b16 %v615, %v614
        %v634 = vpack.c.b16 %v617, %v616
        %v635 = vpack.c.b16 %v619, %v618
        %v640 = vunpack.c.l.b16 %v552
        %v641 = vunpack.c.l.b16 %v553
        %v642 = vunpack.c.l.b16 %v554
        %v643 = vunpack.c.l.b16 %v555
        %v644 = vpack.c.b16 %v641, %v640
        %v645 = vpack.c.b16 %v643, %v642
        %vm648 = vcmask 261120
        %v650 = vsel %vm648, %v620, 0
        %v653 = vsel %vm648, %v621, 0
        %v656 = vsel %vm648, %v622, 0
        %v659 = vsel %vm648, %v623, 0
        %v662 = vsel %vm648, %v624, 0
        %v665 = vsel %vm648, %v625, 0
        %v668 = vsel %vm648, %v626, 0
        %v671 = vsel %vm648, %v627, 0
        %v674 = vsel %vm648, %v628, 0
        %v677 = vsel %vm648, %v629, 0
        %v680 = vsel %vm648, %v630, 0
        %v683 = vsel %vm648, %v631, 0
        %v686 = vsel %vm648, %v632, 0
        %v689 = vsel %vm648, %v633, 0
        %v692 = vsel %vm648, %v634, 0
        %v695 = vsel %vm648, %v635, 0
        %697 = vmatprep.subr.bf16.mxu0 0
        %698 = vmatpush1.bf16.msra.mxu0 0
        %699 = vmatprep.subr.bf16.mxu0 0
        %700 = vmatpush1.bf16.msra.mxu0 0
        %701 = vmatprep.subr.bf16.mxu0 0
        %702 = vmatpush1.bf16.msra.mxu0 0
        %703 = vmatprep.subr.bf16.mxu0 0
        %704 = vmatpush1.bf16.msra.mxu0 0
        %705 = vmatprep.subr.bf16.mxu0 0
        %706 = vmatpush1.bf16.msra.mxu0 0
        %707 = vmatprep.subr.bf16.mxu0 0
        %708 = vmatpush1.bf16.msra.mxu0 0
        %709 = vmatprep.subr.bf16.mxu0 0
        %710 = vmatpush1.bf16.msra.mxu0 %v645
        %711 = vmatprep.subr.bf16.mxu0 0
        %712 = vmatpush1.bf16.msra.mxu0 %v644
        %713 = vmatprep.subr.bf16.mxu0 0
        %714 = vmatpush2.bf16.msra.mxu0 0
        %715 = vmatprep.subr.bf16.mxu0 0
        %716 = vmatpush2.bf16.msra.mxu0 0
        %717 = vmatprep.subr.bf16.mxu0 0
        %718 = vmatpush2.bf16.msra.mxu0 0
        %719 = vmatprep.subr.bf16.mxu0 0
        %720 = vmatpush2.bf16.msra.mxu0 0
        %721 = vmatprep.subr.bf16.mxu0 0
        %722 = vmatpush2.bf16.msra.mxu0 0
        %723 = vmatprep.subr.bf16.mxu0 0
        %724 = vmatpush2.bf16.msra.mxu0 0
        %725 = vmatprep.subr.bf16.mxu0 0
        %726 = vmatpush2.bf16.msra.mxu0 0
        %727 = vmatprep.subr.bf16.mxu0 0
        %728 = vmatpush2.bf16.msra.mxu0 0
        %729 = vmatprep.mubr.bf16.mxu0 0
        %730 = vmatmul.mubr.bf16.gmra.mxu0 %v650
        %v731 = vpop.f32.mrf.mxu0
        %v732 = vadd.f32 0.0, %v731
        %v733 = vpop.f32.mrf.mxu0
        %v734 = vpop.f32.mrf.mxu0
        %v735 = vadd.f32 0.0, %v734
        %v736 = vpop.f32.mrf.mxu0
        %737 = vmatprep.mubr.bf16.mxu0 0
        %738 = vmatmul.mubr.bf16.gmra.mxu0 %v653
        %v739 = vpop.f32.mrf.mxu0
        %v740 = vadd.f32 0.0, %v739
        %v741 = vpop.f32.mrf.mxu0
        %v742 = vpop.f32.mrf.mxu0
        %v743 = vadd.f32 0.0, %v742
        %v744 = vpop.f32.mrf.mxu0
        %745 = vmatprep.mubr.bf16.mxu0 0
        %746 = vmatmul.mubr.bf16.gmra.mxu0 %v656
        %v747 = vpop.f32.mrf.mxu0
        %v748 = vadd.f32 0.0, %v747
        %v749 = vpop.f32.mrf.mxu0
        %v750 = vpop.f32.mrf.mxu0
        %v751 = vadd.f32 0.0, %v750
        %v752 = vpop.f32.mrf.mxu0
        %753 = vmatprep.mubr.bf16.mxu0 0
        %754 = vmatmul.mubr.bf16.gmra.mxu0 %v659
        %v755 = vpop.f32.mrf.mxu0
        %v756 = vadd.f32 0.0, %v755
        %v757 = vpop.f32.mrf.mxu0
        %v758 = vpop.f32.mrf.mxu0
        %v759 = vadd.f32 0.0, %v758
        %v760 = vpop.f32.mrf.mxu0
        %761 = vmatprep.mubr.bf16.mxu0 0
        %762 = vmatmul.mubr.bf16.gmra.mxu0 %v662
        %v763 = vpop.f32.mrf.mxu0
        %v764 = vadd.f32 0.0, %v763
        %v765 = vpop.f32.mrf.mxu0
        %v766 = vpop.f32.mrf.mxu0
        %v767 = vadd.f32 0.0, %v766
        %v768 = vpop.f32.mrf.mxu0
        %769 = vmatprep.mubr.bf16.mxu0 0
        %770 = vmatmul.mubr.bf16.gmra.mxu0 %v665
        %v771 = vpop.f32.mrf.mxu0
        %v772 = vadd.f32 0.0, %v771
        %v773 = vpop.f32.mrf.mxu0
        %v774 = vpop.f32.mrf.mxu0
        %v775 = vadd.f32 0.0, %v774
        %v776 = vpop.f32.mrf.mxu0
        %777 = vmatprep.mubr.bf16.mxu0 0
        %778 = vmatmul.mubr.bf16.gmra.mxu0 %v668
        %v779 = vpop.f32.mrf.mxu0
        %v780 = vadd.f32 0.0, %v779
        %v781 = vpop.f32.mrf.mxu0
        %v782 = vpop.f32.mrf.mxu0
        %v783 = vadd.f32 0.0, %v782
        %v784 = vpop.f32.mrf.mxu0
        %785 = vmatprep.mubr.bf16.mxu0 0
        %786 = vmatmul.mubr.bf16.gmra.mxu0 %v671
        %v787 = vpop.f32.mrf.mxu0
        %v788 = vadd.f32 0.0, %v787
        %v789 = vpop.f32.mrf.mxu0
        %v790 = vpop.f32.mrf.mxu0
        %v791 = vadd.f32 0.0, %v790
        %v792 = vpop.f32.mrf.mxu0
        %793 = vmatprep.mubr.bf16.mxu0 0
        %794 = vmatmul.mubr.bf16.gmra.mxu0 %v674
        %v795 = vpop.f32.mrf.mxu0
        %v796 = vadd.f32 0.0, %v795
        %v797 = vpop.f32.mrf.mxu0
        %v798 = vpop.f32.mrf.mxu0
        %v799 = vadd.f32 0.0, %v798
        %v800 = vpop.f32.mrf.mxu0
        %801 = vmatprep.mubr.bf16.mxu0 0
        %802 = vmatmul.mubr.bf16.gmra.mxu0 %v677
        %v803 = vpop.f32.mrf.mxu0
        %v804 = vadd.f32 0.0, %v803
        %v805 = vpop.f32.mrf.mxu0
        %v806 = vpop.f32.mrf.mxu0
        %v807 = vadd.f32 0.0, %v806
        %v808 = vpop.f32.mrf.mxu0
        %809 = vmatprep.mubr.bf16.mxu0 0
        %810 = vmatmul.mubr.bf16.gmra.mxu0 %v680
        %v811 = vpop.f32.mrf.mxu0
        %v812 = vadd.f32 0.0, %v811
        %v813 = vpop.f32.mrf.mxu0
        %v814 = vpop.f32.mrf.mxu0
        %v815 = vadd.f32 0.0, %v814
        %v816 = vpop.f32.mrf.mxu0
        %817 = vmatprep.mubr.bf16.mxu0 0
        %818 = vmatmul.mubr.bf16.gmra.mxu0 %v683
        %v819 = vpop.f32.mrf.mxu0
        %v820 = vadd.f32 0.0, %v819
        %v821 = vpop.f32.mrf.mxu0
        %v822 = vpop.f32.mrf.mxu0
        %v823 = vadd.f32 0.0, %v822
        %v824 = vpop.f32.mrf.mxu0
        %825 = vmatprep.mubr.bf16.mxu0 0
        %826 = vmatmul.mubr.bf16.gmra.mxu0 %v686
        %v827 = vpop.f32.mrf.mxu0
        %v828 = vadd.f32 0.0, %v827
        %v829 = vpop.f32.mrf.mxu0
        %v830 = vpop.f32.mrf.mxu0
        %v831 = vadd.f32 0.0, %v830
        %v832 = vpop.f32.mrf.mxu0
        %833 = vmatprep.mubr.bf16.mxu0 0
        %834 = vmatmul.mubr.bf16.gmra.mxu0 %v689
        %v835 = vpop.f32.mrf.mxu0
        %v836 = vadd.f32 0.0, %v835
        %v837 = vpop.f32.mrf.mxu0
        %v838 = vpop.f32.mrf.mxu0
        %v839 = vadd.f32 0.0, %v838
        %v840 = vpop.f32.mrf.mxu0
        %841 = vmatprep.mubr.bf16.mxu0 0
        %842 = vmatmul.mubr.bf16.gmra.mxu0 %v692
        %v843 = vpop.f32.mrf.mxu0
        %v844 = vadd.f32 0.0, %v843
        %v845 = vpop.f32.mrf.mxu0
        %v846 = vpop.f32.mrf.mxu0
        %v847 = vadd.f32 0.0, %v846
        %v848 = vpop.f32.mrf.mxu0
        %849 = vmatprep.mubr.bf16.mxu0 0
        %850 = vmatmul.mubr.bf16.gmra.mxu0 %v695
        %v851 = vpop.f32.mrf.mxu0
        %v852 = vadd.f32 0.0, %v851
        %v853 = vpop.f32.mrf.mxu0
        %v854 = vpop.f32.mrf.mxu0
        %v855 = vadd.f32 0.0, %v854
        %v856 = vpop.f32.mrf.mxu0
        %857 = vdwg.mxu0
        %v858 = vld [vmem:[%s2] sm:$0x1]
        %v860 = vlaneseq
        %v861 = vshrl.u32 %v860, 7
        %v862 = vsub.s32 0, %v861
        %v863 = vrot.slane %v858, %v862
        %v865 = vmul.f32 %v732, %v863
        %v866 = vmul.f32 %v735, %v863
        %v867 = vmul.f32 %v740, %v863
        %v868 = vmul.f32 %v743, %v863
        %v869 = vmul.f32 %v748, %v863
        %v870 = vmul.f32 %v751, %v863
        %v871 = vmul.f32 %v756, %v863
        %v872 = vmul.f32 %v759, %v863
        %v873 = vmul.f32 %v764, %v863
        %v874 = vmul.f32 %v767, %v863
        %v875 = vmul.f32 %v772, %v863
        %v876 = vmul.f32 %v775, %v863
        %v877 = vmul.f32 %v780, %v863
        %v878 = vmul.f32 %v783, %v863
        %v879 = vmul.f32 %v788, %v863
        %v880 = vmul.f32 %v791, %v863
        %v881 = vmul.f32 %v796, %v863
        %v882 = vmul.f32 %v799, %v863
        %v883 = vmul.f32 %v804, %v863
        %v884 = vmul.f32 %v807, %v863
        %v885 = vmul.f32 %v812, %v863
        %v886 = vmul.f32 %v815, %v863
        %v887 = vmul.f32 %v820, %v863
        %v888 = vmul.f32 %v823, %v863
        %v889 = vmul.f32 %v828, %v863
        %v890 = vmul.f32 %v831, %v863
        %v891 = vmul.f32 %v836, %v863
        %v892 = vmul.f32 %v839, %v863
        %v893 = vmul.f32 %v844, %v863
        %v894 = vmul.f32 %v847, %v863
        %v895 = vmul.f32 %v852, %v863
        %v896 = vmul.f32 %v855, %v863
        %v897 = vld [vmem:[%s3] sm:$0x1]
        %v899 = vlaneseq
        %v900 = vshrl.u32 %v899, 7
        %v901 = vsub.s32 0, %v900
        %v902 = vrot.slane %v897, %v901
        %v904 = vadd.f32 %v865, %v902
        %v905 = vadd.f32 %v866, %v902
        %v906 = vadd.f32 %v867, %v902
        %v907 = vadd.f32 %v868, %v902
        %v908 = vadd.f32 %v869, %v902
        %v909 = vadd.f32 %v870, %v902
        %v910 = vadd.f32 %v871, %v902
        %v911 = vadd.f32 %v872, %v902
        %v912 = vadd.f32 %v873, %v902
        %v913 = vadd.f32 %v874, %v902
        %v914 = vadd.f32 %v875, %v902
        %v915 = vadd.f32 %v876, %v902
        %v916 = vadd.f32 %v877, %v902
        %v917 = vadd.f32 %v878, %v902
        %v918 = vadd.f32 %v879, %v902
        %v919 = vadd.f32 %v880, %v902
        %v920 = vadd.f32 %v881, %v902
        %v921 = vadd.f32 %v882, %v902
        %v922 = vadd.f32 %v883, %v902
        %v923 = vadd.f32 %v884, %v902
        %v924 = vadd.f32 %v885, %v902
        %v925 = vadd.f32 %v886, %v902
        %v926 = vadd.f32 %v887, %v902
        %v927 = vadd.f32 %v888, %v902
        %v928 = vadd.f32 %v889, %v902
        %v929 = vadd.f32 %v890, %v902
        %v930 = vadd.f32 %v891, %v902
        %v931 = vadd.f32 %v892, %v902
        %v932 = vadd.f32 %v893, %v902
        %v933 = vadd.f32 %v894, %v902
        %v934 = vadd.f32 %v895, %v902
        %v935 = vadd.f32 %v896, %v902
        %v936 = vmax.f32 %v904, 0.0
        %v937 = vmax.f32 %v905, 0.0
        %v938 = vmax.f32 %v906, 0.0
        %v939 = vmax.f32 %v907, 0.0
        %v940 = vmax.f32 %v908, 0.0
        %v941 = vmax.f32 %v909, 0.0
        %v942 = vmax.f32 %v910, 0.0
        %v943 = vmax.f32 %v911, 0.0
        %v944 = vmax.f32 %v912, 0.0
        %v945 = vmax.f32 %v913, 0.0
        %v946 = vmax.f32 %v914, 0.0
        %v947 = vmax.f32 %v915, 0.0
        %v948 = vmax.f32 %v916, 0.0
        %v949 = vmax.f32 %v917, 0.0
        %v950 = vmax.f32 %v918, 0.0
        %v951 = vmax.f32 %v919, 0.0
        %v952 = vmax.f32 %v920, 0.0
        %v953 = vmax.f32 %v921, 0.0
        %v954 = vmax.f32 %v922, 0.0
        %v955 = vmax.f32 %v923, 0.0
        %v956 = vmax.f32 %v924, 0.0
        %v957 = vmax.f32 %v925, 0.0
        %v958 = vmax.f32 %v926, 0.0
        %v959 = vmax.f32 %v927, 0.0
        %v960 = vmax.f32 %v928, 0.0
        %v961 = vmax.f32 %v929, 0.0
        %v962 = vmax.f32 %v930, 0.0
        %v963 = vmax.f32 %v931, 0.0
        %v964 = vmax.f32 %v932, 0.0
        %v965 = vmax.f32 %v933, 0.0
        %v966 = vmax.f32 %v934, 0.0
        %v967 = vmax.f32 %v935, 0.0
        %v968 = vlaneseq
        %v969 = vshrl.u32 %v968, 7
        %v970 = vadd.s32 %v969, 8
        %v971 = vadd.s32 %v969, 16
        %v972 = vadd.s32 %v969, 24
        %v973 = vadd.s32 %v969, 32
        %v974 = vadd.s32 %v969, 40
        %v975 = vadd.s32 %v969, 48
        %v976 = vadd.s32 %v969, 56
        %v977 = vadd.s32 %v969, 64
        %v978 = vadd.s32 %v969, 72
        %v979 = vadd.s32 %v969, 80
        %v980 = vadd.s32 %v969, 88
        %v981 = vadd.s32 %v969, 96
        %v982 = vadd.s32 %v969, 104
        %v983 = vadd.s32 %v969, 112
        %v984 = vadd.s32 %v969, 120
        %v985 = vadd.s32 %v969, 128
        %v986 = vadd.s32 %v969, 136
        %v987 = vadd.s32 %v969, 144
        %v988 = vadd.s32 %v969, 152
        %v989 = vadd.s32 %v969, 160
        %v990 = vadd.s32 %v969, 168
        %v991 = vadd.s32 %v969, 176
        %v992 = vadd.s32 %v969, 184
        %v993 = vadd.s32 %v969, 192
        %v994 = vadd.s32 %v969, 200
        %v995 = vadd.s32 %v969, 208
        %v996 = vadd.s32 %v969, 216
        %v997 = vadd.s32 %v969, 224
        %v998 = vadd.s32 %v969, 232
        %v999 = vadd.s32 %v969, 240
        %v1000 = vadd.s32 %v969, 248
        %vm1001 = vcmp.lt.s32.totalorder %v969, 0
        %v1002 = vsub.s32 0, %v969
        %v1003 = vsel %vm1001, %v1002, %v969
        %v1004 = vshrl.u32 %v1003, 4
        %v1005 = vand.u32 %v1003, 15
        %v1006 = vsub.s32 0, %v1005
        %v1007 = vsel %vm1001, %v1006, %v1005
        %vm1008 = vcmp.lt.s32.totalorder %v970, 0
        %v1009 = vsub.s32 0, %v970
        %v1010 = vsel %vm1008, %v1009, %v970
        %v1011 = vshrl.u32 %v1010, 4
        %v1012 = vand.u32 %v1010, 15
        %v1013 = vsub.s32 0, %v1012
        %v1014 = vsel %vm1008, %v1013, %v1012
        %vm1015 = vcmp.lt.s32.totalorder %v971, 0
        %v1016 = vsub.s32 0, %v971
        %v1017 = vsel %vm1015, %v1016, %v971
        %v1018 = vshrl.u32 %v1017, 4
        %v1019 = vand.u32 %v1017, 15
        %v1020 = vsub.s32 0, %v1019
        %v1021 = vsel %vm1015, %v1020, %v1019
        %vm1022 = vcmp.lt.s32.totalorder %v972, 0
        %v1023 = vsub.s32 0, %v972
        %v1024 = vsel %vm1022, %v1023, %v972
        %v1025 = vshrl.u32 %v1024, 4
        %v1026 = vand.u32 %v1024, 15
        %v1027 = vsub.s32 0, %v1026
        %v1028 = vsel %vm1022, %v1027, %v1026
        %vm1029 = vcmp.lt.s32.totalorder %v973, 0
        %v1030 = vsub.s32 0, %v973
        %v1031 = vsel %vm1029, %v1030, %v973
        %v1032 = vshrl.u32 %v1031, 4
        %v1033 = vand.u32 %v1031, 15
        %v1034 = vsub.s32 0, %v1033
        %v1035 = vsel %vm1029, %v1034, %v1033
        %vm1036 = vcmp.lt.s32.totalorder %v974, 0
        %v1037 = vsub.s32 0, %v974
        %v1038 = vsel %vm1036, %v1037, %v974
        %v1039 = vshrl.u32 %v1038, 4
        %v1040 = vand.u32 %v1038, 15
        %v1041 = vsub.s32 0, %v1040
        %v1042 = vsel %vm1036, %v1041, %v1040
        %vm1043 = vcmp.lt.s32.totalorder %v975, 0
        %v1044 = vsub.s32 0, %v975
        %v1045 = vsel %vm1043, %v1044, %v975
        %v1046 = vshrl.u32 %v1045, 4
        %v1047 = vand.u32 %v1045, 15
        %v1048 = vsub.s32 0, %v1047
        %v1049 = vsel %vm1043, %v1048, %v1047
        %vm1050 = vcmp.lt.s32.totalorder %v976, 0
        %v1051 = vsub.s32 0, %v976
        %v1052 = vsel %vm1050, %v1051, %v976
        %v1053 = vshrl.u32 %v1052, 4
        %v1054 = vand.u32 %v1052, 15
        %v1055 = vsub.s32 0, %v1054
        %v1056 = vsel %vm1050, %v1055, %v1054
        %vm1057 = vcmp.lt.s32.totalorder %v977, 0
        %v1058 = vsub.s32 0, %v977
        %v1059 = vsel %vm1057, %v1058, %v977
        %v1060 = vshrl.u32 %v1059, 4
        %v1061 = vand.u32 %v1059, 15
        %v1062 = vsub.s32 0, %v1061
        %v1063 = vsel %vm1057, %v1062, %v1061
        %vm1064 = vcmp.lt.s32.totalorder %v978, 0
        %v1065 = vsub.s32 0, %v978
        %v1066 = vsel %vm1064, %v1065, %v978
        %v1067 = vshrl.u32 %v1066, 4
        %v1068 = vand.u32 %v1066, 15
        %v1069 = vsub.s32 0, %v1068
        %v1070 = vsel %vm1064, %v1069, %v1068
        %vm1071 = vcmp.lt.s32.totalorder %v979, 0
        %v1072 = vsub.s32 0, %v979
        %v1073 = vsel %vm1071, %v1072, %v979
        %v1074 = vshrl.u32 %v1073, 4
        %v1075 = vand.u32 %v1073, 15
        %v1076 = vsub.s32 0, %v1075
        %v1077 = vsel %vm1071, %v1076, %v1075
        %vm1078 = vcmp.lt.s32.totalorder %v980, 0
        %v1079 = vsub.s32 0, %v980
        %v1080 = vsel %vm1078, %v1079, %v980
        %v1081 = vshrl.u32 %v1080, 4
        %v1082 = vand.u32 %v1080, 15
        %v1083 = vsub.s32 0, %v1082
        %v1084 = vsel %vm1078, %v1083, %v1082
        %vm1085 = vcmp.lt.s32.totalorder %v981, 0
        %v1086 = vsub.s32 0, %v981
        %v1087 = vsel %vm1085, %v1086, %v981
        %v1088 = vshrl.u32 %v1087, 4
        %v1089 = vand.u32 %v1087, 15
        %v1090 = vsub.s32 0, %v1089
        %v1091 = vsel %vm1085, %v1090, %v1089
        %vm1092 = vcmp.lt.s32.totalorder %v982, 0
        %v1093 = vsub.s32 0, %v982
        %v1094 = vsel %vm1092, %v1093, %v982
        %v1095 = vshrl.u32 %v1094, 4
        %v1096 = vand.u32 %v1094, 15
        %v1097 = vsub.s32 0, %v1096
        %v1098 = vsel %vm1092, %v1097, %v1096
        %vm1099 = vcmp.lt.s32.totalorder %v983, 0
        %v1100 = vsub.s32 0, %v983
        %v1101 = vsel %vm1099, %v1100, %v983
        %v1102 = vshrl.u32 %v1101, 4
        %v1103 = vand.u32 %v1101, 15
        %v1104 = vsub.s32 0, %v1103
        %v1105 = vsel %vm1099, %v1104, %v1103
        %vm1106 = vcmp.lt.s32.totalorder %v984, 0
        %v1107 = vsub.s32 0, %v984
        %v1108 = vsel %vm1106, %v1107, %v984
        %v1109 = vshrl.u32 %v1108, 4
        %v1110 = vand.u32 %v1108, 15
        %v1111 = vsub.s32 0, %v1110
        %v1112 = vsel %vm1106, %v1111, %v1110
        %vm1113 = vcmp.lt.s32.totalorder %v985, 0
        %v1114 = vsub.s32 0, %v985
        %v1115 = vsel %vm1113, %v1114, %v985
        %v1116 = vshrl.u32 %v1115, 4
        %v1117 = vand.u32 %v1115, 15
        %v1118 = vsub.s32 0, %v1117
        %v1119 = vsel %vm1113, %v1118, %v1117
        %vm1120 = vcmp.lt.s32.totalorder %v986, 0
        %v1121 = vsub.s32 0, %v986
        %v1122 = vsel %vm1120, %v1121, %v986
        %v1123 = vshrl.u32 %v1122, 4
        %v1124 = vand.u32 %v1122, 15
        %v1125 = vsub.s32 0, %v1124
        %v1126 = vsel %vm1120, %v1125, %v1124
        %vm1127 = vcmp.lt.s32.totalorder %v987, 0
        %v1128 = vsub.s32 0, %v987
        %v1129 = vsel %vm1127, %v1128, %v987
        %v1130 = vshrl.u32 %v1129, 4
        %v1131 = vand.u32 %v1129, 15
        %v1132 = vsub.s32 0, %v1131
        %v1133 = vsel %vm1127, %v1132, %v1131
        %vm1134 = vcmp.lt.s32.totalorder %v988, 0
        %v1135 = vsub.s32 0, %v988
        %v1136 = vsel %vm1134, %v1135, %v988
        %v1137 = vshrl.u32 %v1136, 4
        %v1138 = vand.u32 %v1136, 15
        %v1139 = vsub.s32 0, %v1138
        %v1140 = vsel %vm1134, %v1139, %v1138
        %vm1141 = vcmp.lt.s32.totalorder %v989, 0
        %v1142 = vsub.s32 0, %v989
        %v1143 = vsel %vm1141, %v1142, %v989
        %v1144 = vshrl.u32 %v1143, 4
        %v1145 = vand.u32 %v1143, 15
        %v1146 = vsub.s32 0, %v1145
        %v1147 = vsel %vm1141, %v1146, %v1145
        %vm1148 = vcmp.lt.s32.totalorder %v990, 0
        %v1149 = vsub.s32 0, %v990
        %v1150 = vsel %vm1148, %v1149, %v990
        %v1151 = vshrl.u32 %v1150, 4
        %v1152 = vand.u32 %v1150, 15
        %v1153 = vsub.s32 0, %v1152
        %v1154 = vsel %vm1148, %v1153, %v1152
        %vm1155 = vcmp.lt.s32.totalorder %v991, 0
        %v1156 = vsub.s32 0, %v991
        %v1157 = vsel %vm1155, %v1156, %v991
        %v1158 = vshrl.u32 %v1157, 4
        %v1159 = vand.u32 %v1157, 15
        %v1160 = vsub.s32 0, %v1159
        %v1161 = vsel %vm1155, %v1160, %v1159
        %vm1162 = vcmp.lt.s32.totalorder %v992, 0
        %v1163 = vsub.s32 0, %v992
        %v1164 = vsel %vm1162, %v1163, %v992
        %v1165 = vshrl.u32 %v1164, 4
        %v1166 = vand.u32 %v1164, 15
        %v1167 = vsub.s32 0, %v1166
        %v1168 = vsel %vm1162, %v1167, %v1166
        %vm1169 = vcmp.lt.s32.totalorder %v993, 0
        %v1170 = vsub.s32 0, %v993
        %v1171 = vsel %vm1169, %v1170, %v993
        %v1172 = vshrl.u32 %v1171, 4
        %v1173 = vand.u32 %v1171, 15
        %v1174 = vsub.s32 0, %v1173
        %v1175 = vsel %vm1169, %v1174, %v1173
        %vm1176 = vcmp.lt.s32.totalorder %v994, 0
        %v1177 = vsub.s32 0, %v994
        %v1178 = vsel %vm1176, %v1177, %v994
        %v1179 = vshrl.u32 %v1178, 4
        %v1180 = vand.u32 %v1178, 15
        %v1181 = vsub.s32 0, %v1180
        %v1182 = vsel %vm1176, %v1181, %v1180
        %vm1183 = vcmp.lt.s32.totalorder %v995, 0
        %v1184 = vsub.s32 0, %v995
        %v1185 = vsel %vm1183, %v1184, %v995
        %v1186 = vshrl.u32 %v1185, 4
        %v1187 = vand.u32 %v1185, 15
        %v1188 = vsub.s32 0, %v1187
        %v1189 = vsel %vm1183, %v1188, %v1187
        %vm1190 = vcmp.lt.s32.totalorder %v996, 0
        %v1191 = vsub.s32 0, %v996
        %v1192 = vsel %vm1190, %v1191, %v996
        %v1193 = vshrl.u32 %v1192, 4
        %v1194 = vand.u32 %v1192, 15
        %v1195 = vsub.s32 0, %v1194
        %v1196 = vsel %vm1190, %v1195, %v1194
        %vm1197 = vcmp.lt.s32.totalorder %v997, 0
        %v1198 = vsub.s32 0, %v997
        %v1199 = vsel %vm1197, %v1198, %v997
        %v1200 = vshrl.u32 %v1199, 4
        %v1201 = vand.u32 %v1199, 15
        %v1202 = vsub.s32 0, %v1201
        %v1203 = vsel %vm1197, %v1202, %v1201
        %vm1204 = vcmp.lt.s32.totalorder %v998, 0
        %v1205 = vsub.s32 0, %v998
        %v1206 = vsel %vm1204, %v1205, %v998
        %v1207 = vshrl.u32 %v1206, 4
        %v1208 = vand.u32 %v1206, 15
        %v1209 = vsub.s32 0, %v1208
        %v1210 = vsel %vm1204, %v1209, %v1208
        %vm1211 = vcmp.lt.s32.totalorder %v999, 0
        %v1212 = vsub.s32 0, %v999
        %v1213 = vsel %vm1211, %v1212, %v999
        %v1214 = vshrl.u32 %v1213, 4
        %v1215 = vand.u32 %v1213, 15
        %v1216 = vsub.s32 0, %v1215
        %v1217 = vsel %vm1211, %v1216, %v1215
        %vm1218 = vcmp.lt.s32.totalorder %v1000, 0
        %v1219 = vsub.s32 0, %v1000
        %v1220 = vsel %vm1218, %v1219, %v1000
        %v1221 = vshrl.u32 %v1220, 4
        %v1222 = vand.u32 %v1220, 15
        %v1223 = vsub.s32 0, %v1222
        %v1224 = vsel %vm1218, %v1223, %v1222
        %vm1225 = vcmp.ne.s32.totalorder %v1007, 0
        %vm1226 = vcmp.ne.s32.totalorder %v1014, 0
        %vm1227 = vcmp.ne.s32.totalorder %v1021, 0
        %vm1228 = vcmp.ne.s32.totalorder %v1028, 0
        %vm1229 = vcmp.ne.s32.totalorder %v1035, 0
        %vm1230 = vcmp.ne.s32.totalorder %v1042, 0
        %vm1231 = vcmp.ne.s32.totalorder %v1049, 0
        %vm1232 = vcmp.ne.s32.totalorder %v1056, 0
        %vm1233 = vcmp.ne.s32.totalorder %v1063, 0
        %vm1234 = vcmp.ne.s32.totalorder %v1070, 0
        %vm1235 = vcmp.ne.s32.totalorder %v1077, 0
        %vm1236 = vcmp.ne.s32.totalorder %v1084, 0
        %vm1237 = vcmp.ne.s32.totalorder %v1091, 0
        %vm1238 = vcmp.ne.s32.totalorder %v1098, 0
        %vm1239 = vcmp.ne.s32.totalorder %v1105, 0
        %vm1240 = vcmp.ne.s32.totalorder %v1112, 0
        %vm1241 = vcmp.ne.s32.totalorder %v1119, 0
        %vm1242 = vcmp.ne.s32.totalorder %v1126, 0
        %vm1243 = vcmp.ne.s32.totalorder %v1133, 0
        %vm1244 = vcmp.ne.s32.totalorder %v1140, 0
        %vm1245 = vcmp.ne.s32.totalorder %v1147, 0
        %vm1246 = vcmp.ne.s32.totalorder %v1154, 0
        %vm1247 = vcmp.ne.s32.totalorder %v1161, 0
        %vm1248 = vcmp.ne.s32.totalorder %v1168, 0
        %vm1249 = vcmp.ne.s32.totalorder %v1175, 0
        %vm1250 = vcmp.ne.s32.totalorder %v1182, 0
        %vm1251 = vcmp.ne.s32.totalorder %v1189, 0
        %vm1252 = vcmp.ne.s32.totalorder %v1196, 0
        %vm1253 = vcmp.ne.s32.totalorder %v1203, 0
        %vm1254 = vcmp.ne.s32.totalorder %v1210, 0
        %vm1255 = vcmp.ne.s32.totalorder %v1217, 0
        %vm1256 = vcmp.ne.s32.totalorder %v1224, 0
        %vm1257 = vcmp.lt.s32.totalorder %v1007, 0
        %vm1258 = vcmp.lt.s32.totalorder %v1014, 0
        %vm1259 = vcmp.lt.s32.totalorder %v1021, 0
        %vm1260 = vcmp.lt.s32.totalorder %v1028, 0
        %vm1261 = vcmp.lt.s32.totalorder %v1035, 0
        %vm1262 = vcmp.lt.s32.totalorder %v1042, 0
        %vm1263 = vcmp.lt.s32.totalorder %v1049, 0
        %vm1264 = vcmp.lt.s32.totalorder %v1056, 0
        %vm1265 = vcmp.lt.s32.totalorder %v1063, 0
        %vm1266 = vcmp.lt.s32.totalorder %v1070, 0
        %vm1267 = vcmp.lt.s32.totalorder %v1077, 0
        %vm1268 = vcmp.lt.s32.totalorder %v1084, 0
        %vm1269 = vcmp.lt.s32.totalorder %v1091, 0
        %vm1270 = vcmp.lt.s32.totalorder %v1098, 0
        %vm1271 = vcmp.lt.s32.totalorder %v1105, 0
        %vm1272 = vcmp.lt.s32.totalorder %v1112, 0
        %vm1273 = vcmp.lt.s32.totalorder %v1119, 0
        %vm1274 = vcmp.lt.s32.totalorder %v1126, 0
        %vm1275 = vcmp.lt.s32.totalorder %v1133, 0
        %vm1276 = vcmp.lt.s32.totalorder %v1140, 0
        %vm1277 = vcmp.lt.s32.totalorder %v1147, 0
        %vm1278 = vcmp.lt.s32.totalorder %v1154, 0
        %vm1279 = vcmp.lt.s32.totalorder %v1161, 0
        %vm1280 = vcmp.lt.s32.totalorder %v1168, 0
        %vm1281 = vcmp.lt.s32.totalorder %v1175, 0
        %vm1282 = vcmp.lt.s32.totalorder %v1182, 0
        %vm1283 = vcmp.lt.s32.totalorder %v1189, 0
        %vm1284 = vcmp.lt.s32.totalorder %v1196, 0
        %vm1285 = vcmp.lt.s32.totalorder %v1203, 0
        %vm1286 = vcmp.lt.s32.totalorder %v1210, 0
        %vm1287 = vcmp.lt.s32.totalorder %v1217, 0
        %vm1288 = vcmp.lt.s32.totalorder %v1224, 0
        %vm1289 = vmand %vm1257, %vm1225
        %vm1290 = vmand %vm1258, %vm1226
        %vm1291 = vmand %vm1259, %vm1227
        %vm1292 = vmand %vm1260, %vm1228
        %vm1293 = vmand %vm1261, %vm1229
        %vm1294 = vmand %vm1262, %vm1230
        %vm1295 = vmand %vm1263, %vm1231
        %vm1296 = vmand %vm1264, %vm1232
        %vm1297 = vmand %vm1265, %vm1233
        %vm1298 = vmand %vm1266, %vm1234
        %vm1299 = vmand %vm1267, %vm1235
        %vm1300 = vmand %vm1268, %vm1236
        %vm1301 = vmand %vm1269, %vm1237
        %vm1302 = vmand %vm1270, %vm1238
        %vm1303 = vmand %vm1271, %vm1239
        %vm1304 = vmand %vm1272, %vm1240
        %vm1305 = vmand %vm1273, %vm1241
        %vm1306 = vmand %vm1274, %vm1242
        %vm1307 = vmand %vm1275, %vm1243
        %vm1308 = vmand %vm1276, %vm1244
        %vm1309 = vmand %vm1277, %vm1245
        %vm1310 = vmand %vm1278, %vm1246
        %vm1311 = vmand %vm1279, %vm1247
        %vm1312 = vmand %vm1280, %vm1248
        %vm1313 = vmand %vm1281, %vm1249
        %vm1314 = vmand %vm1282, %vm1250
        %vm1315 = vmand %vm1283, %vm1251
        %vm1316 = vmand %vm1284, %vm1252
        %vm1317 = vmand %vm1285, %vm1253
        %vm1318 = vmand %vm1286, %vm1254
        %vm1319 = vmand %vm1287, %vm1255
        %vm1320 = vmand %vm1288, %vm1256
        %v1321 = vadd.s32 %v1007, 16
        %v1322 = vadd.s32 %v1014, 16
        %v1323 = vadd.s32 %v1021, 16
        %v1324 = vadd.s32 %v1028, 16
        %v1325 = vadd.s32 %v1035, 16
        %v1326 = vadd.s32 %v1042, 16
        %v1327 = vadd.s32 %v1049, 16
        %v1328 = vadd.s32 %v1056, 16
        %v1329 = vadd.s32 %v1063, 16
        %v1330 = vadd.s32 %v1070, 16
        %v1331 = vadd.s32 %v1077, 16
        %v1332 = vadd.s32 %v1084, 16
        %v1333 = vadd.s32 %v1091, 16
        %v1334 = vadd.s32 %v1098, 16
        %v1335 = vadd.s32 %v1105, 16
        %v1336 = vadd.s32 %v1112, 16
        %v1337 = vadd.s32 %v1119, 16
        %v1338 = vadd.s32 %v1126, 16
        %v1339 = vadd.s32 %v1133, 16
        %v1340 = vadd.s32 %v1140, 16
        %v1341 = vadd.s32 %v1147, 16
        %v1342 = vadd.s32 %v1154, 16
        %v1343 = vadd.s32 %v1161, 16
        %v1344 = vadd.s32 %v1168, 16
        %v1345 = vadd.s32 %v1175, 16
        %v1346 = vadd.s32 %v1182, 16
        %v1347 = vadd.s32 %v1189, 16
        %v1348 = vadd.s32 %v1196, 16
        %v1349 = vadd.s32 %v1203, 16
        %v1350 = vadd.s32 %v1210, 16
        %v1351 = vadd.s32 %v1217, 16
        %v1352 = vadd.s32 %v1224, 16
        %v1353 = vsel %vm1289, %v1321, %v1007
        %v1354 = vsel %vm1290, %v1322, %v1014
        %v1355 = vsel %vm1291, %v1323, %v1021
        %v1356 = vsel %vm1292, %v1324, %v1028
        %v1357 = vsel %vm1293, %v1325, %v1035
        %v1358 = vsel %vm1294, %v1326, %v1042
        %v1359 = vsel %vm1295, %v1327, %v1049
        %v1360 = vsel %vm1296, %v1328, %v1056
        %v1361 = vsel %vm1297, %v1329, %v1063
        %v1362 = vsel %vm1298, %v1330, %v1070
        %v1363 = vsel %vm1299, %v1331, %v1077
        %v1364 = vsel %vm1300, %v1332, %v1084
        %v1365 = vsel %vm1301, %v1333, %v1091
        %v1366 = vsel %vm1302, %v1334, %v1098
        %v1367 = vsel %vm1303, %v1335, %v1105
        %v1368 = vsel %vm1304, %v1336, %v1112
        %v1369 = vsel %vm1305, %v1337, %v1119
        %v1370 = vsel %vm1306, %v1338, %v1126
        %v1371 = vsel %vm1307, %v1339, %v1133
        %v1372 = vsel %vm1308, %v1340, %v1140
        %v1373 = vsel %vm1309, %v1341, %v1147
        %v1374 = vsel %vm1310, %v1342, %v1154
        %v1375 = vsel %vm1311, %v1343, %v1161
        %v1376 = vsel %vm1312, %v1344, %v1168
        %v1377 = vsel %vm1313, %v1345, %v1175
        %v1378 = vsel %vm1314, %v1346, %v1182
        %v1379 = vsel %vm1315, %v1347, %v1189
        %v1380 = vsel %vm1316, %v1348, %v1196
        %v1381 = vsel %vm1317, %v1349, %v1203
        %v1382 = vsel %vm1318, %v1350, %v1210
        %v1383 = vsel %vm1319, %v1351, %v1217
        %v1384 = vsel %vm1320, %v1352, %v1224
        %vm1385 = vcmask 130048
        %1386 = vst.msk [vmem:[#allocation2] sm:$0xff] %vm1385, 0.0
        %1387 = vst.msk [vmem:[#allocation2 + $0x8] sm:$0xff] %vm1385, 0.0
        %1388 = vst.msk [vmem:[#allocation2 + $0x10] sm:$0xff] %vm1385, 0.0
        %1389 = vst.msk [vmem:[#allocation2 + $0x118] sm:$0xff] %vm1385, 0.0
        %1390 = vst.msk [vmem:[#allocation2 + $0x120] sm:$0xff] %vm1385, 0.0
        %1391 = vst.msk [vmem:[#allocation2 + $0x128] sm:$0xff] %vm1385, 0.0
        %1392 = vst.msk [vmem:[#allocation2 + $0x18] sm:$0xff] %vm1385, %v936
        %1393 = vst.msk [vmem:[#allocation2 + $0x20] sm:$0xff] %vm1385, %v937
        %1394 = vst.msk [vmem:[#allocation2 + $0x28] sm:$0xff] %vm1385, %v938
        %1395 = vst.msk [vmem:[#allocation2 + $0x30] sm:$0xff] %vm1385, %v939
        %1396 = vst.msk [vmem:[#allocation2 + $0x38] sm:$0xff] %vm1385, %v940
        %1397 = vst.msk [vmem:[#allocation2 + $0x40] sm:$0xff] %vm1385, %v941
        %1398 = vst.msk [vmem:[#allocation2 + $0x48] sm:$0xff] %vm1385, %v942
        %1399 = vst.msk [vmem:[#allocation2 + $0x50] sm:$0xff] %vm1385, %v943
        %1400 = vst.msk [vmem:[#allocation2 + $0x58] sm:$0xff] %vm1385, %v944
        %1401 = vst.msk [vmem:[#allocation2 + $0x60] sm:$0xff] %vm1385, %v945
        %1402 = vst.msk [vmem:[#allocation2 + $0x68] sm:$0xff] %vm1385, %v946
        %1403 = vst.msk [vmem:[#allocation2 + $0x70] sm:$0xff] %vm1385, %v947
        %1404 = vst.msk [vmem:[#allocation2 + $0x78] sm:$0xff] %vm1385, %v948
        %1405 = vst.msk [vmem:[#allocation2 + $0x80] sm:$0xff] %vm1385, %v949
        %1406 = vst.msk [vmem:[#allocation2 + $0x88] sm:$0xff] %vm1385, %v950
        %1407 = vst.msk [vmem:[#allocation2 + $0x90] sm:$0xff] %vm1385, %v951
        %1408 = vst.msk [vmem:[#allocation2 + $0x98] sm:$0xff] %vm1385, %v952
        %1409 = vst.msk [vmem:[#allocation2 + $0xa0] sm:$0xff] %vm1385, %v953
        %1410 = vst.msk [vmem:[#allocation2 + $0xa8] sm:$0xff] %vm1385, %v954
        %1411 = vst.msk [vmem:[#allocation2 + $0xb0] sm:$0xff] %vm1385, %v955
        %1412 = vst.msk [vmem:[#allocation2 + $0xb8] sm:$0xff] %vm1385, %v956
        %1413 = vst.msk [vmem:[#allocation2 + $0xc0] sm:$0xff] %vm1385, %v957
        %1414 = vst.msk [vmem:[#allocation2 + $0xc8] sm:$0xff] %vm1385, %v958
        %1415 = vst.msk [vmem:[#allocation2 + $0xd0] sm:$0xff] %vm1385, %v959
        %1416 = vst.msk [vmem:[#allocation2 + $0xd8] sm:$0xff] %vm1385, %v960
        %1417 = vst.msk [vmem:[#allocation2 + $0xe0] sm:$0xff] %vm1385, %v961
        %1418 = vst.msk [vmem:[#allocation2 + $0xe8] sm:$0xff] %vm1385, %v962
        %1419 = vst.msk [vmem:[#allocation2 + $0xf0] sm:$0xff] %vm1385, %v963
        %1420 = vst.msk [vmem:[#allocation2 + $0xf8] sm:$0xff] %vm1385, %v964
        %1421 = vst.msk [vmem:[#allocation2 + $0x100] sm:$0xff] %vm1385, %v965
        %1422 = vst.msk [vmem:[#allocation2 + $0x108] sm:$0xff] %vm1385, %v966
        %1423 = vst.msk [vmem:[#allocation2 + $0x110] sm:$0xff] %vm1385, %v967
        %v1424 = vld [vmem:[#allocation2 + $0x7] sm:$0xff]
        %v1425 = vld [vmem:[#allocation2 + $0xf] sm:$0xff]
        %v1426 = vld [vmem:[#allocation2 + $0x17] sm:$0xff]
        %v1427 = vld [vmem:[#allocation2 + $0x1f] sm:$0xff]
        %v1428 = vld [vmem:[#allocation2 + $0x27] sm:$0xff]
        %v1429 = vld [vmem:[#allocation2 + $0x2f] sm:$0xff]
        %v1430 = vld [vmem:[#allocation2 + $0x37] sm:$0xff]
        %v1431 = vld [vmem:[#allocation2 + $0x3f] sm:$0xff]
        %v1432 = vld [vmem:[#allocation2 + $0x47] sm:$0xff]
        %v1433 = vld [vmem:[#allocation2 + $0x4f] sm:$0xff]
        %v1434 = vld [vmem:[#allocation2 + $0x57] sm:$0xff]
        %v1435 = vld [vmem:[#allocation2 + $0x5f] sm:$0xff]
        %v1436 = vld [vmem:[#allocation2 + $0x67] sm:$0xff]
        %v1437 = vld [vmem:[#allocation2 + $0x6f] sm:$0xff]
        %v1438 = vld [vmem:[#allocation2 + $0x77] sm:$0xff]
        %v1439 = vld [vmem:[#allocation2 + $0x7f] sm:$0xff]
        %v1440 = vld [vmem:[#allocation2 + $0x87] sm:$0xff]
        %v1441 = vld [vmem:[#allocation2 + $0x8f] sm:$0xff]
        %v1442 = vld [vmem:[#allocation2 + $0x97] sm:$0xff]
        %v1443 = vld [vmem:[#allocation2 + $0x9f] sm:$0xff]
        %v1444 = vld [vmem:[#allocation2 + $0xa7] sm:$0xff]
        %v1445 = vld [vmem:[#allocation2 + $0xaf] sm:$0xff]
        %v1446 = vld [vmem:[#allocation2 + $0xb7] sm:$0xff]
        %v1447 = vld [vmem:[#allocation2 + $0xbf] sm:$0xff]
        %v1448 = vld [vmem:[#allocation2 + $0xc7] sm:$0xff]
        %v1449 = vld [vmem:[#allocation2 + $0xcf] sm:$0xff]
        %v1450 = vld [vmem:[#allocation2 + $0xd7] sm:$0xff]
        %v1451 = vld [vmem:[#allocation2 + $0xdf] sm:$0xff]
        %v1452 = vld [vmem:[#allocation2 + $0xe7] sm:$0xff]
        %v1453 = vld [vmem:[#allocation2 + $0xef] sm:$0xff]
        %v1454 = vld [vmem:[#allocation2 + $0xf7] sm:$0xff]
        %v1455 = vld [vmem:[#allocation2 + $0xff] sm:$0xff]
        %v1456 = vadd.s32 %v1353, 4294967295
        %v1457 = vadd.s32 %v1354, 4294967295
        %v1458 = vadd.s32 %v1355, 4294967295
        %v1459 = vadd.s32 %v1356, 4294967295
        %v1460 = vadd.s32 %v1357, 4294967295
        %v1461 = vadd.s32 %v1358, 4294967295
        %v1462 = vadd.s32 %v1359, 4294967295
        %v1463 = vadd.s32 %v1360, 4294967295
        %v1464 = vadd.s32 %v1361, 4294967295
        %v1465 = vadd.s32 %v1362, 4294967295
        %v1466 = vadd.s32 %v1363, 4294967295
        %v1467 = vadd.s32 %v1364, 4294967295
        %v1468 = vadd.s32 %v1365, 4294967295
        %v1469 = vadd.s32 %v1366, 4294967295
        %v1470 = vadd.s32 %v1367, 4294967295
        %v1471 = vadd.s32 %v1368, 4294967295
        %v1472 = vadd.s32 %v1369, 4294967295
        %v1473 = vadd.s32 %v1370, 4294967295
        %v1474 = vadd.s32 %v1371, 4294967295
        %v1475 = vadd.s32 %v1372, 4294967295
        %v1476 = vadd.s32 %v1373, 4294967295
        %v1477 = vadd.s32 %v1374, 4294967295
        %v1478 = vadd.s32 %v1375, 4294967295
        %v1479 = vadd.s32 %v1376, 4294967295
        %v1480 = vadd.s32 %v1377, 4294967295
        %v1481 = vadd.s32 %v1378, 4294967295
        %v1482 = vadd.s32 %v1379, 4294967295
        %v1483 = vadd.s32 %v1380, 4294967295
        %v1484 = vadd.s32 %v1381, 4294967295
        %v1485 = vadd.s32 %v1382, 4294967295
        %v1486 = vadd.s32 %v1383, 4294967295
        %v1487 = vadd.s32 %v1384, 4294967295
        %vm1488 = vcmp.ge.s32.totalorder %v1456, 0
        %vm1489 = vcmp.ge.s32.totalorder %v1457, 0
        %vm1490 = vcmp.ge.s32.totalorder %v1458, 0
        %vm1491 = vcmp.ge.s32.totalorder %v1459, 0
        %vm1492 = vcmp.ge.s32.totalorder %v1460, 0
        %vm1493 = vcmp.ge.s32.totalorder %v1461, 0
        %vm1494 = vcmp.ge.s32.totalorder %v1462, 0
        %vm1495 = vcmp.ge.s32.totalorder %v1463, 0
        %vm1496 = vcmp.ge.s32.totalorder %v1464, 0
        %vm1497 = vcmp.ge.s32.totalorder %v1465, 0
        %vm1498 = vcmp.ge.s32.totalorder %v1466, 0
        %vm1499 = vcmp.ge.s32.totalorder %v1467, 0
        %vm1500 = vcmp.ge.s32.totalorder %v1468, 0
        %vm1501 = vcmp.ge.s32.totalorder %v1469, 0
        %vm1502 = vcmp.ge.s32.totalorder %v1470, 0
        %vm1503 = vcmp.ge.s32.totalorder %v1471, 0
        %vm1504 = vcmp.ge.s32.totalorder %v1472, 0
        %vm1505 = vcmp.ge.s32.totalorder %v1473, 0
        %vm1506 = vcmp.ge.s32.totalorder %v1474, 0
        %vm1507 = vcmp.ge.s32.totalorder %v1475, 0
        %vm1508 = vcmp.ge.s32.totalorder %v1476, 0
        %vm1509 = vcmp.ge.s32.totalorder %v1477, 0
        %vm1510 = vcmp.ge.s32.totalorder %v1478, 0
        %vm1511 = vcmp.ge.s32.totalorder %v1479, 0
        %vm1512 = vcmp.ge.s32.totalorder %v1480, 0
        %vm1513 = vcmp.ge.s32.totalorder %v1481, 0
        %vm1514 = vcmp.ge.s32.totalorder %v1482, 0
        %vm1515 = vcmp.ge.s32.totalorder %v1483, 0
        %vm1516 = vcmp.ge.s32.totalorder %v1484, 0
        %vm1517 = vcmp.ge.s32.totalorder %v1485, 0
        %vm1518 = vcmp.ge.s32.totalorder %v1486, 0
        %vm1519 = vcmp.ge.s32.totalorder %v1487, 0
        %vm1520 = vcmp.lt.s32.totalorder %v1456, 16
        %vm1521 = vcmp.lt.s32.totalorder %v1457, 16
        %vm1522 = vcmp.lt.s32.totalorder %v1458, 16
        %vm1523 = vcmp.lt.s32.totalorder %v1459, 16
        %vm1524 = vcmp.lt.s32.totalorder %v1460, 16
        %vm1525 = vcmp.lt.s32.totalorder %v1461, 16
        %vm1526 = vcmp.lt.s32.totalorder %v1462, 16
        %vm1527 = vcmp.lt.s32.totalorder %v1463, 16
        %vm1528 = vcmp.lt.s32.totalorder %v1464, 16
        %vm1529 = vcmp.lt.s32.totalorder %v1465, 16
        %vm1530 = vcmp.lt.s32.totalorder %v1466, 16
        %vm1531 = vcmp.lt.s32.totalorder %v1467, 16
        %vm1532 = vcmp.lt.s32.totalorder %v1468, 16
        %vm1533 = vcmp.lt.s32.totalorder %v1469, 16
        %vm1534 = vcmp.lt.s32.totalorder %v1470, 16
        %vm1535 = vcmp.lt.s32.totalorder %v1471, 16
        %vm1536 = vcmp.lt.s32.totalorder %v1472, 16
        %vm1537 = vcmp.lt.s32.totalorder %v1473, 16
        %vm1538 = vcmp.lt.s32.totalorder %v1474, 16
        %vm1539 = vcmp.lt.s32.totalorder %v1475, 16
        %vm1540 = vcmp.lt.s32.totalorder %v1476, 16
        %vm1541 = vcmp.lt.s32.totalorder %v1477, 16
        %vm1542 = vcmp.lt.s32.totalorder %v1478, 16
        %vm1543 = vcmp.lt.s32.totalorder %v1479, 16
        %vm1544 = vcmp.lt.s32.totalorder %v1480, 16
        %vm1545 = vcmp.lt.s32.totalorder %v1481, 16
        %vm1546 = vcmp.lt.s32.totalorder %v1482, 16
        %vm1547 = vcmp.lt.s32.totalorder %v1483, 16
        %vm1548 = vcmp.lt.s32.totalorder %v1484, 16
        %vm1549 = vcmp.lt.s32.totalorder %v1485, 16
        %vm1550 = vcmp.lt.s32.totalorder %v1486, 16
        %vm1551 = vcmp.lt.s32.totalorder %v1487, 16
        %vm1552 = vmand %vm1488, %vm1520
        %vm1553 = vmand %vm1489, %vm1521
        %vm1554 = vmand %vm1490, %vm1522
        %vm1555 = vmand %vm1491, %vm1523
        %vm1556 = vmand %vm1492, %vm1524
        %vm1557 = vmand %vm1493, %vm1525
        %vm1558 = vmand %vm1494, %vm1526
        %vm1559 = vmand %vm1495, %vm1527
        %vm1560 = vmand %vm1496, %vm1528
        %vm1561 = vmand %vm1497, %vm1529
        %vm1562 = vmand %vm1498, %vm1530
        %vm1563 = vmand %vm1499, %vm1531
        %vm1564 = vmand %vm1500, %vm1532
        %vm1565 = vmand %vm1501, %vm1533
        %vm1566 = vmand %vm1502, %vm1534
        %vm1567 = vmand %vm1503, %vm1535
        %vm1568 = vmand %vm1504, %vm1536
        %vm1569 = vmand %vm1505, %vm1537
        %vm1570 = vmand %vm1506, %vm1538
        %vm1571 = vmand %vm1507, %vm1539
        %vm1572 = vmand %vm1508, %vm1540
        %vm1573 = vmand %vm1509, %vm1541
        %vm1574 = vmand %vm1510, %vm1542
        %vm1575 = vmand %vm1511, %vm1543
        %vm1576 = vmand %vm1512, %vm1544
        %vm1577 = vmand %vm1513, %vm1545
        %vm1578 = vmand %vm1514, %vm1546
        %vm1579 = vmand %vm1515, %vm1547
        %vm1580 = vmand %vm1516, %vm1548
        %vm1581 = vmand %vm1517, %vm1549
        %vm1582 = vmand %vm1518, %vm1550
        %vm1583 = vmand %vm1519, %vm1551
        %v1584 = vsel %vm1552, 1, 0
        %v1585 = vsel %vm1553, 1, 0
        %v1586 = vsel %vm1554, 1, 0
        %v1587 = vsel %vm1555, 1, 0
        %v1588 = vsel %vm1556, 1, 0
        %v1589 = vsel %vm1557, 1, 0
        %v1590 = vsel %vm1558, 1, 0
        %v1591 = vsel %vm1559, 1, 0
        %v1592 = vsel %vm1560, 1, 0
        %v1593 = vsel %vm1561, 1, 0
        %v1594 = vsel %vm1562, 1, 0
        %v1595 = vsel %vm1563, 1, 0
        %v1596 = vsel %vm1564, 1, 0
        %v1597 = vsel %vm1565, 1, 0
        %v1598 = vsel %vm1566, 1, 0
        %v1599 = vsel %vm1567, 1, 0
        %v1600 = vsel %vm1568, 1, 0
        %v1601 = vsel %vm1569, 1, 0
        %v1602 = vsel %vm1570, 1, 0
        %v1603 = vsel %vm1571, 1, 0
        %v1604 = vsel %vm1572, 1, 0
        %v1605 = vsel %vm1573, 1, 0
        %v1606 = vsel %vm1574, 1, 0
        %v1607 = vsel %vm1575, 1, 0
        %v1608 = vsel %vm1576, 1, 0
        %v1609 = vsel %vm1577, 1, 0
        %v1610 = vsel %vm1578, 1, 0
        %v1611 = vsel %vm1579, 1, 0
        %v1612 = vsel %vm1580, 1, 0
        %v1613 = vsel %vm1581, 1, 0
        %v1614 = vsel %vm1582, 1, 0
        %v1615 = vsel %vm1583, 1, 0
        %vm1616 = vcmp.eq.s32.totalorder %v1584, 1
        %vm1617 = vcmp.eq.s32.totalorder %v1585, 1
        %vm1618 = vcmp.eq.s32.totalorder %v1586, 1
        %vm1619 = vcmp.eq.s32.totalorder %v1587, 1
        %vm1620 = vcmp.eq.s32.totalorder %v1588, 1
        %vm1621 = vcmp.eq.s32.totalorder %v1589, 1
        %vm1622 = vcmp.eq.s32.totalorder %v1590, 1
        %vm1623 = vcmp.eq.s32.totalorder %v1591, 1
        %vm1624 = vcmp.eq.s32.totalorder %v1592, 1
        %vm1625 = vcmp.eq.s32.totalorder %v1593, 1
        %vm1626 = vcmp.eq.s32.totalorder %v1594, 1
        %vm1627 = vcmp.eq.s32.totalorder %v1595, 1
        %vm1628 = vcmp.eq.s32.totalorder %v1596, 1
        %vm1629 = vcmp.eq.s32.totalorder %v1597, 1
        %vm1630 = vcmp.eq.s32.totalorder %v1598, 1
        %vm1631 = vcmp.eq.s32.totalorder %v1599, 1
        %vm1632 = vcmp.eq.s32.totalorder %v1600, 1
        %vm1633 = vcmp.eq.s32.totalorder %v1601, 1
        %vm1634 = vcmp.eq.s32.totalorder %v1602, 1
        %vm1635 = vcmp.eq.s32.totalorder %v1603, 1
        %vm1636 = vcmp.eq.s32.totalorder %v1604, 1
        %vm1637 = vcmp.eq.s32.totalorder %v1605, 1
        %vm1638 = vcmp.eq.s32.totalorder %v1606, 1
        %vm1639 = vcmp.eq.s32.totalorder %v1607, 1
        %vm1640 = vcmp.eq.s32.totalorder %v1608, 1
        %vm1641 = vcmp.eq.s32.totalorder %v1609, 1
        %vm1642 = vcmp.eq.s32.totalorder %v1610, 1
        %vm1643 = vcmp.eq.s32.totalorder %v1611, 1
        %vm1644 = vcmp.eq.s32.totalorder %v1612, 1
        %vm1645 = vcmp.eq.s32.totalorder %v1613, 1
        %vm1646 = vcmp.eq.s32.totalorder %v1614, 1
        %vm1647 = vcmp.eq.s32.totalorder %v1615, 1
        %v1648 = vsel %vm1616, %v1424, 0.0
        %v1649 = vsel %vm1617, %v1425, 0.0
        %v1650 = vsel %vm1618, %v1426, 0.0
        %v1651 = vsel %vm1619, %v1427, 0.0
        %v1652 = vsel %vm1620, %v1428, 0.0
        %v1653 = vsel %vm1621, %v1429, 0.0
        %v1654 = vsel %vm1622, %v1430, 0.0
        %v1655 = vsel %vm1623, %v1431, 0.0
        %v1656 = vsel %vm1624, %v1432, 0.0
        %v1657 = vsel %vm1625, %v1433, 0.0
        %v1658 = vsel %vm1626, %v1434, 0.0
        %v1659 = vsel %vm1627, %v1435, 0.0
        %v1660 = vsel %vm1628, %v1436, 0.0
        %v1661 = vsel %vm1629, %v1437, 0.0
        %v1662 = vsel %vm1630, %v1438, 0.0
        %v1663 = vsel %vm1631, %v1439, 0.0
        %v1664 = vsel %vm1632, %v1440, 0.0
        %v1665 = vsel %vm1633, %v1441, 0.0
        %v1666 = vsel %vm1634, %v1442, 0.0
        %v1667 = vsel %vm1635, %v1443, 0.0
        %v1668 = vsel %vm1636, %v1444, 0.0
        %v1669 = vsel %vm1637, %v1445, 0.0
        %v1670 = vsel %vm1638, %v1446, 0.0
        %v1671 = vsel %vm1639, %v1447, 0.0
        %v1672 = vsel %vm1640, %v1448, 0.0
        %v1673 = vsel %vm1641, %v1449, 0.0
        %v1674 = vsel %vm1642, %v1450, 0.0
        %v1675 = vsel %vm1643, %v1451, 0.0
        %v1676 = vsel %vm1644, %v1452, 0.0
        %v1677 = vsel %vm1645, %v1453, 0.0
        %v1678 = vsel %vm1646, %v1454, 0.0
        %v1679 = vsel %vm1647, %v1455, 0.0
        %v1680 = vpack.c.bf16 %v1649, %v1648
        %v1681 = vpack.c.bf16 %v1651, %v1650
        %v1682 = vpack.c.bf16 %v1653, %v1652
        %v1683 = vpack.c.bf16 %v1655, %v1654
        %v1684 = vpack.c.bf16 %v1657, %v1656
        %v1685 = vpack.c.bf16 %v1659, %v1658
        %v1686 = vpack.c.bf16 %v1661, %v1660
        %v1687 = vpack.c.bf16 %v1663, %v1662
        %v1688 = vpack.c.bf16 %v1665, %v1664
        %v1689 = vpack.c.bf16 %v1667, %v1666
        %v1690 = vpack.c.bf16 %v1669, %v1668
        %v1691 = vpack.c.bf16 %v1671, %v1670
        %v1692 = vpack.c.bf16 %v1673, %v1672
        %v1693 = vpack.c.bf16 %v1675, %v1674
        %v1694 = vpack.c.bf16 %v1677, %v1676
        %v1695 = vpack.c.bf16 %v1679, %v1678
        %v1696 = vld [vmem:[%s4] sm:$0xf]
        %v1697 = vld [vmem:[%s4 + $0x4] sm:$0xf]
        %v1698 = vld [vmem:[#allocation2 + $0x8] sm:$0xff]
        %v1699 = vld [vmem:[#allocation2 + $0x10] sm:$0xff]
        %v1700 = vld [vmem:[#allocation2 + $0x18] sm:$0xff]
        %v1701 = vld [vmem:[#allocation2 + $0x20] sm:$0xff]
        %v1702 = vld [vmem:[#allocation2 + $0x28] sm:$0xff]
        %v1703 = vld [vmem:[#allocation2 + $0x30] sm:$0xff]
        %v1704 = vld [vmem:[#allocation2 + $0x38] sm:$0xff]
        %v1705 = vld [vmem:[#allocation2 + $0x40] sm:$0xff]
        %v1706 = vld [vmem:[#allocation2 + $0x48] sm:$0xff]
        %v1707 = vld [vmem:[#allocation2 + $0x50] sm:$0xff]
        %v1708 = vld [vmem:[#allocation2 + $0x58] sm:$0xff]
        %v1709 = vld [vmem:[#allocation2 + $0x60] sm:$0xff]
        %v1710 = vld [vmem:[#allocation2 + $0x68] sm:$0xff]
        %v1711 = vld [vmem:[#allocation2 + $0x70] sm:$0xff]
        %v1712 = vld [vmem:[#allocation2 + $0x78] sm:$0xff]
        %v1713 = vld [vmem:[#allocation2 + $0x80] sm:$0xff]
        %v1714 = vld [vmem:[#allocation2 + $0x88] sm:$0xff]
        %v1715 = vld [vmem:[#allocation2 + $0x90] sm:$0xff]
        %v1716 = vld [vmem:[#allocation2 + $0x98] sm:$0xff]
        %v1717 = vld [vmem:[#allocation2 + $0xa0] sm:$0xff]
        %v1718 = vld [vmem:[#allocation2 + $0xa8] sm:$0xff]
        %v1719 = vld [vmem:[#allocation2 + $0xb0] sm:$0xff]
        %v1720 = vld [vmem:[#allocation2 + $0xb8] sm:$0xff]
        %v1721 = vld [vmem:[#allocation2 + $0xc0] sm:$0xff]
        %v1722 = vld [vmem:[#allocation2 + $0xc8] sm:$0xff]
        %v1723 = vld [vmem:[#allocation2 + $0xd0] sm:$0xff]
        %v1724 = vld [vmem:[#allocation2 + $0xd8] sm:$0xff]
        %v1725 = vld [vmem:[#allocation2 + $0xe0] sm:$0xff]
        %v1726 = vld [vmem:[#allocation2 + $0xe8] sm:$0xff]
        %v1727 = vld [vmem:[#allocation2 + $0xf0] sm:$0xff]
        %v1728 = vld [vmem:[#allocation2 + $0xf8] sm:$0xff]
        %v1729 = vld [vmem:[#allocation2 + $0x100] sm:$0xff]
        %v1730 = vpack.c.bf16 %v1699, %v1698
        %v1731 = vpack.c.bf16 %v1701, %v1700
        %v1732 = vpack.c.bf16 %v1703, %v1702
        %v1733 = vpack.c.bf16 %v1705, %v1704
        %v1734 = vpack.c.bf16 %v1707, %v1706
        %v1735 = vpack.c.bf16 %v1709, %v1708
        %v1736 = vpack.c.bf16 %v1711, %v1710
        %v1737 = vpack.c.bf16 %v1713, %v1712
        %v1738 = vpack.c.bf16 %v1715, %v1714
        %v1739 = vpack.c.bf16 %v1717, %v1716
        %v1740 = vpack.c.bf16 %v1719, %v1718
        %v1741 = vpack.c.bf16 %v1721, %v1720
        %v1742 = vpack.c.bf16 %v1723, %v1722
        %v1743 = vpack.c.bf16 %v1725, %v1724
        %v1744 = vpack.c.bf16 %v1727, %v1726
        %v1745 = vpack.c.bf16 %v1729, %v1728
        %s1746 = scalar_lea.vmem %s4, 8
        %v1747 = vld [vmem:[%s1746] sm:$0xf]
        %v1748 = vld [vmem:[%s1746 + $0x4] sm:$0xf]
        %v1751 = vunpack.c.l.b16 %v1747
        %v1752 = vunpack.c.l.b16 %v1748
        %v1753 = vpack.c.b16 %v1752, %v1751
        %v1756 = vsel %vm1385, %v1730, 0
        %v1759 = vsel %vm1385, %v1731, 0
        %v1762 = vsel %vm1385, %v1732, 0
        %v1765 = vsel %vm1385, %v1733, 0
        %v1768 = vsel %vm1385, %v1734, 0
        %v1771 = vsel %vm1385, %v1735, 0
        %v1774 = vsel %vm1385, %v1736, 0
        %v1777 = vsel %vm1385, %v1737, 0
        %v1780 = vsel %vm1385, %v1738, 0
        %v1783 = vsel %vm1385, %v1739, 0
        %v1786 = vsel %vm1385, %v1740, 0
        %v1789 = vsel %vm1385, %v1741, 0
        %v1792 = vsel %vm1385, %v1742, 0
        %v1795 = vsel %vm1385, %v1743, 0
        %v1798 = vsel %vm1385, %v1744, 0
        %v1801 = vsel %vm1385, %v1745, 0
        %1803 = vmatprep.subr.bf16.mxu0 0
        %1804 = vmatpush1.bf16.msra.mxu0 0
        %1805 = vmatprep.subr.bf16.mxu0 0
        %1806 = vmatpush1.bf16.msra.mxu0 0
        %1807 = vmatprep.subr.bf16.mxu0 0
        %1808 = vmatpush1.bf16.msra.mxu0 0
        %1809 = vmatprep.subr.bf16.mxu0 0
        %1810 = vmatpush1.bf16.msra.mxu0 0
        %1811 = vmatprep.subr.bf16.mxu0 0
        %1812 = vmatpush1.bf16.msra.mxu0 0
        %1813 = vmatprep.subr.bf16.mxu0 0
        %1814 = vmatpush1.bf16.msra.mxu0 0
        %1815 = vmatprep.subr.bf16.mxu0 0
        %1816 = vmatpush1.bf16.msra.mxu0 0
        %1817 = vmatprep.subr.bf16.mxu0 0
        %1818 = vmatpush1.bf16.msra.mxu0 %v1753
        %1819 = vmatprep.subr.bf16.mxu0 0
        %1820 = vmatpush2.bf16.msra.mxu0 0
        %1821 = vmatprep.subr.bf16.mxu0 0
        %1822 = vmatpush2.bf16.msra.mxu0 0
        %1823 = vmatprep.subr.bf16.mxu0 0
        %1824 = vmatpush2.bf16.msra.mxu0 0
        %1825 = vmatprep.subr.bf16.mxu0 0
        %1826 = vmatpush2.bf16.msra.mxu0 0
        %1827 = vmatprep.subr.bf16.mxu0 0
        %1828 = vmatpush2.bf16.msra.mxu0 0
        %1829 = vmatprep.subr.bf16.mxu0 0
        %1830 = vmatpush2.bf16.msra.mxu0 0
        %1831 = vmatprep.subr.bf16.mxu0 0
        %1832 = vmatpush2.bf16.msra.mxu0 0
        %1833 = vmatprep.subr.bf16.mxu0 0
        %1834 = vmatpush2.bf16.msra.mxu0 0
        %1835 = vmatprep.mubr.bf16.mxu0 0
        %1836 = vmatmul.mubr.bf16.gmra.mxu0 %v1756
        %v1837 = vpop.f32.mrf.mxu0
        %v1838 = vadd.f32 0.0, %v1837
        %v1839 = vpop.f32.mrf.mxu0
        %v1840 = vpop.f32.mrf.mxu0
        %v1841 = vadd.f32 0.0, %v1840
        %v1842 = vpop.f32.mrf.mxu0
        %1843 = vmatprep.mubr.bf16.mxu0 0
        %1844 = vmatmul.mubr.bf16.gmra.mxu0 %v1759
        %v1845 = vpop.f32.mrf.mxu0
        %v1846 = vadd.f32 0.0, %v1845
        %v1847 = vpop.f32.mrf.mxu0
        %v1848 = vpop.f32.mrf.mxu0
        %v1849 = vadd.f32 0.0, %v1848
        %v1850 = vpop.f32.mrf.mxu0
        %1851 = vmatprep.mubr.bf16.mxu0 0
        %1852 = vmatmul.mubr.bf16.gmra.mxu0 %v1762
        %v1853 = vpop.f32.mrf.mxu0
        %v1854 = vadd.f32 0.0, %v1853
        %v1855 = vpop.f32.mrf.mxu0
        %v1856 = vpop.f32.mrf.mxu0
        %v1857 = vadd.f32 0.0, %v1856
        %v1858 = vpop.f32.mrf.mxu0
        %1859 = vmatprep.mubr.bf16.mxu0 0
        %1860 = vmatmul.mubr.bf16.gmra.mxu0 %v1765
        %v1861 = vpop.f32.mrf.mxu0
        %v1862 = vadd.f32 0.0, %v1861
        %v1863 = vpop.f32.mrf.mxu0
        %v1864 = vpop.f32.mrf.mxu0
        %v1865 = vadd.f32 0.0, %v1864
        %v1866 = vpop.f32.mrf.mxu0
        %1867 = vmatprep.mubr.bf16.mxu0 0
        %1868 = vmatmul.mubr.bf16.gmra.mxu0 %v1768
        %v1869 = vpop.f32.mrf.mxu0
        %v1870 = vadd.f32 0.0, %v1869
        %v1871 = vpop.f32.mrf.mxu0
        %v1872 = vpop.f32.mrf.mxu0
        %v1873 = vadd.f32 0.0, %v1872
        %v1874 = vpop.f32.mrf.mxu0
        %1875 = vmatprep.mubr.bf16.mxu0 0
        %1876 = vmatmul.mubr.bf16.gmra.mxu0 %v1771
        %v1877 = vpop.f32.mrf.mxu0
        %v1878 = vadd.f32 0.0, %v1877
        %v1879 = vpop.f32.mrf.mxu0
        %v1880 = vpop.f32.mrf.mxu0
        %v1881 = vadd.f32 0.0, %v1880
        %v1882 = vpop.f32.mrf.mxu0
        %1883 = vmatprep.mubr.bf16.mxu0 0
        %1884 = vmatmul.mubr.bf16.gmra.mxu0 %v1774
        %v1885 = vpop.f32.mrf.mxu0
        %v1886 = vadd.f32 0.0, %v1885
        %v1887 = vpop.f32.mrf.mxu0
        %v1888 = vpop.f32.mrf.mxu0
        %v1889 = vadd.f32 0.0, %v1888
        %v1890 = vpop.f32.mrf.mxu0
        %1891 = vmatprep.mubr.bf16.mxu0 0
        %1892 = vmatmul.mubr.bf16.gmra.mxu0 %v1777
        %v1893 = vpop.f32.mrf.mxu0
        %v1894 = vadd.f32 0.0, %v1893
        %v1895 = vpop.f32.mrf.mxu0
        %v1896 = vpop.f32.mrf.mxu0
        %v1897 = vadd.f32 0.0, %v1896
        %v1898 = vpop.f32.mrf.mxu0
        %1899 = vmatprep.mubr.bf16.mxu0 0
        %1900 = vmatmul.mubr.bf16.gmra.mxu0 %v1780
        %v1901 = vpop.f32.mrf.mxu0
        %v1902 = vadd.f32 0.0, %v1901
        %v1903 = vpop.f32.mrf.mxu0
        %v1904 = vpop.f32.mrf.mxu0
        %v1905 = vadd.f32 0.0, %v1904
        %v1906 = vpop.f32.mrf.mxu0
        %1907 = vmatprep.mubr.bf16.mxu0 0
        %1908 = vmatmul.mubr.bf16.gmra.mxu0 %v1783
        %v1909 = vpop.f32.mrf.mxu0
        %v1910 = vadd.f32 0.0, %v1909
        %v1911 = vpop.f32.mrf.mxu0
        %v1912 = vpop.f32.mrf.mxu0
        %v1913 = vadd.f32 0.0, %v1912
        %v1914 = vpop.f32.mrf.mxu0
        %1915 = vmatprep.mubr.bf16.mxu0 0
        %1916 = vmatmul.mubr.bf16.gmra.mxu0 %v1786
        %v1917 = vpop.f32.mrf.mxu0
        %v1918 = vadd.f32 0.0, %v1917
        %v1919 = vpop.f32.mrf.mxu0
        %v1920 = vpop.f32.mrf.mxu0
        %v1921 = vadd.f32 0.0, %v1920
        %v1922 = vpop.f32.mrf.mxu0
        %1923 = vmatprep.mubr.bf16.mxu0 0
        %1924 = vmatmul.mubr.bf16.gmra.mxu0 %v1789
        %v1925 = vpop.f32.mrf.mxu0
        %v1926 = vadd.f32 0.0, %v1925
        %v1927 = vpop.f32.mrf.mxu0
        %v1928 = vpop.f32.mrf.mxu0
        %v1929 = vadd.f32 0.0, %v1928
        %v1930 = vpop.f32.mrf.mxu0
        %1931 = vmatprep.mubr.bf16.mxu0 0
        %1932 = vmatmul.mubr.bf16.gmra.mxu0 %v1792
        %v1933 = vpop.f32.mrf.mxu0
        %v1934 = vadd.f32 0.0, %v1933
        %v1935 = vpop.f32.mrf.mxu0
        %v1936 = vpop.f32.mrf.mxu0
        %v1937 = vadd.f32 0.0, %v1936
        %v1938 = vpop.f32.mrf.mxu0
        %1939 = vmatprep.mubr.bf16.mxu0 0
        %1940 = vmatmul.mubr.bf16.gmra.mxu0 %v1795
        %v1941 = vpop.f32.mrf.mxu0
        %v1942 = vadd.f32 0.0, %v1941
        %v1943 = vpop.f32.mrf.mxu0
        %v1944 = vpop.f32.mrf.mxu0
        %v1945 = vadd.f32 0.0, %v1944
        %v1946 = vpop.f32.mrf.mxu0
        %1947 = vmatprep.mubr.bf16.mxu0 0
        %1948 = vmatmul.mubr.bf16.gmra.mxu0 %v1798
        %v1949 = vpop.f32.mrf.mxu0
        %v1950 = vadd.f32 0.0, %v1949
        %v1951 = vpop.f32.mrf.mxu0
        %v1952 = vpop.f32.mrf.mxu0
        %v1953 = vadd.f32 0.0, %v1952
        %v1954 = vpop.f32.mrf.mxu0
        %1955 = vmatprep.mubr.bf16.mxu0 0
        %1956 = vmatmul.mubr.bf16.gmra.mxu0 %v1801
        %v1957 = vpop.f32.mrf.mxu0
        %v1958 = vadd.f32 0.0, %v1957
        %v1959 = vpop.f32.mrf.mxu0
        %v1960 = vpop.f32.mrf.mxu0
        %v1961 = vadd.f32 0.0, %v1960
        %v1962 = vpop.f32.mrf.mxu0
        %1963 = vdwg.mxu0
        %v1966 = vunpack.c.l.b16 %v1696
        %v1967 = vunpack.c.l.b16 %v1697
        %v1968 = vpack.c.b16 %v1967, %v1966
        %v1971 = vsel %vm1385, %v1680, 0
        %v1974 = vsel %vm1385, %v1681, 0
        %v1977 = vsel %vm1385, %v1682, 0
        %v1980 = vsel %vm1385, %v1683, 0
        %v1983 = vsel %vm1385, %v1684, 0
        %v1986 = vsel %vm1385, %v1685, 0
        %v1989 = vsel %vm1385, %v1686, 0
        %v1992 = vsel %vm1385, %v1687, 0
        %v1995 = vsel %vm1385, %v1688, 0
        %v1998 = vsel %vm1385, %v1689, 0
        %v2001 = vsel %vm1385, %v1690, 0
        %v2004 = vsel %vm1385, %v1691, 0
        %v2007 = vsel %vm1385, %v1692, 0
        %v2010 = vsel %vm1385, %v1693, 0
        %v2013 = vsel %vm1385, %v1694, 0
        %v2016 = vsel %vm1385, %v1695, 0
        %2018 = vmatprep.subr.bf16.mxu0 0
        %2019 = vmatpush1.bf16.msra.mxu0 0
        %2020 = vmatprep.subr.bf16.mxu0 0
        %2021 = vmatpush1.bf16.msra.mxu0 0
        %2022 = vmatprep.subr.bf16.mxu0 0
        %2023 = vmatpush1.bf16.msra.mxu0 0
        %2024 = vmatprep.subr.bf16.mxu0 0
        %2025 = vmatpush1.bf16.msra.mxu0 0
        %2026 = vmatprep.subr.bf16.mxu0 0
        %2027 = vmatpush1.bf16.msra.mxu0 0
        %2028 = vmatprep.subr.bf16.mxu0 0
        %2029 = vmatpush1.bf16.msra.mxu0 0
        %2030 = vmatprep.subr.bf16.mxu0 0
        %2031 = vmatpush1.bf16.msra.mxu0 0
        %2032 = vmatprep.subr.bf16.mxu0 0
        %2033 = vmatpush1.bf16.msra.mxu0 %v1968
        %2034 = vmatprep.subr.bf16.mxu0 0
        %2035 = vmatpush2.bf16.msra.mxu0 0
        %2036 = vmatprep.subr.bf16.mxu0 0
        %2037 = vmatpush2.bf16.msra.mxu0 0
        %2038 = vmatprep.subr.bf16.mxu0 0
        %2039 = vmatpush2.bf16.msra.mxu0 0
        %2040 = vmatprep.subr.bf16.mxu0 0
        %2041 = vmatpush2.bf16.msra.mxu0 0
        %2042 = vmatprep.subr.bf16.mxu0 0
        %2043 = vmatpush2.bf16.msra.mxu0 0
        %2044 = vmatprep.subr.bf16.mxu0 0
        %2045 = vmatpush2.bf16.msra.mxu0 0
        %2046 = vmatprep.subr.bf16.mxu0 0
        %2047 = vmatpush2.bf16.msra.mxu0 0
        %2048 = vmatprep.subr.bf16.mxu0 0
        %2049 = vmatpush2.bf16.msra.mxu0 0
        %2050 = vmatprep.mubr.bf16.mxu0 0
        %2051 = vmatmul.mubr.bf16.gmra.mxu0 %v1971
        %v2052 = vpop.f32.mrf.mxu0
        %v2053 = vadd.f32 %v1838, %v2052
        %v2054 = vpop.f32.mrf.mxu0
        %v2055 = vpop.f32.mrf.mxu0
        %v2056 = vadd.f32 %v1841, %v2055
        %v2057 = vpop.f32.mrf.mxu0
        %2058 = vmatprep.mubr.bf16.mxu0 0
        %2059 = vmatmul.mubr.bf16.gmra.mxu0 %v1974
        %v2060 = vpop.f32.mrf.mxu0
        %v2061 = vadd.f32 %v1846, %v2060
        %v2062 = vpop.f32.mrf.mxu0
        %v2063 = vpop.f32.mrf.mxu0
        %v2064 = vadd.f32 %v1849, %v2063
        %v2065 = vpop.f32.mrf.mxu0
        %2066 = vmatprep.mubr.bf16.mxu0 0
        %2067 = vmatmul.mubr.bf16.gmra.mxu0 %v1977
        %v2068 = vpop.f32.mrf.mxu0
        %v2069 = vadd.f32 %v1854, %v2068
        %v2070 = vpop.f32.mrf.mxu0
        %v2071 = vpop.f32.mrf.mxu0
        %v2072 = vadd.f32 %v1857, %v2071
        %v2073 = vpop.f32.mrf.mxu0
        %2074 = vmatprep.mubr.bf16.mxu0 0
        %2075 = vmatmul.mubr.bf16.gmra.mxu0 %v1980
        %v2076 = vpop.f32.mrf.mxu0
        %v2077 = vadd.f32 %v1862, %v2076
        %v2078 = vpop.f32.mrf.mxu0
        %v2079 = vpop.f32.mrf.mxu0
        %v2080 = vadd.f32 %v1865, %v2079
        %v2081 = vpop.f32.mrf.mxu0
        %2082 = vmatprep.mubr.bf16.mxu0 0
        %2083 = vmatmul.mubr.bf16.gmra.mxu0 %v1983
        %v2084 = vpop.f32.mrf.mxu0
        %v2085 = vadd.f32 %v1870, %v2084
        %v2086 = vpop.f32.mrf.mxu0
        %v2087 = vpop.f32.mrf.mxu0
        %v2088 = vadd.f32 %v1873, %v2087
        %v2089 = vpop.f32.mrf.mxu0
        %2090 = vmatprep.mubr.bf16.mxu0 0
        %2091 = vmatmul.mubr.bf16.gmra.mxu0 %v1986
        %v2092 = vpop.f32.mrf.mxu0
        %v2093 = vadd.f32 %v1878, %v2092
        %v2094 = vpop.f32.mrf.mxu0
        %v2095 = vpop.f32.mrf.mxu0
        %v2096 = vadd.f32 %v1881, %v2095
        %v2097 = vpop.f32.mrf.mxu0
        %2098 = vmatprep.mubr.bf16.mxu0 0
        %2099 = vmatmul.mubr.bf16.gmra.mxu0 %v1989
        %v2100 = vpop.f32.mrf.mxu0
        %v2101 = vadd.f32 %v1886, %v2100
        %v2102 = vpop.f32.mrf.mxu0
        %v2103 = vpop.f32.mrf.mxu0
        %v2104 = vadd.f32 %v1889, %v2103
        %v2105 = vpop.f32.mrf.mxu0
        %2106 = vmatprep.mubr.bf16.mxu0 0
        %2107 = vmatmul.mubr.bf16.gmra.mxu0 %v1992
        %v2108 = vpop.f32.mrf.mxu0
        %v2109 = vadd.f32 %v1894, %v2108
        %v2110 = vpop.f32.mrf.mxu0
        %v2111 = vpop.f32.mrf.mxu0
        %v2112 = vadd.f32 %v1897, %v2111
        %v2113 = vpop.f32.mrf.mxu0
        %2114 = vmatprep.mubr.bf16.mxu0 0
        %2115 = vmatmul.mubr.bf16.gmra.mxu0 %v1995
        %v2116 = vpop.f32.mrf.mxu0
        %v2117 = vadd.f32 %v1902, %v2116
        %v2118 = vpop.f32.mrf.mxu0
        %v2119 = vpop.f32.mrf.mxu0
        %v2120 = vadd.f32 %v1905, %v2119
        %v2121 = vpop.f32.mrf.mxu0
        %2122 = vmatprep.mubr.bf16.mxu0 0
        %2123 = vmatmul.mubr.bf16.gmra.mxu0 %v1998
        %v2124 = vpop.f32.mrf.mxu0
        %v2125 = vadd.f32 %v1910, %v2124
        %v2126 = vpop.f32.mrf.mxu0
        %v2127 = vpop.f32.mrf.mxu0
        %v2128 = vadd.f32 %v1913, %v2127
        %v2129 = vpop.f32.mrf.mxu0
        %2130 = vmatprep.mubr.bf16.mxu0 0
        %2131 = vmatmul.mubr.bf16.gmra.mxu0 %v2001
        %v2132 = vpop.f32.mrf.mxu0
        %v2133 = vadd.f32 %v1918, %v2132
        %v2134 = vpop.f32.mrf.mxu0
        %v2135 = vpop.f32.mrf.mxu0
        %v2136 = vadd.f32 %v1921, %v2135
        %v2137 = vpop.f32.mrf.mxu0
        %2138 = vmatprep.mubr.bf16.mxu0 0
        %2139 = vmatmul.mubr.bf16.gmra.mxu0 %v2004
        %v2140 = vpop.f32.mrf.mxu0
        %v2141 = vadd.f32 %v1926, %v2140
        %v2142 = vpop.f32.mrf.mxu0
        %v2143 = vpop.f32.mrf.mxu0
        %v2144 = vadd.f32 %v1929, %v2143
        %v2145 = vpop.f32.mrf.mxu0
        %2146 = vmatprep.mubr.bf16.mxu0 0
        %2147 = vmatmul.mubr.bf16.gmra.mxu0 %v2007
        %v2148 = vpop.f32.mrf.mxu0
        %v2149 = vadd.f32 %v1934, %v2148
        %v2150 = vpop.f32.mrf.mxu0
        %v2151 = vpop.f32.mrf.mxu0
        %v2152 = vadd.f32 %v1937, %v2151
        %v2153 = vpop.f32.mrf.mxu0
        %2154 = vmatprep.mubr.bf16.mxu0 0
        %2155 = vmatmul.mubr.bf16.gmra.mxu0 %v2010
        %v2156 = vpop.f32.mrf.mxu0
        %v2157 = vadd.f32 %v1942, %v2156
        %v2158 = vpop.f32.mrf.mxu0
        %v2159 = vpop.f32.mrf.mxu0
        %v2160 = vadd.f32 %v1945, %v2159
        %v2161 = vpop.f32.mrf.mxu0
        %2162 = vmatprep.mubr.bf16.mxu0 0
        %2163 = vmatmul.mubr.bf16.gmra.mxu0 %v2013
        %v2164 = vpop.f32.mrf.mxu0
        %v2165 = vadd.f32 %v1950, %v2164
        %v2166 = vpop.f32.mrf.mxu0
        %v2167 = vpop.f32.mrf.mxu0
        %v2168 = vadd.f32 %v1953, %v2167
        %v2169 = vpop.f32.mrf.mxu0
        %2170 = vmatprep.mubr.bf16.mxu0 0
        %2171 = vmatmul.mubr.bf16.gmra.mxu0 %v2016
        %v2172 = vpop.f32.mrf.mxu0
        %v2173 = vadd.f32 %v1958, %v2172
        %v2174 = vpop.f32.mrf.mxu0
        %v2175 = vpop.f32.mrf.mxu0
        %v2176 = vadd.f32 %v1961, %v2175
        %v2177 = vpop.f32.mrf.mxu0
        %2178 = vdwg.mxu0
        %v2179 = vld [vmem:[#allocation2 + $0x9] sm:$0xff]
        %v2180 = vld [vmem:[#allocation2 + $0x11] sm:$0xff]
        %v2181 = vld [vmem:[#allocation2 + $0x19] sm:$0xff]
        %v2182 = vld [vmem:[#allocation2 + $0x21] sm:$0xff]
        %v2183 = vld [vmem:[#allocation2 + $0x29] sm:$0xff]
        %v2184 = vld [vmem:[#allocation2 + $0x31] sm:$0xff]
        %v2185 = vld [vmem:[#allocation2 + $0x39] sm:$0xff]
        %v2186 = vld [vmem:[#allocation2 + $0x41] sm:$0xff]
        %v2187 = vld [vmem:[#allocation2 + $0x49] sm:$0xff]
        %v2188 = vld [vmem:[#allocation2 + $0x51] sm:$0xff]
        %v2189 = vld [vmem:[#allocation2 + $0x59] sm:$0xff]
        %v2190 = vld [vmem:[#allocation2 + $0x61] sm:$0xff]
        %v2191 = vld [vmem:[#allocation2 + $0x69] sm:$0xff]
        %v2192 = vld [vmem:[#allocation2 + $0x71] sm:$0xff]
        %v2193 = vld [vmem:[#allocation2 + $0x79] sm:$0xff]
        %v2194 = vld [vmem:[#allocation2 + $0x81] sm:$0xff]
        %v2195 = vld [vmem:[#allocation2 + $0x89] sm:$0xff]
        %v2196 = vld [vmem:[#allocation2 + $0x91] sm:$0xff]
        %v2197 = vld [vmem:[#allocation2 + $0x99] sm:$0xff]
        %v2198 = vld [vmem:[#allocation2 + $0xa1] sm:$0xff]
        %v2199 = vld [vmem:[#allocation2 + $0xa9] sm:$0xff]
        %v2200 = vld [vmem:[#allocation2 + $0xb1] sm:$0xff]
        %v2201 = vld [vmem:[#allocation2 + $0xb9] sm:$0xff]
        %v2202 = vld [vmem:[#allocation2 + $0xc1] sm:$0xff]
        %v2203 = vld [vmem:[#allocation2 + $0xc9] sm:$0xff]
        %v2204 = vld [vmem:[#allocation2 + $0xd1] sm:$0xff]
        %v2205 = vld [vmem:[#allocation2 + $0xd9] sm:$0xff]
        %v2206 = vld [vmem:[#allocation2 + $0xe1] sm:$0xff]
        %v2207 = vld [vmem:[#allocation2 + $0xe9] sm:$0xff]
        %v2208 = vld [vmem:[#allocation2 + $0xf1] sm:$0xff]
        %v2209 = vld [vmem:[#allocation2 + $0xf9] sm:$0xff]
        %v2210 = vld [vmem:[#allocation2 + $0x101] sm:$0xff]
        %v2211 = vadd.s32 %v1353, 1
        %v2212 = vadd.s32 %v1354, 1
        %v2213 = vadd.s32 %v1355, 1
        %v2214 = vadd.s32 %v1356, 1
        %v2215 = vadd.s32 %v1357, 1
        %v2216 = vadd.s32 %v1358, 1
        %v2217 = vadd.s32 %v1359, 1
        %v2218 = vadd.s32 %v1360, 1
        %v2219 = vadd.s32 %v1361, 1
        %v2220 = vadd.s32 %v1362, 1
        %v2221 = vadd.s32 %v1363, 1
        %v2222 = vadd.s32 %v1364, 1
        %v2223 = vadd.s32 %v1365, 1
        %v2224 = vadd.s32 %v1366, 1
        %v2225 = vadd.s32 %v1367, 1
        %v2226 = vadd.s32 %v1368, 1
        %v2227 = vadd.s32 %v1369, 1
        %v2228 = vadd.s32 %v1370, 1
        %v2229 = vadd.s32 %v1371, 1
        %v2230 = vadd.s32 %v1372, 1
        %v2231 = vadd.s32 %v1373, 1
        %v2232 = vadd.s32 %v1374, 1
        %v2233 = vadd.s32 %v1375, 1
        %v2234 = vadd.s32 %v1376, 1
        %v2235 = vadd.s32 %v1377, 1
        %v2236 = vadd.s32 %v1378, 1
        %v2237 = vadd.s32 %v1379, 1
        %v2238 = vadd.s32 %v1380, 1
        %v2239 = vadd.s32 %v1381, 1
        %v2240 = vadd.s32 %v1382, 1
        %v2241 = vadd.s32 %v1383, 1
        %v2242 = vadd.s32 %v1384, 1
        %vm2243 = vcmp.ge.s32.totalorder %v2211, 0
        %vm2244 = vcmp.ge.s32.totalorder %v2212, 0
        %vm2245 = vcmp.ge.s32.totalorder %v2213, 0
        %vm2246 = vcmp.ge.s32.totalorder %v2214, 0
        %vm2247 = vcmp.ge.s32.totalorder %v2215, 0
        %vm2248 = vcmp.ge.s32.totalorder %v2216, 0
        %vm2249 = vcmp.ge.s32.totalorder %v2217, 0
        %vm2250 = vcmp.ge.s32.totalorder %v2218, 0
        %vm2251 = vcmp.ge.s32.totalorder %v2219, 0
        %vm2252 = vcmp.ge.s32.totalorder %v2220, 0
        %vm2253 = vcmp.ge.s32.totalorder %v2221, 0
        %vm2254 = vcmp.ge.s32.totalorder %v2222, 0
        %vm2255 = vcmp.ge.s32.totalorder %v2223, 0
        %vm2256 = vcmp.ge.s32.totalorder %v2224, 0
        %vm2257 = vcmp.ge.s32.totalorder %v2225, 0
        %vm2258 = vcmp.ge.s32.totalorder %v2226, 0
        %vm2259 = vcmp.ge.s32.totalorder %v2227, 0
        %vm2260 = vcmp.ge.s32.totalorder %v2228, 0
        %vm2261 = vcmp.ge.s32.totalorder %v2229, 0
        %vm2262 = vcmp.ge.s32.totalorder %v2230, 0
        %vm2263 = vcmp.ge.s32.totalorder %v2231, 0
        %vm2264 = vcmp.ge.s32.totalorder %v2232, 0
        %vm2265 = vcmp.ge.s32.totalorder %v2233, 0
        %vm2266 = vcmp.ge.s32.totalorder %v2234, 0
        %vm2267 = vcmp.ge.s32.totalorder %v2235, 0
        %vm2268 = vcmp.ge.s32.totalorder %v2236, 0
        %vm2269 = vcmp.ge.s32.totalorder %v2237, 0
        %vm2270 = vcmp.ge.s32.totalorder %v2238, 0
        %vm2271 = vcmp.ge.s32.totalorder %v2239, 0
        %vm2272 = vcmp.ge.s32.totalorder %v2240, 0
        %vm2273 = vcmp.ge.s32.totalorder %v2241, 0
        %vm2274 = vcmp.ge.s32.totalorder %v2242, 0
        %vm2275 = vcmp.lt.s32.totalorder %v2211, 16
        %vm2276 = vcmp.lt.s32.totalorder %v2212, 16
        %vm2277 = vcmp.lt.s32.totalorder %v2213, 16
        %vm2278 = vcmp.lt.s32.totalorder %v2214, 16
        %vm2279 = vcmp.lt.s32.totalorder %v2215, 16
        %vm2280 = vcmp.lt.s32.totalorder %v2216, 16
        %vm2281 = vcmp.lt.s32.totalorder %v2217, 16
        %vm2282 = vcmp.lt.s32.totalorder %v2218, 16
        %vm2283 = vcmp.lt.s32.totalorder %v2219, 16
        %vm2284 = vcmp.lt.s32.totalorder %v2220, 16
        %vm2285 = vcmp.lt.s32.totalorder %v2221, 16
        %vm2286 = vcmp.lt.s32.totalorder %v2222, 16
        %vm2287 = vcmp.lt.s32.totalorder %v2223, 16
        %vm2288 = vcmp.lt.s32.totalorder %v2224, 16
        %vm2289 = vcmp.lt.s32.totalorder %v2225, 16
        %vm2290 = vcmp.lt.s32.totalorder %v2226, 16
        %vm2291 = vcmp.lt.s32.totalorder %v2227, 16
        %vm2292 = vcmp.lt.s32.totalorder %v2228, 16
        %vm2293 = vcmp.lt.s32.totalorder %v2229, 16
        %vm2294 = vcmp.lt.s32.totalorder %v2230, 16
        %vm2295 = vcmp.lt.s32.totalorder %v2231, 16
        %vm2296 = vcmp.lt.s32.totalorder %v2232, 16
        %vm2297 = vcmp.lt.s32.totalorder %v2233, 16
        %vm2298 = vcmp.lt.s32.totalorder %v2234, 16
        %vm2299 = vcmp.lt.s32.totalorder %v2235, 16
        %vm2300 = vcmp.lt.s32.totalorder %v2236, 16
        %vm2301 = vcmp.lt.s32.totalorder %v2237, 16
        %vm2302 = vcmp.lt.s32.totalorder %v2238, 16
        %vm2303 = vcmp.lt.s32.totalorder %v2239, 16
        %vm2304 = vcmp.lt.s32.totalorder %v2240, 16
        %vm2305 = vcmp.lt.s32.totalorder %v2241, 16
        %vm2306 = vcmp.lt.s32.totalorder %v2242, 16
        %vm2307 = vmand %vm2243, %vm2275
        %vm2308 = vmand %vm2244, %vm2276
        %vm2309 = vmand %vm2245, %vm2277
        %vm2310 = vmand %vm2246, %vm2278
        %vm2311 = vmand %vm2247, %vm2279
        %vm2312 = vmand %vm2248, %vm2280
        %vm2313 = vmand %vm2249, %vm2281
        %vm2314 = vmand %vm2250, %vm2282
        %vm2315 = vmand %vm2251, %vm2283
        %vm2316 = vmand %vm2252, %vm2284
        %vm2317 = vmand %vm2253, %vm2285
        %vm2318 = vmand %vm2254, %vm2286
        %vm2319 = vmand %vm2255, %vm2287
        %vm2320 = vmand %vm2256, %vm2288
        %vm2321 = vmand %vm2257, %vm2289
        %vm2322 = vmand %vm2258, %vm2290
        %vm2323 = vmand %vm2259, %vm2291
        %vm2324 = vmand %vm2260, %vm2292
        %vm2325 = vmand %vm2261, %vm2293
        %vm2326 = vmand %vm2262, %vm2294
        %vm2327 = vmand %vm2263, %vm2295
        %vm2328 = vmand %vm2264, %vm2296
        %vm2329 = vmand %vm2265, %vm2297
        %vm2330 = vmand %vm2266, %vm2298
        %vm2331 = vmand %vm2267, %vm2299
        %vm2332 = vmand %vm2268, %vm2300
        %vm2333 = vmand %vm2269, %vm2301
        %vm2334 = vmand %vm2270, %vm2302
        %vm2335 = vmand %vm2271, %vm2303
        %vm2336 = vmand %vm2272, %vm2304
        %vm2337 = vmand %vm2273, %vm2305
        %vm2338 = vmand %vm2274, %vm2306
        %v2339 = vsel %vm2307, 1, 0
        %v2340 = vsel %vm2308, 1, 0
        %v2341 = vsel %vm2309, 1, 0
        %v2342 = vsel %vm2310, 1, 0
        %v2343 = vsel %vm2311, 1, 0
        %v2344 = vsel %vm2312, 1, 0
        %v2345 = vsel %vm2313, 1, 0
        %v2346 = vsel %vm2314, 1, 0
        %v2347 = vsel %vm2315, 1, 0
        %v2348 = vsel %vm2316, 1, 0
        %v2349 = vsel %vm2317, 1, 0
        %v2350 = vsel %vm2318, 1, 0
        %v2351 = vsel %vm2319, 1, 0
        %v2352 = vsel %vm2320, 1, 0
        %v2353 = vsel %vm2321, 1, 0
        %v2354 = vsel %vm2322, 1, 0
        %v2355 = vsel %vm2323, 1, 0
        %v2356 = vsel %vm2324, 1, 0
        %v2357 = vsel %vm2325, 1, 0
        %v2358 = vsel %vm2326, 1, 0
        %v2359 = vsel %vm2327, 1, 0
        %v2360 = vsel %vm2328, 1, 0
        %v2361 = vsel %vm2329, 1, 0
        %v2362 = vsel %vm2330, 1, 0
        %v2363 = vsel %vm2331, 1, 0
        %v2364 = vsel %vm2332, 1, 0
        %v2365 = vsel %vm2333, 1, 0
        %v2366 = vsel %vm2334, 1, 0
        %v2367 = vsel %vm2335, 1, 0
        %v2368 = vsel %vm2336, 1, 0
        %v2369 = vsel %vm2337, 1, 0
        %v2370 = vsel %vm2338, 1, 0
        %vm2371 = vcmp.eq.s32.totalorder %v2339, 1
        %vm2372 = vcmp.eq.s32.totalorder %v2340, 1
        %vm2373 = vcmp.eq.s32.totalorder %v2341, 1
        %vm2374 = vcmp.eq.s32.totalorder %v2342, 1
        %vm2375 = vcmp.eq.s32.totalorder %v2343, 1
        %vm2376 = vcmp.eq.s32.totalorder %v2344, 1
        %vm2377 = vcmp.eq.s32.totalorder %v2345, 1
        %vm2378 = vcmp.eq.s32.totalorder %v2346, 1
        %vm2379 = vcmp.eq.s32.totalorder %v2347, 1
        %vm2380 = vcmp.eq.s32.totalorder %v2348, 1
        %vm2381 = vcmp.eq.s32.totalorder %v2349, 1
        %vm2382 = vcmp.eq.s32.totalorder %v2350, 1
        %vm2383 = vcmp.eq.s32.totalorder %v2351, 1
        %vm2384 = vcmp.eq.s32.totalorder %v2352, 1
        %vm2385 = vcmp.eq.s32.totalorder %v2353, 1
        %vm2386 = vcmp.eq.s32.totalorder %v2354, 1
        %vm2387 = vcmp.eq.s32.totalorder %v2355, 1
        %vm2388 = vcmp.eq.s32.totalorder %v2356, 1
        %vm2389 = vcmp.eq.s32.totalorder %v2357, 1
        %vm2390 = vcmp.eq.s32.totalorder %v2358, 1
        %vm2391 = vcmp.eq.s32.totalorder %v2359, 1
        %vm2392 = vcmp.eq.s32.totalorder %v2360, 1
        %vm2393 = vcmp.eq.s32.totalorder %v2361, 1
        %vm2394 = vcmp.eq.s32.totalorder %v2362, 1
        %vm2395 = vcmp.eq.s32.totalorder %v2363, 1
        %vm2396 = vcmp.eq.s32.totalorder %v2364, 1
        %vm2397 = vcmp.eq.s32.totalorder %v2365, 1
        %vm2398 = vcmp.eq.s32.totalorder %v2366, 1
        %vm2399 = vcmp.eq.s32.totalorder %v2367, 1
        %vm2400 = vcmp.eq.s32.totalorder %v2368, 1
        %vm2401 = vcmp.eq.s32.totalorder %v2369, 1
        %vm2402 = vcmp.eq.s32.totalorder %v2370, 1
        %v2403 = vsel %vm2371, %v2179, 0.0
        %v2404 = vsel %vm2372, %v2180, 0.0
        %v2405 = vsel %vm2373, %v2181, 0.0
        %v2406 = vsel %vm2374, %v2182, 0.0
        %v2407 = vsel %vm2375, %v2183, 0.0
        %v2408 = vsel %vm2376, %v2184, 0.0
        %v2409 = vsel %vm2377, %v2185, 0.0
        %v2410 = vsel %vm2378, %v2186, 0.0
        %v2411 = vsel %vm2379, %v2187, 0.0
        %v2412 = vsel %vm2380, %v2188, 0.0
        %v2413 = vsel %vm2381, %v2189, 0.0
        %v2414 = vsel %vm2382, %v2190, 0.0
        %v2415 = vsel %vm2383, %v2191, 0.0
        %v2416 = vsel %vm2384, %v2192, 0.0
        %v2417 = vsel %vm2385, %v2193, 0.0
        %v2418 = vsel %vm2386, %v2194, 0.0
        %v2419 = vsel %vm2387, %v2195, 0.0
        %v2420 = vsel %vm2388, %v2196, 0.0
        %v2421 = vsel %vm2389, %v2197, 0.0
        %v2422 = vsel %vm2390, %v2198, 0.0
        %v2423 = vsel %vm2391, %v2199, 0.0
        %v2424 = vsel %vm2392, %v2200, 0.0
        %v2425 = vsel %vm2393, %v2201, 0.0
        %v2426 = vsel %vm2394, %v2202, 0.0
        %v2427 = vsel %vm2395, %v2203, 0.0
        %v2428 = vsel %vm2396, %v2204, 0.0
        %v2429 = vsel %vm2397, %v2205, 0.0
        %v2430 = vsel %vm2398, %v2206, 0.0
        %v2431 = vsel %vm2399, %v2207, 0.0
        %v2432 = vsel %vm2400, %v2208, 0.0
        %v2433 = vsel %vm2401, %v2209, 0.0
        %v2434 = vsel %vm2402, %v2210, 0.0
        %v2435 = vpack.c.bf16 %v2404, %v2403
        %v2436 = vpack.c.bf16 %v2406, %v2405
        %v2437 = vpack.c.bf16 %v2408, %v2407
        %v2438 = vpack.c.bf16 %v2410, %v2409
        %v2439 = vpack.c.bf16 %v2412, %v2411
        %v2440 = vpack.c.bf16 %v2414, %v2413
        %v2441 = vpack.c.bf16 %v2416, %v2415
        %v2442 = vpack.c.bf16 %v2418, %v2417
        %v2443 = vpack.c.bf16 %v2420, %v2419
        %v2444 = vpack.c.bf16 %v2422, %v2421
        %v2445 = vpack.c.bf16 %v2424, %v2423
        %v2446 = vpack.c.bf16 %v2426, %v2425
        %v2447 = vpack.c.bf16 %v2428, %v2427
        %v2448 = vpack.c.bf16 %v2430, %v2429
        %v2449 = vpack.c.bf16 %v2432, %v2431
        %v2450 = vpack.c.bf16 %v2434, %v2433
        %s2451 = scalar_lea.vmem %s4, 16
        %v2452 = vld [vmem:[%s2451] sm:$0xf]
        %v2453 = vld [vmem:[%s2451 + $0x4] sm:$0xf]
        %v2456 = vunpack.c.l.b16 %v2452
        %v2457 = vunpack.c.l.b16 %v2453
        %v2458 = vpack.c.b16 %v2457, %v2456
        %v2461 = vsel %vm1385, %v2435, 0
        %v2464 = vsel %vm1385, %v2436, 0
        %v2467 = vsel %vm1385, %v2437, 0
        %v2470 = vsel %vm1385, %v2438, 0
        %v2473 = vsel %vm1385, %v2439, 0
        %v2476 = vsel %vm1385, %v2440, 0
        %v2479 = vsel %vm1385, %v2441, 0
        %v2482 = vsel %vm1385, %v2442, 0
        %v2485 = vsel %vm1385, %v2443, 0
        %v2488 = vsel %vm1385, %v2444, 0
        %v2491 = vsel %vm1385, %v2445, 0
        %v2494 = vsel %vm1385, %v2446, 0
        %v2497 = vsel %vm1385, %v2447, 0
        %v2500 = vsel %vm1385, %v2448, 0
        %v2503 = vsel %vm1385, %v2449, 0
        %v2506 = vsel %vm1385, %v2450, 0
        %2508 = vmatprep.subr.bf16.mxu0 0
        %2509 = vmatpush1.bf16.msra.mxu0 0
        %2510 = vmatprep.subr.bf16.mxu0 0
        %2511 = vmatpush1.bf16.msra.mxu0 0
        %2512 = vmatprep.subr.bf16.mxu0 0
        %2513 = vmatpush1.bf16.msra.mxu0 0
        %2514 = vmatprep.subr.bf16.mxu0 0
        %2515 = vmatpush1.bf16.msra.mxu0 0
        %2516 = vmatprep.subr.bf16.mxu0 0
        %2517 = vmatpush1.bf16.msra.mxu0 0
        %2518 = vmatprep.subr.bf16.mxu0 0
        %2519 = vmatpush1.bf16.msra.mxu0 0
        %2520 = vmatprep.subr.bf16.mxu0 0
        %2521 = vmatpush1.bf16.msra.mxu0 0
        %2522 = vmatprep.subr.bf16.mxu0 0
        %2523 = vmatpush1.bf16.msra.mxu0 %v2458
        %2524 = vmatprep.subr.bf16.mxu0 0
        %2525 = vmatpush2.bf16.msra.mxu0 0
        %2526 = vmatprep.subr.bf16.mxu0 0
        %2527 = vmatpush2.bf16.msra.mxu0 0
        %2528 = vmatprep.subr.bf16.mxu0 0
        %2529 = vmatpush2.bf16.msra.mxu0 0
        %2530 = vmatprep.subr.bf16.mxu0 0
        %2531 = vmatpush2.bf16.msra.mxu0 0
        %2532 = vmatprep.subr.bf16.mxu0 0
        %2533 = vmatpush2.bf16.msra.mxu0 0
        %2534 = vmatprep.subr.bf16.mxu0 0
        %2535 = vmatpush2.bf16.msra.mxu0 0
        %2536 = vmatprep.subr.bf16.mxu0 0
        %2537 = vmatpush2.bf16.msra.mxu0 0
        %2538 = vmatprep.subr.bf16.mxu0 0
        %2539 = vmatpush2.bf16.msra.mxu0 0
        %2540 = vmatprep.mubr.bf16.mxu0 0
        %2541 = vmatmul.mubr.bf16.gmra.mxu0 %v2461
        %v2542 = vpop.f32.mrf.mxu0
        %v2543 = vadd.f32 0.0, %v2542
        %v2544 = vpop.f32.mrf.mxu0
        %v2545 = vpop.f32.mrf.mxu0
        %v2546 = vadd.f32 0.0, %v2545
        %v2547 = vpop.f32.mrf.mxu0
        %2548 = vmatprep.mubr.bf16.mxu0 0
        %2549 = vmatmul.mubr.bf16.gmra.mxu0 %v2464
        %v2550 = vpop.f32.mrf.mxu0
        %v2551 = vadd.f32 0.0, %v2550
        %v2552 = vpop.f32.mrf.mxu0
        %v2553 = vpop.f32.mrf.mxu0
        %v2554 = vadd.f32 0.0, %v2553
        %v2555 = vpop.f32.mrf.mxu0
        %2556 = vmatprep.mubr.bf16.mxu0 0
        %2557 = vmatmul.mubr.bf16.gmra.mxu0 %v2467
        %v2558 = vpop.f32.mrf.mxu0
        %v2559 = vadd.f32 0.0, %v2558
        %v2560 = vpop.f32.mrf.mxu0
        %v2561 = vpop.f32.mrf.mxu0
        %v2562 = vadd.f32 0.0, %v2561
        %v2563 = vpop.f32.mrf.mxu0
        %2564 = vmatprep.mubr.bf16.mxu0 0
        %2565 = vmatmul.mubr.bf16.gmra.mxu0 %v2470
        %v2566 = vpop.f32.mrf.mxu0
        %v2567 = vadd.f32 0.0, %v2566
        %v2568 = vpop.f32.mrf.mxu0
        %v2569 = vpop.f32.mrf.mxu0
        %v2570 = vadd.f32 0.0, %v2569
        %v2571 = vpop.f32.mrf.mxu0
        %2572 = vmatprep.mubr.bf16.mxu0 0
        %2573 = vmatmul.mubr.bf16.gmra.mxu0 %v2473
        %v2574 = vpop.f32.mrf.mxu0
        %v2575 = vadd.f32 0.0, %v2574
        %v2576 = vpop.f32.mrf.mxu0
        %v2577 = vpop.f32.mrf.mxu0
        %v2578 = vadd.f32 0.0, %v2577
        %v2579 = vpop.f32.mrf.mxu0
        %2580 = vmatprep.mubr.bf16.mxu0 0
        %2581 = vmatmul.mubr.bf16.gmra.mxu0 %v2476
        %v2582 = vpop.f32.mrf.mxu0
        %v2583 = vadd.f32 0.0, %v2582
        %v2584 = vpop.f32.mrf.mxu0
        %v2585 = vpop.f32.mrf.mxu0
        %v2586 = vadd.f32 0.0, %v2585
        %v2587 = vpop.f32.mrf.mxu0
        %2588 = vmatprep.mubr.bf16.mxu0 0
        %2589 = vmatmul.mubr.bf16.gmra.mxu0 %v2479
        %v2590 = vpop.f32.mrf.mxu0
        %v2591 = vadd.f32 0.0, %v2590
        %v2592 = vpop.f32.mrf.mxu0
        %v2593 = vpop.f32.mrf.mxu0
        %v2594 = vadd.f32 0.0, %v2593
        %v2595 = vpop.f32.mrf.mxu0
        %2596 = vmatprep.mubr.bf16.mxu0 0
        %2597 = vmatmul.mubr.bf16.gmra.mxu0 %v2482
        %v2598 = vpop.f32.mrf.mxu0
        %v2599 = vadd.f32 0.0, %v2598
        %v2600 = vpop.f32.mrf.mxu0
        %v2601 = vpop.f32.mrf.mxu0
        %v2602 = vadd.f32 0.0, %v2601
        %v2603 = vpop.f32.mrf.mxu0
        %2604 = vmatprep.mubr.bf16.mxu0 0
        %2605 = vmatmul.mubr.bf16.gmra.mxu0 %v2485
        %v2606 = vpop.f32.mrf.mxu0
        %v2607 = vadd.f32 0.0, %v2606
        %v2608 = vpop.f32.mrf.mxu0
        %v2609 = vpop.f32.mrf.mxu0
        %v2610 = vadd.f32 0.0, %v2609
        %v2611 = vpop.f32.mrf.mxu0
        %2612 = vmatprep.mubr.bf16.mxu0 0
        %2613 = vmatmul.mubr.bf16.gmra.mxu0 %v2488
        %v2614 = vpop.f32.mrf.mxu0
        %v2615 = vadd.f32 0.0, %v2614
        %v2616 = vpop.f32.mrf.mxu0
        %v2617 = vpop.f32.mrf.mxu0
        %v2618 = vadd.f32 0.0, %v2617
        %v2619 = vpop.f32.mrf.mxu0
        %2620 = vmatprep.mubr.bf16.mxu0 0
        %2621 = vmatmul.mubr.bf16.gmra.mxu0 %v2491
        %v2622 = vpop.f32.mrf.mxu0
        %v2623 = vadd.f32 0.0, %v2622
        %v2624 = vpop.f32.mrf.mxu0
        %v2625 = vpop.f32.mrf.mxu0
        %v2626 = vadd.f32 0.0, %v2625
        %v2627 = vpop.f32.mrf.mxu0
        %2628 = vmatprep.mubr.bf16.mxu0 0
        %2629 = vmatmul.mubr.bf16.gmra.mxu0 %v2494
        %v2630 = vpop.f32.mrf.mxu0
        %v2631 = vadd.f32 0.0, %v2630
        %v2632 = vpop.f32.mrf.mxu0
        %v2633 = vpop.f32.mrf.mxu0
        %v2634 = vadd.f32 0.0, %v2633
        %v2635 = vpop.f32.mrf.mxu0
        %2636 = vmatprep.mubr.bf16.mxu0 0
        %2637 = vmatmul.mubr.bf16.gmra.mxu0 %v2497
        %v2638 = vpop.f32.mrf.mxu0
        %v2639 = vadd.f32 0.0, %v2638
        %v2640 = vpop.f32.mrf.mxu0
        %v2641 = vpop.f32.mrf.mxu0
        %v2642 = vadd.f32 0.0, %v2641
        %v2643 = vpop.f32.mrf.mxu0
        %2644 = vmatprep.mubr.bf16.mxu0 0
        %2645 = vmatmul.mubr.bf16.gmra.mxu0 %v2500
        %v2646 = vpop.f32.mrf.mxu0
        %v2647 = vadd.f32 0.0, %v2646
        %v2648 = vpop.f32.mrf.mxu0
        %v2649 = vpop.f32.mrf.mxu0
        %v2650 = vadd.f32 0.0, %v2649
        %v2651 = vpop.f32.mrf.mxu0
        %2652 = vmatprep.mubr.bf16.mxu0 0
        %2653 = vmatmul.mubr.bf16.gmra.mxu0 %v2503
        %v2654 = vpop.f32.mrf.mxu0
        %v2655 = vadd.f32 0.0, %v2654
        %v2656 = vpop.f32.mrf.mxu0
        %v2657 = vpop.f32.mrf.mxu0
        %v2658 = vadd.f32 0.0, %v2657
        %v2659 = vpop.f32.mrf.mxu0
        %2660 = vmatprep.mubr.bf16.mxu0 0
        %2661 = vmatmul.mubr.bf16.gmra.mxu0 %v2506
        %v2662 = vpop.f32.mrf.mxu0
        %v2663 = vadd.f32 0.0, %v2662
        %v2664 = vpop.f32.mrf.mxu0
        %v2665 = vpop.f32.mrf.mxu0
        %v2666 = vadd.f32 0.0, %v2665
        %v2667 = vpop.f32.mrf.mxu0
        %2668 = vdwg.mxu0
        %v2669 = vadd.f32 %v2053, %v2543
        %v2670 = vadd.f32 %v2056, %v2546
        %v2671 = vadd.f32 %v2061, %v2551
        %v2672 = vadd.f32 %v2064, %v2554
        %v2673 = vadd.f32 %v2069, %v2559
        %v2674 = vadd.f32 %v2072, %v2562
        %v2675 = vadd.f32 %v2077, %v2567
        %v2676 = vadd.f32 %v2080, %v2570
        %v2677 = vadd.f32 %v2085, %v2575
        %v2678 = vadd.f32 %v2088, %v2578
        %v2679 = vadd.f32 %v2093, %v2583
        %v2680 = vadd.f32 %v2096, %v2586
        %v2681 = vadd.f32 %v2101, %v2591
        %v2682 = vadd.f32 %v2104, %v2594
        %v2683 = vadd.f32 %v2109, %v2599
        %v2684 = vadd.f32 %v2112, %v2602
        %v2685 = vadd.f32 %v2117, %v2607
        %v2686 = vadd.f32 %v2120, %v2610
        %v2687 = vadd.f32 %v2125, %v2615
        %v2688 = vadd.f32 %v2128, %v2618
        %v2689 = vadd.f32 %v2133, %v2623
        %v2690 = vadd.f32 %v2136, %v2626
        %v2691 = vadd.f32 %v2141, %v2631
        %v2692 = vadd.f32 %v2144, %v2634
        %v2693 = vadd.f32 %v2149, %v2639
        %v2694 = vadd.f32 %v2152, %v2642
        %v2695 = vadd.f32 %v2157, %v2647
        %v2696 = vadd.f32 %v2160, %v2650
        %v2697 = vadd.f32 %v2165, %v2655
        %v2698 = vadd.f32 %v2168, %v2658
        %v2699 = vadd.f32 %v2173, %v2663
        %v2700 = vadd.f32 %v2176, %v2666
        %v2701 = vld [vmem:[#allocation2 + $0x17] sm:$0xff]
        %v2702 = vld [vmem:[#allocation2 + $0x1f] sm:$0xff]
        %v2703 = vld [vmem:[#allocation2 + $0x27] sm:$0xff]
        %v2704 = vld [vmem:[#allocation2 + $0x2f] sm:$0xff]
        %v2705 = vld [vmem:[#allocation2 + $0x37] sm:$0xff]
        %v2706 = vld [vmem:[#allocation2 + $0x3f] sm:$0xff]
        %v2707 = vld [vmem:[#allocation2 + $0x47] sm:$0xff]
        %v2708 = vld [vmem:[#allocation2 + $0x4f] sm:$0xff]
        %v2709 = vld [vmem:[#allocation2 + $0x57] sm:$0xff]
        %v2710 = vld [vmem:[#allocation2 + $0x5f] sm:$0xff]
        %v2711 = vld [vmem:[#allocation2 + $0x67] sm:$0xff]
        %v2712 = vld [vmem:[#allocation2 + $0x6f] sm:$0xff]
        %v2713 = vld [vmem:[#allocation2 + $0x77] sm:$0xff]
        %v2714 = vld [vmem:[#allocation2 + $0x7f] sm:$0xff]
        %v2715 = vld [vmem:[#allocation2 + $0x87] sm:$0xff]
        %v2716 = vld [vmem:[#allocation2 + $0x8f] sm:$0xff]
        %v2717 = vld [vmem:[#allocation2 + $0x97] sm:$0xff]
        %v2718 = vld [vmem:[#allocation2 + $0x9f] sm:$0xff]
        %v2719 = vld [vmem:[#allocation2 + $0xa7] sm:$0xff]
        %v2720 = vld [vmem:[#allocation2 + $0xaf] sm:$0xff]
        %v2721 = vld [vmem:[#allocation2 + $0xb7] sm:$0xff]
        %v2722 = vld [vmem:[#allocation2 + $0xbf] sm:$0xff]
        %v2723 = vld [vmem:[#allocation2 + $0xc7] sm:$0xff]
        %v2724 = vld [vmem:[#allocation2 + $0xcf] sm:$0xff]
        %v2725 = vld [vmem:[#allocation2 + $0xd7] sm:$0xff]
        %v2726 = vld [vmem:[#allocation2 + $0xdf] sm:$0xff]
        %v2727 = vld [vmem:[#allocation2 + $0xe7] sm:$0xff]
        %v2728 = vld [vmem:[#allocation2 + $0xef] sm:$0xff]
        %v2729 = vld [vmem:[#allocation2 + $0xf7] sm:$0xff]
        %v2730 = vld [vmem:[#allocation2 + $0xff] sm:$0xff]
        %v2731 = vld [vmem:[#allocation2 + $0x107] sm:$0xff]
        %v2732 = vld [vmem:[#allocation2 + $0x10f] sm:$0xff]
        %v2733 = vsel %vm1616, %v2701, 0.0
        %v2734 = vsel %vm1617, %v2702, 0.0
        %v2735 = vsel %vm1618, %v2703, 0.0
        %v2736 = vsel %vm1619, %v2704, 0.0
        %v2737 = vsel %vm1620, %v2705, 0.0
        %v2738 = vsel %vm1621, %v2706, 0.0
        %v2739 = vsel %vm1622, %v2707, 0.0
        %v2740 = vsel %vm1623, %v2708, 0.0
        %v2741 = vsel %vm1624, %v2709, 0.0
        %v2742 = vsel %vm1625, %v2710, 0.0
        %v2743 = vsel %vm1626, %v2711, 0.0
        %v2744 = vsel %vm1627, %v2712, 0.0
        %v2745 = vsel %vm1628, %v2713, 0.0
        %v2746 = vsel %vm1629, %v2714, 0.0
        %v2747 = vsel %vm1630, %v2715, 0.0
        %v2748 = vsel %vm1631, %v2716, 0.0
        %v2749 = vsel %vm1632, %v2717, 0.0
        %v2750 = vsel %vm1633, %v2718, 0.0
        %v2751 = vsel %vm1634, %v2719, 0.0
        %v2752 = vsel %vm1635, %v2720, 0.0
        %v2753 = vsel %vm1636, %v2721, 0.0
        %v2754 = vsel %vm1637, %v2722, 0.0
        %v2755 = vsel %vm1638, %v2723, 0.0
        %v2756 = vsel %vm1639, %v2724, 0.0
        %v2757 = vsel %vm1640, %v2725, 0.0
        %v2758 = vsel %vm1641, %v2726, 0.0
        %v2759 = vsel %vm1642, %v2727, 0.0
        %v2760 = vsel %vm1643, %v2728, 0.0
        %v2761 = vsel %vm1644, %v2729, 0.0
        %v2762 = vsel %vm1645, %v2730, 0.0
        %v2763 = vsel %vm1646, %v2731, 0.0
        %v2764 = vsel %vm1647, %v2732, 0.0
        %v2765 = vpack.c.bf16 %v2734, %v2733
        %v2766 = vpack.c.bf16 %v2736, %v2735
        %v2767 = vpack.c.bf16 %v2738, %v2737
        %v2768 = vpack.c.bf16 %v2740, %v2739
        %v2769 = vpack.c.bf16 %v2742, %v2741
        %v2770 = vpack.c.bf16 %v2744, %v2743
        %v2771 = vpack.c.bf16 %v2746, %v2745
        %v2772 = vpack.c.bf16 %v2748, %v2747
        %v2773 = vpack.c.bf16 %v2750, %v2749
        %v2774 = vpack.c.bf16 %v2752, %v2751
        %v2775 = vpack.c.bf16 %v2754, %v2753
        %v2776 = vpack.c.bf16 %v2756, %v2755
        %v2777 = vpack.c.bf16 %v2758, %v2757
        %v2778 = vpack.c.bf16 %v2760, %v2759
        %v2779 = vpack.c.bf16 %v2762, %v2761
        %v2780 = vpack.c.bf16 %v2764, %v2763
        %s2781 = scalar_lea.vmem %s4, 24
        %v2782 = vld [vmem:[%s2781] sm:$0xf]
        %v2783 = vld [vmem:[%s2781 + $0x4] sm:$0xf]
        %v2786 = vunpack.c.l.b16 %v2782
        %v2787 = vunpack.c.l.b16 %v2783
        %v2788 = vpack.c.b16 %v2787, %v2786
        %v2791 = vsel %vm1385, %v2765, 0
        %v2794 = vsel %vm1385, %v2766, 0
        %v2797 = vsel %vm1385, %v2767, 0
        %v2800 = vsel %vm1385, %v2768, 0
        %v2803 = vsel %vm1385, %v2769, 0
        %v2806 = vsel %vm1385, %v2770, 0
        %v2809 = vsel %vm1385, %v2771, 0
        %v2812 = vsel %vm1385, %v2772, 0
        %v2815 = vsel %vm1385, %v2773, 0
        %v2818 = vsel %vm1385, %v2774, 0
        %v2821 = vsel %vm1385, %v2775, 0
        %v2824 = vsel %vm1385, %v2776, 0
        %v2827 = vsel %vm1385, %v2777, 0
        %v2830 = vsel %vm1385, %v2778, 0
        %v2833 = vsel %vm1385, %v2779, 0
        %v2836 = vsel %vm1385, %v2780, 0
        %2838 = vmatprep.subr.bf16.mxu0 0
        %2839 = vmatpush1.bf16.msra.mxu0 0
        %2840 = vmatprep.subr.bf16.mxu0 0
        %2841 = vmatpush1.bf16.msra.mxu0 0
        %2842 = vmatprep.subr.bf16.mxu0 0
        %2843 = vmatpush1.bf16.msra.mxu0 0
        %2844 = vmatprep.subr.bf16.mxu0 0
        %2845 = vmatpush1.bf16.msra.mxu0 0
        %2846 = vmatprep.subr.bf16.mxu0 0
        %2847 = vmatpush1.bf16.msra.mxu0 0
        %2848 = vmatprep.subr.bf16.mxu0 0
        %2849 = vmatpush1.bf16.msra.mxu0 0
        %2850 = vmatprep.subr.bf16.mxu0 0
        %2851 = vmatpush1.bf16.msra.mxu0 0
        %2852 = vmatprep.subr.bf16.mxu0 0
        %2853 = vmatpush1.bf16.msra.mxu0 %v2788
        %2854 = vmatprep.subr.bf16.mxu0 0
        %2855 = vmatpush2.bf16.msra.mxu0 0
        %2856 = vmatprep.subr.bf16.mxu0 0
        %2857 = vmatpush2.bf16.msra.mxu0 0
        %2858 = vmatprep.subr.bf16.mxu0 0
        %2859 = vmatpush2.bf16.msra.mxu0 0
        %2860 = vmatprep.subr.bf16.mxu0 0
        %2861 = vmatpush2.bf16.msra.mxu0 0
        %2862 = vmatprep.subr.bf16.mxu0 0
        %2863 = vmatpush2.bf16.msra.mxu0 0
        %2864 = vmatprep.subr.bf16.mxu0 0
        %2865 = vmatpush2.bf16.msra.mxu0 0
        %2866 = vmatprep.subr.bf16.mxu0 0
        %2867 = vmatpush2.bf16.msra.mxu0 0
        %2868 = vmatprep.subr.bf16.mxu0 0
        %2869 = vmatpush2.bf16.msra.mxu0 0
        %2870 = vmatprep.mubr.bf16.mxu0 0
        %2871 = vmatmul.mubr.bf16.gmra.mxu0 %v2791
        %v2872 = vpop.f32.mrf.mxu0
        %v2873 = vadd.f32 0.0, %v2872
        %v2874 = vpop.f32.mrf.mxu0
        %v2875 = vpop.f32.mrf.mxu0
        %v2876 = vadd.f32 0.0, %v2875
        %v2877 = vpop.f32.mrf.mxu0
        %2878 = vmatprep.mubr.bf16.mxu0 0
        %2879 = vmatmul.mubr.bf16.gmra.mxu0 %v2794
        %v2880 = vpop.f32.mrf.mxu0
        %v2881 = vadd.f32 0.0, %v2880
        %v2882 = vpop.f32.mrf.mxu0
        %v2883 = vpop.f32.mrf.mxu0
        %v2884 = vadd.f32 0.0, %v2883
        %v2885 = vpop.f32.mrf.mxu0
        %2886 = vmatprep.mubr.bf16.mxu0 0
        %2887 = vmatmul.mubr.bf16.gmra.mxu0 %v2797
        %v2888 = vpop.f32.mrf.mxu0
        %v2889 = vadd.f32 0.0, %v2888
        %v2890 = vpop.f32.mrf.mxu0
        %v2891 = vpop.f32.mrf.mxu0
        %v2892 = vadd.f32 0.0, %v2891
        %v2893 = vpop.f32.mrf.mxu0
        %2894 = vmatprep.mubr.bf16.mxu0 0
        %2895 = vmatmul.mubr.bf16.gmra.mxu0 %v2800
        %v2896 = vpop.f32.mrf.mxu0
        %v2897 = vadd.f32 0.0, %v2896
        %v2898 = vpop.f32.mrf.mxu0
        %v2899 = vpop.f32.mrf.mxu0
        %v2900 = vadd.f32 0.0, %v2899
        %v2901 = vpop.f32.mrf.mxu0
        %2902 = vmatprep.mubr.bf16.mxu0 0
        %2903 = vmatmul.mubr.bf16.gmra.mxu0 %v2803
        %v2904 = vpop.f32.mrf.mxu0
        %v2905 = vadd.f32 0.0, %v2904
        %v2906 = vpop.f32.mrf.mxu0
        %v2907 = vpop.f32.mrf.mxu0
        %v2908 = vadd.f32 0.0, %v2907
        %v2909 = vpop.f32.mrf.mxu0
        %2910 = vmatprep.mubr.bf16.mxu0 0
        %2911 = vmatmul.mubr.bf16.gmra.mxu0 %v2806
        %v2912 = vpop.f32.mrf.mxu0
        %v2913 = vadd.f32 0.0, %v2912
        %v2914 = vpop.f32.mrf.mxu0
        %v2915 = vpop.f32.mrf.mxu0
        %v2916 = vadd.f32 0.0, %v2915
        %v2917 = vpop.f32.mrf.mxu0
        %2918 = vmatprep.mubr.bf16.mxu0 0
        %2919 = vmatmul.mubr.bf16.gmra.mxu0 %v2809
        %v2920 = vpop.f32.mrf.mxu0
        %v2921 = vadd.f32 0.0, %v2920
        %v2922 = vpop.f32.mrf.mxu0
        %v2923 = vpop.f32.mrf.mxu0
        %v2924 = vadd.f32 0.0, %v2923
        %v2925 = vpop.f32.mrf.mxu0
        %2926 = vmatprep.mubr.bf16.mxu0 0
        %2927 = vmatmul.mubr.bf16.gmra.mxu0 %v2812
        %v2928 = vpop.f32.mrf.mxu0
        %v2929 = vadd.f32 0.0, %v2928
        %v2930 = vpop.f32.mrf.mxu0
        %v2931 = vpop.f32.mrf.mxu0
        %v2932 = vadd.f32 0.0, %v2931
        %v2933 = vpop.f32.mrf.mxu0
        %2934 = vmatprep.mubr.bf16.mxu0 0
        %2935 = vmatmul.mubr.bf16.gmra.mxu0 %v2815
        %v2936 = vpop.f32.mrf.mxu0
        %v2937 = vadd.f32 0.0, %v2936
        %v2938 = vpop.f32.mrf.mxu0
        %v2939 = vpop.f32.mrf.mxu0
        %v2940 = vadd.f32 0.0, %v2939
        %v2941 = vpop.f32.mrf.mxu0
        %2942 = vmatprep.mubr.bf16.mxu0 0
        %2943 = vmatmul.mubr.bf16.gmra.mxu0 %v2818
        %v2944 = vpop.f32.mrf.mxu0
        %v2945 = vadd.f32 0.0, %v2944
        %v2946 = vpop.f32.mrf.mxu0
        %v2947 = vpop.f32.mrf.mxu0
        %v2948 = vadd.f32 0.0, %v2947
        %v2949 = vpop.f32.mrf.mxu0
        %2950 = vmatprep.mubr.bf16.mxu0 0
        %2951 = vmatmul.mubr.bf16.gmra.mxu0 %v2821
        %v2952 = vpop.f32.mrf.mxu0
        %v2953 = vadd.f32 0.0, %v2952
        %v2954 = vpop.f32.mrf.mxu0
        %v2955 = vpop.f32.mrf.mxu0
        %v2956 = vadd.f32 0.0, %v2955
        %v2957 = vpop.f32.mrf.mxu0
        %2958 = vmatprep.mubr.bf16.mxu0 0
        %2959 = vmatmul.mubr.bf16.gmra.mxu0 %v2824
        %v2960 = vpop.f32.mrf.mxu0
        %v2961 = vadd.f32 0.0, %v2960
        %v2962 = vpop.f32.mrf.mxu0
        %v2963 = vpop.f32.mrf.mxu0
        %v2964 = vadd.f32 0.0, %v2963
        %v2965 = vpop.f32.mrf.mxu0
        %2966 = vmatprep.mubr.bf16.mxu0 0
        %2967 = vmatmul.mubr.bf16.gmra.mxu0 %v2827
        %v2968 = vpop.f32.mrf.mxu0
        %v2969 = vadd.f32 0.0, %v2968
        %v2970 = vpop.f32.mrf.mxu0
        %v2971 = vpop.f32.mrf.mxu0
        %v2972 = vadd.f32 0.0, %v2971
        %v2973 = vpop.f32.mrf.mxu0
        %2974 = vmatprep.mubr.bf16.mxu0 0
        %2975 = vmatmul.mubr.bf16.gmra.mxu0 %v2830
        %v2976 = vpop.f32.mrf.mxu0
        %v2977 = vadd.f32 0.0, %v2976
        %v2978 = vpop.f32.mrf.mxu0
        %v2979 = vpop.f32.mrf.mxu0
        %v2980 = vadd.f32 0.0, %v2979
        %v2981 = vpop.f32.mrf.mxu0
        %2982 = vmatprep.mubr.bf16.mxu0 0
        %2983 = vmatmul.mubr.bf16.gmra.mxu0 %v2833
        %v2984 = vpop.f32.mrf.mxu0
        %v2985 = vadd.f32 0.0, %v2984
        %v2986 = vpop.f32.mrf.mxu0
        %v2987 = vpop.f32.mrf.mxu0
        %v2988 = vadd.f32 0.0, %v2987
        %v2989 = vpop.f32.mrf.mxu0
        %2990 = vmatprep.mubr.bf16.mxu0 0
        %2991 = vmatmul.mubr.bf16.gmra.mxu0 %v2836
        %v2992 = vpop.f32.mrf.mxu0
        %v2993 = vadd.f32 0.0, %v2992
        %v2994 = vpop.f32.mrf.mxu0
        %v2995 = vpop.f32.mrf.mxu0
        %v2996 = vadd.f32 0.0, %v2995
        %v2997 = vpop.f32.mrf.mxu0
        %2998 = vdwg.mxu0
        %v2999 = vadd.f32 %v2669, %v2873
        %v3000 = vadd.f32 %v2670, %v2876
        %v3001 = vadd.f32 %v2671, %v2881
        %v3002 = vadd.f32 %v2672, %v2884
        %v3003 = vadd.f32 %v2673, %v2889
        %v3004 = vadd.f32 %v2674, %v2892
        %v3005 = vadd.f32 %v2675, %v2897
        %v3006 = vadd.f32 %v2676, %v2900
        %v3007 = vadd.f32 %v2677, %v2905
        %v3008 = vadd.f32 %v2678, %v2908
        %v3009 = vadd.f32 %v2679, %v2913
        %v3010 = vadd.f32 %v2680, %v2916
        %v3011 = vadd.f32 %v2681, %v2921
        %v3012 = vadd.f32 %v2682, %v2924
        %v3013 = vadd.f32 %v2683, %v2929
        %v3014 = vadd.f32 %v2684, %v2932
        %v3015 = vadd.f32 %v2685, %v2937
        %v3016 = vadd.f32 %v2686, %v2940
        %v3017 = vadd.f32 %v2687, %v2945
        %v3018 = vadd.f32 %v2688, %v2948
        %v3019 = vadd.f32 %v2689, %v2953
        %v3020 = vadd.f32 %v2690, %v2956
        %v3021 = vadd.f32 %v2691, %v2961
        %v3022 = vadd.f32 %v2692, %v2964
        %v3023 = vadd.f32 %v2693, %v2969
        %v3024 = vadd.f32 %v2694, %v2972
        %v3025 = vadd.f32 %v2695, %v2977
        %v3026 = vadd.f32 %v2696, %v2980
        %v3027 = vadd.f32 %v2697, %v2985
        %v3028 = vadd.f32 %v2698, %v2988
        %v3029 = vadd.f32 %v2699, %v2993
        %v3030 = vadd.f32 %v2700, %v2996
        %v3031 = vld [vmem:[#allocation2 + $0x18] sm:$0xff]
        %v3032 = vld [vmem:[#allocation2 + $0x20] sm:$0xff]
        %v3033 = vld [vmem:[#allocation2 + $0x28] sm:$0xff]
        %v3034 = vld [vmem:[#allocation2 + $0x30] sm:$0xff]
        %v3035 = vld [vmem:[#allocation2 + $0x38] sm:$0xff]
        %v3036 = vld [vmem:[#allocation2 + $0x40] sm:$0xff]
        %v3037 = vld [vmem:[#allocation2 + $0x48] sm:$0xff]
        %v3038 = vld [vmem:[#allocation2 + $0x50] sm:$0xff]
        %v3039 = vld [vmem:[#allocation2 + $0x58] sm:$0xff]
        %v3040 = vld [vmem:[#allocation2 + $0x60] sm:$0xff]
        %v3041 = vld [vmem:[#allocation2 + $0x68] sm:$0xff]
        %v3042 = vld [vmem:[#allocation2 + $0x70] sm:$0xff]
        %v3043 = vld [vmem:[#allocation2 + $0x78] sm:$0xff]
        %v3044 = vld [vmem:[#allocation2 + $0x80] sm:$0xff]
        %v3045 = vld [vmem:[#allocation2 + $0x88] sm:$0xff]
        %v3046 = vld [vmem:[#allocation2 + $0x90] sm:$0xff]
        %v3047 = vld [vmem:[#allocation2 + $0x98] sm:$0xff]
        %v3048 = vld [vmem:[#allocation2 + $0xa0] sm:$0xff]
        %v3049 = vld [vmem:[#allocation2 + $0xa8] sm:$0xff]
        %v3050 = vld [vmem:[#allocation2 + $0xb0] sm:$0xff]
        %v3051 = vld [vmem:[#allocation2 + $0xb8] sm:$0xff]
        %v3052 = vld [vmem:[#allocation2 + $0xc0] sm:$0xff]
        %v3053 = vld [vmem:[#allocation2 + $0xc8] sm:$0xff]
        %v3054 = vld [vmem:[#allocation2 + $0xd0] sm:$0xff]
        %v3055 = vld [vmem:[#allocation2 + $0xd8] sm:$0xff]
        %v3056 = vld [vmem:[#allocation2 + $0xe0] sm:$0xff]
        %v3057 = vld [vmem:[#allocation2 + $0xe8] sm:$0xff]
        %v3058 = vld [vmem:[#allocation2 + $0xf0] sm:$0xff]
        %v3059 = vld [vmem:[#allocation2 + $0xf8] sm:$0xff]
        %v3060 = vld [vmem:[#allocation2 + $0x100] sm:$0xff]
        %v3061 = vld [vmem:[#allocation2 + $0x108] sm:$0xff]
        %v3062 = vld [vmem:[#allocation2 + $0x110] sm:$0xff]
        %v3063 = vpack.c.bf16 %v3032, %v3031
        %v3064 = vpack.c.bf16 %v3034, %v3033
        %v3065 = vpack.c.bf16 %v3036, %v3035
        %v3066 = vpack.c.bf16 %v3038, %v3037
        %v3067 = vpack.c.bf16 %v3040, %v3039
        %v3068 = vpack.c.bf16 %v3042, %v3041
        %v3069 = vpack.c.bf16 %v3044, %v3043
        %v3070 = vpack.c.bf16 %v3046, %v3045
        %v3071 = vpack.c.bf16 %v3048, %v3047
        %v3072 = vpack.c.bf16 %v3050, %v3049
        %v3073 = vpack.c.bf16 %v3052, %v3051
        %v3074 = vpack.c.bf16 %v3054, %v3053
        %v3075 = vpack.c.bf16 %v3056, %v3055
        %v3076 = vpack.c.bf16 %v3058, %v3057
        %v3077 = vpack.c.bf16 %v3060, %v3059
        %v3078 = vpack.c.bf16 %v3062, %v3061
        %s3079 = scalar_lea.vmem %s4, 32
        %v3080 = vld [vmem:[%s3079] sm:$0xf]
        %v3081 = vld [vmem:[%s3079 + $0x4] sm:$0xf]
        %v3084 = vunpack.c.l.b16 %v3080
        %v3085 = vunpack.c.l.b16 %v3081
        %v3086 = vpack.c.b16 %v3085, %v3084
        %v3089 = vsel %vm1385, %v3063, 0
        %v3092 = vsel %vm1385, %v3064, 0
        %v3095 = vsel %vm1385, %v3065, 0
        %v3098 = vsel %vm1385, %v3066, 0
        %v3101 = vsel %vm1385, %v3067, 0
        %v3104 = vsel %vm1385, %v3068, 0
        %v3107 = vsel %vm1385, %v3069, 0
        %v3110 = vsel %vm1385, %v3070, 0
        %v3113 = vsel %vm1385, %v3071, 0
        %v3116 = vsel %vm1385, %v3072, 0
        %v3119 = vsel %vm1385, %v3073, 0
        %v3122 = vsel %vm1385, %v3074, 0
        %v3125 = vsel %vm1385, %v3075, 0
        %v3128 = vsel %vm1385, %v3076, 0
        %v3131 = vsel %vm1385, %v3077, 0
        %v3134 = vsel %vm1385, %v3078, 0
        %3136 = vmatprep.subr.bf16.mxu0 0
        %3137 = vmatpush1.bf16.msra.mxu0 0
        %3138 = vmatprep.subr.bf16.mxu0 0
        %3139 = vmatpush1.bf16.msra.mxu0 0
        %3140 = vmatprep.subr.bf16.mxu0 0
        %3141 = vmatpush1.bf16.msra.mxu0 0
        %3142 = vmatprep.subr.bf16.mxu0 0
        %3143 = vmatpush1.bf16.msra.mxu0 0
        %3144 = vmatprep.subr.bf16.mxu0 0
        %3145 = vmatpush1.bf16.msra.mxu0 0
        %3146 = vmatprep.subr.bf16.mxu0 0
        %3147 = vmatpush1.bf16.msra.mxu0 0
        %3148 = vmatprep.subr.bf16.mxu0 0
        %3149 = vmatpush1.bf16.msra.mxu0 0
        %3150 = vmatprep.subr.bf16.mxu0 0
        %3151 = vmatpush1.bf16.msra.mxu0 %v3086
        %3152 = vmatprep.subr.bf16.mxu0 0
        %3153 = vmatpush2.bf16.msra.mxu0 0
        %3154 = vmatprep.subr.bf16.mxu0 0
        %3155 = vmatpush2.bf16.msra.mxu0 0
        %3156 = vmatprep.subr.bf16.mxu0 0
        %3157 = vmatpush2.bf16.msra.mxu0 0
        %3158 = vmatprep.subr.bf16.mxu0 0
        %3159 = vmatpush2.bf16.msra.mxu0 0
        %3160 = vmatprep.subr.bf16.mxu0 0
        %3161 = vmatpush2.bf16.msra.mxu0 0
        %3162 = vmatprep.subr.bf16.mxu0 0
        %3163 = vmatpush2.bf16.msra.mxu0 0
        %3164 = vmatprep.subr.bf16.mxu0 0
        %3165 = vmatpush2.bf16.msra.mxu0 0
        %3166 = vmatprep.subr.bf16.mxu0 0
        %3167 = vmatpush2.bf16.msra.mxu0 0
        %3168 = vmatprep.mubr.bf16.mxu0 0
        %3169 = vmatmul.mubr.bf16.gmra.mxu0 %v3089
        %v3170 = vpop.f32.mrf.mxu0
        %v3171 = vadd.f32 0.0, %v3170
        %v3172 = vpop.f32.mrf.mxu0
        %v3173 = vpop.f32.mrf.mxu0
        %v3174 = vadd.f32 0.0, %v3173
        %v3175 = vpop.f32.mrf.mxu0
        %3176 = vmatprep.mubr.bf16.mxu0 0
        %3177 = vmatmul.mubr.bf16.gmra.mxu0 %v3092
        %v3178 = vpop.f32.mrf.mxu0
        %v3179 = vadd.f32 0.0, %v3178
        %v3180 = vpop.f32.mrf.mxu0
        %v3181 = vpop.f32.mrf.mxu0
        %v3182 = vadd.f32 0.0, %v3181
        %v3183 = vpop.f32.mrf.mxu0
        %3184 = vmatprep.mubr.bf16.mxu0 0
        %3185 = vmatmul.mubr.bf16.gmra.mxu0 %v3095
        %v3186 = vpop.f32.mrf.mxu0
        %v3187 = vadd.f32 0.0, %v3186
        %v3188 = vpop.f32.mrf.mxu0
        %v3189 = vpop.f32.mrf.mxu0
        %v3190 = vadd.f32 0.0, %v3189
        %v3191 = vpop.f32.mrf.mxu0
        %3192 = vmatprep.mubr.bf16.mxu0 0
        %3193 = vmatmul.mubr.bf16.gmra.mxu0 %v3098
        %v3194 = vpop.f32.mrf.mxu0
        %v3195 = vadd.f32 0.0, %v3194
        %v3196 = vpop.f32.mrf.mxu0
        %v3197 = vpop.f32.mrf.mxu0
        %v3198 = vadd.f32 0.0, %v3197
        %v3199 = vpop.f32.mrf.mxu0
        %3200 = vmatprep.mubr.bf16.mxu0 0
        %3201 = vmatmul.mubr.bf16.gmra.mxu0 %v3101
        %v3202 = vpop.f32.mrf.mxu0
        %v3203 = vadd.f32 0.0, %v3202
        %v3204 = vpop.f32.mrf.mxu0
        %v3205 = vpop.f32.mrf.mxu0
        %v3206 = vadd.f32 0.0, %v3205
        %v3207 = vpop.f32.mrf.mxu0
        %3208 = vmatprep.mubr.bf16.mxu0 0
        %3209 = vmatmul.mubr.bf16.gmra.mxu0 %v3104
        %v3210 = vpop.f32.mrf.mxu0
        %v3211 = vadd.f32 0.0, %v3210
        %v3212 = vpop.f32.mrf.mxu0
        %v3213 = vpop.f32.mrf.mxu0
        %v3214 = vadd.f32 0.0, %v3213
        %v3215 = vpop.f32.mrf.mxu0
        %3216 = vmatprep.mubr.bf16.mxu0 0
        %3217 = vmatmul.mubr.bf16.gmra.mxu0 %v3107
        %v3218 = vpop.f32.mrf.mxu0
        %v3219 = vadd.f32 0.0, %v3218
        %v3220 = vpop.f32.mrf.mxu0
        %v3221 = vpop.f32.mrf.mxu0
        %v3222 = vadd.f32 0.0, %v3221
        %v3223 = vpop.f32.mrf.mxu0
        %3224 = vmatprep.mubr.bf16.mxu0 0
        %3225 = vmatmul.mubr.bf16.gmra.mxu0 %v3110
        %v3226 = vpop.f32.mrf.mxu0
        %v3227 = vadd.f32 0.0, %v3226
        %v3228 = vpop.f32.mrf.mxu0
        %v3229 = vpop.f32.mrf.mxu0
        %v3230 = vadd.f32 0.0, %v3229
        %v3231 = vpop.f32.mrf.mxu0
        %3232 = vmatprep.mubr.bf16.mxu0 0
        %3233 = vmatmul.mubr.bf16.gmra.mxu0 %v3113
        %v3234 = vpop.f32.mrf.mxu0
        %v3235 = vadd.f32 0.0, %v3234
        %v3236 = vpop.f32.mrf.mxu0
        %v3237 = vpop.f32.mrf.mxu0
        %v3238 = vadd.f32 0.0, %v3237
        %v3239 = vpop.f32.mrf.mxu0
        %3240 = vmatprep.mubr.bf16.mxu0 0
        %3241 = vmatmul.mubr.bf16.gmra.mxu0 %v3116
        %v3242 = vpop.f32.mrf.mxu0
        %v3243 = vadd.f32 0.0, %v3242
        %v3244 = vpop.f32.mrf.mxu0
        %v3245 = vpop.f32.mrf.mxu0
        %v3246 = vadd.f32 0.0, %v3245
        %v3247 = vpop.f32.mrf.mxu0
        %3248 = vmatprep.mubr.bf16.mxu0 0
        %3249 = vmatmul.mubr.bf16.gmra.mxu0 %v3119
        %v3250 = vpop.f32.mrf.mxu0
        %v3251 = vadd.f32 0.0, %v3250
        %v3252 = vpop.f32.mrf.mxu0
        %v3253 = vpop.f32.mrf.mxu0
        %v3254 = vadd.f32 0.0, %v3253
        %v3255 = vpop.f32.mrf.mxu0
        %3256 = vmatprep.mubr.bf16.mxu0 0
        %3257 = vmatmul.mubr.bf16.gmra.mxu0 %v3122
        %v3258 = vpop.f32.mrf.mxu0
        %v3259 = vadd.f32 0.0, %v3258
        %v3260 = vpop.f32.mrf.mxu0
        %v3261 = vpop.f32.mrf.mxu0
        %v3262 = vadd.f32 0.0, %v3261
        %v3263 = vpop.f32.mrf.mxu0
        %3264 = vmatprep.mubr.bf16.mxu0 0
        %3265 = vmatmul.mubr.bf16.gmra.mxu0 %v3125
        %v3266 = vpop.f32.mrf.mxu0
        %v3267 = vadd.f32 0.0, %v3266
        %v3268 = vpop.f32.mrf.mxu0
        %v3269 = vpop.f32.mrf.mxu0
        %v3270 = vadd.f32 0.0, %v3269
        %v3271 = vpop.f32.mrf.mxu0
        %3272 = vmatprep.mubr.bf16.mxu0 0
        %3273 = vmatmul.mubr.bf16.gmra.mxu0 %v3128
        %v3274 = vpop.f32.mrf.mxu0
        %v3275 = vadd.f32 0.0, %v3274
        %v3276 = vpop.f32.mrf.mxu0
        %v3277 = vpop.f32.mrf.mxu0
        %v3278 = vadd.f32 0.0, %v3277
        %v3279 = vpop.f32.mrf.mxu0
        %3280 = vmatprep.mubr.bf16.mxu0 0
        %3281 = vmatmul.mubr.bf16.gmra.mxu0 %v3131
        %v3282 = vpop.f32.mrf.mxu0
        %v3283 = vadd.f32 0.0, %v3282
        %v3284 = vpop.f32.mrf.mxu0
        %v3285 = vpop.f32.mrf.mxu0
        %v3286 = vadd.f32 0.0, %v3285
        %v3287 = vpop.f32.mrf.mxu0
        %3288 = vmatprep.mubr.bf16.mxu0 0
        %3289 = vmatmul.mubr.bf16.gmra.mxu0 %v3134
        %v3290 = vpop.f32.mrf.mxu0
        %v3291 = vadd.f32 0.0, %v3290
        %v3292 = vpop.f32.mrf.mxu0
        %v3293 = vpop.f32.mrf.mxu0
        %v3294 = vadd.f32 0.0, %v3293
        %v3295 = vpop.f32.mrf.mxu0
        %3296 = vdwg.mxu0
        %v3297 = vadd.f32 %v2999, %v3171
        %v3298 = vadd.f32 %v3000, %v3174
        %v3299 = vadd.f32 %v3001, %v3179
        %v3300 = vadd.f32 %v3002, %v3182
        %v3301 = vadd.f32 %v3003, %v3187
        %v3302 = vadd.f32 %v3004, %v3190
        %v3303 = vadd.f32 %v3005, %v3195
        %v3304 = vadd.f32 %v3006, %v3198
        %v3305 = vadd.f32 %v3007, %v3203
        %v3306 = vadd.f32 %v3008, %v3206
        %v3307 = vadd.f32 %v3009, %v3211
        %v3308 = vadd.f32 %v3010, %v3214
        %v3309 = vadd.f32 %v3011, %v3219
        %v3310 = vadd.f32 %v3012, %v3222
        %v3311 = vadd.f32 %v3013, %v3227
        %v3312 = vadd.f32 %v3014, %v3230
        %v3313 = vadd.f32 %v3015, %v3235
        %v3314 = vadd.f32 %v3016, %v3238
        %v3315 = vadd.f32 %v3017, %v3243
        %v3316 = vadd.f32 %v3018, %v3246
        %v3317 = vadd.f32 %v3019, %v3251
        %v3318 = vadd.f32 %v3020, %v3254
        %v3319 = vadd.f32 %v3021, %v3259
        %v3320 = vadd.f32 %v3022, %v3262
        %v3321 = vadd.f32 %v3023, %v3267
        %v3322 = vadd.f32 %v3024, %v3270
        %v3323 = vadd.f32 %v3025, %v3275
        %v3324 = vadd.f32 %v3026, %v3278
        %v3325 = vadd.f32 %v3027, %v3283
        %v3326 = vadd.f32 %v3028, %v3286
        %v3327 = vadd.f32 %v3029, %v3291
        %v3328 = vadd.f32 %v3030, %v3294
        %v3329 = vld [vmem:[#allocation2 + $0x19] sm:$0xff]
        %v3330 = vld [vmem:[#allocation2 + $0x21] sm:$0xff]
        %v3331 = vld [vmem:[#allocation2 + $0x29] sm:$0xff]
        %v3332 = vld [vmem:[#allocation2 + $0x31] sm:$0xff]
        %v3333 = vld [vmem:[#allocation2 + $0x39] sm:$0xff]
        %v3334 = vld [vmem:[#allocation2 + $0x41] sm:$0xff]
        %v3335 = vld [vmem:[#allocation2 + $0x49] sm:$0xff]
        %v3336 = vld [vmem:[#allocation2 + $0x51] sm:$0xff]
        %v3337 = vld [vmem:[#allocation2 + $0x59] sm:$0xff]
        %v3338 = vld [vmem:[#allocation2 + $0x61] sm:$0xff]
        %v3339 = vld [vmem:[#allocation2 + $0x69] sm:$0xff]
        %v3340 = vld [vmem:[#allocation2 + $0x71] sm:$0xff]
        %v3341 = vld [vmem:[#allocation2 + $0x79] sm:$0xff]
        %v3342 = vld [vmem:[#allocation2 + $0x81] sm:$0xff]
        %v3343 = vld [vmem:[#allocation2 + $0x89] sm:$0xff]
        %v3344 = vld [vmem:[#allocation2 + $0x91] sm:$0xff]
        %v3345 = vld [vmem:[#allocation2 + $0x99] sm:$0xff]
        %v3346 = vld [vmem:[#allocation2 + $0xa1] sm:$0xff]
        %v3347 = vld [vmem:[#allocation2 + $0xa9] sm:$0xff]
        %v3348 = vld [vmem:[#allocation2 + $0xb1] sm:$0xff]
        %v3349 = vld [vmem:[#allocation2 + $0xb9] sm:$0xff]
        %v3350 = vld [vmem:[#allocation2 + $0xc1] sm:$0xff]
        %v3351 = vld [vmem:[#allocation2 + $0xc9] sm:$0xff]
        %v3352 = vld [vmem:[#allocation2 + $0xd1] sm:$0xff]
        %v3353 = vld [vmem:[#allocation2 + $0xd9] sm:$0xff]
        %v3354 = vld [vmem:[#allocation2 + $0xe1] sm:$0xff]
        %v3355 = vld [vmem:[#allocation2 + $0xe9] sm:$0xff]
        %v3356 = vld [vmem:[#allocation2 + $0xf1] sm:$0xff]
        %v3357 = vld [vmem:[#allocation2 + $0xf9] sm:$0xff]
        %v3358 = vld [vmem:[#allocation2 + $0x101] sm:$0xff]
        %v3359 = vld [vmem:[#allocation2 + $0x109] sm:$0xff]
        %v3360 = vld [vmem:[#allocation2 + $0x111] sm:$0xff]
        %v3361 = vsel %vm2371, %v3329, 0.0
        %v3362 = vsel %vm2372, %v3330, 0.0
        %v3363 = vsel %vm2373, %v3331, 0.0
        %v3364 = vsel %vm2374, %v3332, 0.0
        %v3365 = vsel %vm2375, %v3333, 0.0
        %v3366 = vsel %vm2376, %v3334, 0.0
        %v3367 = vsel %vm2377, %v3335, 0.0
        %v3368 = vsel %vm2378, %v3336, 0.0
        %v3369 = vsel %vm2379, %v3337, 0.0
        %v3370 = vsel %vm2380, %v3338, 0.0
        %v3371 = vsel %vm2381, %v3339, 0.0
        %v3372 = vsel %vm2382, %v3340, 0.0
        %v3373 = vsel %vm2383, %v3341, 0.0
        %v3374 = vsel %vm2384, %v3342, 0.0
        %v3375 = vsel %vm2385, %v3343, 0.0
        %v3376 = vsel %vm2386, %v3344, 0.0
        %v3377 = vsel %vm2387, %v3345, 0.0
        %v3378 = vsel %vm2388, %v3346, 0.0
        %v3379 = vsel %vm2389, %v3347, 0.0
        %v3380 = vsel %vm2390, %v3348, 0.0
        %v3381 = vsel %vm2391, %v3349, 0.0
        %v3382 = vsel %vm2392, %v3350, 0.0
        %v3383 = vsel %vm2393, %v3351, 0.0
        %v3384 = vsel %vm2394, %v3352, 0.0
        %v3385 = vsel %vm2395, %v3353, 0.0
        %v3386 = vsel %vm2396, %v3354, 0.0
        %v3387 = vsel %vm2397, %v3355, 0.0
        %v3388 = vsel %vm2398, %v3356, 0.0
        %v3389 = vsel %vm2399, %v3357, 0.0
        %v3390 = vsel %vm2400, %v3358, 0.0
        %v3391 = vsel %vm2401, %v3359, 0.0
        %v3392 = vsel %vm2402, %v3360, 0.0
        %v3393 = vpack.c.bf16 %v3362, %v3361
        %v3394 = vpack.c.bf16 %v3364, %v3363
        %v3395 = vpack.c.bf16 %v3366, %v3365
        %v3396 = vpack.c.bf16 %v3368, %v3367
        %v3397 = vpack.c.bf16 %v3370, %v3369
        %v3398 = vpack.c.bf16 %v3372, %v3371
        %v3399 = vpack.c.bf16 %v3374, %v3373
        %v3400 = vpack.c.bf16 %v3376, %v3375
        %v3401 = vpack.c.bf16 %v3378, %v3377
        %v3402 = vpack.c.bf16 %v3380, %v3379
        %v3403 = vpack.c.bf16 %v3382, %v3381
        %v3404 = vpack.c.bf16 %v3384, %v3383
        %v3405 = vpack.c.bf16 %v3386, %v3385
        %v3406 = vpack.c.bf16 %v3388, %v3387
        %v3407 = vpack.c.bf16 %v3390, %v3389
        %v3408 = vpack.c.bf16 %v3392, %v3391
        %s3409 = scalar_lea.vmem %s4, 40
        %v3410 = vld [vmem:[%s3409] sm:$0xf]
        %v3411 = vld [vmem:[%s3409 + $0x4] sm:$0xf]
        %v3414 = vunpack.c.l.b16 %v3410
        %v3415 = vunpack.c.l.b16 %v3411
        %v3416 = vpack.c.b16 %v3415, %v3414
        %v3419 = vsel %vm1385, %v3393, 0
        %v3422 = vsel %vm1385, %v3394, 0
        %v3425 = vsel %vm1385, %v3395, 0
        %v3428 = vsel %vm1385, %v3396, 0
        %v3431 = vsel %vm1385, %v3397, 0
        %v3434 = vsel %vm1385, %v3398, 0
        %v3437 = vsel %vm1385, %v3399, 0
        %v3440 = vsel %vm1385, %v3400, 0
        %v3443 = vsel %vm1385, %v3401, 0
        %v3446 = vsel %vm1385, %v3402, 0
        %v3449 = vsel %vm1385, %v3403, 0
        %v3452 = vsel %vm1385, %v3404, 0
        %v3455 = vsel %vm1385, %v3405, 0
        %v3458 = vsel %vm1385, %v3406, 0
        %v3461 = vsel %vm1385, %v3407, 0
        %v3464 = vsel %vm1385, %v3408, 0
        %3466 = vmatprep.subr.bf16.mxu0 0
        %3467 = vmatpush1.bf16.msra.mxu0 0
        %3468 = vmatprep.subr.bf16.mxu0 0
        %3469 = vmatpush1.bf16.msra.mxu0 0
        %3470 = vmatprep.subr.bf16.mxu0 0
        %3471 = vmatpush1.bf16.msra.mxu0 0
        %3472 = vmatprep.subr.bf16.mxu0 0
        %3473 = vmatpush1.bf16.msra.mxu0 0
        %3474 = vmatprep.subr.bf16.mxu0 0
        %3475 = vmatpush1.bf16.msra.mxu0 0
        %3476 = vmatprep.subr.bf16.mxu0 0
        %3477 = vmatpush1.bf16.msra.mxu0 0
        %3478 = vmatprep.subr.bf16.mxu0 0
        %3479 = vmatpush1.bf16.msra.mxu0 0
        %3480 = vmatprep.subr.bf16.mxu0 0
        %3481 = vmatpush1.bf16.msra.mxu0 %v3416
        %3482 = vmatprep.subr.bf16.mxu0 0
        %3483 = vmatpush2.bf16.msra.mxu0 0
        %3484 = vmatprep.subr.bf16.mxu0 0
        %3485 = vmatpush2.bf16.msra.mxu0 0
        %3486 = vmatprep.subr.bf16.mxu0 0
        %3487 = vmatpush2.bf16.msra.mxu0 0
        %3488 = vmatprep.subr.bf16.mxu0 0
        %3489 = vmatpush2.bf16.msra.mxu0 0
        %3490 = vmatprep.subr.bf16.mxu0 0
        %3491 = vmatpush2.bf16.msra.mxu0 0
        %3492 = vmatprep.subr.bf16.mxu0 0
        %3493 = vmatpush2.bf16.msra.mxu0 0
        %3494 = vmatprep.subr.bf16.mxu0 0
        %3495 = vmatpush2.bf16.msra.mxu0 0
        %3496 = vmatprep.subr.bf16.mxu0 0
        %3497 = vmatpush2.bf16.msra.mxu0 0
        %3498 = vmatprep.mubr.bf16.mxu0 0
        %3499 = vmatmul.mubr.bf16.gmra.mxu0 %v3419
        %v3500 = vpop.f32.mrf.mxu0
        %v3501 = vadd.f32 0.0, %v3500
        %v3502 = vpop.f32.mrf.mxu0
        %v3503 = vpop.f32.mrf.mxu0
        %v3504 = vadd.f32 0.0, %v3503
        %v3505 = vpop.f32.mrf.mxu0
        %3506 = vmatprep.mubr.bf16.mxu0 0
        %3507 = vmatmul.mubr.bf16.gmra.mxu0 %v3422
        %v3508 = vpop.f32.mrf.mxu0
        %v3509 = vadd.f32 0.0, %v3508
        %v3510 = vpop.f32.mrf.mxu0
        %v3511 = vpop.f32.mrf.mxu0
        %v3512 = vadd.f32 0.0, %v3511
        %v3513 = vpop.f32.mrf.mxu0
        %3514 = vmatprep.mubr.bf16.mxu0 0
        %3515 = vmatmul.mubr.bf16.gmra.mxu0 %v3425
        %v3516 = vpop.f32.mrf.mxu0
        %v3517 = vadd.f32 0.0, %v3516
        %v3518 = vpop.f32.mrf.mxu0
        %v3519 = vpop.f32.mrf.mxu0
        %v3520 = vadd.f32 0.0, %v3519
        %v3521 = vpop.f32.mrf.mxu0
        %3522 = vmatprep.mubr.bf16.mxu0 0
        %3523 = vmatmul.mubr.bf16.gmra.mxu0 %v3428
        %v3524 = vpop.f32.mrf.mxu0
        %v3525 = vadd.f32 0.0, %v3524
        %v3526 = vpop.f32.mrf.mxu0
        %v3527 = vpop.f32.mrf.mxu0
        %v3528 = vadd.f32 0.0, %v3527
        %v3529 = vpop.f32.mrf.mxu0
        %3530 = vmatprep.mubr.bf16.mxu0 0
        %3531 = vmatmul.mubr.bf16.gmra.mxu0 %v3431
        %v3532 = vpop.f32.mrf.mxu0
        %v3533 = vadd.f32 0.0, %v3532
        %v3534 = vpop.f32.mrf.mxu0
        %v3535 = vpop.f32.mrf.mxu0
        %v3536 = vadd.f32 0.0, %v3535
        %v3537 = vpop.f32.mrf.mxu0
        %3538 = vmatprep.mubr.bf16.mxu0 0
        %3539 = vmatmul.mubr.bf16.gmra.mxu0 %v3434
        %v3540 = vpop.f32.mrf.mxu0
        %v3541 = vadd.f32 0.0, %v3540
        %v3542 = vpop.f32.mrf.mxu0
        %v3543 = vpop.f32.mrf.mxu0
        %v3544 = vadd.f32 0.0, %v3543
        %v3545 = vpop.f32.mrf.mxu0
        %3546 = vmatprep.mubr.bf16.mxu0 0
        %3547 = vmatmul.mubr.bf16.gmra.mxu0 %v3437
        %v3548 = vpop.f32.mrf.mxu0
        %v3549 = vadd.f32 0.0, %v3548
        %v3550 = vpop.f32.mrf.mxu0
        %v3551 = vpop.f32.mrf.mxu0
        %v3552 = vadd.f32 0.0, %v3551
        %v3553 = vpop.f32.mrf.mxu0
        %3554 = vmatprep.mubr.bf16.mxu0 0
        %3555 = vmatmul.mubr.bf16.gmra.mxu0 %v3440
        %v3556 = vpop.f32.mrf.mxu0
        %v3557 = vadd.f32 0.0, %v3556
        %v3558 = vpop.f32.mrf.mxu0
        %v3559 = vpop.f32.mrf.mxu0
        %v3560 = vadd.f32 0.0, %v3559
        %v3561 = vpop.f32.mrf.mxu0
        %3562 = vmatprep.mubr.bf16.mxu0 0
        %3563 = vmatmul.mubr.bf16.gmra.mxu0 %v3443
        %v3564 = vpop.f32.mrf.mxu0
        %v3565 = vadd.f32 0.0, %v3564
        %v3566 = vpop.f32.mrf.mxu0
        %v3567 = vpop.f32.mrf.mxu0
        %v3568 = vadd.f32 0.0, %v3567
        %v3569 = vpop.f32.mrf.mxu0
        %3570 = vmatprep.mubr.bf16.mxu0 0
        %3571 = vmatmul.mubr.bf16.gmra.mxu0 %v3446
        %v3572 = vpop.f32.mrf.mxu0
        %v3573 = vadd.f32 0.0, %v3572
        %v3574 = vpop.f32.mrf.mxu0
        %v3575 = vpop.f32.mrf.mxu0
        %v3576 = vadd.f32 0.0, %v3575
        %v3577 = vpop.f32.mrf.mxu0
        %3578 = vmatprep.mubr.bf16.mxu0 0
        %3579 = vmatmul.mubr.bf16.gmra.mxu0 %v3449
        %v3580 = vpop.f32.mrf.mxu0
        %v3581 = vadd.f32 0.0, %v3580
        %v3582 = vpop.f32.mrf.mxu0
        %v3583 = vpop.f32.mrf.mxu0
        %v3584 = vadd.f32 0.0, %v3583
        %v3585 = vpop.f32.mrf.mxu0
        %3586 = vmatprep.mubr.bf16.mxu0 0
        %3587 = vmatmul.mubr.bf16.gmra.mxu0 %v3452
        %v3588 = vpop.f32.mrf.mxu0
        %v3589 = vadd.f32 0.0, %v3588
        %v3590 = vpop.f32.mrf.mxu0
        %v3591 = vpop.f32.mrf.mxu0
        %v3592 = vadd.f32 0.0, %v3591
        %v3593 = vpop.f32.mrf.mxu0
        %3594 = vmatprep.mubr.bf16.mxu0 0
        %3595 = vmatmul.mubr.bf16.gmra.mxu0 %v3455
        %v3596 = vpop.f32.mrf.mxu0
        %v3597 = vadd.f32 0.0, %v3596
        %v3598 = vpop.f32.mrf.mxu0
        %v3599 = vpop.f32.mrf.mxu0
        %v3600 = vadd.f32 0.0, %v3599
        %v3601 = vpop.f32.mrf.mxu0
        %3602 = vmatprep.mubr.bf16.mxu0 0
        %3603 = vmatmul.mubr.bf16.gmra.mxu0 %v3458
        %v3604 = vpop.f32.mrf.mxu0
        %v3605 = vadd.f32 0.0, %v3604
        %v3606 = vpop.f32.mrf.mxu0
        %v3607 = vpop.f32.mrf.mxu0
        %v3608 = vadd.f32 0.0, %v3607
        %v3609 = vpop.f32.mrf.mxu0
        %3610 = vmatprep.mubr.bf16.mxu0 0
        %3611 = vmatmul.mubr.bf16.gmra.mxu0 %v3461
        %v3612 = vpop.f32.mrf.mxu0
        %v3613 = vadd.f32 0.0, %v3612
        %v3614 = vpop.f32.mrf.mxu0
        %v3615 = vpop.f32.mrf.mxu0
        %v3616 = vadd.f32 0.0, %v3615
        %v3617 = vpop.f32.mrf.mxu0
        %3618 = vmatprep.mubr.bf16.mxu0 0
        %3619 = vmatmul.mubr.bf16.gmra.mxu0 %v3464
        %v3620 = vpop.f32.mrf.mxu0
        %v3621 = vadd.f32 0.0, %v3620
        %v3622 = vpop.f32.mrf.mxu0
        %v3623 = vpop.f32.mrf.mxu0
        %v3624 = vadd.f32 0.0, %v3623
        %v3625 = vpop.f32.mrf.mxu0
        %3626 = vdwg.mxu0
        %v3627 = vadd.f32 %v3297, %v3501
        %v3628 = vadd.f32 %v3298, %v3504
        %v3629 = vadd.f32 %v3299, %v3509
        %v3630 = vadd.f32 %v3300, %v3512
        %v3631 = vadd.f32 %v3301, %v3517
        %v3632 = vadd.f32 %v3302, %v3520
        %v3633 = vadd.f32 %v3303, %v3525
        %v3634 = vadd.f32 %v3304, %v3528
        %v3635 = vadd.f32 %v3305, %v3533
        %v3636 = vadd.f32 %v3306, %v3536
        %v3637 = vadd.f32 %v3307, %v3541
        %v3638 = vadd.f32 %v3308, %v3544
        %v3639 = vadd.f32 %v3309, %v3549
        %v3640 = vadd.f32 %v3310, %v3552
        %v3641 = vadd.f32 %v3311, %v3557
        %v3642 = vadd.f32 %v3312, %v3560
        %v3643 = vadd.f32 %v3313, %v3565
        %v3644 = vadd.f32 %v3314, %v3568
        %v3645 = vadd.f32 %v3315, %v3573
        %v3646 = vadd.f32 %v3316, %v3576
        %v3647 = vadd.f32 %v3317, %v3581
        %v3648 = vadd.f32 %v3318, %v3584
        %v3649 = vadd.f32 %v3319, %v3589
        %v3650 = vadd.f32 %v3320, %v3592
        %v3651 = vadd.f32 %v3321, %v3597
        %v3652 = vadd.f32 %v3322, %v3600
        %v3653 = vadd.f32 %v3323, %v3605
        %v3654 = vadd.f32 %v3324, %v3608
        %v3655 = vadd.f32 %v3325, %v3613
        %v3656 = vadd.f32 %v3326, %v3616
        %v3657 = vadd.f32 %v3327, %v3621
        %v3658 = vadd.f32 %v3328, %v3624
        %v3659 = vld [vmem:[#allocation2 + $0x27] sm:$0xff]
        %v3660 = vld [vmem:[#allocation2 + $0x2f] sm:$0xff]
        %v3661 = vld [vmem:[#allocation2 + $0x37] sm:$0xff]
        %v3662 = vld [vmem:[#allocation2 + $0x3f] sm:$0xff]
        %v3663 = vld [vmem:[#allocation2 + $0x47] sm:$0xff]
        %v3664 = vld [vmem:[#allocation2 + $0x4f] sm:$0xff]
        %v3665 = vld [vmem:[#allocation2 + $0x57] sm:$0xff]
        %v3666 = vld [vmem:[#allocation2 + $0x5f] sm:$0xff]
        %v3667 = vld [vmem:[#allocation2 + $0x67] sm:$0xff]
        %v3668 = vld [vmem:[#allocation2 + $0x6f] sm:$0xff]
        %v3669 = vld [vmem:[#allocation2 + $0x77] sm:$0xff]
        %v3670 = vld [vmem:[#allocation2 + $0x7f] sm:$0xff]
        %v3671 = vld [vmem:[#allocation2 + $0x87] sm:$0xff]
        %v3672 = vld [vmem:[#allocation2 + $0x8f] sm:$0xff]
        %v3673 = vld [vmem:[#allocation2 + $0x97] sm:$0xff]
        %v3674 = vld [vmem:[#allocation2 + $0x9f] sm:$0xff]
        %v3675 = vld [vmem:[#allocation2 + $0xa7] sm:$0xff]
        %v3676 = vld [vmem:[#allocation2 + $0xaf] sm:$0xff]
        %v3677 = vld [vmem:[#allocation2 + $0xb7] sm:$0xff]
        %v3678 = vld [vmem:[#allocation2 + $0xbf] sm:$0xff]
        %v3679 = vld [vmem:[#allocation2 + $0xc7] sm:$0xff]
        %v3680 = vld [vmem:[#allocation2 + $0xcf] sm:$0xff]
        %v3681 = vld [vmem:[#allocation2 + $0xd7] sm:$0xff]
        %v3682 = vld [vmem:[#allocation2 + $0xdf] sm:$0xff]
        %v3683 = vld [vmem:[#allocation2 + $0xe7] sm:$0xff]
        %v3684 = vld [vmem:[#allocation2 + $0xef] sm:$0xff]
        %v3685 = vld [vmem:[#allocation2 + $0xf7] sm:$0xff]
        %v3686 = vld [vmem:[#allocation2 + $0xff] sm:$0xff]
        %v3687 = vld [vmem:[#allocation2 + $0x107] sm:$0xff]
        %v3688 = vld [vmem:[#allocation2 + $0x10f] sm:$0xff]
        %v3689 = vld [vmem:[#allocation2 + $0x117] sm:$0xff]
        %v3690 = vld [vmem:[#allocation2 + $0x11f] sm:$0xff]
        %v3691 = vsel %vm1616, %v3659, 0.0
        %v3692 = vsel %vm1617, %v3660, 0.0
        %v3693 = vsel %vm1618, %v3661, 0.0
        %v3694 = vsel %vm1619, %v3662, 0.0
        %v3695 = vsel %vm1620, %v3663, 0.0
        %v3696 = vsel %vm1621, %v3664, 0.0
        %v3697 = vsel %vm1622, %v3665, 0.0
        %v3698 = vsel %vm1623, %v3666, 0.0
        %v3699 = vsel %vm1624, %v3667, 0.0
        %v3700 = vsel %vm1625, %v3668, 0.0
        %v3701 = vsel %vm1626, %v3669, 0.0
        %v3702 = vsel %vm1627, %v3670, 0.0
        %v3703 = vsel %vm1628, %v3671, 0.0
        %v3704 = vsel %vm1629, %v3672, 0.0
        %v3705 = vsel %vm1630, %v3673, 0.0
        %v3706 = vsel %vm1631, %v3674, 0.0
        %v3707 = vsel %vm1632, %v3675, 0.0
        %v3708 = vsel %vm1633, %v3676, 0.0
        %v3709 = vsel %vm1634, %v3677, 0.0
        %v3710 = vsel %vm1635, %v3678, 0.0
        %v3711 = vsel %vm1636, %v3679, 0.0
        %v3712 = vsel %vm1637, %v3680, 0.0
        %v3713 = vsel %vm1638, %v3681, 0.0
        %v3714 = vsel %vm1639, %v3682, 0.0
        %v3715 = vsel %vm1640, %v3683, 0.0
        %v3716 = vsel %vm1641, %v3684, 0.0
        %v3717 = vsel %vm1642, %v3685, 0.0
        %v3718 = vsel %vm1643, %v3686, 0.0
        %v3719 = vsel %vm1644, %v3687, 0.0
        %v3720 = vsel %vm1645, %v3688, 0.0
        %v3721 = vsel %vm1646, %v3689, 0.0
        %v3722 = vsel %vm1647, %v3690, 0.0
        %v3723 = vpack.c.bf16 %v3692, %v3691
        %v3724 = vpack.c.bf16 %v3694, %v3693
        %v3725 = vpack.c.bf16 %v3696, %v3695
        %v3726 = vpack.c.bf16 %v3698, %v3697
        %v3727 = vpack.c.bf16 %v3700, %v3699
        %v3728 = vpack.c.bf16 %v3702, %v3701
        %v3729 = vpack.c.bf16 %v3704, %v3703
        %v3730 = vpack.c.bf16 %v3706, %v3705
        %v3731 = vpack.c.bf16 %v3708, %v3707
        %v3732 = vpack.c.bf16 %v3710, %v3709
        %v3733 = vpack.c.bf16 %v3712, %v3711
        %v3734 = vpack.c.bf16 %v3714, %v3713
        %v3735 = vpack.c.bf16 %v3716, %v3715
        %v3736 = vpack.c.bf16 %v3718, %v3717
        %v3737 = vpack.c.bf16 %v3720, %v3719
        %v3738 = vpack.c.bf16 %v3722, %v3721
        %s3739 = scalar_lea.vmem %s4, 48
        %v3740 = vld [vmem:[%s3739] sm:$0xf]
        %v3741 = vld [vmem:[%s3739 + $0x4] sm:$0xf]
        %v3744 = vunpack.c.l.b16 %v3740
        %v3745 = vunpack.c.l.b16 %v3741
        %v3746 = vpack.c.b16 %v3745, %v3744
        %v3749 = vsel %vm1385, %v3723, 0
        %v3752 = vsel %vm1385, %v3724, 0
        %v3755 = vsel %vm1385, %v3725, 0
        %v3758 = vsel %vm1385, %v3726, 0
        %v3761 = vsel %vm1385, %v3727, 0
        %v3764 = vsel %vm1385, %v3728, 0
        %v3767 = vsel %vm1385, %v3729, 0
        %v3770 = vsel %vm1385, %v3730, 0
        %v3773 = vsel %vm1385, %v3731, 0
        %v3776 = vsel %vm1385, %v3732, 0
        %v3779 = vsel %vm1385, %v3733, 0
        %v3782 = vsel %vm1385, %v3734, 0
        %v3785 = vsel %vm1385, %v3735, 0
        %v3788 = vsel %vm1385, %v3736, 0
        %v3791 = vsel %vm1385, %v3737, 0
        %v3794 = vsel %vm1385, %v3738, 0
        %3796 = vmatprep.subr.bf16.mxu0 0
        %3797 = vmatpush1.bf16.msra.mxu0 0
        %3798 = vmatprep.subr.bf16.mxu0 0
        %3799 = vmatpush1.bf16.msra.mxu0 0
        %3800 = vmatprep.subr.bf16.mxu0 0
        %3801 = vmatpush1.bf16.msra.mxu0 0
        %3802 = vmatprep.subr.bf16.mxu0 0
        %3803 = vmatpush1.bf16.msra.mxu0 0
        %3804 = vmatprep.subr.bf16.mxu0 0
        %3805 = vmatpush1.bf16.msra.mxu0 0
        %3806 = vmatprep.subr.bf16.mxu0 0
        %3807 = vmatpush1.bf16.msra.mxu0 0
        %3808 = vmatprep.subr.bf16.mxu0 0
        %3809 = vmatpush1.bf16.msra.mxu0 0
        %3810 = vmatprep.subr.bf16.mxu0 0
        %3811 = vmatpush1.bf16.msra.mxu0 %v3746
        %3812 = vmatprep.subr.bf16.mxu0 0
        %3813 = vmatpush2.bf16.msra.mxu0 0
        %3814 = vmatprep.subr.bf16.mxu0 0
        %3815 = vmatpush2.bf16.msra.mxu0 0
        %3816 = vmatprep.subr.bf16.mxu0 0
        %3817 = vmatpush2.bf16.msra.mxu0 0
        %3818 = vmatprep.subr.bf16.mxu0 0
        %3819 = vmatpush2.bf16.msra.mxu0 0
        %3820 = vmatprep.subr.bf16.mxu0 0
        %3821 = vmatpush2.bf16.msra.mxu0 0
        %3822 = vmatprep.subr.bf16.mxu0 0
        %3823 = vmatpush2.bf16.msra.mxu0 0
        %3824 = vmatprep.subr.bf16.mxu0 0
        %3825 = vmatpush2.bf16.msra.mxu0 0
        %3826 = vmatprep.subr.bf16.mxu0 0
        %3827 = vmatpush2.bf16.msra.mxu0 0
        %3828 = vmatprep.mubr.bf16.mxu0 0
        %3829 = vmatmul.mubr.bf16.gmra.mxu0 %v3749
        %v3830 = vpop.f32.mrf.mxu0
        %v3831 = vadd.f32 0.0, %v3830
        %v3832 = vpop.f32.mrf.mxu0
        %v3833 = vpop.f32.mrf.mxu0
        %v3834 = vadd.f32 0.0, %v3833
        %v3835 = vpop.f32.mrf.mxu0
        %3836 = vmatprep.mubr.bf16.mxu0 0
        %3837 = vmatmul.mubr.bf16.gmra.mxu0 %v3752
        %v3838 = vpop.f32.mrf.mxu0
        %v3839 = vadd.f32 0.0, %v3838
        %v3840 = vpop.f32.mrf.mxu0
        %v3841 = vpop.f32.mrf.mxu0
        %v3842 = vadd.f32 0.0, %v3841
        %v3843 = vpop.f32.mrf.mxu0
        %3844 = vmatprep.mubr.bf16.mxu0 0
        %3845 = vmatmul.mubr.bf16.gmra.mxu0 %v3755
        %v3846 = vpop.f32.mrf.mxu0
        %v3847 = vadd.f32 0.0, %v3846
        %v3848 = vpop.f32.mrf.mxu0
        %v3849 = vpop.f32.mrf.mxu0
        %v3850 = vadd.f32 0.0, %v3849
        %v3851 = vpop.f32.mrf.mxu0
        %3852 = vmatprep.mubr.bf16.mxu0 0
        %3853 = vmatmul.mubr.bf16.gmra.mxu0 %v3758
        %v3854 = vpop.f32.mrf.mxu0
        %v3855 = vadd.f32 0.0, %v3854
        %v3856 = vpop.f32.mrf.mxu0
        %v3857 = vpop.f32.mrf.mxu0
        %v3858 = vadd.f32 0.0, %v3857
        %v3859 = vpop.f32.mrf.mxu0
        %3860 = vmatprep.mubr.bf16.mxu0 0
        %3861 = vmatmul.mubr.bf16.gmra.mxu0 %v3761
        %v3862 = vpop.f32.mrf.mxu0
        %v3863 = vadd.f32 0.0, %v3862
        %v3864 = vpop.f32.mrf.mxu0
        %v3865 = vpop.f32.mrf.mxu0
        %v3866 = vadd.f32 0.0, %v3865
        %v3867 = vpop.f32.mrf.mxu0
        %3868 = vmatprep.mubr.bf16.mxu0 0
        %3869 = vmatmul.mubr.bf16.gmra.mxu0 %v3764
        %v3870 = vpop.f32.mrf.mxu0
        %v3871 = vadd.f32 0.0, %v3870
        %v3872 = vpop.f32.mrf.mxu0
        %v3873 = vpop.f32.mrf.mxu0
        %v3874 = vadd.f32 0.0, %v3873
        %v3875 = vpop.f32.mrf.mxu0
        %3876 = vmatprep.mubr.bf16.mxu0 0
        %3877 = vmatmul.mubr.bf16.gmra.mxu0 %v3767
        %v3878 = vpop.f32.mrf.mxu0
        %v3879 = vadd.f32 0.0, %v3878
        %v3880 = vpop.f32.mrf.mxu0
        %v3881 = vpop.f32.mrf.mxu0
        %v3882 = vadd.f32 0.0, %v3881
        %v3883 = vpop.f32.mrf.mxu0
        %3884 = vmatprep.mubr.bf16.mxu0 0
        %3885 = vmatmul.mubr.bf16.gmra.mxu0 %v3770
        %v3886 = vpop.f32.mrf.mxu0
        %v3887 = vadd.f32 0.0, %v3886
        %v3888 = vpop.f32.mrf.mxu0
        %v3889 = vpop.f32.mrf.mxu0
        %v3890 = vadd.f32 0.0, %v3889
        %v3891 = vpop.f32.mrf.mxu0
        %3892 = vmatprep.mubr.bf16.mxu0 0
        %3893 = vmatmul.mubr.bf16.gmra.mxu0 %v3773
        %v3894 = vpop.f32.mrf.mxu0
        %v3895 = vadd.f32 0.0, %v3894
        %v3896 = vpop.f32.mrf.mxu0
        %v3897 = vpop.f32.mrf.mxu0
        %v3898 = vadd.f32 0.0, %v3897
        %v3899 = vpop.f32.mrf.mxu0
        %3900 = vmatprep.mubr.bf16.mxu0 0
        %3901 = vmatmul.mubr.bf16.gmra.mxu0 %v3776
        %v3902 = vpop.f32.mrf.mxu0
        %v3903 = vadd.f32 0.0, %v3902
        %v3904 = vpop.f32.mrf.mxu0
        %v3905 = vpop.f32.mrf.mxu0
        %v3906 = vadd.f32 0.0, %v3905
        %v3907 = vpop.f32.mrf.mxu0
        %3908 = vmatprep.mubr.bf16.mxu0 0
        %3909 = vmatmul.mubr.bf16.gmra.mxu0 %v3779
        %v3910 = vpop.f32.mrf.mxu0
        %v3911 = vadd.f32 0.0, %v3910
        %v3912 = vpop.f32.mrf.mxu0
        %v3913 = vpop.f32.mrf.mxu0
        %v3914 = vadd.f32 0.0, %v3913
        %v3915 = vpop.f32.mrf.mxu0
        %3916 = vmatprep.mubr.bf16.mxu0 0
        %3917 = vmatmul.mubr.bf16.gmra.mxu0 %v3782
        %v3918 = vpop.f32.mrf.mxu0
        %v3919 = vadd.f32 0.0, %v3918
        %v3920 = vpop.f32.mrf.mxu0
        %v3921 = vpop.f32.mrf.mxu0
        %v3922 = vadd.f32 0.0, %v3921
        %v3923 = vpop.f32.mrf.mxu0
        %3924 = vmatprep.mubr.bf16.mxu0 0
        %3925 = vmatmul.mubr.bf16.gmra.mxu0 %v3785
        %v3926 = vpop.f32.mrf.mxu0
        %v3927 = vadd.f32 0.0, %v3926
        %v3928 = vpop.f32.mrf.mxu0
        %v3929 = vpop.f32.mrf.mxu0
        %v3930 = vadd.f32 0.0, %v3929
        %v3931 = vpop.f32.mrf.mxu0
        %3932 = vmatprep.mubr.bf16.mxu0 0
        %3933 = vmatmul.mubr.bf16.gmra.mxu0 %v3788
        %v3934 = vpop.f32.mrf.mxu0
        %v3935 = vadd.f32 0.0, %v3934
        %v3936 = vpop.f32.mrf.mxu0
        %v3937 = vpop.f32.mrf.mxu0
        %v3938 = vadd.f32 0.0, %v3937
        %v3939 = vpop.f32.mrf.mxu0
        %3940 = vmatprep.mubr.bf16.mxu0 0
        %3941 = vmatmul.mubr.bf16.gmra.mxu0 %v3791
        %v3942 = vpop.f32.mrf.mxu0
        %v3943 = vadd.f32 0.0, %v3942
        %v3944 = vpop.f32.mrf.mxu0
        %v3945 = vpop.f32.mrf.mxu0
        %v3946 = vadd.f32 0.0, %v3945
        %v3947 = vpop.f32.mrf.mxu0
        %3948 = vmatprep.mubr.bf16.mxu0 0
        %3949 = vmatmul.mubr.bf16.gmra.mxu0 %v3794
        %v3950 = vpop.f32.mrf.mxu0
        %v3951 = vadd.f32 0.0, %v3950
        %v3952 = vpop.f32.mrf.mxu0
        %v3953 = vpop.f32.mrf.mxu0
        %v3954 = vadd.f32 0.0, %v3953
        %v3955 = vpop.f32.mrf.mxu0
        %3956 = vdwg.mxu0
        %v3957 = vadd.f32 %v3627, %v3831
        %v3958 = vadd.f32 %v3628, %v3834
        %v3959 = vadd.f32 %v3629, %v3839
        %v3960 = vadd.f32 %v3630, %v3842
        %v3961 = vadd.f32 %v3631, %v3847
        %v3962 = vadd.f32 %v3632, %v3850
        %v3963 = vadd.f32 %v3633, %v3855
        %v3964 = vadd.f32 %v3634, %v3858
        %v3965 = vadd.f32 %v3635, %v3863
        %v3966 = vadd.f32 %v3636, %v3866
        %v3967 = vadd.f32 %v3637, %v3871
        %v3968 = vadd.f32 %v3638, %v3874
        %v3969 = vadd.f32 %v3639, %v3879
        %v3970 = vadd.f32 %v3640, %v3882
        %v3971 = vadd.f32 %v3641, %v3887
        %v3972 = vadd.f32 %v3642, %v3890
        %v3973 = vadd.f32 %v3643, %v3895
        %v3974 = vadd.f32 %v3644, %v3898
        %v3975 = vadd.f32 %v3645, %v3903
        %v3976 = vadd.f32 %v3646, %v3906
        %v3977 = vadd.f32 %v3647, %v3911
        %v3978 = vadd.f32 %v3648, %v3914
        %v3979 = vadd.f32 %v3649, %v3919
        %v3980 = vadd.f32 %v3650, %v3922
        %v3981 = vadd.f32 %v3651, %v3927
        %v3982 = vadd.f32 %v3652, %v3930
        %v3983 = vadd.f32 %v3653, %v3935
        %v3984 = vadd.f32 %v3654, %v3938
        %v3985 = vadd.f32 %v3655, %v3943
        %v3986 = vadd.f32 %v3656, %v3946
        %v3987 = vadd.f32 %v3657, %v3951
        %v3988 = vadd.f32 %v3658, %v3954
        %v3989 = vld [vmem:[#allocation2 + $0x28] sm:$0xff]
        %v3990 = vld [vmem:[#allocation2 + $0x30] sm:$0xff]
        %v3991 = vld [vmem:[#allocation2 + $0x38] sm:$0xff]
        %v3992 = vld [vmem:[#allocation2 + $0x40] sm:$0xff]
        %v3993 = vld [vmem:[#allocation2 + $0x48] sm:$0xff]
        %v3994 = vld [vmem:[#allocation2 + $0x50] sm:$0xff]
        %v3995 = vld [vmem:[#allocation2 + $0x58] sm:$0xff]
        %v3996 = vld [vmem:[#allocation2 + $0x60] sm:$0xff]
        %v3997 = vld [vmem:[#allocation2 + $0x68] sm:$0xff]
        %v3998 = vld [vmem:[#allocation2 + $0x70] sm:$0xff]
        %v3999 = vld [vmem:[#allocation2 + $0x78] sm:$0xff]
        %v4000 = vld [vmem:[#allocation2 + $0x80] sm:$0xff]
        %v4001 = vld [vmem:[#allocation2 + $0x88] sm:$0xff]
        %v4002 = vld [vmem:[#allocation2 + $0x90] sm:$0xff]
        %v4003 = vld [vmem:[#allocation2 + $0x98] sm:$0xff]
        %v4004 = vld [vmem:[#allocation2 + $0xa0] sm:$0xff]
        %v4005 = vld [vmem:[#allocation2 + $0xa8] sm:$0xff]
        %v4006 = vld [vmem:[#allocation2 + $0xb0] sm:$0xff]
        %v4007 = vld [vmem:[#allocation2 + $0xb8] sm:$0xff]
        %v4008 = vld [vmem:[#allocation2 + $0xc0] sm:$0xff]
        %v4009 = vld [vmem:[#allocation2 + $0xc8] sm:$0xff]
        %v4010 = vld [vmem:[#allocation2 + $0xd0] sm:$0xff]
        %v4011 = vld [vmem:[#allocation2 + $0xd8] sm:$0xff]
        %v4012 = vld [vmem:[#allocation2 + $0xe0] sm:$0xff]
        %v4013 = vld [vmem:[#allocation2 + $0xe8] sm:$0xff]
        %v4014 = vld [vmem:[#allocation2 + $0xf0] sm:$0xff]
        %v4015 = vld [vmem:[#allocation2 + $0xf8] sm:$0xff]
        %v4016 = vld [vmem:[#allocation2 + $0x100] sm:$0xff]
        %v4017 = vld [vmem:[#allocation2 + $0x108] sm:$0xff]
        %v4018 = vld [vmem:[#allocation2 + $0x110] sm:$0xff]
        %v4019 = vld [vmem:[#allocation2 + $0x118] sm:$0xff]
        %v4020 = vld [vmem:[#allocation2 + $0x120] sm:$0xff]
        %v4021 = vpack.c.bf16 %v3990, %v3989
        %v4022 = vpack.c.bf16 %v3992, %v3991
        %v4023 = vpack.c.bf16 %v3994, %v3993
        %v4024 = vpack.c.bf16 %v3996, %v3995
        %v4025 = vpack.c.bf16 %v3998, %v3997
        %v4026 = vpack.c.bf16 %v4000, %v3999
        %v4027 = vpack.c.bf16 %v4002, %v4001
        %v4028 = vpack.c.bf16 %v4004, %v4003
        %v4029 = vpack.c.bf16 %v4006, %v4005
        %v4030 = vpack.c.bf16 %v4008, %v4007
        %v4031 = vpack.c.bf16 %v4010, %v4009
        %v4032 = vpack.c.bf16 %v4012, %v4011
        %v4033 = vpack.c.bf16 %v4014, %v4013
        %v4034 = vpack.c.bf16 %v4016, %v4015
        %v4035 = vpack.c.bf16 %v4018, %v4017
        %v4036 = vpack.c.bf16 %v4020, %v4019
        %s4037 = scalar_lea.vmem %s4, 56
        %v4038 = vld [vmem:[%s4037] sm:$0xf]
        %v4039 = vld [vmem:[%s4037 + $0x4] sm:$0xf]
        %v4042 = vunpack.c.l.b16 %v4038
        %v4043 = vunpack.c.l.b16 %v4039
        %v4044 = vpack.c.b16 %v4043, %v4042
        %v4047 = vsel %vm1385, %v4021, 0
        %v4050 = vsel %vm1385, %v4022, 0
        %v4053 = vsel %vm1385, %v4023, 0
        %v4056 = vsel %vm1385, %v4024, 0
        %v4059 = vsel %vm1385, %v4025, 0
        %v4062 = vsel %vm1385, %v4026, 0
        %v4065 = vsel %vm1385, %v4027, 0
        %v4068 = vsel %vm1385, %v4028, 0
        %v4071 = vsel %vm1385, %v4029, 0
        %v4074 = vsel %vm1385, %v4030, 0
        %v4077 = vsel %vm1385, %v4031, 0
        %v4080 = vsel %vm1385, %v4032, 0
        %v4083 = vsel %vm1385, %v4033, 0
        %v4086 = vsel %vm1385, %v4034, 0
        %v4089 = vsel %vm1385, %v4035, 0
        %v4092 = vsel %vm1385, %v4036, 0
        %4094 = vmatprep.subr.bf16.mxu0 0
        %4095 = vmatpush1.bf16.msra.mxu0 0
        %4096 = vmatprep.subr.bf16.mxu0 0
        %4097 = vmatpush1.bf16.msra.mxu0 0
        %4098 = vmatprep.subr.bf16.mxu0 0
        %4099 = vmatpush1.bf16.msra.mxu0 0
        %4100 = vmatprep.subr.bf16.mxu0 0
        %4101 = vmatpush1.bf16.msra.mxu0 0
        %4102 = vmatprep.subr.bf16.mxu0 0
        %4103 = vmatpush1.bf16.msra.mxu0 0
        %4104 = vmatprep.subr.bf16.mxu0 0
        %4105 = vmatpush1.bf16.msra.mxu0 0
        %4106 = vmatprep.subr.bf16.mxu0 0
        %4107 = vmatpush1.bf16.msra.mxu0 0
        %4108 = vmatprep.subr.bf16.mxu0 0
        %4109 = vmatpush1.bf16.msra.mxu0 %v4044
        %4110 = vmatprep.subr.bf16.mxu0 0
        %4111 = vmatpush2.bf16.msra.mxu0 0
        %4112 = vmatprep.subr.bf16.mxu0 0
        %4113 = vmatpush2.bf16.msra.mxu0 0
        %4114 = vmatprep.subr.bf16.mxu0 0
        %4115 = vmatpush2.bf16.msra.mxu0 0
        %4116 = vmatprep.subr.bf16.mxu0 0
        %4117 = vmatpush2.bf16.msra.mxu0 0
        %4118 = vmatprep.subr.bf16.mxu0 0
        %4119 = vmatpush2.bf16.msra.mxu0 0
        %4120 = vmatprep.subr.bf16.mxu0 0
        %4121 = vmatpush2.bf16.msra.mxu0 0
        %4122 = vmatprep.subr.bf16.mxu0 0
        %4123 = vmatpush2.bf16.msra.mxu0 0
        %4124 = vmatprep.subr.bf16.mxu0 0
        %4125 = vmatpush2.bf16.msra.mxu0 0
        %4126 = vmatprep.mubr.bf16.mxu0 0
        %4127 = vmatmul.mubr.bf16.gmra.mxu0 %v4047
        %v4128 = vpop.f32.mrf.mxu0
        %v4129 = vadd.f32 0.0, %v4128
        %v4130 = vpop.f32.mrf.mxu0
        %v4131 = vpop.f32.mrf.mxu0
        %v4132 = vadd.f32 0.0, %v4131
        %v4133 = vpop.f32.mrf.mxu0
        %4134 = vmatprep.mubr.bf16.mxu0 0
        %4135 = vmatmul.mubr.bf16.gmra.mxu0 %v4050
        %v4136 = vpop.f32.mrf.mxu0
        %v4137 = vadd.f32 0.0, %v4136
        %v4138 = vpop.f32.mrf.mxu0
        %v4139 = vpop.f32.mrf.mxu0
        %v4140 = vadd.f32 0.0, %v4139
        %v4141 = vpop.f32.mrf.mxu0
        %4142 = vmatprep.mubr.bf16.mxu0 0
        %4143 = vmatmul.mubr.bf16.gmra.mxu0 %v4053
        %v4144 = vpop.f32.mrf.mxu0
        %v4145 = vadd.f32 0.0, %v4144
        %v4146 = vpop.f32.mrf.mxu0
        %v4147 = vpop.f32.mrf.mxu0
        %v4148 = vadd.f32 0.0, %v4147
        %v4149 = vpop.f32.mrf.mxu0
        %4150 = vmatprep.mubr.bf16.mxu0 0
        %4151 = vmatmul.mubr.bf16.gmra.mxu0 %v4056
        %v4152 = vpop.f32.mrf.mxu0
        %v4153 = vadd.f32 0.0, %v4152
        %v4154 = vpop.f32.mrf.mxu0
        %v4155 = vpop.f32.mrf.mxu0
        %v4156 = vadd.f32 0.0, %v4155
        %v4157 = vpop.f32.mrf.mxu0
        %4158 = vmatprep.mubr.bf16.mxu0 0
        %4159 = vmatmul.mubr.bf16.gmra.mxu0 %v4059
        %v4160 = vpop.f32.mrf.mxu0
        %v4161 = vadd.f32 0.0, %v4160
        %v4162 = vpop.f32.mrf.mxu0
        %v4163 = vpop.f32.mrf.mxu0
        %v4164 = vadd.f32 0.0, %v4163
        %v4165 = vpop.f32.mrf.mxu0
        %4166 = vmatprep.mubr.bf16.mxu0 0
        %4167 = vmatmul.mubr.bf16.gmra.mxu0 %v4062
        %v4168 = vpop.f32.mrf.mxu0
        %v4169 = vadd.f32 0.0, %v4168
        %v4170 = vpop.f32.mrf.mxu0
        %v4171 = vpop.f32.mrf.mxu0
        %v4172 = vadd.f32 0.0, %v4171
        %v4173 = vpop.f32.mrf.mxu0
        %4174 = vmatprep.mubr.bf16.mxu0 0
        %4175 = vmatmul.mubr.bf16.gmra.mxu0 %v4065
        %v4176 = vpop.f32.mrf.mxu0
        %v4177 = vadd.f32 0.0, %v4176
        %v4178 = vpop.f32.mrf.mxu0
        %v4179 = vpop.f32.mrf.mxu0
        %v4180 = vadd.f32 0.0, %v4179
        %v4181 = vpop.f32.mrf.mxu0
        %4182 = vmatprep.mubr.bf16.mxu0 0
        %4183 = vmatmul.mubr.bf16.gmra.mxu0 %v4068
        %v4184 = vpop.f32.mrf.mxu0
        %v4185 = vadd.f32 0.0, %v4184
        %v4186 = vpop.f32.mrf.mxu0
        %v4187 = vpop.f32.mrf.mxu0
        %v4188 = vadd.f32 0.0, %v4187
        %v4189 = vpop.f32.mrf.mxu0
        %4190 = vmatprep.mubr.bf16.mxu0 0
        %4191 = vmatmul.mubr.bf16.gmra.mxu0 %v4071
        %v4192 = vpop.f32.mrf.mxu0
        %v4193 = vadd.f32 0.0, %v4192
        %v4194 = vpop.f32.mrf.mxu0
        %v4195 = vpop.f32.mrf.mxu0
        %v4196 = vadd.f32 0.0, %v4195
        %v4197 = vpop.f32.mrf.mxu0
        %4198 = vmatprep.mubr.bf16.mxu0 0
        %4199 = vmatmul.mubr.bf16.gmra.mxu0 %v4074
        %v4200 = vpop.f32.mrf.mxu0
        %v4201 = vadd.f32 0.0, %v4200
        %v4202 = vpop.f32.mrf.mxu0
        %v4203 = vpop.f32.mrf.mxu0
        %v4204 = vadd.f32 0.0, %v4203
        %v4205 = vpop.f32.mrf.mxu0
        %4206 = vmatprep.mubr.bf16.mxu0 0
        %4207 = vmatmul.mubr.bf16.gmra.mxu0 %v4077
        %v4208 = vpop.f32.mrf.mxu0
        %v4209 = vadd.f32 0.0, %v4208
        %v4210 = vpop.f32.mrf.mxu0
        %v4211 = vpop.f32.mrf.mxu0
        %v4212 = vadd.f32 0.0, %v4211
        %v4213 = vpop.f32.mrf.mxu0
        %4214 = vmatprep.mubr.bf16.mxu0 0
        %4215 = vmatmul.mubr.bf16.gmra.mxu0 %v4080
        %v4216 = vpop.f32.mrf.mxu0
        %v4217 = vadd.f32 0.0, %v4216
        %v4218 = vpop.f32.mrf.mxu0
        %v4219 = vpop.f32.mrf.mxu0
        %v4220 = vadd.f32 0.0, %v4219
        %v4221 = vpop.f32.mrf.mxu0
        %4222 = vmatprep.mubr.bf16.mxu0 0
        %4223 = vmatmul.mubr.bf16.gmra.mxu0 %v4083
        %v4224 = vpop.f32.mrf.mxu0
        %v4225 = vadd.f32 0.0, %v4224
        %v4226 = vpop.f32.mrf.mxu0
        %v4227 = vpop.f32.mrf.mxu0
        %v4228 = vadd.f32 0.0, %v4227
        %v4229 = vpop.f32.mrf.mxu0
        %4230 = vmatprep.mubr.bf16.mxu0 0
        %4231 = vmatmul.mubr.bf16.gmra.mxu0 %v4086
        %v4232 = vpop.f32.mrf.mxu0
        %v4233 = vadd.f32 0.0, %v4232
        %v4234 = vpop.f32.mrf.mxu0
        %v4235 = vpop.f32.mrf.mxu0
        %v4236 = vadd.f32 0.0, %v4235
        %v4237 = vpop.f32.mrf.mxu0
        %4238 = vmatprep.mubr.bf16.mxu0 0
        %4239 = vmatmul.mubr.bf16.gmra.mxu0 %v4089
        %v4240 = vpop.f32.mrf.mxu0
        %v4241 = vadd.f32 0.0, %v4240
        %v4242 = vpop.f32.mrf.mxu0
        %v4243 = vpop.f32.mrf.mxu0
        %v4244 = vadd.f32 0.0, %v4243
        %v4245 = vpop.f32.mrf.mxu0
        %4246 = vmatprep.mubr.bf16.mxu0 0
        %4247 = vmatmul.mubr.bf16.gmra.mxu0 %v4092
        %v4248 = vpop.f32.mrf.mxu0
        %v4249 = vadd.f32 0.0, %v4248
        %v4250 = vpop.f32.mrf.mxu0
        %v4251 = vpop.f32.mrf.mxu0
        %v4252 = vadd.f32 0.0, %v4251
        %v4253 = vpop.f32.mrf.mxu0
        %4254 = vdwg.mxu0
        %v4255 = vadd.f32 %v3957, %v4129
        %v4256 = vadd.f32 %v3958, %v4132
        %v4257 = vadd.f32 %v3959, %v4137
        %v4258 = vadd.f32 %v3960, %v4140
        %v4259 = vadd.f32 %v3961, %v4145
        %v4260 = vadd.f32 %v3962, %v4148
        %v4261 = vadd.f32 %v3963, %v4153
        %v4262 = vadd.f32 %v3964, %v4156
        %v4263 = vadd.f32 %v3965, %v4161
        %v4264 = vadd.f32 %v3966, %v4164
        %v4265 = vadd.f32 %v3967, %v4169
        %v4266 = vadd.f32 %v3968, %v4172
        %v4267 = vadd.f32 %v3969, %v4177
        %v4268 = vadd.f32 %v3970, %v4180
        %v4269 = vadd.f32 %v3971, %v4185
        %v4270 = vadd.f32 %v3972, %v4188
        %v4271 = vadd.f32 %v3973, %v4193
        %v4272 = vadd.f32 %v3974, %v4196
        %v4273 = vadd.f32 %v3975, %v4201
        %v4274 = vadd.f32 %v3976, %v4204
        %v4275 = vadd.f32 %v3977, %v4209
        %v4276 = vadd.f32 %v3978, %v4212
        %v4277 = vadd.f32 %v3979, %v4217
        %v4278 = vadd.f32 %v3980, %v4220
        %v4279 = vadd.f32 %v3981, %v4225
        %v4280 = vadd.f32 %v3982, %v4228
        %v4281 = vadd.f32 %v3983, %v4233
        %v4282 = vadd.f32 %v3984, %v4236
        %v4283 = vadd.f32 %v3985, %v4241
        %v4284 = vadd.f32 %v3986, %v4244
        %v4285 = vadd.f32 %v3987, %v4249
        %v4286 = vadd.f32 %v3988, %v4252
        %v4287 = vld [vmem:[#allocation2 + $0x29] sm:$0xff]
        %v4288 = vld [vmem:[#allocation2 + $0x31] sm:$0xff]
        %v4289 = vld [vmem:[#allocation2 + $0x39] sm:$0xff]
        %v4290 = vld [vmem:[#allocation2 + $0x41] sm:$0xff]
        %v4291 = vld [vmem:[#allocation2 + $0x49] sm:$0xff]
        %v4292 = vld [vmem:[#allocation2 + $0x51] sm:$0xff]
        %v4293 = vld [vmem:[#allocation2 + $0x59] sm:$0xff]
        %v4294 = vld [vmem:[#allocation2 + $0x61] sm:$0xff]
        %v4295 = vld [vmem:[#allocation2 + $0x69] sm:$0xff]
        %v4296 = vld [vmem:[#allocation2 + $0x71] sm:$0xff]
        %v4297 = vld [vmem:[#allocation2 + $0x79] sm:$0xff]
        %v4298 = vld [vmem:[#allocation2 + $0x81] sm:$0xff]
        %v4299 = vld [vmem:[#allocation2 + $0x89] sm:$0xff]
        %v4300 = vld [vmem:[#allocation2 + $0x91] sm:$0xff]
        %v4301 = vld [vmem:[#allocation2 + $0x99] sm:$0xff]
        %v4302 = vld [vmem:[#allocation2 + $0xa1] sm:$0xff]
        %v4303 = vld [vmem:[#allocation2 + $0xa9] sm:$0xff]
        %v4304 = vld [vmem:[#allocation2 + $0xb1] sm:$0xff]
        %v4305 = vld [vmem:[#allocation2 + $0xb9] sm:$0xff]
        %v4306 = vld [vmem:[#allocation2 + $0xc1] sm:$0xff]
        %v4307 = vld [vmem:[#allocation2 + $0xc9] sm:$0xff]
        %v4308 = vld [vmem:[#allocation2 + $0xd1] sm:$0xff]
        %v4309 = vld [vmem:[#allocation2 + $0xd9] sm:$0xff]
        %v4310 = vld [vmem:[#allocation2 + $0xe1] sm:$0xff]
        %v4311 = vld [vmem:[#allocation2 + $0xe9] sm:$0xff]
        %v4312 = vld [vmem:[#allocation2 + $0xf1] sm:$0xff]
        %v4313 = vld [vmem:[#allocation2 + $0xf9] sm:$0xff]
        %v4314 = vld [vmem:[#allocation2 + $0x101] sm:$0xff]
        %v4315 = vld [vmem:[#allocation2 + $0x109] sm:$0xff]
        %v4316 = vld [vmem:[#allocation2 + $0x111] sm:$0xff]
        %v4317 = vld [vmem:[#allocation2 + $0x119] sm:$0xff]
        %v4318 = vld [vmem:[#allocation2 + $0x121] sm:$0xff]
        %v4319 = vsel %vm2371, %v4287, 0.0
        %v4320 = vsel %vm2372, %v4288, 0.0
        %v4321 = vsel %vm2373, %v4289, 0.0
        %v4322 = vsel %vm2374, %v4290, 0.0
        %v4323 = vsel %vm2375, %v4291, 0.0
        %v4324 = vsel %vm2376, %v4292, 0.0
        %v4325 = vsel %vm2377, %v4293, 0.0
        %v4326 = vsel %vm2378, %v4294, 0.0
        %v4327 = vsel %vm2379, %v4295, 0.0
        %v4328 = vsel %vm2380, %v4296, 0.0
        %v4329 = vsel %vm2381, %v4297, 0.0
        %v4330 = vsel %vm2382, %v4298, 0.0
        %v4331 = vsel %vm2383, %v4299, 0.0
        %v4332 = vsel %vm2384, %v4300, 0.0
        %v4333 = vsel %vm2385, %v4301, 0.0
        %v4334 = vsel %vm2386, %v4302, 0.0
        %v4335 = vsel %vm2387, %v4303, 0.0
        %v4336 = vsel %vm2388, %v4304, 0.0
        %v4337 = vsel %vm2389, %v4305, 0.0
        %v4338 = vsel %vm2390, %v4306, 0.0
        %v4339 = vsel %vm2391, %v4307, 0.0
        %v4340 = vsel %vm2392, %v4308, 0.0
        %v4341 = vsel %vm2393, %v4309, 0.0
        %v4342 = vsel %vm2394, %v4310, 0.0
        %v4343 = vsel %vm2395, %v4311, 0.0
        %v4344 = vsel %vm2396, %v4312, 0.0
        %v4345 = vsel %vm2397, %v4313, 0.0
        %v4346 = vsel %vm2398, %v4314, 0.0
        %v4347 = vsel %vm2399, %v4315, 0.0
        %v4348 = vsel %vm2400, %v4316, 0.0
        %v4349 = vsel %vm2401, %v4317, 0.0
        %v4350 = vsel %vm2402, %v4318, 0.0
        %v4351 = vpack.c.bf16 %v4320, %v4319
        %v4352 = vpack.c.bf16 %v4322, %v4321
        %v4353 = vpack.c.bf16 %v4324, %v4323
        %v4354 = vpack.c.bf16 %v4326, %v4325
        %v4355 = vpack.c.bf16 %v4328, %v4327
        %v4356 = vpack.c.bf16 %v4330, %v4329
        %v4357 = vpack.c.bf16 %v4332, %v4331
        %v4358 = vpack.c.bf16 %v4334, %v4333
        %v4359 = vpack.c.bf16 %v4336, %v4335
        %v4360 = vpack.c.bf16 %v4338, %v4337
        %v4361 = vpack.c.bf16 %v4340, %v4339
        %v4362 = vpack.c.bf16 %v4342, %v4341
        %v4363 = vpack.c.bf16 %v4344, %v4343
        %v4364 = vpack.c.bf16 %v4346, %v4345
        %v4365 = vpack.c.bf16 %v4348, %v4347
        %v4366 = vpack.c.bf16 %v4350, %v4349
        %s4367 = scalar_lea.vmem %s4, 64
        %v4368 = vld [vmem:[%s4367] sm:$0xf]
        %v4369 = vld [vmem:[%s4367 + $0x4] sm:$0xf]
        %v4372 = vunpack.c.l.b16 %v4368
        %v4373 = vunpack.c.l.b16 %v4369
        %v4374 = vpack.c.b16 %v4373, %v4372
        %v4377 = vsel %vm1385, %v4351, 0
        %v4380 = vsel %vm1385, %v4352, 0
        %v4383 = vsel %vm1385, %v4353, 0
        %v4386 = vsel %vm1385, %v4354, 0
        %v4389 = vsel %vm1385, %v4355, 0
        %v4392 = vsel %vm1385, %v4356, 0
        %v4395 = vsel %vm1385, %v4357, 0
        %v4398 = vsel %vm1385, %v4358, 0
        %v4401 = vsel %vm1385, %v4359, 0
        %v4404 = vsel %vm1385, %v4360, 0
        %v4407 = vsel %vm1385, %v4361, 0
        %v4410 = vsel %vm1385, %v4362, 0
        %v4413 = vsel %vm1385, %v4363, 0
        %v4416 = vsel %vm1385, %v4364, 0
        %v4419 = vsel %vm1385, %v4365, 0
        %v4422 = vsel %vm1385, %v4366, 0
        %4424 = vmatprep.subr.bf16.mxu0 0
        %4425 = vmatpush1.bf16.msra.mxu0 0
        %4426 = vmatprep.subr.bf16.mxu0 0
        %4427 = vmatpush1.bf16.msra.mxu0 0
        %4428 = vmatprep.subr.bf16.mxu0 0
        %4429 = vmatpush1.bf16.msra.mxu0 0
        %4430 = vmatprep.subr.bf16.mxu0 0
        %4431 = vmatpush1.bf16.msra.mxu0 0
        %4432 = vmatprep.subr.bf16.mxu0 0
        %4433 = vmatpush1.bf16.msra.mxu0 0
        %4434 = vmatprep.subr.bf16.mxu0 0
        %4435 = vmatpush1.bf16.msra.mxu0 0
        %4436 = vmatprep.subr.bf16.mxu0 0
        %4437 = vmatpush1.bf16.msra.mxu0 0
        %4438 = vmatprep.subr.bf16.mxu0 0
        %4439 = vmatpush1.bf16.msra.mxu0 %v4374
        %4440 = vmatprep.subr.bf16.mxu0 0
        %4441 = vmatpush2.bf16.msra.mxu0 0
        %4442 = vmatprep.subr.bf16.mxu0 0
        %4443 = vmatpush2.bf16.msra.mxu0 0
        %4444 = vmatprep.subr.bf16.mxu0 0
        %4445 = vmatpush2.bf16.msra.mxu0 0
        %4446 = vmatprep.subr.bf16.mxu0 0
        %4447 = vmatpush2.bf16.msra.mxu0 0
        %4448 = vmatprep.subr.bf16.mxu0 0
        %4449 = vmatpush2.bf16.msra.mxu0 0
        %4450 = vmatprep.subr.bf16.mxu0 0
        %4451 = vmatpush2.bf16.msra.mxu0 0
        %4452 = vmatprep.subr.bf16.mxu0 0
        %4453 = vmatpush2.bf16.msra.mxu0 0
        %4454 = vmatprep.subr.bf16.mxu0 0
        %4455 = vmatpush2.bf16.msra.mxu0 0
        %4456 = vmatprep.mubr.bf16.mxu0 0
        %4457 = vmatmul.mubr.bf16.gmra.mxu0 %v4377
        %v4458 = vpop.f32.mrf.mxu0
        %v4459 = vadd.f32 0.0, %v4458
        %v4460 = vpop.f32.mrf.mxu0
        %v4461 = vpop.f32.mrf.mxu0
        %v4462 = vadd.f32 0.0, %v4461
        %v4463 = vpop.f32.mrf.mxu0
        %4464 = vmatprep.mubr.bf16.mxu0 0
        %4465 = vmatmul.mubr.bf16.gmra.mxu0 %v4380
        %v4466 = vpop.f32.mrf.mxu0
        %v4467 = vadd.f32 0.0, %v4466
        %v4468 = vpop.f32.mrf.mxu0
        %v4469 = vpop.f32.mrf.mxu0
        %v4470 = vadd.f32 0.0, %v4469
        %v4471 = vpop.f32.mrf.mxu0
        %4472 = vmatprep.mubr.bf16.mxu0 0
        %4473 = vmatmul.mubr.bf16.gmra.mxu0 %v4383
        %v4474 = vpop.f32.mrf.mxu0
        %v4475 = vadd.f32 0.0, %v4474
        %v4476 = vpop.f32.mrf.mxu0
        %v4477 = vpop.f32.mrf.mxu0
        %v4478 = vadd.f32 0.0, %v4477
        %v4479 = vpop.f32.mrf.mxu0
        %4480 = vmatprep.mubr.bf16.mxu0 0
        %4481 = vmatmul.mubr.bf16.gmra.mxu0 %v4386
        %v4482 = vpop.f32.mrf.mxu0
        %v4483 = vadd.f32 0.0, %v4482
        %v4484 = vpop.f32.mrf.mxu0
        %v4485 = vpop.f32.mrf.mxu0
        %v4486 = vadd.f32 0.0, %v4485
        %v4487 = vpop.f32.mrf.mxu0
        %4488 = vmatprep.mubr.bf16.mxu0 0
        %4489 = vmatmul.mubr.bf16.gmra.mxu0 %v4389
        %v4490 = vpop.f32.mrf.mxu0
        %v4491 = vadd.f32 0.0, %v4490
        %v4492 = vpop.f32.mrf.mxu0
        %v4493 = vpop.f32.mrf.mxu0
        %v4494 = vadd.f32 0.0, %v4493
        %v4495 = vpop.f32.mrf.mxu0
        %4496 = vmatprep.mubr.bf16.mxu0 0
        %4497 = vmatmul.mubr.bf16.gmra.mxu0 %v4392
        %v4498 = vpop.f32.mrf.mxu0
        %v4499 = vadd.f32 0.0, %v4498
        %v4500 = vpop.f32.mrf.mxu0
        %v4501 = vpop.f32.mrf.mxu0
        %v4502 = vadd.f32 0.0, %v4501
        %v4503 = vpop.f32.mrf.mxu0
        %4504 = vmatprep.mubr.bf16.mxu0 0
        %4505 = vmatmul.mubr.bf16.gmra.mxu0 %v4395
        %v4506 = vpop.f32.mrf.mxu0
        %v4507 = vadd.f32 0.0, %v4506
        %v4508 = vpop.f32.mrf.mxu0
        %v4509 = vpop.f32.mrf.mxu0
        %v4510 = vadd.f32 0.0, %v4509
        %v4511 = vpop.f32.mrf.mxu0
        %4512 = vmatprep.mubr.bf16.mxu0 0
        %4513 = vmatmul.mubr.bf16.gmra.mxu0 %v4398
        %v4514 = vpop.f32.mrf.mxu0
        %v4515 = vadd.f32 0.0, %v4514
        %v4516 = vpop.f32.mrf.mxu0
        %v4517 = vpop.f32.mrf.mxu0
        %v4518 = vadd.f32 0.0, %v4517
        %v4519 = vpop.f32.mrf.mxu0
        %4520 = vmatprep.mubr.bf16.mxu0 0
        %4521 = vmatmul.mubr.bf16.gmra.mxu0 %v4401
        %v4522 = vpop.f32.mrf.mxu0
        %v4523 = vadd.f32 0.0, %v4522
        %v4524 = vpop.f32.mrf.mxu0
        %v4525 = vpop.f32.mrf.mxu0
        %v4526 = vadd.f32 0.0, %v4525
        %v4527 = vpop.f32.mrf.mxu0
        %4528 = vmatprep.mubr.bf16.mxu0 0
        %4529 = vmatmul.mubr.bf16.gmra.mxu0 %v4404
        %v4530 = vpop.f32.mrf.mxu0
        %v4531 = vadd.f32 0.0, %v4530
        %v4532 = vpop.f32.mrf.mxu0
        %v4533 = vpop.f32.mrf.mxu0
        %v4534 = vadd.f32 0.0, %v4533
        %v4535 = vpop.f32.mrf.mxu0
        %4536 = vmatprep.mubr.bf16.mxu0 0
        %4537 = vmatmul.mubr.bf16.gmra.mxu0 %v4407
        %v4538 = vpop.f32.mrf.mxu0
        %v4539 = vadd.f32 0.0, %v4538
        %v4540 = vpop.f32.mrf.mxu0
        %v4541 = vpop.f32.mrf.mxu0
        %v4542 = vadd.f32 0.0, %v4541
        %v4543 = vpop.f32.mrf.mxu0
        %4544 = vmatprep.mubr.bf16.mxu0 0
        %4545 = vmatmul.mubr.bf16.gmra.mxu0 %v4410
        %v4546 = vpop.f32.mrf.mxu0
        %v4547 = vadd.f32 0.0, %v4546
        %v4548 = vpop.f32.mrf.mxu0
        %v4549 = vpop.f32.mrf.mxu0
        %v4550 = vadd.f32 0.0, %v4549
        %v4551 = vpop.f32.mrf.mxu0
        %4552 = vmatprep.mubr.bf16.mxu0 0
        %4553 = vmatmul.mubr.bf16.gmra.mxu0 %v4413
        %v4554 = vpop.f32.mrf.mxu0
        %v4555 = vadd.f32 0.0, %v4554
        %v4556 = vpop.f32.mrf.mxu0
        %v4557 = vpop.f32.mrf.mxu0
        %v4558 = vadd.f32 0.0, %v4557
        %v4559 = vpop.f32.mrf.mxu0
        %4560 = vmatprep.mubr.bf16.mxu0 0
        %4561 = vmatmul.mubr.bf16.gmra.mxu0 %v4416
        %v4562 = vpop.f32.mrf.mxu0
        %v4563 = vadd.f32 0.0, %v4562
        %v4564 = vpop.f32.mrf.mxu0
        %v4565 = vpop.f32.mrf.mxu0
        %v4566 = vadd.f32 0.0, %v4565
        %v4567 = vpop.f32.mrf.mxu0
        %4568 = vmatprep.mubr.bf16.mxu0 0
        %4569 = vmatmul.mubr.bf16.gmra.mxu0 %v4419
        %v4570 = vpop.f32.mrf.mxu0
        %v4571 = vadd.f32 0.0, %v4570
        %v4572 = vpop.f32.mrf.mxu0
        %v4573 = vpop.f32.mrf.mxu0
        %v4574 = vadd.f32 0.0, %v4573
        %v4575 = vpop.f32.mrf.mxu0
        %4576 = vmatprep.mubr.bf16.mxu0 0
        %4577 = vmatmul.mubr.bf16.gmra.mxu0 %v4422
        %v4578 = vpop.f32.mrf.mxu0
        %v4579 = vadd.f32 0.0, %v4578
        %v4580 = vpop.f32.mrf.mxu0
        %v4581 = vpop.f32.mrf.mxu0
        %v4582 = vadd.f32 0.0, %v4581
        %v4583 = vpop.f32.mrf.mxu0
        %4584 = vdwg.mxu0
        %v4585 = vadd.f32 %v4255, %v4459
        %v4586 = vadd.f32 %v4256, %v4462
        %v4587 = vadd.f32 %v4257, %v4467
        %v4588 = vadd.f32 %v4258, %v4470
        %v4589 = vadd.f32 %v4259, %v4475
        %v4590 = vadd.f32 %v4260, %v4478
        %v4591 = vadd.f32 %v4261, %v4483
        %v4592 = vadd.f32 %v4262, %v4486
        %v4593 = vadd.f32 %v4263, %v4491
        %v4594 = vadd.f32 %v4264, %v4494
        %v4595 = vadd.f32 %v4265, %v4499
        %v4596 = vadd.f32 %v4266, %v4502
        %v4597 = vadd.f32 %v4267, %v4507
        %v4598 = vadd.f32 %v4268, %v4510
        %v4599 = vadd.f32 %v4269, %v4515
        %v4600 = vadd.f32 %v4270, %v4518
        %v4601 = vadd.f32 %v4271, %v4523
        %v4602 = vadd.f32 %v4272, %v4526
        %v4603 = vadd.f32 %v4273, %v4531
        %v4604 = vadd.f32 %v4274, %v4534
        %v4605 = vadd.f32 %v4275, %v4539
        %v4606 = vadd.f32 %v4276, %v4542
        %v4607 = vadd.f32 %v4277, %v4547
        %v4608 = vadd.f32 %v4278, %v4550
        %v4609 = vadd.f32 %v4279, %v4555
        %v4610 = vadd.f32 %v4280, %v4558
        %v4611 = vadd.f32 %v4281, %v4563
        %v4612 = vadd.f32 %v4282, %v4566
        %v4613 = vadd.f32 %v4283, %v4571
        %v4614 = vadd.f32 %v4284, %v4574
        %v4615 = vadd.f32 %v4285, %v4579
        %v4616 = vadd.f32 %v4286, %v4582
        %v4617 = vld [vmem:[%s5] sm:$0x1]
        %v4619 = vlaneseq
        %v4620 = vshrl.u32 %v4619, 7
        %v4621 = vsub.s32 0, %v4620
        %v4622 = vrot.slane %v4617, %v4621
        %v4624 = vmul.f32 %v4585, %v4622
        %v4625 = vmul.f32 %v4586, %v4622
        %v4626 = vmul.f32 %v4587, %v4622
        %v4627 = vmul.f32 %v4588, %v4622
        %v4628 = vmul.f32 %v4589, %v4622
        %v4629 = vmul.f32 %v4590, %v4622
        %v4630 = vmul.f32 %v4591, %v4622
        %v4631 = vmul.f32 %v4592, %v4622
        %v4632 = vmul.f32 %v4593, %v4622
        %v4633 = vmul.f32 %v4594, %v4622
        %v4634 = vmul.f32 %v4595, %v4622
        %v4635 = vmul.f32 %v4596, %v4622
        %v4636 = vmul.f32 %v4597, %v4622
        %v4637 = vmul.f32 %v4598, %v4622
        %v4638 = vmul.f32 %v4599, %v4622
        %v4639 = vmul.f32 %v4600, %v4622
        %v4640 = vmul.f32 %v4601, %v4622
        %v4641 = vmul.f32 %v4602, %v4622
        %v4642 = vmul.f32 %v4603, %v4622
        %v4643 = vmul.f32 %v4604, %v4622
        %v4644 = vmul.f32 %v4605, %v4622
        %v4645 = vmul.f32 %v4606, %v4622
        %v4646 = vmul.f32 %v4607, %v4622
        %v4647 = vmul.f32 %v4608, %v4622
        %v4648 = vmul.f32 %v4609, %v4622
        %v4649 = vmul.f32 %v4610, %v4622
        %v4650 = vmul.f32 %v4611, %v4622
        %v4651 = vmul.f32 %v4612, %v4622
        %v4652 = vmul.f32 %v4613, %v4622
        %v4653 = vmul.f32 %v4614, %v4622
        %v4654 = vmul.f32 %v4615, %v4622
        %v4655 = vmul.f32 %v4616, %v4622
        %v4656 = vld [vmem:[%s6] sm:$0x1]
        %v4658 = vlaneseq
        %v4659 = vshrl.u32 %v4658, 7
        %v4660 = vsub.s32 0, %v4659
        %v4661 = vrot.slane %v4656, %v4660
        %v4663 = vadd.f32 %v4624, %v4661
        %v4664 = vadd.f32 %v4625, %v4661
        %v4665 = vadd.f32 %v4626, %v4661
        %v4666 = vadd.f32 %v4627, %v4661
        %v4667 = vadd.f32 %v4628, %v4661
        %v4668 = vadd.f32 %v4629, %v4661
        %v4669 = vadd.f32 %v4630, %v4661
        %v4670 = vadd.f32 %v4631, %v4661
        %v4671 = vadd.f32 %v4632, %v4661
        %v4672 = vadd.f32 %v4633, %v4661
        %v4673 = vadd.f32 %v4634, %v4661
        %v4674 = vadd.f32 %v4635, %v4661
        %v4675 = vadd.f32 %v4636, %v4661
        %v4676 = vadd.f32 %v4637, %v4661
        %v4677 = vadd.f32 %v4638, %v4661
        %v4678 = vadd.f32 %v4639, %v4661
        %v4679 = vadd.f32 %v4640, %v4661
        %v4680 = vadd.f32 %v4641, %v4661
        %v4681 = vadd.f32 %v4642, %v4661
        %v4682 = vadd.f32 %v4643, %v4661
        %v4683 = vadd.f32 %v4644, %v4661
        %v4684 = vadd.f32 %v4645, %v4661
        %v4685 = vadd.f32 %v4646, %v4661
        %v4686 = vadd.f32 %v4647, %v4661
        %v4687 = vadd.f32 %v4648, %v4661
        %v4688 = vadd.f32 %v4649, %v4661
        %v4689 = vadd.f32 %v4650, %v4661
        %v4690 = vadd.f32 %v4651, %v4661
        %v4691 = vadd.f32 %v4652, %v4661
        %v4692 = vadd.f32 %v4653, %v4661
        %v4693 = vadd.f32 %v4654, %v4661
        %v4694 = vadd.f32 %v4655, %v4661
        %v4695 = vmax.f32 %v4663, 0.0
        %v4696 = vmax.f32 %v4664, 0.0
        %v4697 = vmax.f32 %v4665, 0.0
        %v4698 = vmax.f32 %v4666, 0.0
        %v4699 = vmax.f32 %v4667, 0.0
        %v4700 = vmax.f32 %v4668, 0.0
        %v4701 = vmax.f32 %v4669, 0.0
        %v4702 = vmax.f32 %v4670, 0.0
        %v4703 = vmax.f32 %v4671, 0.0
        %v4704 = vmax.f32 %v4672, 0.0
        %v4705 = vmax.f32 %v4673, 0.0
        %v4706 = vmax.f32 %v4674, 0.0
        %v4707 = vmax.f32 %v4675, 0.0
        %v4708 = vmax.f32 %v4676, 0.0
        %v4709 = vmax.f32 %v4677, 0.0
        %v4710 = vmax.f32 %v4678, 0.0
        %v4711 = vmax.f32 %v4679, 0.0
        %v4712 = vmax.f32 %v4680, 0.0
        %v4713 = vmax.f32 %v4681, 0.0
        %v4714 = vmax.f32 %v4682, 0.0
        %v4715 = vmax.f32 %v4683, 0.0
        %v4716 = vmax.f32 %v4684, 0.0
        %v4717 = vmax.f32 %v4685, 0.0
        %v4718 = vmax.f32 %v4686, 0.0
        %v4719 = vmax.f32 %v4687, 0.0
        %v4720 = vmax.f32 %v4688, 0.0
        %v4721 = vmax.f32 %v4689, 0.0
        %v4722 = vmax.f32 %v4690, 0.0
        %v4723 = vmax.f32 %v4691, 0.0
        %v4724 = vmax.f32 %v4692, 0.0
        %v4725 = vmax.f32 %v4693, 0.0
        %v4726 = vmax.f32 %v4694, 0.0
        %4727 = vst.msk [vmem:[#allocation3] sm:$0xff] %vm648, 0.0
        %4728 = vst.msk [vmem:[#allocation3 + $0x8] sm:$0xff] %vm648, 0.0
        %4729 = vst.msk [vmem:[#allocation3 + $0x10] sm:$0xff] %vm648, 0.0
        %4730 = vst.msk [vmem:[#allocation3 + $0x118] sm:$0xff] %vm648, 0.0
        %4731 = vst.msk [vmem:[#allocation3 + $0x120] sm:$0xff] %vm648, 0.0
        %4732 = vst.msk [vmem:[#allocation3 + $0x128] sm:$0xff] %vm648, 0.0
        %4733 = vst.msk [vmem:[#allocation3 + $0x18] sm:$0xff] %vm648, %v4695
        %4734 = vst.msk [vmem:[#allocation3 + $0x20] sm:$0xff] %vm648, %v4696
        %4735 = vst.msk [vmem:[#allocation3 + $0x28] sm:$0xff] %vm648, %v4697
        %4736 = vst.msk [vmem:[#allocation3 + $0x30] sm:$0xff] %vm648, %v4698
        %4737 = vst.msk [vmem:[#allocation3 + $0x38] sm:$0xff] %vm648, %v4699
        %4738 = vst.msk [vmem:[#allocation3 + $0x40] sm:$0xff] %vm648, %v4700
        %4739 = vst.msk [vmem:[#allocation3 + $0x48] sm:$0xff] %vm648, %v4701
        %4740 = vst.msk [vmem:[#allocation3 + $0x50] sm:$0xff] %vm648, %v4702
        %4741 = vst.msk [vmem:[#allocation3 + $0x58] sm:$0xff] %vm648, %v4703
        %4742 = vst.msk [vmem:[#allocation3 + $0x60] sm:$0xff] %vm648, %v4704
        %4743 = vst.msk [vmem:[#allocation3 + $0x68] sm:$0xff] %vm648, %v4705
        %4744 = vst.msk [vmem:[#allocation3 + $0x70] sm:$0xff] %vm648, %v4706
        %4745 = vst.msk [vmem:[#allocation3 + $0x78] sm:$0xff] %vm648, %v4707
        %4746 = vst.msk [vmem:[#allocation3 + $0x80] sm:$0xff] %vm648, %v4708
        %4747 = vst.msk [vmem:[#allocation3 + $0x88] sm:$0xff] %vm648, %v4709
        %4748 = vst.msk [vmem:[#allocation3 + $0x90] sm:$0xff] %vm648, %v4710
        %4749 = vst.msk [vmem:[#allocation3 + $0x98] sm:$0xff] %vm648, %v4711
        %4750 = vst.msk [vmem:[#allocation3 + $0xa0] sm:$0xff] %vm648, %v4712
        %4751 = vst.msk [vmem:[#allocation3 + $0xa8] sm:$0xff] %vm648, %v4713
        %4752 = vst.msk [vmem:[#allocation3 + $0xb0] sm:$0xff] %vm648, %v4714
        %4753 = vst.msk [vmem:[#allocation3 + $0xb8] sm:$0xff] %vm648, %v4715
        %4754 = vst.msk [vmem:[#allocation3 + $0xc0] sm:$0xff] %vm648, %v4716
        %4755 = vst.msk [vmem:[#allocation3 + $0xc8] sm:$0xff] %vm648, %v4717
        %4756 = vst.msk [vmem:[#allocation3 + $0xd0] sm:$0xff] %vm648, %v4718
        %4757 = vst.msk [vmem:[#allocation3 + $0xd8] sm:$0xff] %vm648, %v4719
        %4758 = vst.msk [vmem:[#allocation3 + $0xe0] sm:$0xff] %vm648, %v4720
        %4759 = vst.msk [vmem:[#allocation3 + $0xe8] sm:$0xff] %vm648, %v4721
        %4760 = vst.msk [vmem:[#allocation3 + $0xf0] sm:$0xff] %vm648, %v4722
        %4761 = vst.msk [vmem:[#allocation3 + $0xf8] sm:$0xff] %vm648, %v4723
        %4762 = vst.msk [vmem:[#allocation3 + $0x100] sm:$0xff] %vm648, %v4724
        %4763 = vst.msk [vmem:[#allocation3 + $0x108] sm:$0xff] %vm648, %v4725
        %4764 = vst.msk [vmem:[#allocation3 + $0x110] sm:$0xff] %vm648, %v4726
        %v4765 = vld [vmem:[#allocation3 + $0x7] sm:$0xff]
        %v4766 = vld [vmem:[#allocation3 + $0xf] sm:$0xff]
        %v4767 = vld [vmem:[#allocation3 + $0x17] sm:$0xff]
        %v4768 = vld [vmem:[#allocation3 + $0x1f] sm:$0xff]
        %v4769 = vld [vmem:[#allocation3 + $0x27] sm:$0xff]
        %v4770 = vld [vmem:[#allocation3 + $0x2f] sm:$0xff]
        %v4771 = vld [vmem:[#allocation3 + $0x37] sm:$0xff]
        %v4772 = vld [vmem:[#allocation3 + $0x3f] sm:$0xff]
        %v4773 = vld [vmem:[#allocation3 + $0x47] sm:$0xff]
        %v4774 = vld [vmem:[#allocation3 + $0x4f] sm:$0xff]
        %v4775 = vld [vmem:[#allocation3 + $0x57] sm:$0xff]
        %v4776 = vld [vmem:[#allocation3 + $0x5f] sm:$0xff]
        %v4777 = vld [vmem:[#allocation3 + $0x67] sm:$0xff]
        %v4778 = vld [vmem:[#allocation3 + $0x6f] sm:$0xff]
        %v4779 = vld [vmem:[#allocation3 + $0x77] sm:$0xff]
        %v4780 = vld [vmem:[#allocation3 + $0x7f] sm:$0xff]
        %v4781 = vld [vmem:[#allocation3 + $0x87] sm:$0xff]
        %v4782 = vld [vmem:[#allocation3 + $0x8f] sm:$0xff]
        %v4783 = vld [vmem:[#allocation3 + $0x97] sm:$0xff]
        %v4784 = vld [vmem:[#allocation3 + $0x9f] sm:$0xff]
        %v4785 = vld [vmem:[#allocation3 + $0xa7] sm:$0xff]
        %v4786 = vld [vmem:[#allocation3 + $0xaf] sm:$0xff]
        %v4787 = vld [vmem:[#allocation3 + $0xb7] sm:$0xff]
        %v4788 = vld [vmem:[#allocation3 + $0xbf] sm:$0xff]
        %v4789 = vld [vmem:[#allocation3 + $0xc7] sm:$0xff]
        %v4790 = vld [vmem:[#allocation3 + $0xcf] sm:$0xff]
        %v4791 = vld [vmem:[#allocation3 + $0xd7] sm:$0xff]
        %v4792 = vld [vmem:[#allocation3 + $0xdf] sm:$0xff]
        %v4793 = vld [vmem:[#allocation3 + $0xe7] sm:$0xff]
        %v4794 = vld [vmem:[#allocation3 + $0xef] sm:$0xff]
        %v4795 = vld [vmem:[#allocation3 + $0xf7] sm:$0xff]
        %v4796 = vld [vmem:[#allocation3 + $0xff] sm:$0xff]
        %v4797 = vsel %vm1616, %v4765, 0.0
        %v4798 = vsel %vm1617, %v4766, 0.0
        %v4799 = vsel %vm1618, %v4767, 0.0
        %v4800 = vsel %vm1619, %v4768, 0.0
        %v4801 = vsel %vm1620, %v4769, 0.0
        %v4802 = vsel %vm1621, %v4770, 0.0
        %v4803 = vsel %vm1622, %v4771, 0.0
        %v4804 = vsel %vm1623, %v4772, 0.0
        %v4805 = vsel %vm1624, %v4773, 0.0
        %v4806 = vsel %vm1625, %v4774, 0.0
        %v4807 = vsel %vm1626, %v4775, 0.0
        %v4808 = vsel %vm1627, %v4776, 0.0
        %v4809 = vsel %vm1628, %v4777, 0.0
        %v4810 = vsel %vm1629, %v4778, 0.0
        %v4811 = vsel %vm1630, %v4779, 0.0
        %v4812 = vsel %vm1631, %v4780, 0.0
        %v4813 = vsel %vm1632, %v4781, 0.0
        %v4814 = vsel %vm1633, %v4782, 0.0
        %v4815 = vsel %vm1634, %v4783, 0.0
        %v4816 = vsel %vm1635, %v4784, 0.0
        %v4817 = vsel %vm1636, %v4785, 0.0
        %v4818 = vsel %vm1637, %v4786, 0.0
        %v4819 = vsel %vm1638, %v4787, 0.0
        %v4820 = vsel %vm1639, %v4788, 0.0
        %v4821 = vsel %vm1640, %v4789, 0.0
        %v4822 = vsel %vm1641, %v4790, 0.0
        %v4823 = vsel %vm1642, %v4791, 0.0
        %v4824 = vsel %vm1643, %v4792, 0.0
        %v4825 = vsel %vm1644, %v4793, 0.0
        %v4826 = vsel %vm1645, %v4794, 0.0
        %v4827 = vsel %vm1646, %v4795, 0.0
        %v4828 = vsel %vm1647, %v4796, 0.0
        %v4829 = vpack.c.bf16 %v4798, %v4797
        %v4830 = vpack.c.bf16 %v4800, %v4799
        %v4831 = vpack.c.bf16 %v4802, %v4801
        %v4832 = vpack.c.bf16 %v4804, %v4803
        %v4833 = vpack.c.bf16 %v4806, %v4805
        %v4834 = vpack.c.bf16 %v4808, %v4807
        %v4835 = vpack.c.bf16 %v4810, %v4809
        %v4836 = vpack.c.bf16 %v4812, %v4811
        %v4837 = vpack.c.bf16 %v4814, %v4813
        %v4838 = vpack.c.bf16 %v4816, %v4815
        %v4839 = vpack.c.bf16 %v4818, %v4817
        %v4840 = vpack.c.bf16 %v4820, %v4819
        %v4841 = vpack.c.bf16 %v4822, %v4821
        %v4842 = vpack.c.bf16 %v4824, %v4823
        %v4843 = vpack.c.bf16 %v4826, %v4825
        %v4844 = vpack.c.bf16 %v4828, %v4827
        %v4845 = vld [vmem:[%s7] sm:$0xf]
        %v4846 = vld [vmem:[%s7 + $0x4] sm:$0xf]
        %v4847 = vld [vmem:[%s7 + $0x8] sm:$0xf]
        %v4848 = vld [vmem:[%s7 + $0xc] sm:$0xf]
        %v4849 = vld [vmem:[#allocation3 + $0x8] sm:$0xff]
        %v4850 = vld [vmem:[#allocation3 + $0x10] sm:$0xff]
        %v4851 = vld [vmem:[#allocation3 + $0x18] sm:$0xff]
        %v4852 = vld [vmem:[#allocation3 + $0x20] sm:$0xff]
        %v4853 = vld [vmem:[#allocation3 + $0x28] sm:$0xff]
        %v4854 = vld [vmem:[#allocation3 + $0x30] sm:$0xff]
        %v4855 = vld [vmem:[#allocation3 + $0x38] sm:$0xff]
        %v4856 = vld [vmem:[#allocation3 + $0x40] sm:$0xff]
        %v4857 = vld [vmem:[#allocation3 + $0x48] sm:$0xff]
        %v4858 = vld [vmem:[#allocation3 + $0x50] sm:$0xff]
        %v4859 = vld [vmem:[#allocation3 + $0x58] sm:$0xff]
        %v4860 = vld [vmem:[#allocation3 + $0x60] sm:$0xff]
        %v4861 = vld [vmem:[#allocation3 + $0x68] sm:$0xff]
        %v4862 = vld [vmem:[#allocation3 + $0x70] sm:$0xff]
        %v4863 = vld [vmem:[#allocation3 + $0x78] sm:$0xff]
        %v4864 = vld [vmem:[#allocation3 + $0x80] sm:$0xff]
        %v4865 = vld [vmem:[#allocation3 + $0x88] sm:$0xff]
        %v4866 = vld [vmem:[#allocation3 + $0x90] sm:$0xff]
        %v4867 = vld [vmem:[#allocation3 + $0x98] sm:$0xff]
        %v4868 = vld [vmem:[#allocation3 + $0xa0] sm:$0xff]
        %v4869 = vld [vmem:[#allocation3 + $0xa8] sm:$0xff]
        %v4870 = vld [vmem:[#allocation3 + $0xb0] sm:$0xff]
        %v4871 = vld [vmem:[#allocation3 + $0xb8] sm:$0xff]
        %v4872 = vld [vmem:[#allocation3 + $0xc0] sm:$0xff]
        %v4873 = vld [vmem:[#allocation3 + $0xc8] sm:$0xff]
        %v4874 = vld [vmem:[#allocation3 + $0xd0] sm:$0xff]
        %v4875 = vld [vmem:[#allocation3 + $0xd8] sm:$0xff]
        %v4876 = vld [vmem:[#allocation3 + $0xe0] sm:$0xff]
        %v4877 = vld [vmem:[#allocation3 + $0xe8] sm:$0xff]
        %v4878 = vld [vmem:[#allocation3 + $0xf0] sm:$0xff]
        %v4879 = vld [vmem:[#allocation3 + $0xf8] sm:$0xff]
        %v4880 = vld [vmem:[#allocation3 + $0x100] sm:$0xff]
        %v4881 = vpack.c.bf16 %v4850, %v4849
        %v4882 = vpack.c.bf16 %v4852, %v4851
        %v4883 = vpack.c.bf16 %v4854, %v4853
        %v4884 = vpack.c.bf16 %v4856, %v4855
        %v4885 = vpack.c.bf16 %v4858, %v4857
        %v4886 = vpack.c.bf16 %v4860, %v4859
        %v4887 = vpack.c.bf16 %v4862, %v4861
        %v4888 = vpack.c.bf16 %v4864, %v4863
        %v4889 = vpack.c.bf16 %v4866, %v4865
        %v4890 = vpack.c.bf16 %v4868, %v4867
        %v4891 = vpack.c.bf16 %v4870, %v4869
        %v4892 = vpack.c.bf16 %v4872, %v4871
        %v4893 = vpack.c.bf16 %v4874, %v4873
        %v4894 = vpack.c.bf16 %v4876, %v4875
        %v4895 = vpack.c.bf16 %v4878, %v4877
        %v4896 = vpack.c.bf16 %v4880, %v4879
        %s4897 = scalar_lea.vmem %s7, 16
        %v4898 = vld [vmem:[%s4897] sm:$0xf]
        %v4899 = vld [vmem:[%s4897 + $0x4] sm:$0xf]
        %v4900 = vld [vmem:[%s4897 + $0x8] sm:$0xf]
        %v4901 = vld [vmem:[%s4897 + $0xc] sm:$0xf]
        %v4906 = vunpack.c.l.b16 %v4898
        %v4907 = vunpack.c.l.b16 %v4899
        %v4908 = vunpack.c.l.b16 %v4900
        %v4909 = vunpack.c.l.b16 %v4901
        %v4910 = vpack.c.b16 %v4907, %v4906
        %v4911 = vpack.c.b16 %v4909, %v4908
        %v4915 = vsel %vm648, %v4881, 0
        %v4918 = vsel %vm648, %v4882, 0
        %v4921 = vsel %vm648, %v4883, 0
        %v4924 = vsel %vm648, %v4884, 0
        %v4927 = vsel %vm648, %v4885, 0
        %v4930 = vsel %vm648, %v4886, 0
        %v4933 = vsel %vm648, %v4887, 0
        %v4936 = vsel %vm648, %v4888, 0
        %v4939 = vsel %vm648, %v4889, 0
        %v4942 = vsel %vm648, %v4890, 0
        %v4945 = vsel %vm648, %v4891, 0
        %v4948 = vsel %vm648, %v4892, 0
        %v4951 = vsel %vm648, %v4893, 0
        %v4954 = vsel %vm648, %v4894, 0
        %v4957 = vsel %vm648, %v4895, 0
        %v4960 = vsel %vm648, %v4896, 0
        %4962 = vmatprep.subr.bf16.mxu0 0
        %4963 = vmatpush1.bf16.msra.mxu0 0
        %4964 = vmatprep.subr.bf16.mxu0 0
        %4965 = vmatpush1.bf16.msra.mxu0 0
        %4966 = vmatprep.subr.bf16.mxu0 0
        %4967 = vmatpush1.bf16.msra.mxu0 0
        %4968 = vmatprep.subr.bf16.mxu0 0
        %4969 = vmatpush1.bf16.msra.mxu0 0
        %4970 = vmatprep.subr.bf16.mxu0 0
        %4971 = vmatpush1.bf16.msra.mxu0 0
        %4972 = vmatprep.subr.bf16.mxu0 0
        %4973 = vmatpush1.bf16.msra.mxu0 0
        %4974 = vmatprep.subr.bf16.mxu0 0
        %4975 = vmatpush1.bf16.msra.mxu0 %v4911
        %4976 = vmatprep.subr.bf16.mxu0 0
        %4977 = vmatpush1.bf16.msra.mxu0 %v4910
        %4978 = vmatprep.subr.bf16.mxu0 0
        %4979 = vmatpush2.bf16.msra.mxu0 0
        %4980 = vmatprep.subr.bf16.mxu0 0
        %4981 = vmatpush2.bf16.msra.mxu0 0
        %4982 = vmatprep.subr.bf16.mxu0 0
        %4983 = vmatpush2.bf16.msra.mxu0 0
        %4984 = vmatprep.subr.bf16.mxu0 0
        %4985 = vmatpush2.bf16.msra.mxu0 0
        %4986 = vmatprep.subr.bf16.mxu0 0
        %4987 = vmatpush2.bf16.msra.mxu0 0
        %4988 = vmatprep.subr.bf16.mxu0 0
        %4989 = vmatpush2.bf16.msra.mxu0 0
        %4990 = vmatprep.subr.bf16.mxu0 0
        %4991 = vmatpush2.bf16.msra.mxu0 0
        %4992 = vmatprep.subr.bf16.mxu0 0
        %4993 = vmatpush2.bf16.msra.mxu0 0
        %4994 = vmatprep.mubr.bf16.mxu0 0
        %4995 = vmatmul.mubr.bf16.gmra.mxu0 %v4915
        %v4996 = vpop.f32.mrf.mxu0
        %v4997 = vadd.f32 0.0, %v4996
        %v4998 = vpop.f32.mrf.mxu0
        %v4999 = vpop.f32.mrf.mxu0
        %v5000 = vadd.f32 0.0, %v4999
        %v5001 = vpop.f32.mrf.mxu0
        %5002 = vmatprep.mubr.bf16.mxu0 0
        %5003 = vmatmul.mubr.bf16.gmra.mxu0 %v4918
        %v5004 = vpop.f32.mrf.mxu0
        %v5005 = vadd.f32 0.0, %v5004
        %v5006 = vpop.f32.mrf.mxu0
        %v5007 = vpop.f32.mrf.mxu0
        %v5008 = vadd.f32 0.0, %v5007
        %v5009 = vpop.f32.mrf.mxu0
        %5010 = vmatprep.mubr.bf16.mxu0 0
        %5011 = vmatmul.mubr.bf16.gmra.mxu0 %v4921
        %v5012 = vpop.f32.mrf.mxu0
        %v5013 = vadd.f32 0.0, %v5012
        %v5014 = vpop.f32.mrf.mxu0
        %v5015 = vpop.f32.mrf.mxu0
        %v5016 = vadd.f32 0.0, %v5015
        %v5017 = vpop.f32.mrf.mxu0
        %5018 = vmatprep.mubr.bf16.mxu0 0
        %5019 = vmatmul.mubr.bf16.gmra.mxu0 %v4924
        %v5020 = vpop.f32.mrf.mxu0
        %v5021 = vadd.f32 0.0, %v5020
        %v5022 = vpop.f32.mrf.mxu0
        %v5023 = vpop.f32.mrf.mxu0
        %v5024 = vadd.f32 0.0, %v5023
        %v5025 = vpop.f32.mrf.mxu0
        %5026 = vmatprep.mubr.bf16.mxu0 0
        %5027 = vmatmul.mubr.bf16.gmra.mxu0 %v4927
        %v5028 = vpop.f32.mrf.mxu0
        %v5029 = vadd.f32 0.0, %v5028
        %v5030 = vpop.f32.mrf.mxu0
        %v5031 = vpop.f32.mrf.mxu0
        %v5032 = vadd.f32 0.0, %v5031
        %v5033 = vpop.f32.mrf.mxu0
        %5034 = vmatprep.mubr.bf16.mxu0 0
        %5035 = vmatmul.mubr.bf16.gmra.mxu0 %v4930
        %v5036 = vpop.f32.mrf.mxu0
        %v5037 = vadd.f32 0.0, %v5036
        %v5038 = vpop.f32.mrf.mxu0
        %v5039 = vpop.f32.mrf.mxu0
        %v5040 = vadd.f32 0.0, %v5039
        %v5041 = vpop.f32.mrf.mxu0
        %5042 = vmatprep.mubr.bf16.mxu0 0
        %5043 = vmatmul.mubr.bf16.gmra.mxu0 %v4933
        %v5044 = vpop.f32.mrf.mxu0
        %v5045 = vadd.f32 0.0, %v5044
        %v5046 = vpop.f32.mrf.mxu0
        %v5047 = vpop.f32.mrf.mxu0
        %v5048 = vadd.f32 0.0, %v5047
        %v5049 = vpop.f32.mrf.mxu0
        %5050 = vmatprep.mubr.bf16.mxu0 0
        %5051 = vmatmul.mubr.bf16.gmra.mxu0 %v4936
        %v5052 = vpop.f32.mrf.mxu0
        %v5053 = vadd.f32 0.0, %v5052
        %v5054 = vpop.f32.mrf.mxu0
        %v5055 = vpop.f32.mrf.mxu0
        %v5056 = vadd.f32 0.0, %v5055
        %v5057 = vpop.f32.mrf.mxu0
        %5058 = vmatprep.mubr.bf16.mxu0 0
        %5059 = vmatmul.mubr.bf16.gmra.mxu0 %v4939
        %v5060 = vpop.f32.mrf.mxu0
        %v5061 = vadd.f32 0.0, %v5060
        %v5062 = vpop.f32.mrf.mxu0
        %v5063 = vpop.f32.mrf.mxu0
        %v5064 = vadd.f32 0.0, %v5063
        %v5065 = vpop.f32.mrf.mxu0
        %5066 = vmatprep.mubr.bf16.mxu0 0
        %5067 = vmatmul.mubr.bf16.gmra.mxu0 %v4942
        %v5068 = vpop.f32.mrf.mxu0
        %v5069 = vadd.f32 0.0, %v5068
        %v5070 = vpop.f32.mrf.mxu0
        %v5071 = vpop.f32.mrf.mxu0
        %v5072 = vadd.f32 0.0, %v5071
        %v5073 = vpop.f32.mrf.mxu0
        %5074 = vmatprep.mubr.bf16.mxu0 0
        %5075 = vmatmul.mubr.bf16.gmra.mxu0 %v4945
        %v5076 = vpop.f32.mrf.mxu0
        %v5077 = vadd.f32 0.0, %v5076
        %v5078 = vpop.f32.mrf.mxu0
        %v5079 = vpop.f32.mrf.mxu0
        %v5080 = vadd.f32 0.0, %v5079
        %v5081 = vpop.f32.mrf.mxu0
        %5082 = vmatprep.mubr.bf16.mxu0 0
        %5083 = vmatmul.mubr.bf16.gmra.mxu0 %v4948
        %v5084 = vpop.f32.mrf.mxu0
        %v5085 = vadd.f32 0.0, %v5084
        %v5086 = vpop.f32.mrf.mxu0
        %v5087 = vpop.f32.mrf.mxu0
        %v5088 = vadd.f32 0.0, %v5087
        %v5089 = vpop.f32.mrf.mxu0
        %5090 = vmatprep.mubr.bf16.mxu0 0
        %5091 = vmatmul.mubr.bf16.gmra.mxu0 %v4951
        %v5092 = vpop.f32.mrf.mxu0
        %v5093 = vadd.f32 0.0, %v5092
        %v5094 = vpop.f32.mrf.mxu0
        %v5095 = vpop.f32.mrf.mxu0
        %v5096 = vadd.f32 0.0, %v5095
        %v5097 = vpop.f32.mrf.mxu0
        %5098 = vmatprep.mubr.bf16.mxu0 0
        %5099 = vmatmul.mubr.bf16.gmra.mxu0 %v4954
        %v5100 = vpop.f32.mrf.mxu0
        %v5101 = vadd.f32 0.0, %v5100
        %v5102 = vpop.f32.mrf.mxu0
        %v5103 = vpop.f32.mrf.mxu0
        %v5104 = vadd.f32 0.0, %v5103
        %v5105 = vpop.f32.mrf.mxu0
        %5106 = vmatprep.mubr.bf16.mxu0 0
        %5107 = vmatmul.mubr.bf16.gmra.mxu0 %v4957
        %v5108 = vpop.f32.mrf.mxu0
        %v5109 = vadd.f32 0.0, %v5108
        %v5110 = vpop.f32.mrf.mxu0
        %v5111 = vpop.f32.mrf.mxu0
        %v5112 = vadd.f32 0.0, %v5111
        %v5113 = vpop.f32.mrf.mxu0
        %5114 = vmatprep.mubr.bf16.mxu0 0
        %5115 = vmatmul.mubr.bf16.gmra.mxu0 %v4960
        %v5116 = vpop.f32.mrf.mxu0
        %v5117 = vadd.f32 0.0, %v5116
        %v5118 = vpop.f32.mrf.mxu0
        %v5119 = vpop.f32.mrf.mxu0
        %v5120 = vadd.f32 0.0, %v5119
        %v5121 = vpop.f32.mrf.mxu0
        %5122 = vdwg.mxu0
        %v5127 = vunpack.c.l.b16 %v4845
        %v5128 = vunpack.c.l.b16 %v4846
        %v5129 = vunpack.c.l.b16 %v4847
        %v5130 = vunpack.c.l.b16 %v4848
        %v5131 = vpack.c.b16 %v5128, %v5127
        %v5132 = vpack.c.b16 %v5130, %v5129
        %v5136 = vsel %vm648, %v4829, 0
        %v5139 = vsel %vm648, %v4830, 0
        %v5142 = vsel %vm648, %v4831, 0
        %v5145 = vsel %vm648, %v4832, 0
        %v5148 = vsel %vm648, %v4833, 0
        %v5151 = vsel %vm648, %v4834, 0
        %v5154 = vsel %vm648, %v4835, 0
        %v5157 = vsel %vm648, %v4836, 0
        %v5160 = vsel %vm648, %v4837, 0
        %v5163 = vsel %vm648, %v4838, 0
        %v5166 = vsel %vm648, %v4839, 0
        %v5169 = vsel %vm648, %v4840, 0
        %v5172 = vsel %vm648, %v4841, 0
        %v5175 = vsel %vm648, %v4842, 0
        %v5178 = vsel %vm648, %v4843, 0
        %v5181 = vsel %vm648, %v4844, 0
        %5183 = vmatprep.subr.bf16.mxu0 0
        %5184 = vmatpush1.bf16.msra.mxu0 0
        %5185 = vmatprep.subr.bf16.mxu0 0
        %5186 = vmatpush1.bf16.msra.mxu0 0
        %5187 = vmatprep.subr.bf16.mxu0 0
        %5188 = vmatpush1.bf16.msra.mxu0 0
        %5189 = vmatprep.subr.bf16.mxu0 0
        %5190 = vmatpush1.bf16.msra.mxu0 0
        %5191 = vmatprep.subr.bf16.mxu0 0
        %5192 = vmatpush1.bf16.msra.mxu0 0
        %5193 = vmatprep.subr.bf16.mxu0 0
        %5194 = vmatpush1.bf16.msra.mxu0 0
        %5195 = vmatprep.subr.bf16.mxu0 0
        %5196 = vmatpush1.bf16.msra.mxu0 %v5132
        %5197 = vmatprep.subr.bf16.mxu0 0
        %5198 = vmatpush1.bf16.msra.mxu0 %v5131
        %5199 = vmatprep.subr.bf16.mxu0 0
        %5200 = vmatpush2.bf16.msra.mxu0 0
        %5201 = vmatprep.subr.bf16.mxu0 0
        %5202 = vmatpush2.bf16.msra.mxu0 0
        %5203 = vmatprep.subr.bf16.mxu0 0
        %5204 = vmatpush2.bf16.msra.mxu0 0
        %5205 = vmatprep.subr.bf16.mxu0 0
        %5206 = vmatpush2.bf16.msra.mxu0 0
        %5207 = vmatprep.subr.bf16.mxu0 0
        %5208 = vmatpush2.bf16.msra.mxu0 0
        %5209 = vmatprep.subr.bf16.mxu0 0
        %5210 = vmatpush2.bf16.msra.mxu0 0
        %5211 = vmatprep.subr.bf16.mxu0 0
        %5212 = vmatpush2.bf16.msra.mxu0 0
        %5213 = vmatprep.subr.bf16.mxu0 0
        %5214 = vmatpush2.bf16.msra.mxu0 0
        %5215 = vmatprep.mubr.bf16.mxu0 0
        %5216 = vmatmul.mubr.bf16.gmra.mxu0 %v5136
        %v5217 = vpop.f32.mrf.mxu0
        %v5218 = vadd.f32 %v4997, %v5217
        %v5219 = vpop.f32.mrf.mxu0
        %v5220 = vpop.f32.mrf.mxu0
        %v5221 = vadd.f32 %v5000, %v5220
        %v5222 = vpop.f32.mrf.mxu0
        %5223 = vmatprep.mubr.bf16.mxu0 0
        %5224 = vmatmul.mubr.bf16.gmra.mxu0 %v5139
        %v5225 = vpop.f32.mrf.mxu0
        %v5226 = vadd.f32 %v5005, %v5225
        %v5227 = vpop.f32.mrf.mxu0
        %v5228 = vpop.f32.mrf.mxu0
        %v5229 = vadd.f32 %v5008, %v5228
        %v5230 = vpop.f32.mrf.mxu0
        %5231 = vmatprep.mubr.bf16.mxu0 0
        %5232 = vmatmul.mubr.bf16.gmra.mxu0 %v5142
        %v5233 = vpop.f32.mrf.mxu0
        %v5234 = vadd.f32 %v5013, %v5233
        %v5235 = vpop.f32.mrf.mxu0
        %v5236 = vpop.f32.mrf.mxu0
        %v5237 = vadd.f32 %v5016, %v5236
        %v5238 = vpop.f32.mrf.mxu0
        %5239 = vmatprep.mubr.bf16.mxu0 0
        %5240 = vmatmul.mubr.bf16.gmra.mxu0 %v5145
        %v5241 = vpop.f32.mrf.mxu0
        %v5242 = vadd.f32 %v5021, %v5241
        %v5243 = vpop.f32.mrf.mxu0
        %v5244 = vpop.f32.mrf.mxu0
        %v5245 = vadd.f32 %v5024, %v5244
        %v5246 = vpop.f32.mrf.mxu0
        %5247 = vmatprep.mubr.bf16.mxu0 0
        %5248 = vmatmul.mubr.bf16.gmra.mxu0 %v5148
        %v5249 = vpop.f32.mrf.mxu0
        %v5250 = vadd.f32 %v5029, %v5249
        %v5251 = vpop.f32.mrf.mxu0
        %v5252 = vpop.f32.mrf.mxu0
        %v5253 = vadd.f32 %v5032, %v5252
        %v5254 = vpop.f32.mrf.mxu0
        %5255 = vmatprep.mubr.bf16.mxu0 0
        %5256 = vmatmul.mubr.bf16.gmra.mxu0 %v5151
        %v5257 = vpop.f32.mrf.mxu0
        %v5258 = vadd.f32 %v5037, %v5257
        %v5259 = vpop.f32.mrf.mxu0
        %v5260 = vpop.f32.mrf.mxu0
        %v5261 = vadd.f32 %v5040, %v5260
        %v5262 = vpop.f32.mrf.mxu0
        %5263 = vmatprep.mubr.bf16.mxu0 0
        %5264 = vmatmul.mubr.bf16.gmra.mxu0 %v5154
        %v5265 = vpop.f32.mrf.mxu0
        %v5266 = vadd.f32 %v5045, %v5265
        %v5267 = vpop.f32.mrf.mxu0
        %v5268 = vpop.f32.mrf.mxu0
        %v5269 = vadd.f32 %v5048, %v5268
        %v5270 = vpop.f32.mrf.mxu0
        %5271 = vmatprep.mubr.bf16.mxu0 0
        %5272 = vmatmul.mubr.bf16.gmra.mxu0 %v5157
        %v5273 = vpop.f32.mrf.mxu0
        %v5274 = vadd.f32 %v5053, %v5273
        %v5275 = vpop.f32.mrf.mxu0
        %v5276 = vpop.f32.mrf.mxu0
        %v5277 = vadd.f32 %v5056, %v5276
        %v5278 = vpop.f32.mrf.mxu0
        %5279 = vmatprep.mubr.bf16.mxu0 0
        %5280 = vmatmul.mubr.bf16.gmra.mxu0 %v5160
        %v5281 = vpop.f32.mrf.mxu0
        %v5282 = vadd.f32 %v5061, %v5281
        %v5283 = vpop.f32.mrf.mxu0
        %v5284 = vpop.f32.mrf.mxu0
        %v5285 = vadd.f32 %v5064, %v5284
        %v5286 = vpop.f32.mrf.mxu0
        %5287 = vmatprep.mubr.bf16.mxu0 0
        %5288 = vmatmul.mubr.bf16.gmra.mxu0 %v5163
        %v5289 = vpop.f32.mrf.mxu0
        %v5290 = vadd.f32 %v5069, %v5289
        %v5291 = vpop.f32.mrf.mxu0
        %v5292 = vpop.f32.mrf.mxu0
        %v5293 = vadd.f32 %v5072, %v5292
        %v5294 = vpop.f32.mrf.mxu0
        %5295 = vmatprep.mubr.bf16.mxu0 0
        %5296 = vmatmul.mubr.bf16.gmra.mxu0 %v5166
        %v5297 = vpop.f32.mrf.mxu0
        %v5298 = vadd.f32 %v5077, %v5297
        %v5299 = vpop.f32.mrf.mxu0
        %v5300 = vpop.f32.mrf.mxu0
        %v5301 = vadd.f32 %v5080, %v5300
        %v5302 = vpop.f32.mrf.mxu0
        %5303 = vmatprep.mubr.bf16.mxu0 0
        %5304 = vmatmul.mubr.bf16.gmra.mxu0 %v5169
        %v5305 = vpop.f32.mrf.mxu0
        %v5306 = vadd.f32 %v5085, %v5305
        %v5307 = vpop.f32.mrf.mxu0
        %v5308 = vpop.f32.mrf.mxu0
        %v5309 = vadd.f32 %v5088, %v5308
        %v5310 = vpop.f32.mrf.mxu0
        %5311 = vmatprep.mubr.bf16.mxu0 0
        %5312 = vmatmul.mubr.bf16.gmra.mxu0 %v5172
        %v5313 = vpop.f32.mrf.mxu0
        %v5314 = vadd.f32 %v5093, %v5313
        %v5315 = vpop.f32.mrf.mxu0
        %v5316 = vpop.f32.mrf.mxu0
        %v5317 = vadd.f32 %v5096, %v5316
        %v5318 = vpop.f32.mrf.mxu0
        %5319 = vmatprep.mubr.bf16.mxu0 0
        %5320 = vmatmul.mubr.bf16.gmra.mxu0 %v5175
        %v5321 = vpop.f32.mrf.mxu0
        %v5322 = vadd.f32 %v5101, %v5321
        %v5323 = vpop.f32.mrf.mxu0
        %v5324 = vpop.f32.mrf.mxu0
        %v5325 = vadd.f32 %v5104, %v5324
        %v5326 = vpop.f32.mrf.mxu0
        %5327 = vmatprep.mubr.bf16.mxu0 0
        %5328 = vmatmul.mubr.bf16.gmra.mxu0 %v5178
        %v5329 = vpop.f32.mrf.mxu0
        %v5330 = vadd.f32 %v5109, %v5329
        %v5331 = vpop.f32.mrf.mxu0
        %v5332 = vpop.f32.mrf.mxu0
        %v5333 = vadd.f32 %v5112, %v5332
        %v5334 = vpop.f32.mrf.mxu0
        %5335 = vmatprep.mubr.bf16.mxu0 0
        %5336 = vmatmul.mubr.bf16.gmra.mxu0 %v5181
        %v5337 = vpop.f32.mrf.mxu0
        %v5338 = vadd.f32 %v5117, %v5337
        %v5339 = vpop.f32.mrf.mxu0
        %v5340 = vpop.f32.mrf.mxu0
        %v5341 = vadd.f32 %v5120, %v5340
        %v5342 = vpop.f32.mrf.mxu0
        %5343 = vdwg.mxu0
        %v5344 = vld [vmem:[#allocation3 + $0x9] sm:$0xff]
        %v5345 = vld [vmem:[#allocation3 + $0x11] sm:$0xff]
        %v5346 = vld [vmem:[#allocation3 + $0x19] sm:$0xff]
        %v5347 = vld [vmem:[#allocation3 + $0x21] sm:$0xff]
        %v5348 = vld [vmem:[#allocation3 + $0x29] sm:$0xff]
        %v5349 = vld [vmem:[#allocation3 + $0x31] sm:$0xff]
        %v5350 = vld [vmem:[#allocation3 + $0x39] sm:$0xff]
        %v5351 = vld [vmem:[#allocation3 + $0x41] sm:$0xff]
        %v5352 = vld [vmem:[#allocation3 + $0x49] sm:$0xff]
        %v5353 = vld [vmem:[#allocation3 + $0x51] sm:$0xff]
        %v5354 = vld [vmem:[#allocation3 + $0x59] sm:$0xff]
        %v5355 = vld [vmem:[#allocation3 + $0x61] sm:$0xff]
        %v5356 = vld [vmem:[#allocation3 + $0x69] sm:$0xff]
        %v5357 = vld [vmem:[#allocation3 + $0x71] sm:$0xff]
        %v5358 = vld [vmem:[#allocation3 + $0x79] sm:$0xff]
        %v5359 = vld [vmem:[#allocation3 + $0x81] sm:$0xff]
        %v5360 = vld [vmem:[#allocation3 + $0x89] sm:$0xff]
        %v5361 = vld [vmem:[#allocation3 + $0x91] sm:$0xff]
        %v5362 = vld [vmem:[#allocation3 + $0x99] sm:$0xff]
        %v5363 = vld [vmem:[#allocation3 + $0xa1] sm:$0xff]
        %v5364 = vld [vmem:[#allocation3 + $0xa9] sm:$0xff]
        %v5365 = vld [vmem:[#allocation3 + $0xb1] sm:$0xff]
        %v5366 = vld [vmem:[#allocation3 + $0xb9] sm:$0xff]
        %v5367 = vld [vmem:[#allocation3 + $0xc1] sm:$0xff]
        %v5368 = vld [vmem:[#allocation3 + $0xc9] sm:$0xff]
        %v5369 = vld [vmem:[#allocation3 + $0xd1] sm:$0xff]
        %v5370 = vld [vmem:[#allocation3 + $0xd9] sm:$0xff]
        %v5371 = vld [vmem:[#allocation3 + $0xe1] sm:$0xff]
        %v5372 = vld [vmem:[#allocation3 + $0xe9] sm:$0xff]
        %v5373 = vld [vmem:[#allocation3 + $0xf1] sm:$0xff]
        %v5374 = vld [vmem:[#allocation3 + $0xf9] sm:$0xff]
        %v5375 = vld [vmem:[#allocation3 + $0x101] sm:$0xff]
        %v5376 = vsel %vm2371, %v5344, 0.0
        %v5377 = vsel %vm2372, %v5345, 0.0
        %v5378 = vsel %vm2373, %v5346, 0.0
        %v5379 = vsel %vm2374, %v5347, 0.0
        %v5380 = vsel %vm2375, %v5348, 0.0
        %v5381 = vsel %vm2376, %v5349, 0.0
        %v5382 = vsel %vm2377, %v5350, 0.0
        %v5383 = vsel %vm2378, %v5351, 0.0
        %v5384 = vsel %vm2379, %v5352, 0.0
        %v5385 = vsel %vm2380, %v5353, 0.0
        %v5386 = vsel %vm2381, %v5354, 0.0
        %v5387 = vsel %vm2382, %v5355, 0.0
        %v5388 = vsel %vm2383, %v5356, 0.0
        %v5389 = vsel %vm2384, %v5357, 0.0
        %v5390 = vsel %vm2385, %v5358, 0.0
        %v5391 = vsel %vm2386, %v5359, 0.0
        %v5392 = vsel %vm2387, %v5360, 0.0
        %v5393 = vsel %vm2388, %v5361, 0.0
        %v5394 = vsel %vm2389, %v5362, 0.0
        %v5395 = vsel %vm2390, %v5363, 0.0
        %v5396 = vsel %vm2391, %v5364, 0.0
        %v5397 = vsel %vm2392, %v5365, 0.0
        %v5398 = vsel %vm2393, %v5366, 0.0
        %v5399 = vsel %vm2394, %v5367, 0.0
        %v5400 = vsel %vm2395, %v5368, 0.0
        %v5401 = vsel %vm2396, %v5369, 0.0
        %v5402 = vsel %vm2397, %v5370, 0.0
        %v5403 = vsel %vm2398, %v5371, 0.0
        %v5404 = vsel %vm2399, %v5372, 0.0
        %v5405 = vsel %vm2400, %v5373, 0.0
        %v5406 = vsel %vm2401, %v5374, 0.0
        %v5407 = vsel %vm2402, %v5375, 0.0
        %v5408 = vpack.c.bf16 %v5377, %v5376
        %v5409 = vpack.c.bf16 %v5379, %v5378
        %v5410 = vpack.c.bf16 %v5381, %v5380
        %v5411 = vpack.c.bf16 %v5383, %v5382
        %v5412 = vpack.c.bf16 %v5385, %v5384
        %v5413 = vpack.c.bf16 %v5387, %v5386
        %v5414 = vpack.c.bf16 %v5389, %v5388
        %v5415 = vpack.c.bf16 %v5391, %v5390
        %v5416 = vpack.c.bf16 %v5393, %v5392
        %v5417 = vpack.c.bf16 %v5395, %v5394
        %v5418 = vpack.c.bf16 %v5397, %v5396
        %v5419 = vpack.c.bf16 %v5399, %v5398
        %v5420 = vpack.c.bf16 %v5401, %v5400
        %v5421 = vpack.c.bf16 %v5403, %v5402
        %v5422 = vpack.c.bf16 %v5405, %v5404
        %v5423 = vpack.c.bf16 %v5407, %v5406
        %s5424 = scalar_lea.vmem %s7, 32
        %v5425 = vld [vmem:[%s5424] sm:$0xf]
        %v5426 = vld [vmem:[%s5424 + $0x4] sm:$0xf]
        %v5427 = vld [vmem:[%s5424 + $0x8] sm:$0xf]
        %v5428 = vld [vmem:[%s5424 + $0xc] sm:$0xf]
        %v5433 = vunpack.c.l.b16 %v5425
        %v5434 = vunpack.c.l.b16 %v5426
        %v5435 = vunpack.c.l.b16 %v5427
        %v5436 = vunpack.c.l.b16 %v5428
        %v5437 = vpack.c.b16 %v5434, %v5433
        %v5438 = vpack.c.b16 %v5436, %v5435
        %v5442 = vsel %vm648, %v5408, 0
        %v5445 = vsel %vm648, %v5409, 0
        %v5448 = vsel %vm648, %v5410, 0
        %v5451 = vsel %vm648, %v5411, 0
        %v5454 = vsel %vm648, %v5412, 0
        %v5457 = vsel %vm648, %v5413, 0
        %v5460 = vsel %vm648, %v5414, 0
        %v5463 = vsel %vm648, %v5415, 0
        %v5466 = vsel %vm648, %v5416, 0
        %v5469 = vsel %vm648, %v5417, 0
        %v5472 = vsel %vm648, %v5418, 0
        %v5475 = vsel %vm648, %v5419, 0
        %v5478 = vsel %vm648, %v5420, 0
        %v5481 = vsel %vm648, %v5421, 0
        %v5484 = vsel %vm648, %v5422, 0
        %v5487 = vsel %vm648, %v5423, 0
        %5489 = vmatprep.subr.bf16.mxu0 0
        %5490 = vmatpush1.bf16.msra.mxu0 0
        %5491 = vmatprep.subr.bf16.mxu0 0
        %5492 = vmatpush1.bf16.msra.mxu0 0
        %5493 = vmatprep.subr.bf16.mxu0 0
        %5494 = vmatpush1.bf16.msra.mxu0 0
        %5495 = vmatprep.subr.bf16.mxu0 0
        %5496 = vmatpush1.bf16.msra.mxu0 0
        %5497 = vmatprep.subr.bf16.mxu0 0
        %5498 = vmatpush1.bf16.msra.mxu0 0
        %5499 = vmatprep.subr.bf16.mxu0 0
        %5500 = vmatpush1.bf16.msra.mxu0 0
        %5501 = vmatprep.subr.bf16.mxu0 0
        %5502 = vmatpush1.bf16.msra.mxu0 %v5438
        %5503 = vmatprep.subr.bf16.mxu0 0
        %5504 = vmatpush1.bf16.msra.mxu0 %v5437
        %5505 = vmatprep.subr.bf16.mxu0 0
        %5506 = vmatpush2.bf16.msra.mxu0 0
        %5507 = vmatprep.subr.bf16.mxu0 0
        %5508 = vmatpush2.bf16.msra.mxu0 0
        %5509 = vmatprep.subr.bf16.mxu0 0
        %5510 = vmatpush2.bf16.msra.mxu0 0
        %5511 = vmatprep.subr.bf16.mxu0 0
        %5512 = vmatpush2.bf16.msra.mxu0 0
        %5513 = vmatprep.subr.bf16.mxu0 0
        %5514 = vmatpush2.bf16.msra.mxu0 0
        %5515 = vmatprep.subr.bf16.mxu0 0
        %5516 = vmatpush2.bf16.msra.mxu0 0
        %5517 = vmatprep.subr.bf16.mxu0 0
        %5518 = vmatpush2.bf16.msra.mxu0 0
        %5519 = vmatprep.subr.bf16.mxu0 0
        %5520 = vmatpush2.bf16.msra.mxu0 0
        %5521 = vmatprep.mubr.bf16.mxu0 0
        %5522 = vmatmul.mubr.bf16.gmra.mxu0 %v5442
        %v5523 = vpop.f32.mrf.mxu0
        %v5524 = vadd.f32 0.0, %v5523
        %v5525 = vpop.f32.mrf.mxu0
        %v5526 = vpop.f32.mrf.mxu0
        %v5527 = vadd.f32 0.0, %v5526
        %v5528 = vpop.f32.mrf.mxu0
        %5529 = vmatprep.mubr.bf16.mxu0 0
        %5530 = vmatmul.mubr.bf16.gmra.mxu0 %v5445
        %v5531 = vpop.f32.mrf.mxu0
        %v5532 = vadd.f32 0.0, %v5531
        %v5533 = vpop.f32.mrf.mxu0
        %v5534 = vpop.f32.mrf.mxu0
        %v5535 = vadd.f32 0.0, %v5534
        %v5536 = vpop.f32.mrf.mxu0
        %5537 = vmatprep.mubr.bf16.mxu0 0
        %5538 = vmatmul.mubr.bf16.gmra.mxu0 %v5448
        %v5539 = vpop.f32.mrf.mxu0
        %v5540 = vadd.f32 0.0, %v5539
        %v5541 = vpop.f32.mrf.mxu0
        %v5542 = vpop.f32.mrf.mxu0
        %v5543 = vadd.f32 0.0, %v5542
        %v5544 = vpop.f32.mrf.mxu0
        %5545 = vmatprep.mubr.bf16.mxu0 0
        %5546 = vmatmul.mubr.bf16.gmra.mxu0 %v5451
        %v5547 = vpop.f32.mrf.mxu0
        %v5548 = vadd.f32 0.0, %v5547
        %v5549 = vpop.f32.mrf.mxu0
        %v5550 = vpop.f32.mrf.mxu0
        %v5551 = vadd.f32 0.0, %v5550
        %v5552 = vpop.f32.mrf.mxu0
        %5553 = vmatprep.mubr.bf16.mxu0 0
        %5554 = vmatmul.mubr.bf16.gmra.mxu0 %v5454
        %v5555 = vpop.f32.mrf.mxu0
        %v5556 = vadd.f32 0.0, %v5555
        %v5557 = vpop.f32.mrf.mxu0
        %v5558 = vpop.f32.mrf.mxu0
        %v5559 = vadd.f32 0.0, %v5558
        %v5560 = vpop.f32.mrf.mxu0
        %5561 = vmatprep.mubr.bf16.mxu0 0
        %5562 = vmatmul.mubr.bf16.gmra.mxu0 %v5457
        %v5563 = vpop.f32.mrf.mxu0
        %v5564 = vadd.f32 0.0, %v5563
        %v5565 = vpop.f32.mrf.mxu0
        %v5566 = vpop.f32.mrf.mxu0
        %v5567 = vadd.f32 0.0, %v5566
        %v5568 = vpop.f32.mrf.mxu0
        %5569 = vmatprep.mubr.bf16.mxu0 0
        %5570 = vmatmul.mubr.bf16.gmra.mxu0 %v5460
        %v5571 = vpop.f32.mrf.mxu0
        %v5572 = vadd.f32 0.0, %v5571
        %v5573 = vpop.f32.mrf.mxu0
        %v5574 = vpop.f32.mrf.mxu0
        %v5575 = vadd.f32 0.0, %v5574
        %v5576 = vpop.f32.mrf.mxu0
        %5577 = vmatprep.mubr.bf16.mxu0 0
        %5578 = vmatmul.mubr.bf16.gmra.mxu0 %v5463
        %v5579 = vpop.f32.mrf.mxu0
        %v5580 = vadd.f32 0.0, %v5579
        %v5581 = vpop.f32.mrf.mxu0
        %v5582 = vpop.f32.mrf.mxu0
        %v5583 = vadd.f32 0.0, %v5582
        %v5584 = vpop.f32.mrf.mxu0
        %5585 = vmatprep.mubr.bf16.mxu0 0
        %5586 = vmatmul.mubr.bf16.gmra.mxu0 %v5466
        %v5587 = vpop.f32.mrf.mxu0
        %v5588 = vadd.f32 0.0, %v5587
        %v5589 = vpop.f32.mrf.mxu0
        %v5590 = vpop.f32.mrf.mxu0
        %v5591 = vadd.f32 0.0, %v5590
        %v5592 = vpop.f32.mrf.mxu0
        %5593 = vmatprep.mubr.bf16.mxu0 0
        %5594 = vmatmul.mubr.bf16.gmra.mxu0 %v5469
        %v5595 = vpop.f32.mrf.mxu0
        %v5596 = vadd.f32 0.0, %v5595
        %v5597 = vpop.f32.mrf.mxu0
        %v5598 = vpop.f32.mrf.mxu0
        %v5599 = vadd.f32 0.0, %v5598
        %v5600 = vpop.f32.mrf.mxu0
        %5601 = vmatprep.mubr.bf16.mxu0 0
        %5602 = vmatmul.mubr.bf16.gmra.mxu0 %v5472
        %v5603 = vpop.f32.mrf.mxu0
        %v5604 = vadd.f32 0.0, %v5603
        %v5605 = vpop.f32.mrf.mxu0
        %v5606 = vpop.f32.mrf.mxu0
        %v5607 = vadd.f32 0.0, %v5606
        %v5608 = vpop.f32.mrf.mxu0
        %5609 = vmatprep.mubr.bf16.mxu0 0
        %5610 = vmatmul.mubr.bf16.gmra.mxu0 %v5475
        %v5611 = vpop.f32.mrf.mxu0
        %v5612 = vadd.f32 0.0, %v5611
        %v5613 = vpop.f32.mrf.mxu0
        %v5614 = vpop.f32.mrf.mxu0
        %v5615 = vadd.f32 0.0, %v5614
        %v5616 = vpop.f32.mrf.mxu0
        %5617 = vmatprep.mubr.bf16.mxu0 0
        %5618 = vmatmul.mubr.bf16.gmra.mxu0 %v5478
        %v5619 = vpop.f32.mrf.mxu0
        %v5620 = vadd.f32 0.0, %v5619
        %v5621 = vpop.f32.mrf.mxu0
        %v5622 = vpop.f32.mrf.mxu0
        %v5623 = vadd.f32 0.0, %v5622
        %v5624 = vpop.f32.mrf.mxu0
        %5625 = vmatprep.mubr.bf16.mxu0 0
        %5626 = vmatmul.mubr.bf16.gmra.mxu0 %v5481
        %v5627 = vpop.f32.mrf.mxu0
        %v5628 = vadd.f32 0.0, %v5627
        %v5629 = vpop.f32.mrf.mxu0
        %v5630 = vpop.f32.mrf.mxu0
        %v5631 = vadd.f32 0.0, %v5630
        %v5632 = vpop.f32.mrf.mxu0
        %5633 = vmatprep.mubr.bf16.mxu0 0
        %5634 = vmatmul.mubr.bf16.gmra.mxu0 %v5484
        %v5635 = vpop.f32.mrf.mxu0
        %v5636 = vadd.f32 0.0, %v5635
        %v5637 = vpop.f32.mrf.mxu0
        %v5638 = vpop.f32.mrf.mxu0
        %v5639 = vadd.f32 0.0, %v5638
        %v5640 = vpop.f32.mrf.mxu0
        %5641 = vmatprep.mubr.bf16.mxu0 0
        %5642 = vmatmul.mubr.bf16.gmra.mxu0 %v5487
        %v5643 = vpop.f32.mrf.mxu0
        %v5644 = vadd.f32 0.0, %v5643
        %v5645 = vpop.f32.mrf.mxu0
        %v5646 = vpop.f32.mrf.mxu0
        %v5647 = vadd.f32 0.0, %v5646
        %v5648 = vpop.f32.mrf.mxu0
        %5649 = vdwg.mxu0
        %v5650 = vadd.f32 %v5218, %v5524
        %v5651 = vadd.f32 %v5221, %v5527
        %v5652 = vadd.f32 %v5226, %v5532
        %v5653 = vadd.f32 %v5229, %v5535
        %v5654 = vadd.f32 %v5234, %v5540
        %v5655 = vadd.f32 %v5237, %v5543
        %v5656 = vadd.f32 %v5242, %v5548
        %v5657 = vadd.f32 %v5245, %v5551
        %v5658 = vadd.f32 %v5250, %v5556
        %v5659 = vadd.f32 %v5253, %v5559
        %v5660 = vadd.f32 %v5258, %v5564
        %v5661 = vadd.f32 %v5261, %v5567
        %v5662 = vadd.f32 %v5266, %v5572
        %v5663 = vadd.f32 %v5269, %v5575
        %v5664 = vadd.f32 %v5274, %v5580
        %v5665 = vadd.f32 %v5277, %v5583
        %v5666 = vadd.f32 %v5282, %v5588
        %v5667 = vadd.f32 %v5285, %v5591
        %v5668 = vadd.f32 %v5290, %v5596
        %v5669 = vadd.f32 %v5293, %v5599
        %v5670 = vadd.f32 %v5298, %v5604
        %v5671 = vadd.f32 %v5301, %v5607
        %v5672 = vadd.f32 %v5306, %v5612
        %v5673 = vadd.f32 %v5309, %v5615
        %v5674 = vadd.f32 %v5314, %v5620
        %v5675 = vadd.f32 %v5317, %v5623
        %v5676 = vadd.f32 %v5322, %v5628
        %v5677 = vadd.f32 %v5325, %v5631
        %v5678 = vadd.f32 %v5330, %v5636
        %v5679 = vadd.f32 %v5333, %v5639
        %v5680 = vadd.f32 %v5338, %v5644
        %v5681 = vadd.f32 %v5341, %v5647
        %v5682 = vld [vmem:[#allocation3 + $0x17] sm:$0xff]
        %v5683 = vld [vmem:[#allocation3 + $0x1f] sm:$0xff]
        %v5684 = vld [vmem:[#allocation3 + $0x27] sm:$0xff]
        %v5685 = vld [vmem:[#allocation3 + $0x2f] sm:$0xff]
        %v5686 = vld [vmem:[#allocation3 + $0x37] sm:$0xff]
        %v5687 = vld [vmem:[#allocation3 + $0x3f] sm:$0xff]
        %v5688 = vld [vmem:[#allocation3 + $0x47] sm:$0xff]
        %v5689 = vld [vmem:[#allocation3 + $0x4f] sm:$0xff]
        %v5690 = vld [vmem:[#allocation3 + $0x57] sm:$0xff]
        %v5691 = vld [vmem:[#allocation3 + $0x5f] sm:$0xff]
        %v5692 = vld [vmem:[#allocation3 + $0x67] sm:$0xff]
        %v5693 = vld [vmem:[#allocation3 + $0x6f] sm:$0xff]
        %v5694 = vld [vmem:[#allocation3 + $0x77] sm:$0xff]
        %v5695 = vld [vmem:[#allocation3 + $0x7f] sm:$0xff]
        %v5696 = vld [vmem:[#allocation3 + $0x87] sm:$0xff]
        %v5697 = vld [vmem:[#allocation3 + $0x8f] sm:$0xff]
        %v5698 = vld [vmem:[#allocation3 + $0x97] sm:$0xff]
        %v5699 = vld [vmem:[#allocation3 + $0x9f] sm:$0xff]
        %v5700 = vld [vmem:[#allocation3 + $0xa7] sm:$0xff]
        %v5701 = vld [vmem:[#allocation3 + $0xaf] sm:$0xff]
        %v5702 = vld [vmem:[#allocation3 + $0xb7] sm:$0xff]
        %v5703 = vld [vmem:[#allocation3 + $0xbf] sm:$0xff]
        %v5704 = vld [vmem:[#allocation3 + $0xc7] sm:$0xff]
        %v5705 = vld [vmem:[#allocation3 + $0xcf] sm:$0xff]
        %v5706 = vld [vmem:[#allocation3 + $0xd7] sm:$0xff]
        %v5707 = vld [vmem:[#allocation3 + $0xdf] sm:$0xff]
        %v5708 = vld [vmem:[#allocation3 + $0xe7] sm:$0xff]
        %v5709 = vld [vmem:[#allocation3 + $0xef] sm:$0xff]
        %v5710 = vld [vmem:[#allocation3 + $0xf7] sm:$0xff]
        %v5711 = vld [vmem:[#allocation3 + $0xff] sm:$0xff]
        %v5712 = vld [vmem:[#allocation3 + $0x107] sm:$0xff]
        %v5713 = vld [vmem:[#allocation3 + $0x10f] sm:$0xff]
        %v5714 = vsel %vm1616, %v5682, 0.0
        %v5715 = vsel %vm1617, %v5683, 0.0
        %v5716 = vsel %vm1618, %v5684, 0.0
        %v5717 = vsel %vm1619, %v5685, 0.0
        %v5718 = vsel %vm1620, %v5686, 0.0
        %v5719 = vsel %vm1621, %v5687, 0.0
        %v5720 = vsel %vm1622, %v5688, 0.0
        %v5721 = vsel %vm1623, %v5689, 0.0
        %v5722 = vsel %vm1624, %v5690, 0.0
        %v5723 = vsel %vm1625, %v5691, 0.0
        %v5724 = vsel %vm1626, %v5692, 0.0
        %v5725 = vsel %vm1627, %v5693, 0.0
        %v5726 = vsel %vm1628, %v5694, 0.0
        %v5727 = vsel %vm1629, %v5695, 0.0
        %v5728 = vsel %vm1630, %v5696, 0.0
        %v5729 = vsel %vm1631, %v5697, 0.0
        %v5730 = vsel %vm1632, %v5698, 0.0
        %v5731 = vsel %vm1633, %v5699, 0.0
        %v5732 = vsel %vm1634, %v5700, 0.0
        %v5733 = vsel %vm1635, %v5701, 0.0
        %v5734 = vsel %vm1636, %v5702, 0.0
        %v5735 = vsel %vm1637, %v5703, 0.0
        %v5736 = vsel %vm1638, %v5704, 0.0
        %v5737 = vsel %vm1639, %v5705, 0.0
        %v5738 = vsel %vm1640, %v5706, 0.0
        %v5739 = vsel %vm1641, %v5707, 0.0
        %v5740 = vsel %vm1642, %v5708, 0.0
        %v5741 = vsel %vm1643, %v5709, 0.0
        %v5742 = vsel %vm1644, %v5710, 0.0
        %v5743 = vsel %vm1645, %v5711, 0.0
        %v5744 = vsel %vm1646, %v5712, 0.0
        %v5745 = vsel %vm1647, %v5713, 0.0
        %v5746 = vpack.c.bf16 %v5715, %v5714
        %v5747 = vpack.c.bf16 %v5717, %v5716
        %v5748 = vpack.c.bf16 %v5719, %v5718
        %v5749 = vpack.c.bf16 %v5721, %v5720
        %v5750 = vpack.c.bf16 %v5723, %v5722
        %v5751 = vpack.c.bf16 %v5725, %v5724
        %v5752 = vpack.c.bf16 %v5727, %v5726
        %v5753 = vpack.c.bf16 %v5729, %v5728
        %v5754 = vpack.c.bf16 %v5731, %v5730
        %v5755 = vpack.c.bf16 %v5733, %v5732
        %v5756 = vpack.c.bf16 %v5735, %v5734
        %v5757 = vpack.c.bf16 %v5737, %v5736
        %v5758 = vpack.c.bf16 %v5739, %v5738
        %v5759 = vpack.c.bf16 %v5741, %v5740
        %v5760 = vpack.c.bf16 %v5743, %v5742
        %v5761 = vpack.c.bf16 %v5745, %v5744
        %s5762 = scalar_lea.vmem %s7, 48
        %v5763 = vld [vmem:[%s5762] sm:$0xf]
        %v5764 = vld [vmem:[%s5762 + $0x4] sm:$0xf]
        %v5765 = vld [vmem:[%s5762 + $0x8] sm:$0xf]
        %v5766 = vld [vmem:[%s5762 + $0xc] sm:$0xf]
        %v5771 = vunpack.c.l.b16 %v5763
        %v5772 = vunpack.c.l.b16 %v5764
        %v5773 = vunpack.c.l.b16 %v5765
        %v5774 = vunpack.c.l.b16 %v5766
        %v5775 = vpack.c.b16 %v5772, %v5771
        %v5776 = vpack.c.b16 %v5774, %v5773
        %v5780 = vsel %vm648, %v5746, 0
        %v5783 = vsel %vm648, %v5747, 0
        %v5786 = vsel %vm648, %v5748, 0
        %v5789 = vsel %vm648, %v5749, 0
        %v5792 = vsel %vm648, %v5750, 0
        %v5795 = vsel %vm648, %v5751, 0
        %v5798 = vsel %vm648, %v5752, 0
        %v5801 = vsel %vm648, %v5753, 0
        %v5804 = vsel %vm648, %v5754, 0
        %v5807 = vsel %vm648, %v5755, 0
        %v5810 = vsel %vm648, %v5756, 0
        %v5813 = vsel %vm648, %v5757, 0
        %v5816 = vsel %vm648, %v5758, 0
        %v5819 = vsel %vm648, %v5759, 0
        %v5822 = vsel %vm648, %v5760, 0
        %v5825 = vsel %vm648, %v5761, 0
        %5827 = vmatprep.subr.bf16.mxu0 0
        %5828 = vmatpush1.bf16.msra.mxu0 0
        %5829 = vmatprep.subr.bf16.mxu0 0
        %5830 = vmatpush1.bf16.msra.mxu0 0
        %5831 = vmatprep.subr.bf16.mxu0 0
        %5832 = vmatpush1.bf16.msra.mxu0 0
        %5833 = vmatprep.subr.bf16.mxu0 0
        %5834 = vmatpush1.bf16.msra.mxu0 0
        %5835 = vmatprep.subr.bf16.mxu0 0
        %5836 = vmatpush1.bf16.msra.mxu0 0
        %5837 = vmatprep.subr.bf16.mxu0 0
        %5838 = vmatpush1.bf16.msra.mxu0 0
        %5839 = vmatprep.subr.bf16.mxu0 0
        %5840 = vmatpush1.bf16.msra.mxu0 %v5776
        %5841 = vmatprep.subr.bf16.mxu0 0
        %5842 = vmatpush1.bf16.msra.mxu0 %v5775
        %5843 = vmatprep.subr.bf16.mxu0 0
        %5844 = vmatpush2.bf16.msra.mxu0 0
        %5845 = vmatprep.subr.bf16.mxu0 0
        %5846 = vmatpush2.bf16.msra.mxu0 0
        %5847 = vmatprep.subr.bf16.mxu0 0
        %5848 = vmatpush2.bf16.msra.mxu0 0
        %5849 = vmatprep.subr.bf16.mxu0 0
        %5850 = vmatpush2.bf16.msra.mxu0 0
        %5851 = vmatprep.subr.bf16.mxu0 0
        %5852 = vmatpush2.bf16.msra.mxu0 0
        %5853 = vmatprep.subr.bf16.mxu0 0
        %5854 = vmatpush2.bf16.msra.mxu0 0
        %5855 = vmatprep.subr.bf16.mxu0 0
        %5856 = vmatpush2.bf16.msra.mxu0 0
        %5857 = vmatprep.subr.bf16.mxu0 0
        %5858 = vmatpush2.bf16.msra.mxu0 0
        %5859 = vmatprep.mubr.bf16.mxu0 0
        %5860 = vmatmul.mubr.bf16.gmra.mxu0 %v5780
        %v5861 = vpop.f32.mrf.mxu0
        %v5862 = vadd.f32 0.0, %v5861
        %v5863 = vpop.f32.mrf.mxu0
        %v5864 = vpop.f32.mrf.mxu0
        %v5865 = vadd.f32 0.0, %v5864
        %v5866 = vpop.f32.mrf.mxu0
        %5867 = vmatprep.mubr.bf16.mxu0 0
        %5868 = vmatmul.mubr.bf16.gmra.mxu0 %v5783
        %v5869 = vpop.f32.mrf.mxu0
        %v5870 = vadd.f32 0.0, %v5869
        %v5871 = vpop.f32.mrf.mxu0
        %v5872 = vpop.f32.mrf.mxu0
        %v5873 = vadd.f32 0.0, %v5872
        %v5874 = vpop.f32.mrf.mxu0
        %5875 = vmatprep.mubr.bf16.mxu0 0
        %5876 = vmatmul.mubr.bf16.gmra.mxu0 %v5786
        %v5877 = vpop.f32.mrf.mxu0
        %v5878 = vadd.f32 0.0, %v5877
        %v5879 = vpop.f32.mrf.mxu0
        %v5880 = vpop.f32.mrf.mxu0
        %v5881 = vadd.f32 0.0, %v5880
        %v5882 = vpop.f32.mrf.mxu0
        %5883 = vmatprep.mubr.bf16.mxu0 0
        %5884 = vmatmul.mubr.bf16.gmra.mxu0 %v5789
        %v5885 = vpop.f32.mrf.mxu0
        %v5886 = vadd.f32 0.0, %v5885
        %v5887 = vpop.f32.mrf.mxu0
        %v5888 = vpop.f32.mrf.mxu0
        %v5889 = vadd.f32 0.0, %v5888
        %v5890 = vpop.f32.mrf.mxu0
        %5891 = vmatprep.mubr.bf16.mxu0 0
        %5892 = vmatmul.mubr.bf16.gmra.mxu0 %v5792
        %v5893 = vpop.f32.mrf.mxu0
        %v5894 = vadd.f32 0.0, %v5893
        %v5895 = vpop.f32.mrf.mxu0
        %v5896 = vpop.f32.mrf.mxu0
        %v5897 = vadd.f32 0.0, %v5896
        %v5898 = vpop.f32.mrf.mxu0
        %5899 = vmatprep.mubr.bf16.mxu0 0
        %5900 = vmatmul.mubr.bf16.gmra.mxu0 %v5795
        %v5901 = vpop.f32.mrf.mxu0
        %v5902 = vadd.f32 0.0, %v5901
        %v5903 = vpop.f32.mrf.mxu0
        %v5904 = vpop.f32.mrf.mxu0
        %v5905 = vadd.f32 0.0, %v5904
        %v5906 = vpop.f32.mrf.mxu0
        %5907 = vmatprep.mubr.bf16.mxu0 0
        %5908 = vmatmul.mubr.bf16.gmra.mxu0 %v5798
        %v5909 = vpop.f32.mrf.mxu0
        %v5910 = vadd.f32 0.0, %v5909
        %v5911 = vpop.f32.mrf.mxu0
        %v5912 = vpop.f32.mrf.mxu0
        %v5913 = vadd.f32 0.0, %v5912
        %v5914 = vpop.f32.mrf.mxu0
        %5915 = vmatprep.mubr.bf16.mxu0 0
        %5916 = vmatmul.mubr.bf16.gmra.mxu0 %v5801
        %v5917 = vpop.f32.mrf.mxu0
        %v5918 = vadd.f32 0.0, %v5917
        %v5919 = vpop.f32.mrf.mxu0
        %v5920 = vpop.f32.mrf.mxu0
        %v5921 = vadd.f32 0.0, %v5920
        %v5922 = vpop.f32.mrf.mxu0
        %5923 = vmatprep.mubr.bf16.mxu0 0
        %5924 = vmatmul.mubr.bf16.gmra.mxu0 %v5804
        %v5925 = vpop.f32.mrf.mxu0
        %v5926 = vadd.f32 0.0, %v5925
        %v5927 = vpop.f32.mrf.mxu0
        %v5928 = vpop.f32.mrf.mxu0
        %v5929 = vadd.f32 0.0, %v5928
        %v5930 = vpop.f32.mrf.mxu0
        %5931 = vmatprep.mubr.bf16.mxu0 0
        %5932 = vmatmul.mubr.bf16.gmra.mxu0 %v5807
        %v5933 = vpop.f32.mrf.mxu0
        %v5934 = vadd.f32 0.0, %v5933
        %v5935 = vpop.f32.mrf.mxu0
        %v5936 = vpop.f32.mrf.mxu0
        %v5937 = vadd.f32 0.0, %v5936
        %v5938 = vpop.f32.mrf.mxu0
        %5939 = vmatprep.mubr.bf16.mxu0 0
        %5940 = vmatmul.mubr.bf16.gmra.mxu0 %v5810
        %v5941 = vpop.f32.mrf.mxu0
        %v5942 = vadd.f32 0.0, %v5941
        %v5943 = vpop.f32.mrf.mxu0
        %v5944 = vpop.f32.mrf.mxu0
        %v5945 = vadd.f32 0.0, %v5944
        %v5946 = vpop.f32.mrf.mxu0
        %5947 = vmatprep.mubr.bf16.mxu0 0
        %5948 = vmatmul.mubr.bf16.gmra.mxu0 %v5813
        %v5949 = vpop.f32.mrf.mxu0
        %v5950 = vadd.f32 0.0, %v5949
        %v5951 = vpop.f32.mrf.mxu0
        %v5952 = vpop.f32.mrf.mxu0
        %v5953 = vadd.f32 0.0, %v5952
        %v5954 = vpop.f32.mrf.mxu0
        %5955 = vmatprep.mubr.bf16.mxu0 0
        %5956 = vmatmul.mubr.bf16.gmra.mxu0 %v5816
        %v5957 = vpop.f32.mrf.mxu0
        %v5958 = vadd.f32 0.0, %v5957
        %v5959 = vpop.f32.mrf.mxu0
        %v5960 = vpop.f32.mrf.mxu0
        %v5961 = vadd.f32 0.0, %v5960
        %v5962 = vpop.f32.mrf.mxu0
        %5963 = vmatprep.mubr.bf16.mxu0 0
        %5964 = vmatmul.mubr.bf16.gmra.mxu0 %v5819
        %v5965 = vpop.f32.mrf.mxu0
        %v5966 = vadd.f32 0.0, %v5965
        %v5967 = vpop.f32.mrf.mxu0
        %v5968 = vpop.f32.mrf.mxu0
        %v5969 = vadd.f32 0.0, %v5968
        %v5970 = vpop.f32.mrf.mxu0
        %5971 = vmatprep.mubr.bf16.mxu0 0
        %5972 = vmatmul.mubr.bf16.gmra.mxu0 %v5822
        %v5973 = vpop.f32.mrf.mxu0
        %v5974 = vadd.f32 0.0, %v5973
        %v5975 = vpop.f32.mrf.mxu0
        %v5976 = vpop.f32.mrf.mxu0
        %v5977 = vadd.f32 0.0, %v5976
        %v5978 = vpop.f32.mrf.mxu0
        %5979 = vmatprep.mubr.bf16.mxu0 0
        %5980 = vmatmul.mubr.bf16.gmra.mxu0 %v5825
        %v5981 = vpop.f32.mrf.mxu0
        %v5982 = vadd.f32 0.0, %v5981
        %v5983 = vpop.f32.mrf.mxu0
        %v5984 = vpop.f32.mrf.mxu0
        %v5985 = vadd.f32 0.0, %v5984
        %v5986 = vpop.f32.mrf.mxu0
        %5987 = vdwg.mxu0
        %v5988 = vadd.f32 %v5650, %v5862
        %v5989 = vadd.f32 %v5651, %v5865
        %v5990 = vadd.f32 %v5652, %v5870
        %v5991 = vadd.f32 %v5653, %v5873
        %v5992 = vadd.f32 %v5654, %v5878
        %v5993 = vadd.f32 %v5655, %v5881
        %v5994 = vadd.f32 %v5656, %v5886
        %v5995 = vadd.f32 %v5657, %v5889
        %v5996 = vadd.f32 %v5658, %v5894
        %v5997 = vadd.f32 %v5659, %v5897
        %v5998 = vadd.f32 %v5660, %v5902
        %v5999 = vadd.f32 %v5661, %v5905
        %v6000 = vadd.f32 %v5662, %v5910
        %v6001 = vadd.f32 %v5663, %v5913
        %v6002 = vadd.f32 %v5664, %v5918
        %v6003 = vadd.f32 %v5665, %v5921
        %v6004 = vadd.f32 %v5666, %v5926
        %v6005 = vadd.f32 %v5667, %v5929
        %v6006 = vadd.f32 %v5668, %v5934
        %v6007 = vadd.f32 %v5669, %v5937
        %v6008 = vadd.f32 %v5670, %v5942
        %v6009 = vadd.f32 %v5671, %v5945
        %v6010 = vadd.f32 %v5672, %v5950
        %v6011 = vadd.f32 %v5673, %v5953
        %v6012 = vadd.f32 %v5674, %v5958
        %v6013 = vadd.f32 %v5675, %v5961
        %v6014 = vadd.f32 %v5676, %v5966
        %v6015 = vadd.f32 %v5677, %v5969
        %v6016 = vadd.f32 %v5678, %v5974
        %v6017 = vadd.f32 %v5679, %v5977
        %v6018 = vadd.f32 %v5680, %v5982
        %v6019 = vadd.f32 %v5681, %v5985
        %v6020 = vld [vmem:[#allocation3 + $0x18] sm:$0xff]
        %v6021 = vld [vmem:[#allocation3 + $0x20] sm:$0xff]
        %v6022 = vld [vmem:[#allocation3 + $0x28] sm:$0xff]
        %v6023 = vld [vmem:[#allocation3 + $0x30] sm:$0xff]
        %v6024 = vld [vmem:[#allocation3 + $0x38] sm:$0xff]
        %v6025 = vld [vmem:[#allocation3 + $0x40] sm:$0xff]
        %v6026 = vld [vmem:[#allocation3 + $0x48] sm:$0xff]
        %v6027 = vld [vmem:[#allocation3 + $0x50] sm:$0xff]
        %v6028 = vld [vmem:[#allocation3 + $0x58] sm:$0xff]
        %v6029 = vld [vmem:[#allocation3 + $0x60] sm:$0xff]
        %v6030 = vld [vmem:[#allocation3 + $0x68] sm:$0xff]
        %v6031 = vld [vmem:[#allocation3 + $0x70] sm:$0xff]
        %v6032 = vld [vmem:[#allocation3 + $0x78] sm:$0xff]
        %v6033 = vld [vmem:[#allocation3 + $0x80] sm:$0xff]
        %v6034 = vld [vmem:[#allocation3 + $0x88] sm:$0xff]
        %v6035 = vld [vmem:[#allocation3 + $0x90] sm:$0xff]
        %v6036 = vld [vmem:[#allocation3 + $0x98] sm:$0xff]
        %v6037 = vld [vmem:[#allocation3 + $0xa0] sm:$0xff]
        %v6038 = vld [vmem:[#allocation3 + $0xa8] sm:$0xff]
        %v6039 = vld [vmem:[#allocation3 + $0xb0] sm:$0xff]
        %v6040 = vld [vmem:[#allocation3 + $0xb8] sm:$0xff]
        %v6041 = vld [vmem:[#allocation3 + $0xc0] sm:$0xff]
        %v6042 = vld [vmem:[#allocation3 + $0xc8] sm:$0xff]
        %v6043 = vld [vmem:[#allocation3 + $0xd0] sm:$0xff]
        %v6044 = vld [vmem:[#allocation3 + $0xd8] sm:$0xff]
        %v6045 = vld [vmem:[#allocation3 + $0xe0] sm:$0xff]
        %v6046 = vld [vmem:[#allocation3 + $0xe8] sm:$0xff]
        %v6047 = vld [vmem:[#allocation3 + $0xf0] sm:$0xff]
        %v6048 = vld [vmem:[#allocation3 + $0xf8] sm:$0xff]
        %v6049 = vld [vmem:[#allocation3 + $0x100] sm:$0xff]
        %v6050 = vld [vmem:[#allocation3 + $0x108] sm:$0xff]
        %v6051 = vld [vmem:[#allocation3 + $0x110] sm:$0xff]
        %v6052 = vpack.c.bf16 %v6021, %v6020
        %v6053 = vpack.c.bf16 %v6023, %v6022
        %v6054 = vpack.c.bf16 %v6025, %v6024
        %v6055 = vpack.c.bf16 %v6027, %v6026
        %v6056 = vpack.c.bf16 %v6029, %v6028
        %v6057 = vpack.c.bf16 %v6031, %v6030
        %v6058 = vpack.c.bf16 %v6033, %v6032
        %v6059 = vpack.c.bf16 %v6035, %v6034
        %v6060 = vpack.c.bf16 %v6037, %v6036
        %v6061 = vpack.c.bf16 %v6039, %v6038
        %v6062 = vpack.c.bf16 %v6041, %v6040
        %v6063 = vpack.c.bf16 %v6043, %v6042
        %v6064 = vpack.c.bf16 %v6045, %v6044
        %v6065 = vpack.c.bf16 %v6047, %v6046
        %v6066 = vpack.c.bf16 %v6049, %v6048
        %v6067 = vpack.c.bf16 %v6051, %v6050
        %s6068 = scalar_lea.vmem %s7, 64
        %v6069 = vld [vmem:[%s6068] sm:$0xf]
        %v6070 = vld [vmem:[%s6068 + $0x4] sm:$0xf]
        %v6071 = vld [vmem:[%s6068 + $0x8] sm:$0xf]
        %v6072 = vld [vmem:[%s6068 + $0xc] sm:$0xf]
        %v6077 = vunpack.c.l.b16 %v6069
        %v6078 = vunpack.c.l.b16 %v6070
        %v6079 = vunpack.c.l.b16 %v6071
        %v6080 = vunpack.c.l.b16 %v6072
        %v6081 = vpack.c.b16 %v6078, %v6077
        %v6082 = vpack.c.b16 %v6080, %v6079
        %v6086 = vsel %vm648, %v6052, 0
        %v6089 = vsel %vm648, %v6053, 0
        %v6092 = vsel %vm648, %v6054, 0
        %v6095 = vsel %vm648, %v6055, 0
        %v6098 = vsel %vm648, %v6056, 0
        %v6101 = vsel %vm648, %v6057, 0
        %v6104 = vsel %vm648, %v6058, 0
        %v6107 = vsel %vm648, %v6059, 0
        %v6110 = vsel %vm648, %v6060, 0
        %v6113 = vsel %vm648, %v6061, 0
        %v6116 = vsel %vm648, %v6062, 0
        %v6119 = vsel %vm648, %v6063, 0
        %v6122 = vsel %vm648, %v6064, 0
        %v6125 = vsel %vm648, %v6065, 0
        %v6128 = vsel %vm648, %v6066, 0
        %v6131 = vsel %vm648, %v6067, 0
        %6133 = vmatprep.subr.bf16.mxu0 0
        %6134 = vmatpush1.bf16.msra.mxu0 0
        %6135 = vmatprep.subr.bf16.mxu0 0
        %6136 = vmatpush1.bf16.msra.mxu0 0
        %6137 = vmatprep.subr.bf16.mxu0 0
        %6138 = vmatpush1.bf16.msra.mxu0 0
        %6139 = vmatprep.subr.bf16.mxu0 0
        %6140 = vmatpush1.bf16.msra.mxu0 0
        %6141 = vmatprep.subr.bf16.mxu0 0
        %6142 = vmatpush1.bf16.msra.mxu0 0
        %6143 = vmatprep.subr.bf16.mxu0 0
        %6144 = vmatpush1.bf16.msra.mxu0 0
        %6145 = vmatprep.subr.bf16.mxu0 0
        %6146 = vmatpush1.bf16.msra.mxu0 %v6082
        %6147 = vmatprep.subr.bf16.mxu0 0
        %6148 = vmatpush1.bf16.msra.mxu0 %v6081
        %6149 = vmatprep.subr.bf16.mxu0 0
        %6150 = vmatpush2.bf16.msra.mxu0 0
        %6151 = vmatprep.subr.bf16.mxu0 0
        %6152 = vmatpush2.bf16.msra.mxu0 0
        %6153 = vmatprep.subr.bf16.mxu0 0
        %6154 = vmatpush2.bf16.msra.mxu0 0
        %6155 = vmatprep.subr.bf16.mxu0 0
        %6156 = vmatpush2.bf16.msra.mxu0 0
        %6157 = vmatprep.subr.bf16.mxu0 0
        %6158 = vmatpush2.bf16.msra.mxu0 0
        %6159 = vmatprep.subr.bf16.mxu0 0
        %6160 = vmatpush2.bf16.msra.mxu0 0
        %6161 = vmatprep.subr.bf16.mxu0 0
        %6162 = vmatpush2.bf16.msra.mxu0 0
        %6163 = vmatprep.subr.bf16.mxu0 0
        %6164 = vmatpush2.bf16.msra.mxu0 0
        %6165 = vmatprep.mubr.bf16.mxu0 0
        %6166 = vmatmul.mubr.bf16.gmra.mxu0 %v6086
        %v6167 = vpop.f32.mrf.mxu0
        %v6168 = vadd.f32 0.0, %v6167
        %v6169 = vpop.f32.mrf.mxu0
        %v6170 = vpop.f32.mrf.mxu0
        %v6171 = vadd.f32 0.0, %v6170
        %v6172 = vpop.f32.mrf.mxu0
        %6173 = vmatprep.mubr.bf16.mxu0 0
        %6174 = vmatmul.mubr.bf16.gmra.mxu0 %v6089
        %v6175 = vpop.f32.mrf.mxu0
        %v6176 = vadd.f32 0.0, %v6175
        %v6177 = vpop.f32.mrf.mxu0
        %v6178 = vpop.f32.mrf.mxu0
        %v6179 = vadd.f32 0.0, %v6178
        %v6180 = vpop.f32.mrf.mxu0
        %6181 = vmatprep.mubr.bf16.mxu0 0
        %6182 = vmatmul.mubr.bf16.gmra.mxu0 %v6092
        %v6183 = vpop.f32.mrf.mxu0
        %v6184 = vadd.f32 0.0, %v6183
        %v6185 = vpop.f32.mrf.mxu0
        %v6186 = vpop.f32.mrf.mxu0
        %v6187 = vadd.f32 0.0, %v6186
        %v6188 = vpop.f32.mrf.mxu0
        %6189 = vmatprep.mubr.bf16.mxu0 0
        %6190 = vmatmul.mubr.bf16.gmra.mxu0 %v6095
        %v6191 = vpop.f32.mrf.mxu0
        %v6192 = vadd.f32 0.0, %v6191
        %v6193 = vpop.f32.mrf.mxu0
        %v6194 = vpop.f32.mrf.mxu0
        %v6195 = vadd.f32 0.0, %v6194
        %v6196 = vpop.f32.mrf.mxu0
        %6197 = vmatprep.mubr.bf16.mxu0 0
        %6198 = vmatmul.mubr.bf16.gmra.mxu0 %v6098
        %v6199 = vpop.f32.mrf.mxu0
        %v6200 = vadd.f32 0.0, %v6199
        %v6201 = vpop.f32.mrf.mxu0
        %v6202 = vpop.f32.mrf.mxu0
        %v6203 = vadd.f32 0.0, %v6202
        %v6204 = vpop.f32.mrf.mxu0
        %6205 = vmatprep.mubr.bf16.mxu0 0
        %6206 = vmatmul.mubr.bf16.gmra.mxu0 %v6101
        %v6207 = vpop.f32.mrf.mxu0
        %v6208 = vadd.f32 0.0, %v6207
        %v6209 = vpop.f32.mrf.mxu0
        %v6210 = vpop.f32.mrf.mxu0
        %v6211 = vadd.f32 0.0, %v6210
        %v6212 = vpop.f32.mrf.mxu0
        %6213 = vmatprep.mubr.bf16.mxu0 0
        %6214 = vmatmul.mubr.bf16.gmra.mxu0 %v6104
        %v6215 = vpop.f32.mrf.mxu0
        %v6216 = vadd.f32 0.0, %v6215
        %v6217 = vpop.f32.mrf.mxu0
        %v6218 = vpop.f32.mrf.mxu0
        %v6219 = vadd.f32 0.0, %v6218
        %v6220 = vpop.f32.mrf.mxu0
        %6221 = vmatprep.mubr.bf16.mxu0 0
        %6222 = vmatmul.mubr.bf16.gmra.mxu0 %v6107
        %v6223 = vpop.f32.mrf.mxu0
        %v6224 = vadd.f32 0.0, %v6223
        %v6225 = vpop.f32.mrf.mxu0
        %v6226 = vpop.f32.mrf.mxu0
        %v6227 = vadd.f32 0.0, %v6226
        %v6228 = vpop.f32.mrf.mxu0
        %6229 = vmatprep.mubr.bf16.mxu0 0
        %6230 = vmatmul.mubr.bf16.gmra.mxu0 %v6110
        %v6231 = vpop.f32.mrf.mxu0
        %v6232 = vadd.f32 0.0, %v6231
        %v6233 = vpop.f32.mrf.mxu0
        %v6234 = vpop.f32.mrf.mxu0
        %v6235 = vadd.f32 0.0, %v6234
        %v6236 = vpop.f32.mrf.mxu0
        %6237 = vmatprep.mubr.bf16.mxu0 0
        %6238 = vmatmul.mubr.bf16.gmra.mxu0 %v6113
        %v6239 = vpop.f32.mrf.mxu0
        %v6240 = vadd.f32 0.0, %v6239
        %v6241 = vpop.f32.mrf.mxu0
        %v6242 = vpop.f32.mrf.mxu0
        %v6243 = vadd.f32 0.0, %v6242
        %v6244 = vpop.f32.mrf.mxu0
        %6245 = vmatprep.mubr.bf16.mxu0 0
        %6246 = vmatmul.mubr.bf16.gmra.mxu0 %v6116
        %v6247 = vpop.f32.mrf.mxu0
        %v6248 = vadd.f32 0.0, %v6247
        %v6249 = vpop.f32.mrf.mxu0
        %v6250 = vpop.f32.mrf.mxu0
        %v6251 = vadd.f32 0.0, %v6250
        %v6252 = vpop.f32.mrf.mxu0
        %6253 = vmatprep.mubr.bf16.mxu0 0
        %6254 = vmatmul.mubr.bf16.gmra.mxu0 %v6119
        %v6255 = vpop.f32.mrf.mxu0
        %v6256 = vadd.f32 0.0, %v6255
        %v6257 = vpop.f32.mrf.mxu0
        %v6258 = vpop.f32.mrf.mxu0
        %v6259 = vadd.f32 0.0, %v6258
        %v6260 = vpop.f32.mrf.mxu0
        %6261 = vmatprep.mubr.bf16.mxu0 0
        %6262 = vmatmul.mubr.bf16.gmra.mxu0 %v6122
        %v6263 = vpop.f32.mrf.mxu0
        %v6264 = vadd.f32 0.0, %v6263
        %v6265 = vpop.f32.mrf.mxu0
        %v6266 = vpop.f32.mrf.mxu0
        %v6267 = vadd.f32 0.0, %v6266
        %v6268 = vpop.f32.mrf.mxu0
        %6269 = vmatprep.mubr.bf16.mxu0 0
        %6270 = vmatmul.mubr.bf16.gmra.mxu0 %v6125
        %v6271 = vpop.f32.mrf.mxu0
        %v6272 = vadd.f32 0.0, %v6271
        %v6273 = vpop.f32.mrf.mxu0
        %v6274 = vpop.f32.mrf.mxu0
        %v6275 = vadd.f32 0.0, %v6274
        %v6276 = vpop.f32.mrf.mxu0
        %6277 = vmatprep.mubr.bf16.mxu0 0
        %6278 = vmatmul.mubr.bf16.gmra.mxu0 %v6128
        %v6279 = vpop.f32.mrf.mxu0
        %v6280 = vadd.f32 0.0, %v6279
        %v6281 = vpop.f32.mrf.mxu0
        %v6282 = vpop.f32.mrf.mxu0
        %v6283 = vadd.f32 0.0, %v6282
        %v6284 = vpop.f32.mrf.mxu0
        %6285 = vmatprep.mubr.bf16.mxu0 0
        %6286 = vmatmul.mubr.bf16.gmra.mxu0 %v6131
        %v6287 = vpop.f32.mrf.mxu0
        %v6288 = vadd.f32 0.0, %v6287
        %v6289 = vpop.f32.mrf.mxu0
        %v6290 = vpop.f32.mrf.mxu0
        %v6291 = vadd.f32 0.0, %v6290
        %v6292 = vpop.f32.mrf.mxu0
        %6293 = vdwg.mxu0
        %v6294 = vadd.f32 %v5988, %v6168
        %v6295 = vadd.f32 %v5989, %v6171
        %v6296 = vadd.f32 %v5990, %v6176
        %v6297 = vadd.f32 %v5991, %v6179
        %v6298 = vadd.f32 %v5992, %v6184
        %v6299 = vadd.f32 %v5993, %v6187
        %v6300 = vadd.f32 %v5994, %v6192
        %v6301 = vadd.f32 %v5995, %v6195
        %v6302 = vadd.f32 %v5996, %v6200
        %v6303 = vadd.f32 %v5997, %v6203
        %v6304 = vadd.f32 %v5998, %v6208
        %v6305 = vadd.f32 %v5999, %v6211
        %v6306 = vadd.f32 %v6000, %v6216
        %v6307 = vadd.f32 %v6001, %v6219
        %v6308 = vadd.f32 %v6002, %v6224
        %v6309 = vadd.f32 %v6003, %v6227
        %v6310 = vadd.f32 %v6004, %v6232
        %v6311 = vadd.f32 %v6005, %v6235
        %v6312 = vadd.f32 %v6006, %v6240
        %v6313 = vadd.f32 %v6007, %v6243
        %v6314 = vadd.f32 %v6008, %v6248
        %v6315 = vadd.f32 %v6009, %v6251
        %v6316 = vadd.f32 %v6010, %v6256
        %v6317 = vadd.f32 %v6011, %v6259
        %v6318 = vadd.f32 %v6012, %v6264
        %v6319 = vadd.f32 %v6013, %v6267
        %v6320 = vadd.f32 %v6014, %v6272
        %v6321 = vadd.f32 %v6015, %v6275
        %v6322 = vadd.f32 %v6016, %v6280
        %v6323 = vadd.f32 %v6017, %v6283
        %v6324 = vadd.f32 %v6018, %v6288
        %v6325 = vadd.f32 %v6019, %v6291
        %v6326 = vld [vmem:[#allocation3 + $0x19] sm:$0xff]
        %v6327 = vld [vmem:[#allocation3 + $0x21] sm:$0xff]
        %v6328 = vld [vmem:[#allocation3 + $0x29] sm:$0xff]
        %v6329 = vld [vmem:[#allocation3 + $0x31] sm:$0xff]
        %v6330 = vld [vmem:[#allocation3 + $0x39] sm:$0xff]
        %v6331 = vld [vmem:[#allocation3 + $0x41] sm:$0xff]
        %v6332 = vld [vmem:[#allocation3 + $0x49] sm:$0xff]
        %v6333 = vld [vmem:[#allocation3 + $0x51] sm:$0xff]
        %v6334 = vld [vmem:[#allocation3 + $0x59] sm:$0xff]
        %v6335 = vld [vmem:[#allocation3 + $0x61] sm:$0xff]
        %v6336 = vld [vmem:[#allocation3 + $0x69] sm:$0xff]
        %v6337 = vld [vmem:[#allocation3 + $0x71] sm:$0xff]
        %v6338 = vld [vmem:[#allocation3 + $0x79] sm:$0xff]
        %v6339 = vld [vmem:[#allocation3 + $0x81] sm:$0xff]
        %v6340 = vld [vmem:[#allocation3 + $0x89] sm:$0xff]
        %v6341 = vld [vmem:[#allocation3 + $0x91] sm:$0xff]
        %v6342 = vld [vmem:[#allocation3 + $0x99] sm:$0xff]
        %v6343 = vld [vmem:[#allocation3 + $0xa1] sm:$0xff]
        %v6344 = vld [vmem:[#allocation3 + $0xa9] sm:$0xff]
        %v6345 = vld [vmem:[#allocation3 + $0xb1] sm:$0xff]
        %v6346 = vld [vmem:[#allocation3 + $0xb9] sm:$0xff]
        %v6347 = vld [vmem:[#allocation3 + $0xc1] sm:$0xff]
        %v6348 = vld [vmem:[#allocation3 + $0xc9] sm:$0xff]
        %v6349 = vld [vmem:[#allocation3 + $0xd1] sm:$0xff]
        %v6350 = vld [vmem:[#allocation3 + $0xd9] sm:$0xff]
        %v6351 = vld [vmem:[#allocation3 + $0xe1] sm:$0xff]
        %v6352 = vld [vmem:[#allocation3 + $0xe9] sm:$0xff]
        %v6353 = vld [vmem:[#allocation3 + $0xf1] sm:$0xff]
        %v6354 = vld [vmem:[#allocation3 + $0xf9] sm:$0xff]
        %v6355 = vld [vmem:[#allocation3 + $0x101] sm:$0xff]
        %v6356 = vld [vmem:[#allocation3 + $0x109] sm:$0xff]
        %v6357 = vld [vmem:[#allocation3 + $0x111] sm:$0xff]
        %v6358 = vsel %vm2371, %v6326, 0.0
        %v6359 = vsel %vm2372, %v6327, 0.0
        %v6360 = vsel %vm2373, %v6328, 0.0
        %v6361 = vsel %vm2374, %v6329, 0.0
        %v6362 = vsel %vm2375, %v6330, 0.0
        %v6363 = vsel %vm2376, %v6331, 0.0
        %v6364 = vsel %vm2377, %v6332, 0.0
        %v6365 = vsel %vm2378, %v6333, 0.0
        %v6366 = vsel %vm2379, %v6334, 0.0
        %v6367 = vsel %vm2380, %v6335, 0.0
        %v6368 = vsel %vm2381, %v6336, 0.0
        %v6369 = vsel %vm2382, %v6337, 0.0
        %v6370 = vsel %vm2383, %v6338, 0.0
        %v6371 = vsel %vm2384, %v6339, 0.0
        %v6372 = vsel %vm2385, %v6340, 0.0
        %v6373 = vsel %vm2386, %v6341, 0.0
        %v6374 = vsel %vm2387, %v6342, 0.0
        %v6375 = vsel %vm2388, %v6343, 0.0
        %v6376 = vsel %vm2389, %v6344, 0.0
        %v6377 = vsel %vm2390, %v6345, 0.0
        %v6378 = vsel %vm2391, %v6346, 0.0
        %v6379 = vsel %vm2392, %v6347, 0.0
        %v6380 = vsel %vm2393, %v6348, 0.0
        %v6381 = vsel %vm2394, %v6349, 0.0
        %v6382 = vsel %vm2395, %v6350, 0.0
        %v6383 = vsel %vm2396, %v6351, 0.0
        %v6384 = vsel %vm2397, %v6352, 0.0
        %v6385 = vsel %vm2398, %v6353, 0.0
        %v6386 = vsel %vm2399, %v6354, 0.0
        %v6387 = vsel %vm2400, %v6355, 0.0
        %v6388 = vsel %vm2401, %v6356, 0.0
        %v6389 = vsel %vm2402, %v6357, 0.0
        %v6390 = vpack.c.bf16 %v6359, %v6358
        %v6391 = vpack.c.bf16 %v6361, %v6360
        %v6392 = vpack.c.bf16 %v6363, %v6362
        %v6393 = vpack.c.bf16 %v6365, %v6364
        %v6394 = vpack.c.bf16 %v6367, %v6366
        %v6395 = vpack.c.bf16 %v6369, %v6368
        %v6396 = vpack.c.bf16 %v6371, %v6370
        %v6397 = vpack.c.bf16 %v6373, %v6372
        %v6398 = vpack.c.bf16 %v6375, %v6374
        %v6399 = vpack.c.bf16 %v6377, %v6376
        %v6400 = vpack.c.bf16 %v6379, %v6378
        %v6401 = vpack.c.bf16 %v6381, %v6380
        %v6402 = vpack.c.bf16 %v6383, %v6382
        %v6403 = vpack.c.bf16 %v6385, %v6384
        %v6404 = vpack.c.bf16 %v6387, %v6386
        %v6405 = vpack.c.bf16 %v6389, %v6388
        %s6406 = scalar_lea.vmem %s7, 80
        %v6407 = vld [vmem:[%s6406] sm:$0xf]
        %v6408 = vld [vmem:[%s6406 + $0x4] sm:$0xf]
        %v6409 = vld [vmem:[%s6406 + $0x8] sm:$0xf]
        %v6410 = vld [vmem:[%s6406 + $0xc] sm:$0xf]
        %v6415 = vunpack.c.l.b16 %v6407
        %v6416 = vunpack.c.l.b16 %v6408
        %v6417 = vunpack.c.l.b16 %v6409
        %v6418 = vunpack.c.l.b16 %v6410
        %v6419 = vpack.c.b16 %v6416, %v6415
        %v6420 = vpack.c.b16 %v6418, %v6417
        %v6424 = vsel %vm648, %v6390, 0
        %v6427 = vsel %vm648, %v6391, 0
        %v6430 = vsel %vm648, %v6392, 0
        %v6433 = vsel %vm648, %v6393, 0
        %v6436 = vsel %vm648, %v6394, 0
        %v6439 = vsel %vm648, %v6395, 0
        %v6442 = vsel %vm648, %v6396, 0
        %v6445 = vsel %vm648, %v6397, 0
        %v6448 = vsel %vm648, %v6398, 0
        %v6451 = vsel %vm648, %v6399, 0
        %v6454 = vsel %vm648, %v6400, 0
        %v6457 = vsel %vm648, %v6401, 0
        %v6460 = vsel %vm648, %v6402, 0
        %v6463 = vsel %vm648, %v6403, 0
        %v6466 = vsel %vm648, %v6404, 0
        %v6469 = vsel %vm648, %v6405, 0
        %6471 = vmatprep.subr.bf16.mxu0 0
        %6472 = vmatpush1.bf16.msra.mxu0 0
        %6473 = vmatprep.subr.bf16.mxu0 0
        %6474 = vmatpush1.bf16.msra.mxu0 0
        %6475 = vmatprep.subr.bf16.mxu0 0
        %6476 = vmatpush1.bf16.msra.mxu0 0
        %6477 = vmatprep.subr.bf16.mxu0 0
        %6478 = vmatpush1.bf16.msra.mxu0 0
        %6479 = vmatprep.subr.bf16.mxu0 0
        %6480 = vmatpush1.bf16.msra.mxu0 0
        %6481 = vmatprep.subr.bf16.mxu0 0
        %6482 = vmatpush1.bf16.msra.mxu0 0
        %6483 = vmatprep.subr.bf16.mxu0 0
        %6484 = vmatpush1.bf16.msra.mxu0 %v6420
        %6485 = vmatprep.subr.bf16.mxu0 0
        %6486 = vmatpush1.bf16.msra.mxu0 %v6419
        %6487 = vmatprep.subr.bf16.mxu0 0
        %6488 = vmatpush2.bf16.msra.mxu0 0
        %6489 = vmatprep.subr.bf16.mxu0 0
        %6490 = vmatpush2.bf16.msra.mxu0 0
        %6491 = vmatprep.subr.bf16.mxu0 0
        %6492 = vmatpush2.bf16.msra.mxu0 0
        %6493 = vmatprep.subr.bf16.mxu0 0
        %6494 = vmatpush2.bf16.msra.mxu0 0
        %6495 = vmatprep.subr.bf16.mxu0 0
        %6496 = vmatpush2.bf16.msra.mxu0 0
        %6497 = vmatprep.subr.bf16.mxu0 0
        %6498 = vmatpush2.bf16.msra.mxu0 0
        %6499 = vmatprep.subr.bf16.mxu0 0
        %6500 = vmatpush2.bf16.msra.mxu0 0
        %6501 = vmatprep.subr.bf16.mxu0 0
        %6502 = vmatpush2.bf16.msra.mxu0 0
        %6503 = vmatprep.mubr.bf16.mxu0 0
        %6504 = vmatmul.mubr.bf16.gmra.mxu0 %v6424
        %v6505 = vpop.f32.mrf.mxu0
        %v6506 = vadd.f32 0.0, %v6505
        %v6507 = vpop.f32.mrf.mxu0
        %v6508 = vpop.f32.mrf.mxu0
        %v6509 = vadd.f32 0.0, %v6508
        %v6510 = vpop.f32.mrf.mxu0
        %6511 = vmatprep.mubr.bf16.mxu0 0
        %6512 = vmatmul.mubr.bf16.gmra.mxu0 %v6427
        %v6513 = vpop.f32.mrf.mxu0
        %v6514 = vadd.f32 0.0, %v6513
        %v6515 = vpop.f32.mrf.mxu0
        %v6516 = vpop.f32.mrf.mxu0
        %v6517 = vadd.f32 0.0, %v6516
        %v6518 = vpop.f32.mrf.mxu0
        %6519 = vmatprep.mubr.bf16.mxu0 0
        %6520 = vmatmul.mubr.bf16.gmra.mxu0 %v6430
        %v6521 = vpop.f32.mrf.mxu0
        %v6522 = vadd.f32 0.0, %v6521
        %v6523 = vpop.f32.mrf.mxu0
        %v6524 = vpop.f32.mrf.mxu0
        %v6525 = vadd.f32 0.0, %v6524
        %v6526 = vpop.f32.mrf.mxu0
        %6527 = vmatprep.mubr.bf16.mxu0 0
        %6528 = vmatmul.mubr.bf16.gmra.mxu0 %v6433
        %v6529 = vpop.f32.mrf.mxu0
        %v6530 = vadd.f32 0.0, %v6529
        %v6531 = vpop.f32.mrf.mxu0
        %v6532 = vpop.f32.mrf.mxu0
        %v6533 = vadd.f32 0.0, %v6532
        %v6534 = vpop.f32.mrf.mxu0
        %6535 = vmatprep.mubr.bf16.mxu0 0
        %6536 = vmatmul.mubr.bf16.gmra.mxu0 %v6436
        %v6537 = vpop.f32.mrf.mxu0
        %v6538 = vadd.f32 0.0, %v6537
        %v6539 = vpop.f32.mrf.mxu0
        %v6540 = vpop.f32.mrf.mxu0
        %v6541 = vadd.f32 0.0, %v6540
        %v6542 = vpop.f32.mrf.mxu0
        %6543 = vmatprep.mubr.bf16.mxu0 0
        %6544 = vmatmul.mubr.bf16.gmra.mxu0 %v6439
        %v6545 = vpop.f32.mrf.mxu0
        %v6546 = vadd.f32 0.0, %v6545
        %v6547 = vpop.f32.mrf.mxu0
        %v6548 = vpop.f32.mrf.mxu0
        %v6549 = vadd.f32 0.0, %v6548
        %v6550 = vpop.f32.mrf.mxu0
        %6551 = vmatprep.mubr.bf16.mxu0 0
        %6552 = vmatmul.mubr.bf16.gmra.mxu0 %v6442
        %v6553 = vpop.f32.mrf.mxu0
        %v6554 = vadd.f32 0.0, %v6553
        %v6555 = vpop.f32.mrf.mxu0
        %v6556 = vpop.f32.mrf.mxu0
        %v6557 = vadd.f32 0.0, %v6556
        %v6558 = vpop.f32.mrf.mxu0
        %6559 = vmatprep.mubr.bf16.mxu0 0
        %6560 = vmatmul.mubr.bf16.gmra.mxu0 %v6445
        %v6561 = vpop.f32.mrf.mxu0
        %v6562 = vadd.f32 0.0, %v6561
        %v6563 = vpop.f32.mrf.mxu0
        %v6564 = vpop.f32.mrf.mxu0
        %v6565 = vadd.f32 0.0, %v6564
        %v6566 = vpop.f32.mrf.mxu0
        %6567 = vmatprep.mubr.bf16.mxu0 0
        %6568 = vmatmul.mubr.bf16.gmra.mxu0 %v6448
        %v6569 = vpop.f32.mrf.mxu0
        %v6570 = vadd.f32 0.0, %v6569
        %v6571 = vpop.f32.mrf.mxu0
        %v6572 = vpop.f32.mrf.mxu0
        %v6573 = vadd.f32 0.0, %v6572
        %v6574 = vpop.f32.mrf.mxu0
        %6575 = vmatprep.mubr.bf16.mxu0 0
        %6576 = vmatmul.mubr.bf16.gmra.mxu0 %v6451
        %v6577 = vpop.f32.mrf.mxu0
        %v6578 = vadd.f32 0.0, %v6577
        %v6579 = vpop.f32.mrf.mxu0
        %v6580 = vpop.f32.mrf.mxu0
        %v6581 = vadd.f32 0.0, %v6580
        %v6582 = vpop.f32.mrf.mxu0
        %6583 = vmatprep.mubr.bf16.mxu0 0
        %6584 = vmatmul.mubr.bf16.gmra.mxu0 %v6454
        %v6585 = vpop.f32.mrf.mxu0
        %v6586 = vadd.f32 0.0, %v6585
        %v6587 = vpop.f32.mrf.mxu0
        %v6588 = vpop.f32.mrf.mxu0
        %v6589 = vadd.f32 0.0, %v6588
        %v6590 = vpop.f32.mrf.mxu0
        %6591 = vmatprep.mubr.bf16.mxu0 0
        %6592 = vmatmul.mubr.bf16.gmra.mxu0 %v6457
        %v6593 = vpop.f32.mrf.mxu0
        %v6594 = vadd.f32 0.0, %v6593
        %v6595 = vpop.f32.mrf.mxu0
        %v6596 = vpop.f32.mrf.mxu0
        %v6597 = vadd.f32 0.0, %v6596
        %v6598 = vpop.f32.mrf.mxu0
        %6599 = vmatprep.mubr.bf16.mxu0 0
        %6600 = vmatmul.mubr.bf16.gmra.mxu0 %v6460
        %v6601 = vpop.f32.mrf.mxu0
        %v6602 = vadd.f32 0.0, %v6601
        %v6603 = vpop.f32.mrf.mxu0
        %v6604 = vpop.f32.mrf.mxu0
        %v6605 = vadd.f32 0.0, %v6604
        %v6606 = vpop.f32.mrf.mxu0
        %6607 = vmatprep.mubr.bf16.mxu0 0
        %6608 = vmatmul.mubr.bf16.gmra.mxu0 %v6463
        %v6609 = vpop.f32.mrf.mxu0
        %v6610 = vadd.f32 0.0, %v6609
        %v6611 = vpop.f32.mrf.mxu0
        %v6612 = vpop.f32.mrf.mxu0
        %v6613 = vadd.f32 0.0, %v6612
        %v6614 = vpop.f32.mrf.mxu0
        %6615 = vmatprep.mubr.bf16.mxu0 0
        %6616 = vmatmul.mubr.bf16.gmra.mxu0 %v6466
        %v6617 = vpop.f32.mrf.mxu0
        %v6618 = vadd.f32 0.0, %v6617
        %v6619 = vpop.f32.mrf.mxu0
        %v6620 = vpop.f32.mrf.mxu0
        %v6621 = vadd.f32 0.0, %v6620
        %v6622 = vpop.f32.mrf.mxu0
        %6623 = vmatprep.mubr.bf16.mxu0 0
        %6624 = vmatmul.mubr.bf16.gmra.mxu0 %v6469
        %v6625 = vpop.f32.mrf.mxu0
        %v6626 = vadd.f32 0.0, %v6625
        %v6627 = vpop.f32.mrf.mxu0
        %v6628 = vpop.f32.mrf.mxu0
        %v6629 = vadd.f32 0.0, %v6628
        %v6630 = vpop.f32.mrf.mxu0
        %6631 = vdwg.mxu0
        %v6632 = vadd.f32 %v6294, %v6506
        %v6633 = vadd.f32 %v6295, %v6509
        %v6634 = vadd.f32 %v6296, %v6514
        %v6635 = vadd.f32 %v6297, %v6517
        %v6636 = vadd.f32 %v6298, %v6522
        %v6637 = vadd.f32 %v6299, %v6525
        %v6638 = vadd.f32 %v6300, %v6530
        %v6639 = vadd.f32 %v6301, %v6533
        %v6640 = vadd.f32 %v6302, %v6538
        %v6641 = vadd.f32 %v6303, %v6541
        %v6642 = vadd.f32 %v6304, %v6546
        %v6643 = vadd.f32 %v6305, %v6549
        %v6644 = vadd.f32 %v6306, %v6554
        %v6645 = vadd.f32 %v6307, %v6557
        %v6646 = vadd.f32 %v6308, %v6562
        %v6647 = vadd.f32 %v6309, %v6565
        %v6648 = vadd.f32 %v6310, %v6570
        %v6649 = vadd.f32 %v6311, %v6573
        %v6650 = vadd.f32 %v6312, %v6578
        %v6651 = vadd.f32 %v6313, %v6581
        %v6652 = vadd.f32 %v6314, %v6586
        %v6653 = vadd.f32 %v6315, %v6589
        %v6654 = vadd.f32 %v6316, %v6594
        %v6655 = vadd.f32 %v6317, %v6597
        %v6656 = vadd.f32 %v6318, %v6602
        %v6657 = vadd.f32 %v6319, %v6605
        %v6658 = vadd.f32 %v6320, %v6610
        %v6659 = vadd.f32 %v6321, %v6613
        %v6660 = vadd.f32 %v6322, %v6618
        %v6661 = vadd.f32 %v6323, %v6621
        %v6662 = vadd.f32 %v6324, %v6626
        %v6663 = vadd.f32 %v6325, %v6629
        %v6664 = vld [vmem:[#allocation3 + $0x27] sm:$0xff]
        %v6665 = vld [vmem:[#allocation3 + $0x2f] sm:$0xff]
        %v6666 = vld [vmem:[#allocation3 + $0x37] sm:$0xff]
        %v6667 = vld [vmem:[#allocation3 + $0x3f] sm:$0xff]
        %v6668 = vld [vmem:[#allocation3 + $0x47] sm:$0xff]
        %v6669 = vld [vmem:[#allocation3 + $0x4f] sm:$0xff]
        %v6670 = vld [vmem:[#allocation3 + $0x57] sm:$0xff]
        %v6671 = vld [vmem:[#allocation3 + $0x5f] sm:$0xff]
        %v6672 = vld [vmem:[#allocation3 + $0x67] sm:$0xff]
        %v6673 = vld [vmem:[#allocation3 + $0x6f] sm:$0xff]
        %v6674 = vld [vmem:[#allocation3 + $0x77] sm:$0xff]
        %v6675 = vld [vmem:[#allocation3 + $0x7f] sm:$0xff]
        %v6676 = vld [vmem:[#allocation3 + $0x87] sm:$0xff]
        %v6677 = vld [vmem:[#allocation3 + $0x8f] sm:$0xff]
        %v6678 = vld [vmem:[#allocation3 + $0x97] sm:$0xff]
        %v6679 = vld [vmem:[#allocation3 + $0x9f] sm:$0xff]
        %v6680 = vld [vmem:[#allocation3 + $0xa7] sm:$0xff]
        %v6681 = vld [vmem:[#allocation3 + $0xaf] sm:$0xff]
        %v6682 = vld [vmem:[#allocation3 + $0xb7] sm:$0xff]
        %v6683 = vld [vmem:[#allocation3 + $0xbf] sm:$0xff]
        %v6684 = vld [vmem:[#allocation3 + $0xc7] sm:$0xff]
        %v6685 = vld [vmem:[#allocation3 + $0xcf] sm:$0xff]
        %v6686 = vld [vmem:[#allocation3 + $0xd7] sm:$0xff]
        %v6687 = vld [vmem:[#allocation3 + $0xdf] sm:$0xff]
        %v6688 = vld [vmem:[#allocation3 + $0xe7] sm:$0xff]
        %v6689 = vld [vmem:[#allocation3 + $0xef] sm:$0xff]
        %v6690 = vld [vmem:[#allocation3 + $0xf7] sm:$0xff]
        %v6691 = vld [vmem:[#allocation3 + $0xff] sm:$0xff]
        %v6692 = vld [vmem:[#allocation3 + $0x107] sm:$0xff]
        %v6693 = vld [vmem:[#allocation3 + $0x10f] sm:$0xff]
        %v6694 = vld [vmem:[#allocation3 + $0x117] sm:$0xff]
        %v6695 = vld [vmem:[#allocation3 + $0x11f] sm:$0xff]
        %v6696 = vsel %vm1616, %v6664, 0.0
        %v6697 = vsel %vm1617, %v6665, 0.0
        %v6698 = vsel %vm1618, %v6666, 0.0
        %v6699 = vsel %vm1619, %v6667, 0.0
        %v6700 = vsel %vm1620, %v6668, 0.0
        %v6701 = vsel %vm1621, %v6669, 0.0
        %v6702 = vsel %vm1622, %v6670, 0.0
        %v6703 = vsel %vm1623, %v6671, 0.0
        %v6704 = vsel %vm1624, %v6672, 0.0
        %v6705 = vsel %vm1625, %v6673, 0.0
        %v6706 = vsel %vm1626, %v6674, 0.0
        %v6707 = vsel %vm1627, %v6675, 0.0
        %v6708 = vsel %vm1628, %v6676, 0.0
        %v6709 = vsel %vm1629, %v6677, 0.0
        %v6710 = vsel %vm1630, %v6678, 0.0
        %v6711 = vsel %vm1631, %v6679, 0.0
        %v6712 = vsel %vm1632, %v6680, 0.0
        %v6713 = vsel %vm1633, %v6681, 0.0
        %v6714 = vsel %vm1634, %v6682, 0.0
        %v6715 = vsel %vm1635, %v6683, 0.0
        %v6716 = vsel %vm1636, %v6684, 0.0
        %v6717 = vsel %vm1637, %v6685, 0.0
        %v6718 = vsel %vm1638, %v6686, 0.0
        %v6719 = vsel %vm1639, %v6687, 0.0
        %v6720 = vsel %vm1640, %v6688, 0.0
        %v6721 = vsel %vm1641, %v6689, 0.0
        %v6722 = vsel %vm1642, %v6690, 0.0
        %v6723 = vsel %vm1643, %v6691, 0.0
        %v6724 = vsel %vm1644, %v6692, 0.0
        %v6725 = vsel %vm1645, %v6693, 0.0
        %v6726 = vsel %vm1646, %v6694, 0.0
        %v6727 = vsel %vm1647, %v6695, 0.0
        %v6728 = vpack.c.bf16 %v6697, %v6696
        %v6729 = vpack.c.bf16 %v6699, %v6698
        %v6730 = vpack.c.bf16 %v6701, %v6700
        %v6731 = vpack.c.bf16 %v6703, %v6702
        %v6732 = vpack.c.bf16 %v6705, %v6704
        %v6733 = vpack.c.bf16 %v6707, %v6706
        %v6734 = vpack.c.bf16 %v6709, %v6708
        %v6735 = vpack.c.bf16 %v6711, %v6710
        %v6736 = vpack.c.bf16 %v6713, %v6712
        %v6737 = vpack.c.bf16 %v6715, %v6714
        %v6738 = vpack.c.bf16 %v6717, %v6716
        %v6739 = vpack.c.bf16 %v6719, %v6718
        %v6740 = vpack.c.bf16 %v6721, %v6720
        %v6741 = vpack.c.bf16 %v6723, %v6722
        %v6742 = vpack.c.bf16 %v6725, %v6724
        %v6743 = vpack.c.bf16 %v6727, %v6726
        %s6744 = scalar_lea.vmem %s7, 96
        %v6745 = vld [vmem:[%s6744] sm:$0xf]
        %v6746 = vld [vmem:[%s6744 + $0x4] sm:$0xf]
        %v6747 = vld [vmem:[%s6744 + $0x8] sm:$0xf]
        %v6748 = vld [vmem:[%s6744 + $0xc] sm:$0xf]
        %v6753 = vunpack.c.l.b16 %v6745
        %v6754 = vunpack.c.l.b16 %v6746
        %v6755 = vunpack.c.l.b16 %v6747
        %v6756 = vunpack.c.l.b16 %v6748
        %v6757 = vpack.c.b16 %v6754, %v6753
        %v6758 = vpack.c.b16 %v6756, %v6755
        %v6762 = vsel %vm648, %v6728, 0
        %v6765 = vsel %vm648, %v6729, 0
        %v6768 = vsel %vm648, %v6730, 0
        %v6771 = vsel %vm648, %v6731, 0
        %v6774 = vsel %vm648, %v6732, 0
        %v6777 = vsel %vm648, %v6733, 0
        %v6780 = vsel %vm648, %v6734, 0
        %v6783 = vsel %vm648, %v6735, 0
        %v6786 = vsel %vm648, %v6736, 0
        %v6789 = vsel %vm648, %v6737, 0
        %v6792 = vsel %vm648, %v6738, 0
        %v6795 = vsel %vm648, %v6739, 0
        %v6798 = vsel %vm648, %v6740, 0
        %v6801 = vsel %vm648, %v6741, 0
        %v6804 = vsel %vm648, %v6742, 0
        %v6807 = vsel %vm648, %v6743, 0
        %6809 = vmatprep.subr.bf16.mxu0 0
        %6810 = vmatpush1.bf16.msra.mxu0 0
        %6811 = vmatprep.subr.bf16.mxu0 0
        %6812 = vmatpush1.bf16.msra.mxu0 0
        %6813 = vmatprep.subr.bf16.mxu0 0
        %6814 = vmatpush1.bf16.msra.mxu0 0
        %6815 = vmatprep.subr.bf16.mxu0 0
        %6816 = vmatpush1.bf16.msra.mxu0 0
        %6817 = vmatprep.subr.bf16.mxu0 0
        %6818 = vmatpush1.bf16.msra.mxu0 0
        %6819 = vmatprep.subr.bf16.mxu0 0
        %6820 = vmatpush1.bf16.msra.mxu0 0
        %6821 = vmatprep.subr.bf16.mxu0 0
        %6822 = vmatpush1.bf16.msra.mxu0 %v6758
        %6823 = vmatprep.subr.bf16.mxu0 0
        %6824 = vmatpush1.bf16.msra.mxu0 %v6757
        %6825 = vmatprep.subr.bf16.mxu0 0
        %6826 = vmatpush2.bf16.msra.mxu0 0
        %6827 = vmatprep.subr.bf16.mxu0 0
        %6828 = vmatpush2.bf16.msra.mxu0 0
        %6829 = vmatprep.subr.bf16.mxu0 0
        %6830 = vmatpush2.bf16.msra.mxu0 0
        %6831 = vmatprep.subr.bf16.mxu0 0
        %6832 = vmatpush2.bf16.msra.mxu0 0
        %6833 = vmatprep.subr.bf16.mxu0 0
        %6834 = vmatpush2.bf16.msra.mxu0 0
        %6835 = vmatprep.subr.bf16.mxu0 0
        %6836 = vmatpush2.bf16.msra.mxu0 0
        %6837 = vmatprep.subr.bf16.mxu0 0
        %6838 = vmatpush2.bf16.msra.mxu0 0
        %6839 = vmatprep.subr.bf16.mxu0 0
        %6840 = vmatpush2.bf16.msra.mxu0 0
        %6841 = vmatprep.mubr.bf16.mxu0 0
        %6842 = vmatmul.mubr.bf16.gmra.mxu0 %v6762
        %v6843 = vpop.f32.mrf.mxu0
        %v6844 = vadd.f32 0.0, %v6843
        %v6845 = vpop.f32.mrf.mxu0
        %v6846 = vpop.f32.mrf.mxu0
        %v6847 = vadd.f32 0.0, %v6846
        %v6848 = vpop.f32.mrf.mxu0
        %6849 = vmatprep.mubr.bf16.mxu0 0
        %6850 = vmatmul.mubr.bf16.gmra.mxu0 %v6765
        %v6851 = vpop.f32.mrf.mxu0
        %v6852 = vadd.f32 0.0, %v6851
        %v6853 = vpop.f32.mrf.mxu0
        %v6854 = vpop.f32.mrf.mxu0
        %v6855 = vadd.f32 0.0, %v6854
        %v6856 = vpop.f32.mrf.mxu0
        %6857 = vmatprep.mubr.bf16.mxu0 0
        %6858 = vmatmul.mubr.bf16.gmra.mxu0 %v6768
        %v6859 = vpop.f32.mrf.mxu0
        %v6860 = vadd.f32 0.0, %v6859
        %v6861 = vpop.f32.mrf.mxu0
        %v6862 = vpop.f32.mrf.mxu0
        %v6863 = vadd.f32 0.0, %v6862
        %v6864 = vpop.f32.mrf.mxu0
        %6865 = vmatprep.mubr.bf16.mxu0 0
        %6866 = vmatmul.mubr.bf16.gmra.mxu0 %v6771
        %v6867 = vpop.f32.mrf.mxu0
        %v6868 = vadd.f32 0.0, %v6867
        %v6869 = vpop.f32.mrf.mxu0
        %v6870 = vpop.f32.mrf.mxu0
        %v6871 = vadd.f32 0.0, %v6870
        %v6872 = vpop.f32.mrf.mxu0
        %6873 = vmatprep.mubr.bf16.mxu0 0
        %6874 = vmatmul.mubr.bf16.gmra.mxu0 %v6774
        %v6875 = vpop.f32.mrf.mxu0
        %v6876 = vadd.f32 0.0, %v6875
        %v6877 = vpop.f32.mrf.mxu0
        %v6878 = vpop.f32.mrf.mxu0
        %v6879 = vadd.f32 0.0, %v6878
        %v6880 = vpop.f32.mrf.mxu0
        %6881 = vmatprep.mubr.bf16.mxu0 0
        %6882 = vmatmul.mubr.bf16.gmra.mxu0 %v6777
        %v6883 = vpop.f32.mrf.mxu0
        %v6884 = vadd.f32 0.0, %v6883
        %v6885 = vpop.f32.mrf.mxu0
        %v6886 = vpop.f32.mrf.mxu0
        %v6887 = vadd.f32 0.0, %v6886
        %v6888 = vpop.f32.mrf.mxu0
        %6889 = vmatprep.mubr.bf16.mxu0 0
        %6890 = vmatmul.mubr.bf16.gmra.mxu0 %v6780
        %v6891 = vpop.f32.mrf.mxu0
        %v6892 = vadd.f32 0.0, %v6891
        %v6893 = vpop.f32.mrf.mxu0
        %v6894 = vpop.f32.mrf.mxu0
        %v6895 = vadd.f32 0.0, %v6894
        %v6896 = vpop.f32.mrf.mxu0
        %6897 = vmatprep.mubr.bf16.mxu0 0
        %6898 = vmatmul.mubr.bf16.gmra.mxu0 %v6783
        %v6899 = vpop.f32.mrf.mxu0
        %v6900 = vadd.f32 0.0, %v6899
        %v6901 = vpop.f32.mrf.mxu0
        %v6902 = vpop.f32.mrf.mxu0
        %v6903 = vadd.f32 0.0, %v6902
        %v6904 = vpop.f32.mrf.mxu0
        %6905 = vmatprep.mubr.bf16.mxu0 0
        %6906 = vmatmul.mubr.bf16.gmra.mxu0 %v6786
        %v6907 = vpop.f32.mrf.mxu0
        %v6908 = vadd.f32 0.0, %v6907
        %v6909 = vpop.f32.mrf.mxu0
        %v6910 = vpop.f32.mrf.mxu0
        %v6911 = vadd.f32 0.0, %v6910
        %v6912 = vpop.f32.mrf.mxu0
        %6913 = vmatprep.mubr.bf16.mxu0 0
        %6914 = vmatmul.mubr.bf16.gmra.mxu0 %v6789
        %v6915 = vpop.f32.mrf.mxu0
        %v6916 = vadd.f32 0.0, %v6915
        %v6917 = vpop.f32.mrf.mxu0
        %v6918 = vpop.f32.mrf.mxu0
        %v6919 = vadd.f32 0.0, %v6918
        %v6920 = vpop.f32.mrf.mxu0
        %6921 = vmatprep.mubr.bf16.mxu0 0
        %6922 = vmatmul.mubr.bf16.gmra.mxu0 %v6792
        %v6923 = vpop.f32.mrf.mxu0
        %v6924 = vadd.f32 0.0, %v6923
        %v6925 = vpop.f32.mrf.mxu0
        %v6926 = vpop.f32.mrf.mxu0
        %v6927 = vadd.f32 0.0, %v6926
        %v6928 = vpop.f32.mrf.mxu0
        %6929 = vmatprep.mubr.bf16.mxu0 0
        %6930 = vmatmul.mubr.bf16.gmra.mxu0 %v6795
        %v6931 = vpop.f32.mrf.mxu0
        %v6932 = vadd.f32 0.0, %v6931
        %v6933 = vpop.f32.mrf.mxu0
        %v6934 = vpop.f32.mrf.mxu0
        %v6935 = vadd.f32 0.0, %v6934
        %v6936 = vpop.f32.mrf.mxu0
        %6937 = vmatprep.mubr.bf16.mxu0 0
        %6938 = vmatmul.mubr.bf16.gmra.mxu0 %v6798
        %v6939 = vpop.f32.mrf.mxu0
        %v6940 = vadd.f32 0.0, %v6939
        %v6941 = vpop.f32.mrf.mxu0
        %v6942 = vpop.f32.mrf.mxu0
        %v6943 = vadd.f32 0.0, %v6942
        %v6944 = vpop.f32.mrf.mxu0
        %6945 = vmatprep.mubr.bf16.mxu0 0
        %6946 = vmatmul.mubr.bf16.gmra.mxu0 %v6801
        %v6947 = vpop.f32.mrf.mxu0
        %v6948 = vadd.f32 0.0, %v6947
        %v6949 = vpop.f32.mrf.mxu0
        %v6950 = vpop.f32.mrf.mxu0
        %v6951 = vadd.f32 0.0, %v6950
        %v6952 = vpop.f32.mrf.mxu0
        %6953 = vmatprep.mubr.bf16.mxu0 0
        %6954 = vmatmul.mubr.bf16.gmra.mxu0 %v6804
        %v6955 = vpop.f32.mrf.mxu0
        %v6956 = vadd.f32 0.0, %v6955
        %v6957 = vpop.f32.mrf.mxu0
        %v6958 = vpop.f32.mrf.mxu0
        %v6959 = vadd.f32 0.0, %v6958
        %v6960 = vpop.f32.mrf.mxu0
        %6961 = vmatprep.mubr.bf16.mxu0 0
        %6962 = vmatmul.mubr.bf16.gmra.mxu0 %v6807
        %v6963 = vpop.f32.mrf.mxu0
        %v6964 = vadd.f32 0.0, %v6963
        %v6965 = vpop.f32.mrf.mxu0
        %v6966 = vpop.f32.mrf.mxu0
        %v6967 = vadd.f32 0.0, %v6966
        %v6968 = vpop.f32.mrf.mxu0
        %6969 = vdwg.mxu0
        %v6970 = vadd.f32 %v6632, %v6844
        %v6971 = vadd.f32 %v6633, %v6847
        %v6972 = vadd.f32 %v6634, %v6852
        %v6973 = vadd.f32 %v6635, %v6855
        %v6974 = vadd.f32 %v6636, %v6860
        %v6975 = vadd.f32 %v6637, %v6863
        %v6976 = vadd.f32 %v6638, %v6868
        %v6977 = vadd.f32 %v6639, %v6871
        %v6978 = vadd.f32 %v6640, %v6876
        %v6979 = vadd.f32 %v6641, %v6879
        %v6980 = vadd.f32 %v6642, %v6884
        %v6981 = vadd.f32 %v6643, %v6887
        %v6982 = vadd.f32 %v6644, %v6892
        %v6983 = vadd.f32 %v6645, %v6895
        %v6984 = vadd.f32 %v6646, %v6900
        %v6985 = vadd.f32 %v6647, %v6903
        %v6986 = vadd.f32 %v6648, %v6908
        %v6987 = vadd.f32 %v6649, %v6911
        %v6988 = vadd.f32 %v6650, %v6916
        %v6989 = vadd.f32 %v6651, %v6919
        %v6990 = vadd.f32 %v6652, %v6924
        %v6991 = vadd.f32 %v6653, %v6927
        %v6992 = vadd.f32 %v6654, %v6932
        %v6993 = vadd.f32 %v6655, %v6935
        %v6994 = vadd.f32 %v6656, %v6940
        %v6995 = vadd.f32 %v6657, %v6943
        %v6996 = vadd.f32 %v6658, %v6948
        %v6997 = vadd.f32 %v6659, %v6951
        %v6998 = vadd.f32 %v6660, %v6956
        %v6999 = vadd.f32 %v6661, %v6959
        %v7000 = vadd.f32 %v6662, %v6964
        %v7001 = vadd.f32 %v6663, %v6967
        %v7002 = vld [vmem:[#allocation3 + $0x28] sm:$0xff]
        %v7003 = vld [vmem:[#allocation3 + $0x30] sm:$0xff]
        %v7004 = vld [vmem:[#allocation3 + $0x38] sm:$0xff]
        %v7005 = vld [vmem:[#allocation3 + $0x40] sm:$0xff]
        %v7006 = vld [vmem:[#allocation3 + $0x48] sm:$0xff]
        %v7007 = vld [vmem:[#allocation3 + $0x50] sm:$0xff]
        %v7008 = vld [vmem:[#allocation3 + $0x58] sm:$0xff]
        %v7009 = vld [vmem:[#allocation3 + $0x60] sm:$0xff]
        %v7010 = vld [vmem:[#allocation3 + $0x68] sm:$0xff]
        %v7011 = vld [vmem:[#allocation3 + $0x70] sm:$0xff]
        %v7012 = vld [vmem:[#allocation3 + $0x78] sm:$0xff]
        %v7013 = vld [vmem:[#allocation3 + $0x80] sm:$0xff]
        %v7014 = vld [vmem:[#allocation3 + $0x88] sm:$0xff]
        %v7015 = vld [vmem:[#allocation3 + $0x90] sm:$0xff]
        %v7016 = vld [vmem:[#allocation3 + $0x98] sm:$0xff]
        %v7017 = vld [vmem:[#allocation3 + $0xa0] sm:$0xff]
        %v7018 = vld [vmem:[#allocation3 + $0xa8] sm:$0xff]
        %v7019 = vld [vmem:[#allocation3 + $0xb0] sm:$0xff]
        %v7020 = vld [vmem:[#allocation3 + $0xb8] sm:$0xff]
        %v7021 = vld [vmem:[#allocation3 + $0xc0] sm:$0xff]
        %v7022 = vld [vmem:[#allocation3 + $0xc8] sm:$0xff]
        %v7023 = vld [vmem:[#allocation3 + $0xd0] sm:$0xff]
        %v7024 = vld [vmem:[#allocation3 + $0xd8] sm:$0xff]
        %v7025 = vld [vmem:[#allocation3 + $0xe0] sm:$0xff]
        %v7026 = vld [vmem:[#allocation3 + $0xe8] sm:$0xff]
        %v7027 = vld [vmem:[#allocation3 + $0xf0] sm:$0xff]
        %v7028 = vld [vmem:[#allocation3 + $0xf8] sm:$0xff]
        %v7029 = vld [vmem:[#allocation3 + $0x100] sm:$0xff]
        %v7030 = vld [vmem:[#allocation3 + $0x108] sm:$0xff]
        %v7031 = vld [vmem:[#allocation3 + $0x110] sm:$0xff]
        %v7032 = vld [vmem:[#allocation3 + $0x118] sm:$0xff]
        %v7033 = vld [vmem:[#allocation3 + $0x120] sm:$0xff]
        %v7034 = vpack.c.bf16 %v7003, %v7002
        %v7035 = vpack.c.bf16 %v7005, %v7004
        %v7036 = vpack.c.bf16 %v7007, %v7006
        %v7037 = vpack.c.bf16 %v7009, %v7008
        %v7038 = vpack.c.bf16 %v7011, %v7010
        %v7039 = vpack.c.bf16 %v7013, %v7012
        %v7040 = vpack.c.bf16 %v7015, %v7014
        %v7041 = vpack.c.bf16 %v7017, %v7016
        %v7042 = vpack.c.bf16 %v7019, %v7018
        %v7043 = vpack.c.bf16 %v7021, %v7020
        %v7044 = vpack.c.bf16 %v7023, %v7022
        %v7045 = vpack.c.bf16 %v7025, %v7024
        %v7046 = vpack.c.bf16 %v7027, %v7026
        %v7047 = vpack.c.bf16 %v7029, %v7028
        %v7048 = vpack.c.bf16 %v7031, %v7030
        %v7049 = vpack.c.bf16 %v7033, %v7032
        %s7050 = scalar_lea.vmem %s7, 112
        %v7051 = vld [vmem:[%s7050] sm:$0xf]
        %v7052 = vld [vmem:[%s7050 + $0x4] sm:$0xf]
        %v7053 = vld [vmem:[%s7050 + $0x8] sm:$0xf]
        %v7054 = vld [vmem:[%s7050 + $0xc] sm:$0xf]
        %v7059 = vunpack.c.l.b16 %v7051
        %v7060 = vunpack.c.l.b16 %v7052
        %v7061 = vunpack.c.l.b16 %v7053
        %v7062 = vunpack.c.l.b16 %v7054
        %v7063 = vpack.c.b16 %v7060, %v7059
        %v7064 = vpack.c.b16 %v7062, %v7061
        %v7068 = vsel %vm648, %v7034, 0
        %v7071 = vsel %vm648, %v7035, 0
        %v7074 = vsel %vm648, %v7036, 0
        %v7077 = vsel %vm648, %v7037, 0
        %v7080 = vsel %vm648, %v7038, 0
        %v7083 = vsel %vm648, %v7039, 0
        %v7086 = vsel %vm648, %v7040, 0
        %v7089 = vsel %vm648, %v7041, 0
        %v7092 = vsel %vm648, %v7042, 0
        %v7095 = vsel %vm648, %v7043, 0
        %v7098 = vsel %vm648, %v7044, 0
        %v7101 = vsel %vm648, %v7045, 0
        %v7104 = vsel %vm648, %v7046, 0
        %v7107 = vsel %vm648, %v7047, 0
        %v7110 = vsel %vm648, %v7048, 0
        %v7113 = vsel %vm648, %v7049, 0
        %7115 = vmatprep.subr.bf16.mxu0 0
        %7116 = vmatpush1.bf16.msra.mxu0 0
        %7117 = vmatprep.subr.bf16.mxu0 0
        %7118 = vmatpush1.bf16.msra.mxu0 0
        %7119 = vmatprep.subr.bf16.mxu0 0
        %7120 = vmatpush1.bf16.msra.mxu0 0
        %7121 = vmatprep.subr.bf16.mxu0 0
        %7122 = vmatpush1.bf16.msra.mxu0 0
        %7123 = vmatprep.subr.bf16.mxu0 0
        %7124 = vmatpush1.bf16.msra.mxu0 0
        %7125 = vmatprep.subr.bf16.mxu0 0
        %7126 = vmatpush1.bf16.msra.mxu0 0
        %7127 = vmatprep.subr.bf16.mxu0 0
        %7128 = vmatpush1.bf16.msra.mxu0 %v7064
        %7129 = vmatprep.subr.bf16.mxu0 0
        %7130 = vmatpush1.bf16.msra.mxu0 %v7063
        %7131 = vmatprep.subr.bf16.mxu0 0
        %7132 = vmatpush2.bf16.msra.mxu0 0
        %7133 = vmatprep.subr.bf16.mxu0 0
        %7134 = vmatpush2.bf16.msra.mxu0 0
        %7135 = vmatprep.subr.bf16.mxu0 0
        %7136 = vmatpush2.bf16.msra.mxu0 0
        %7137 = vmatprep.subr.bf16.mxu0 0
        %7138 = vmatpush2.bf16.msra.mxu0 0
        %7139 = vmatprep.subr.bf16.mxu0 0
        %7140 = vmatpush2.bf16.msra.mxu0 0
        %7141 = vmatprep.subr.bf16.mxu0 0
        %7142 = vmatpush2.bf16.msra.mxu0 0
        %7143 = vmatprep.subr.bf16.mxu0 0
        %7144 = vmatpush2.bf16.msra.mxu0 0
        %7145 = vmatprep.subr.bf16.mxu0 0
        %7146 = vmatpush2.bf16.msra.mxu0 0
        %7147 = vmatprep.mubr.bf16.mxu0 0
        %7148 = vmatmul.mubr.bf16.gmra.mxu0 %v7068
        %v7149 = vpop.f32.mrf.mxu0
        %v7150 = vadd.f32 0.0, %v7149
        %v7151 = vpop.f32.mrf.mxu0
        %v7152 = vpop.f32.mrf.mxu0
        %v7153 = vadd.f32 0.0, %v7152
        %v7154 = vpop.f32.mrf.mxu0
        %7155 = vmatprep.mubr.bf16.mxu0 0
        %7156 = vmatmul.mubr.bf16.gmra.mxu0 %v7071
        %v7157 = vpop.f32.mrf.mxu0
        %v7158 = vadd.f32 0.0, %v7157
        %v7159 = vpop.f32.mrf.mxu0
        %v7160 = vpop.f32.mrf.mxu0
        %v7161 = vadd.f32 0.0, %v7160
        %v7162 = vpop.f32.mrf.mxu0
        %7163 = vmatprep.mubr.bf16.mxu0 0
        %7164 = vmatmul.mubr.bf16.gmra.mxu0 %v7074
        %v7165 = vpop.f32.mrf.mxu0
        %v7166 = vadd.f32 0.0, %v7165
        %v7167 = vpop.f32.mrf.mxu0
        %v7168 = vpop.f32.mrf.mxu0
        %v7169 = vadd.f32 0.0, %v7168
        %v7170 = vpop.f32.mrf.mxu0
        %7171 = vmatprep.mubr.bf16.mxu0 0
        %7172 = vmatmul.mubr.bf16.gmra.mxu0 %v7077
        %v7173 = vpop.f32.mrf.mxu0
        %v7174 = vadd.f32 0.0, %v7173
        %v7175 = vpop.f32.mrf.mxu0
        %v7176 = vpop.f32.mrf.mxu0
        %v7177 = vadd.f32 0.0, %v7176
        %v7178 = vpop.f32.mrf.mxu0
        %7179 = vmatprep.mubr.bf16.mxu0 0
        %7180 = vmatmul.mubr.bf16.gmra.mxu0 %v7080
        %v7181 = vpop.f32.mrf.mxu0
        %v7182 = vadd.f32 0.0, %v7181
        %v7183 = vpop.f32.mrf.mxu0
        %v7184 = vpop.f32.mrf.mxu0
        %v7185 = vadd.f32 0.0, %v7184
        %v7186 = vpop.f32.mrf.mxu0
        %7187 = vmatprep.mubr.bf16.mxu0 0
        %7188 = vmatmul.mubr.bf16.gmra.mxu0 %v7083
        %v7189 = vpop.f32.mrf.mxu0
        %v7190 = vadd.f32 0.0, %v7189
        %v7191 = vpop.f32.mrf.mxu0
        %v7192 = vpop.f32.mrf.mxu0
        %v7193 = vadd.f32 0.0, %v7192
        %v7194 = vpop.f32.mrf.mxu0
        %7195 = vmatprep.mubr.bf16.mxu0 0
        %7196 = vmatmul.mubr.bf16.gmra.mxu0 %v7086
        %v7197 = vpop.f32.mrf.mxu0
        %v7198 = vadd.f32 0.0, %v7197
        %v7199 = vpop.f32.mrf.mxu0
        %v7200 = vpop.f32.mrf.mxu0
        %v7201 = vadd.f32 0.0, %v7200
        %v7202 = vpop.f32.mrf.mxu0
        %7203 = vmatprep.mubr.bf16.mxu0 0
        %7204 = vmatmul.mubr.bf16.gmra.mxu0 %v7089
        %v7205 = vpop.f32.mrf.mxu0
        %v7206 = vadd.f32 0.0, %v7205
        %v7207 = vpop.f32.mrf.mxu0
        %v7208 = vpop.f32.mrf.mxu0
        %v7209 = vadd.f32 0.0, %v7208
        %v7210 = vpop.f32.mrf.mxu0
        %7211 = vmatprep.mubr.bf16.mxu0 0
        %7212 = vmatmul.mubr.bf16.gmra.mxu0 %v7092
        %v7213 = vpop.f32.mrf.mxu0
        %v7214 = vadd.f32 0.0, %v7213
        %v7215 = vpop.f32.mrf.mxu0
        %v7216 = vpop.f32.mrf.mxu0
        %v7217 = vadd.f32 0.0, %v7216
        %v7218 = vpop.f32.mrf.mxu0
        %7219 = vmatprep.mubr.bf16.mxu0 0
        %7220 = vmatmul.mubr.bf16.gmra.mxu0 %v7095
        %v7221 = vpop.f32.mrf.mxu0
        %v7222 = vadd.f32 0.0, %v7221
        %v7223 = vpop.f32.mrf.mxu0
        %v7224 = vpop.f32.mrf.mxu0
        %v7225 = vadd.f32 0.0, %v7224
        %v7226 = vpop.f32.mrf.mxu0
        %7227 = vmatprep.mubr.bf16.mxu0 0
        %7228 = vmatmul.mubr.bf16.gmra.mxu0 %v7098
        %v7229 = vpop.f32.mrf.mxu0
        %v7230 = vadd.f32 0.0, %v7229
        %v7231 = vpop.f32.mrf.mxu0
        %v7232 = vpop.f32.mrf.mxu0
        %v7233 = vadd.f32 0.0, %v7232
        %v7234 = vpop.f32.mrf.mxu0
        %7235 = vmatprep.mubr.bf16.mxu0 0
        %7236 = vmatmul.mubr.bf16.gmra.mxu0 %v7101
        %v7237 = vpop.f32.mrf.mxu0
        %v7238 = vadd.f32 0.0, %v7237
        %v7239 = vpop.f32.mrf.mxu0
        %v7240 = vpop.f32.mrf.mxu0
        %v7241 = vadd.f32 0.0, %v7240
        %v7242 = vpop.f32.mrf.mxu0
        %7243 = vmatprep.mubr.bf16.mxu0 0
        %7244 = vmatmul.mubr.bf16.gmra.mxu0 %v7104
        %v7245 = vpop.f32.mrf.mxu0
        %v7246 = vadd.f32 0.0, %v7245
        %v7247 = vpop.f32.mrf.mxu0
        %v7248 = vpop.f32.mrf.mxu0
        %v7249 = vadd.f32 0.0, %v7248
        %v7250 = vpop.f32.mrf.mxu0
        %7251 = vmatprep.mubr.bf16.mxu0 0
        %7252 = vmatmul.mubr.bf16.gmra.mxu0 %v7107
        %v7253 = vpop.f32.mrf.mxu0
        %v7254 = vadd.f32 0.0, %v7253
        %v7255 = vpop.f32.mrf.mxu0
        %v7256 = vpop.f32.mrf.mxu0
        %v7257 = vadd.f32 0.0, %v7256
        %v7258 = vpop.f32.mrf.mxu0
        %7259 = vmatprep.mubr.bf16.mxu0 0
        %7260 = vmatmul.mubr.bf16.gmra.mxu0 %v7110
        %v7261 = vpop.f32.mrf.mxu0
        %v7262 = vadd.f32 0.0, %v7261
        %v7263 = vpop.f32.mrf.mxu0
        %v7264 = vpop.f32.mrf.mxu0
        %v7265 = vadd.f32 0.0, %v7264
        %v7266 = vpop.f32.mrf.mxu0
        %7267 = vmatprep.mubr.bf16.mxu0 0
        %7268 = vmatmul.mubr.bf16.gmra.mxu0 %v7113
        %v7269 = vpop.f32.mrf.mxu0
        %v7270 = vadd.f32 0.0, %v7269
        %v7271 = vpop.f32.mrf.mxu0
        %v7272 = vpop.f32.mrf.mxu0
        %v7273 = vadd.f32 0.0, %v7272
        %v7274 = vpop.f32.mrf.mxu0
        %7275 = vdwg.mxu0
        %v7276 = vadd.f32 %v6970, %v7150
        %v7277 = vadd.f32 %v6971, %v7153
        %v7278 = vadd.f32 %v6972, %v7158
        %v7279 = vadd.f32 %v6973, %v7161
        %v7280 = vadd.f32 %v6974, %v7166
        %v7281 = vadd.f32 %v6975, %v7169
        %v7282 = vadd.f32 %v6976, %v7174
        %v7283 = vadd.f32 %v6977, %v7177
        %v7284 = vadd.f32 %v6978, %v7182
        %v7285 = vadd.f32 %v6979, %v7185
        %v7286 = vadd.f32 %v6980, %v7190
        %v7287 = vadd.f32 %v6981, %v7193
        %v7288 = vadd.f32 %v6982, %v7198
        %v7289 = vadd.f32 %v6983, %v7201
        %v7290 = vadd.f32 %v6984, %v7206
        %v7291 = vadd.f32 %v6985, %v7209
        %v7292 = vadd.f32 %v6986, %v7214
        %v7293 = vadd.f32 %v6987, %v7217
        %v7294 = vadd.f32 %v6988, %v7222
        %v7295 = vadd.f32 %v6989, %v7225
        %v7296 = vadd.f32 %v6990, %v7230
        %v7297 = vadd.f32 %v6991, %v7233
        %v7298 = vadd.f32 %v6992, %v7238
        %v7299 = vadd.f32 %v6993, %v7241
        %v7300 = vadd.f32 %v6994, %v7246
        %v7301 = vadd.f32 %v6995, %v7249
        %v7302 = vadd.f32 %v6996, %v7254
        %v7303 = vadd.f32 %v6997, %v7257
        %v7304 = vadd.f32 %v6998, %v7262
        %v7305 = vadd.f32 %v6999, %v7265
        %v7306 = vadd.f32 %v7000, %v7270
        %v7307 = vadd.f32 %v7001, %v7273
        %v7308 = vld [vmem:[#allocation3 + $0x29] sm:$0xff]
        %v7309 = vld [vmem:[#allocation3 + $0x31] sm:$0xff]
        %v7310 = vld [vmem:[#allocation3 + $0x39] sm:$0xff]
        %v7311 = vld [vmem:[#allocation3 + $0x41] sm:$0xff]
        %v7312 = vld [vmem:[#allocation3 + $0x49] sm:$0xff]
        %v7313 = vld [vmem:[#allocation3 + $0x51] sm:$0xff]
        %v7314 = vld [vmem:[#allocation3 + $0x59] sm:$0xff]
        %v7315 = vld [vmem:[#allocation3 + $0x61] sm:$0xff]
        %v7316 = vld [vmem:[#allocation3 + $0x69] sm:$0xff]
        %v7317 = vld [vmem:[#allocation3 + $0x71] sm:$0xff]
        %v7318 = vld [vmem:[#allocation3 + $0x79] sm:$0xff]
        %v7319 = vld [vmem:[#allocation3 + $0x81] sm:$0xff]
        %v7320 = vld [vmem:[#allocation3 + $0x89] sm:$0xff]
        %v7321 = vld [vmem:[#allocation3 + $0x91] sm:$0xff]
        %v7322 = vld [vmem:[#allocation3 + $0x99] sm:$0xff]
        %v7323 = vld [vmem:[#allocation3 + $0xa1] sm:$0xff]
        %v7324 = vld [vmem:[#allocation3 + $0xa9] sm:$0xff]
        %v7325 = vld [vmem:[#allocation3 + $0xb1] sm:$0xff]
        %v7326 = vld [vmem:[#allocation3 + $0xb9] sm:$0xff]
        %v7327 = vld [vmem:[#allocation3 + $0xc1] sm:$0xff]
        %v7328 = vld [vmem:[#allocation3 + $0xc9] sm:$0xff]
        %v7329 = vld [vmem:[#allocation3 + $0xd1] sm:$0xff]
        %v7330 = vld [vmem:[#allocation3 + $0xd9] sm:$0xff]
        %v7331 = vld [vmem:[#allocation3 + $0xe1] sm:$0xff]
        %v7332 = vld [vmem:[#allocation3 + $0xe9] sm:$0xff]
        %v7333 = vld [vmem:[#allocation3 + $0xf1] sm:$0xff]
        %v7334 = vld [vmem:[#allocation3 + $0xf9] sm:$0xff]
        %v7335 = vld [vmem:[#allocation3 + $0x101] sm:$0xff]
        %v7336 = vld [vmem:[#allocation3 + $0x109] sm:$0xff]
        %v7337 = vld [vmem:[#allocation3 + $0x111] sm:$0xff]
        %v7338 = vld [vmem:[#allocation3 + $0x119] sm:$0xff]
        %v7339 = vld [vmem:[#allocation3 + $0x121] sm:$0xff]
        %v7340 = vsel %vm2371, %v7308, 0.0
        %v7341 = vsel %vm2372, %v7309, 0.0
        %v7342 = vsel %vm2373, %v7310, 0.0
        %v7343 = vsel %vm2374, %v7311, 0.0
        %v7344 = vsel %vm2375, %v7312, 0.0
        %v7345 = vsel %vm2376, %v7313, 0.0
        %v7346 = vsel %vm2377, %v7314, 0.0
        %v7347 = vsel %vm2378, %v7315, 0.0
        %v7348 = vsel %vm2379, %v7316, 0.0
        %v7349 = vsel %vm2380, %v7317, 0.0
        %v7350 = vsel %vm2381, %v7318, 0.0
        %v7351 = vsel %vm2382, %v7319, 0.0
        %v7352 = vsel %vm2383, %v7320, 0.0
        %v7353 = vsel %vm2384, %v7321, 0.0
        %v7354 = vsel %vm2385, %v7322, 0.0
        %v7355 = vsel %vm2386, %v7323, 0.0
        %v7356 = vsel %vm2387, %v7324, 0.0
        %v7357 = vsel %vm2388, %v7325, 0.0
        %v7358 = vsel %vm2389, %v7326, 0.0
        %v7359 = vsel %vm2390, %v7327, 0.0
        %v7360 = vsel %vm2391, %v7328, 0.0
        %v7361 = vsel %vm2392, %v7329, 0.0
        %v7362 = vsel %vm2393, %v7330, 0.0
        %v7363 = vsel %vm2394, %v7331, 0.0
        %v7364 = vsel %vm2395, %v7332, 0.0
        %v7365 = vsel %vm2396, %v7333, 0.0
        %v7366 = vsel %vm2397, %v7334, 0.0
        %v7367 = vsel %vm2398, %v7335, 0.0
        %v7368 = vsel %vm2399, %v7336, 0.0
        %v7369 = vsel %vm2400, %v7337, 0.0
        %v7370 = vsel %vm2401, %v7338, 0.0
        %v7371 = vsel %vm2402, %v7339, 0.0
        %v7372 = vpack.c.bf16 %v7341, %v7340
        %v7373 = vpack.c.bf16 %v7343, %v7342
        %v7374 = vpack.c.bf16 %v7345, %v7344
        %v7375 = vpack.c.bf16 %v7347, %v7346
        %v7376 = vpack.c.bf16 %v7349, %v7348
        %v7377 = vpack.c.bf16 %v7351, %v7350
        %v7378 = vpack.c.bf16 %v7353, %v7352
        %v7379 = vpack.c.bf16 %v7355, %v7354
        %v7380 = vpack.c.bf16 %v7357, %v7356
        %v7381 = vpack.c.bf16 %v7359, %v7358
        %v7382 = vpack.c.bf16 %v7361, %v7360
        %v7383 = vpack.c.bf16 %v7363, %v7362
        %v7384 = vpack.c.bf16 %v7365, %v7364
        %v7385 = vpack.c.bf16 %v7367, %v7366
        %v7386 = vpack.c.bf16 %v7369, %v7368
        %v7387 = vpack.c.bf16 %v7371, %v7370
        %s7388 = scalar_lea.vmem %s7, 128
        %v7389 = vld [vmem:[%s7388] sm:$0xf]
        %v7390 = vld [vmem:[%s7388 + $0x4] sm:$0xf]
        %v7391 = vld [vmem:[%s7388 + $0x8] sm:$0xf]
        %v7392 = vld [vmem:[%s7388 + $0xc] sm:$0xf]
        %v7397 = vunpack.c.l.b16 %v7389
        %v7398 = vunpack.c.l.b16 %v7390
        %v7399 = vunpack.c.l.b16 %v7391
        %v7400 = vunpack.c.l.b16 %v7392
        %v7401 = vpack.c.b16 %v7398, %v7397
        %v7402 = vpack.c.b16 %v7400, %v7399
        %v7406 = vsel %vm648, %v7372, 0
        %v7409 = vsel %vm648, %v7373, 0
        %v7412 = vsel %vm648, %v7374, 0
        %v7415 = vsel %vm648, %v7375, 0
        %v7418 = vsel %vm648, %v7376, 0
        %v7421 = vsel %vm648, %v7377, 0
        %v7424 = vsel %vm648, %v7378, 0
        %v7427 = vsel %vm648, %v7379, 0
        %v7430 = vsel %vm648, %v7380, 0
        %v7433 = vsel %vm648, %v7381, 0
        %v7436 = vsel %vm648, %v7382, 0
        %v7439 = vsel %vm648, %v7383, 0
        %v7442 = vsel %vm648, %v7384, 0
        %v7445 = vsel %vm648, %v7385, 0
        %v7448 = vsel %vm648, %v7386, 0
        %v7451 = vsel %vm648, %v7387, 0
        %7453 = vmatprep.subr.bf16.mxu0 0
        %7454 = vmatpush1.bf16.msra.mxu0 0
        %7455 = vmatprep.subr.bf16.mxu0 0
        %7456 = vmatpush1.bf16.msra.mxu0 0
        %7457 = vmatprep.subr.bf16.mxu0 0
        %7458 = vmatpush1.bf16.msra.mxu0 0
        %7459 = vmatprep.subr.bf16.mxu0 0
        %7460 = vmatpush1.bf16.msra.mxu0 0
        %7461 = vmatprep.subr.bf16.mxu0 0
        %7462 = vmatpush1.bf16.msra.mxu0 0
        %7463 = vmatprep.subr.bf16.mxu0 0
        %7464 = vmatpush1.bf16.msra.mxu0 0
        %7465 = vmatprep.subr.bf16.mxu0 0
        %7466 = vmatpush1.bf16.msra.mxu0 %v7402
        %7467 = vmatprep.subr.bf16.mxu0 0
        %7468 = vmatpush1.bf16.msra.mxu0 %v7401
        %7469 = vmatprep.subr.bf16.mxu0 0
        %7470 = vmatpush2.bf16.msra.mxu0 0
        %7471 = vmatprep.subr.bf16.mxu0 0
        %7472 = vmatpush2.bf16.msra.mxu0 0
        %7473 = vmatprep.subr.bf16.mxu0 0
        %7474 = vmatpush2.bf16.msra.mxu0 0
        %7475 = vmatprep.subr.bf16.mxu0 0
        %7476 = vmatpush2.bf16.msra.mxu0 0
        %7477 = vmatprep.subr.bf16.mxu0 0
        %7478 = vmatpush2.bf16.msra.mxu0 0
        %7479 = vmatprep.subr.bf16.mxu0 0
        %7480 = vmatpush2.bf16.msra.mxu0 0
        %7481 = vmatprep.subr.bf16.mxu0 0
        %7482 = vmatpush2.bf16.msra.mxu0 0
        %7483 = vmatprep.subr.bf16.mxu0 0
        %7484 = vmatpush2.bf16.msra.mxu0 0
        %7485 = vmatprep.mubr.bf16.mxu0 0
        %7486 = vmatmul.mubr.bf16.gmra.mxu0 %v7406
        %v7487 = vpop.f32.mrf.mxu0
        %v7488 = vadd.f32 0.0, %v7487
        %v7489 = vpop.f32.mrf.mxu0
        %v7490 = vpop.f32.mrf.mxu0
        %v7491 = vadd.f32 0.0, %v7490
        %v7492 = vpop.f32.mrf.mxu0
        %7493 = vmatprep.mubr.bf16.mxu0 0
        %7494 = vmatmul.mubr.bf16.gmra.mxu0 %v7409
        %v7495 = vpop.f32.mrf.mxu0
        %v7496 = vadd.f32 0.0, %v7495
        %v7497 = vpop.f32.mrf.mxu0
        %v7498 = vpop.f32.mrf.mxu0
        %v7499 = vadd.f32 0.0, %v7498
        %v7500 = vpop.f32.mrf.mxu0
        %7501 = vmatprep.mubr.bf16.mxu0 0
        %7502 = vmatmul.mubr.bf16.gmra.mxu0 %v7412
        %v7503 = vpop.f32.mrf.mxu0
        %v7504 = vadd.f32 0.0, %v7503
        %v7505 = vpop.f32.mrf.mxu0
        %v7506 = vpop.f32.mrf.mxu0
        %v7507 = vadd.f32 0.0, %v7506
        %v7508 = vpop.f32.mrf.mxu0
        %7509 = vmatprep.mubr.bf16.mxu0 0
        %7510 = vmatmul.mubr.bf16.gmra.mxu0 %v7415
        %v7511 = vpop.f32.mrf.mxu0
        %v7512 = vadd.f32 0.0, %v7511
        %v7513 = vpop.f32.mrf.mxu0
        %v7514 = vpop.f32.mrf.mxu0
        %v7515 = vadd.f32 0.0, %v7514
        %v7516 = vpop.f32.mrf.mxu0
        %7517 = vmatprep.mubr.bf16.mxu0 0
        %7518 = vmatmul.mubr.bf16.gmra.mxu0 %v7418
        %v7519 = vpop.f32.mrf.mxu0
        %v7520 = vadd.f32 0.0, %v7519
        %v7521 = vpop.f32.mrf.mxu0
        %v7522 = vpop.f32.mrf.mxu0
        %v7523 = vadd.f32 0.0, %v7522
        %v7524 = vpop.f32.mrf.mxu0
        %7525 = vmatprep.mubr.bf16.mxu0 0
        %7526 = vmatmul.mubr.bf16.gmra.mxu0 %v7421
        %v7527 = vpop.f32.mrf.mxu0
        %v7528 = vadd.f32 0.0, %v7527
        %v7529 = vpop.f32.mrf.mxu0
        %v7530 = vpop.f32.mrf.mxu0
        %v7531 = vadd.f32 0.0, %v7530
        %v7532 = vpop.f32.mrf.mxu0
        %7533 = vmatprep.mubr.bf16.mxu0 0
        %7534 = vmatmul.mubr.bf16.gmra.mxu0 %v7424
        %v7535 = vpop.f32.mrf.mxu0
        %v7536 = vadd.f32 0.0, %v7535
        %v7537 = vpop.f32.mrf.mxu0
        %v7538 = vpop.f32.mrf.mxu0
        %v7539 = vadd.f32 0.0, %v7538
        %v7540 = vpop.f32.mrf.mxu0
        %7541 = vmatprep.mubr.bf16.mxu0 0
        %7542 = vmatmul.mubr.bf16.gmra.mxu0 %v7427
        %v7543 = vpop.f32.mrf.mxu0
        %v7544 = vadd.f32 0.0, %v7543
        %v7545 = vpop.f32.mrf.mxu0
        %v7546 = vpop.f32.mrf.mxu0
        %v7547 = vadd.f32 0.0, %v7546
        %v7548 = vpop.f32.mrf.mxu0
        %7549 = vmatprep.mubr.bf16.mxu0 0
        %7550 = vmatmul.mubr.bf16.gmra.mxu0 %v7430
        %v7551 = vpop.f32.mrf.mxu0
        %v7552 = vadd.f32 0.0, %v7551
        %v7553 = vpop.f32.mrf.mxu0
        %v7554 = vpop.f32.mrf.mxu0
        %v7555 = vadd.f32 0.0, %v7554
        %v7556 = vpop.f32.mrf.mxu0
        %7557 = vmatprep.mubr.bf16.mxu0 0
        %7558 = vmatmul.mubr.bf16.gmra.mxu0 %v7433
        %v7559 = vpop.f32.mrf.mxu0
        %v7560 = vadd.f32 0.0, %v7559
        %v7561 = vpop.f32.mrf.mxu0
        %v7562 = vpop.f32.mrf.mxu0
        %v7563 = vadd.f32 0.0, %v7562
        %v7564 = vpop.f32.mrf.mxu0
        %7565 = vmatprep.mubr.bf16.mxu0 0
        %7566 = vmatmul.mubr.bf16.gmra.mxu0 %v7436
        %v7567 = vpop.f32.mrf.mxu0
        %v7568 = vadd.f32 0.0, %v7567
        %v7569 = vpop.f32.mrf.mxu0
        %v7570 = vpop.f32.mrf.mxu0
        %v7571 = vadd.f32 0.0, %v7570
        %v7572 = vpop.f32.mrf.mxu0
        %7573 = vmatprep.mubr.bf16.mxu0 0
        %7574 = vmatmul.mubr.bf16.gmra.mxu0 %v7439
        %v7575 = vpop.f32.mrf.mxu0
        %v7576 = vadd.f32 0.0, %v7575
        %v7577 = vpop.f32.mrf.mxu0
        %v7578 = vpop.f32.mrf.mxu0
        %v7579 = vadd.f32 0.0, %v7578
        %v7580 = vpop.f32.mrf.mxu0
        %7581 = vmatprep.mubr.bf16.mxu0 0
        %7582 = vmatmul.mubr.bf16.gmra.mxu0 %v7442
        %v7583 = vpop.f32.mrf.mxu0
        %v7584 = vadd.f32 0.0, %v7583
        %v7585 = vpop.f32.mrf.mxu0
        %v7586 = vpop.f32.mrf.mxu0
        %v7587 = vadd.f32 0.0, %v7586
        %v7588 = vpop.f32.mrf.mxu0
        %7589 = vmatprep.mubr.bf16.mxu0 0
        %7590 = vmatmul.mubr.bf16.gmra.mxu0 %v7445
        %v7591 = vpop.f32.mrf.mxu0
        %v7592 = vadd.f32 0.0, %v7591
        %v7593 = vpop.f32.mrf.mxu0
        %v7594 = vpop.f32.mrf.mxu0
        %v7595 = vadd.f32 0.0, %v7594
        %v7596 = vpop.f32.mrf.mxu0
        %7597 = vmatprep.mubr.bf16.mxu0 0
        %7598 = vmatmul.mubr.bf16.gmra.mxu0 %v7448
        %v7599 = vpop.f32.mrf.mxu0
        %v7600 = vadd.f32 0.0, %v7599
        %v7601 = vpop.f32.mrf.mxu0
        %v7602 = vpop.f32.mrf.mxu0
        %v7603 = vadd.f32 0.0, %v7602
        %v7604 = vpop.f32.mrf.mxu0
        %7605 = vmatprep.mubr.bf16.mxu0 0
        %7606 = vmatmul.mubr.bf16.gmra.mxu0 %v7451
        %v7607 = vpop.f32.mrf.mxu0
        %v7608 = vadd.f32 0.0, %v7607
        %v7609 = vpop.f32.mrf.mxu0
        %v7610 = vpop.f32.mrf.mxu0
        %v7611 = vadd.f32 0.0, %v7610
        %v7612 = vpop.f32.mrf.mxu0
        %7613 = vdwg.mxu0
        %v7614 = vadd.f32 %v7276, %v7488
        %v7615 = vadd.f32 %v7277, %v7491
        %v7616 = vadd.f32 %v7278, %v7496
        %v7617 = vadd.f32 %v7279, %v7499
        %v7618 = vadd.f32 %v7280, %v7504
        %v7619 = vadd.f32 %v7281, %v7507
        %v7620 = vadd.f32 %v7282, %v7512
        %v7621 = vadd.f32 %v7283, %v7515
        %v7622 = vadd.f32 %v7284, %v7520
        %v7623 = vadd.f32 %v7285, %v7523
        %v7624 = vadd.f32 %v7286, %v7528
        %v7625 = vadd.f32 %v7287, %v7531
        %v7626 = vadd.f32 %v7288, %v7536
        %v7627 = vadd.f32 %v7289, %v7539
        %v7628 = vadd.f32 %v7290, %v7544
        %v7629 = vadd.f32 %v7291, %v7547
        %v7630 = vadd.f32 %v7292, %v7552
        %v7631 = vadd.f32 %v7293, %v7555
        %v7632 = vadd.f32 %v7294, %v7560
        %v7633 = vadd.f32 %v7295, %v7563
        %v7634 = vadd.f32 %v7296, %v7568
        %v7635 = vadd.f32 %v7297, %v7571
        %v7636 = vadd.f32 %v7298, %v7576
        %v7637 = vadd.f32 %v7299, %v7579
        %v7638 = vadd.f32 %v7300, %v7584
        %v7639 = vadd.f32 %v7301, %v7587
        %v7640 = vadd.f32 %v7302, %v7592
        %v7641 = vadd.f32 %v7303, %v7595
        %v7642 = vadd.f32 %v7304, %v7600
        %v7643 = vadd.f32 %v7305, %v7603
        %v7644 = vadd.f32 %v7306, %v7608
        %v7645 = vadd.f32 %v7307, %v7611
        %v7646 = vld [vmem:[%s8] sm:$0x1]
        %v7648 = vlaneseq
        %v7649 = vshrl.u32 %v7648, 7
        %v7650 = vsub.s32 0, %v7649
        %v7651 = vrot.slane %v7646, %v7650
        %v7653 = vmul.f32 %v7614, %v7651
        %v7654 = vmul.f32 %v7615, %v7651
        %v7655 = vmul.f32 %v7616, %v7651
        %v7656 = vmul.f32 %v7617, %v7651
        %v7657 = vmul.f32 %v7618, %v7651
        %v7658 = vmul.f32 %v7619, %v7651
        %v7659 = vmul.f32 %v7620, %v7651
        %v7660 = vmul.f32 %v7621, %v7651
        %v7661 = vmul.f32 %v7622, %v7651
        %v7662 = vmul.f32 %v7623, %v7651
        %v7663 = vmul.f32 %v7624, %v7651
        %v7664 = vmul.f32 %v7625, %v7651
        %v7665 = vmul.f32 %v7626, %v7651
        %v7666 = vmul.f32 %v7627, %v7651
        %v7667 = vmul.f32 %v7628, %v7651
        %v7668 = vmul.f32 %v7629, %v7651
        %v7669 = vmul.f32 %v7630, %v7651
        %v7670 = vmul.f32 %v7631, %v7651
        %v7671 = vmul.f32 %v7632, %v7651
        %v7672 = vmul.f32 %v7633, %v7651
        %v7673 = vmul.f32 %v7634, %v7651
        %v7674 = vmul.f32 %v7635, %v7651
        %v7675 = vmul.f32 %v7636, %v7651
        %v7676 = vmul.f32 %v7637, %v7651
        %v7677 = vmul.f32 %v7638, %v7651
        %v7678 = vmul.f32 %v7639, %v7651
        %v7679 = vmul.f32 %v7640, %v7651
        %v7680 = vmul.f32 %v7641, %v7651
        %v7681 = vmul.f32 %v7642, %v7651
        %v7682 = vmul.f32 %v7643, %v7651
        %v7683 = vmul.f32 %v7644, %v7651
        %v7684 = vmul.f32 %v7645, %v7651
        %v7685 = vld [vmem:[%s9] sm:$0x1]
        %v7687 = vlaneseq
        %v7688 = vshrl.u32 %v7687, 7
        %v7689 = vsub.s32 0, %v7688
        %v7690 = vrot.slane %v7685, %v7689
        %v7692 = vadd.f32 %v7653, %v7690
        %v7693 = vadd.f32 %v7654, %v7690
        %v7694 = vadd.f32 %v7655, %v7690
        %v7695 = vadd.f32 %v7656, %v7690
        %v7696 = vadd.f32 %v7657, %v7690
        %v7697 = vadd.f32 %v7658, %v7690
        %v7698 = vadd.f32 %v7659, %v7690
        %v7699 = vadd.f32 %v7660, %v7690
        %v7700 = vadd.f32 %v7661, %v7690
        %v7701 = vadd.f32 %v7662, %v7690
        %v7702 = vadd.f32 %v7663, %v7690
        %v7703 = vadd.f32 %v7664, %v7690
        %v7704 = vadd.f32 %v7665, %v7690
        %v7705 = vadd.f32 %v7666, %v7690
        %v7706 = vadd.f32 %v7667, %v7690
        %v7707 = vadd.f32 %v7668, %v7690
        %v7708 = vadd.f32 %v7669, %v7690
        %v7709 = vadd.f32 %v7670, %v7690
        %v7710 = vadd.f32 %v7671, %v7690
        %v7711 = vadd.f32 %v7672, %v7690
        %v7712 = vadd.f32 %v7673, %v7690
        %v7713 = vadd.f32 %v7674, %v7690
        %v7714 = vadd.f32 %v7675, %v7690
        %v7715 = vadd.f32 %v7676, %v7690
        %v7716 = vadd.f32 %v7677, %v7690
        %v7717 = vadd.f32 %v7678, %v7690
        %v7718 = vadd.f32 %v7679, %v7690
        %v7719 = vadd.f32 %v7680, %v7690
        %v7720 = vadd.f32 %v7681, %v7690
        %v7721 = vadd.f32 %v7682, %v7690
        %v7722 = vadd.f32 %v7683, %v7690
        %v7723 = vadd.f32 %v7684, %v7690
        %v7724 = vmax.f32 %v7692, 0.0
        %v7725 = vmax.f32 %v7693, 0.0
        %v7726 = vmax.f32 %v7694, 0.0
        %v7727 = vmax.f32 %v7695, 0.0
        %v7728 = vmax.f32 %v7696, 0.0
        %v7729 = vmax.f32 %v7697, 0.0
        %v7730 = vmax.f32 %v7698, 0.0
        %v7731 = vmax.f32 %v7699, 0.0
        %v7732 = vmax.f32 %v7700, 0.0
        %v7733 = vmax.f32 %v7701, 0.0
        %v7734 = vmax.f32 %v7702, 0.0
        %v7735 = vmax.f32 %v7703, 0.0
        %v7736 = vmax.f32 %v7704, 0.0
        %v7737 = vmax.f32 %v7705, 0.0
        %v7738 = vmax.f32 %v7706, 0.0
        %v7739 = vmax.f32 %v7707, 0.0
        %v7740 = vmax.f32 %v7708, 0.0
        %v7741 = vmax.f32 %v7709, 0.0
        %v7742 = vmax.f32 %v7710, 0.0
        %v7743 = vmax.f32 %v7711, 0.0
        %v7744 = vmax.f32 %v7712, 0.0
        %v7745 = vmax.f32 %v7713, 0.0
        %v7746 = vmax.f32 %v7714, 0.0
        %v7747 = vmax.f32 %v7715, 0.0
        %v7748 = vmax.f32 %v7716, 0.0
        %v7749 = vmax.f32 %v7717, 0.0
        %v7750 = vmax.f32 %v7718, 0.0
        %v7751 = vmax.f32 %v7719, 0.0
        %v7752 = vmax.f32 %v7720, 0.0
        %v7753 = vmax.f32 %v7721, 0.0
        %v7754 = vmax.f32 %v7722, 0.0
        %v7755 = vmax.f32 %v7723, 0.0
        %vm7756 = vcmask 392192
        %v7757 = vsel %vm7756, %v7724, 0.0
        %v7758 = vsel %vm7756, %v7725, 0.0
        %v7759 = vadd.f32 %v7757, %v7758
        %v7760 = vsel %vm7756, %v7726, 0.0
        %v7761 = vadd.f32 %v7759, %v7760
        %v7762 = vsel %vm7756, %v7727, 0.0
        %v7763 = vadd.f32 %v7761, %v7762
        %v7764 = vsel %vm7756, %v7728, 0.0
        %v7765 = vadd.f32 %v7763, %v7764
        %v7766 = vsel %vm7756, %v7729, 0.0
        %v7767 = vadd.f32 %v7765, %v7766
        %v7768 = vsel %vm7756, %v7730, 0.0
        %v7769 = vadd.f32 %v7767, %v7768
        %v7770 = vsel %vm7756, %v7731, 0.0
        %v7771 = vadd.f32 %v7769, %v7770
        %v7772 = vsel %vm7756, %v7732, 0.0
        %v7773 = vadd.f32 %v7771, %v7772
        %v7774 = vsel %vm7756, %v7733, 0.0
        %v7775 = vadd.f32 %v7773, %v7774
        %v7776 = vsel %vm7756, %v7734, 0.0
        %v7777 = vadd.f32 %v7775, %v7776
        %v7778 = vsel %vm7756, %v7735, 0.0
        %v7779 = vadd.f32 %v7777, %v7778
        %v7780 = vsel %vm7756, %v7736, 0.0
        %v7781 = vadd.f32 %v7779, %v7780
        %v7782 = vsel %vm7756, %v7737, 0.0
        %v7783 = vadd.f32 %v7781, %v7782
        %v7784 = vsel %vm7756, %v7738, 0.0
        %v7785 = vadd.f32 %v7783, %v7784
        %v7786 = vsel %vm7756, %v7739, 0.0
        %v7787 = vadd.f32 %v7785, %v7786
        %v7788 = vsel %vm7756, %v7740, 0.0
        %v7789 = vadd.f32 %v7787, %v7788
        %v7790 = vsel %vm7756, %v7741, 0.0
        %v7791 = vadd.f32 %v7789, %v7790
        %v7792 = vsel %vm7756, %v7742, 0.0
        %v7793 = vadd.f32 %v7791, %v7792
        %v7794 = vsel %vm7756, %v7743, 0.0
        %v7795 = vadd.f32 %v7793, %v7794
        %v7796 = vsel %vm7756, %v7744, 0.0
        %v7797 = vadd.f32 %v7795, %v7796
        %v7798 = vsel %vm7756, %v7745, 0.0
        %v7799 = vadd.f32 %v7797, %v7798
        %v7800 = vsel %vm7756, %v7746, 0.0
        %v7801 = vadd.f32 %v7799, %v7800
        %v7802 = vsel %vm7756, %v7747, 0.0
        %v7803 = vadd.f32 %v7801, %v7802
        %v7804 = vsel %vm7756, %v7748, 0.0
        %v7805 = vadd.f32 %v7803, %v7804
        %v7806 = vsel %vm7756, %v7749, 0.0
        %v7807 = vadd.f32 %v7805, %v7806
        %v7808 = vsel %vm7756, %v7750, 0.0
        %v7809 = vadd.f32 %v7807, %v7808
        %v7810 = vsel %vm7756, %v7751, 0.0
        %v7811 = vadd.f32 %v7809, %v7810
        %v7812 = vsel %vm7756, %v7752, 0.0
        %v7813 = vadd.f32 %v7811, %v7812
        %v7814 = vsel %vm7756, %v7753, 0.0
        %v7815 = vadd.f32 %v7813, %v7814
        %v7816 = vsel %vm7756, %v7754, 0.0
        %v7817 = vadd.f32 %v7815, %v7816
        %v7818 = vsel %vm7756, %v7755, 0.0
        %v7819 = vadd.f32 %v7817, %v7818
        %v7820 = vrot.slane %v7819, 4
        %v7821 = vadd.f32 %v7819, %v7820
        %v7822 = vrot.slane %v7821, 2
        %v7823 = vadd.f32 %v7821, %v7822
        %v7824 = vrot.slane %v7823, 1
        %v7825 = vadd.f32 %v7823, %v7824
        %v7826 = vmul.f32 %v7825, 0.00390625
        %v7827 = vld [vmem:[%s10] sm:$0xff]
        %v7828 = vld [vmem:[%s10 + $0x8] sm:$0xff]
        %v7829 = vld [vmem:[%s10 + $0x10] sm:$0xff]
        %v7830 = vld [vmem:[%s10 + $0x18] sm:$0xff]
        %v7831 = vld [vmem:[%s10 + $0x20] sm:$0xff]
        %v7832 = vld [vmem:[%s10 + $0x28] sm:$0xff]
        %v7833 = vld [vmem:[%s11] sm:$0x1]
        %v7835 = vsel %vm7756, %v7826, 0
        %7837 = vmatprep.subr.mxu0 0.0
        %7838 = vmatpush1.msra.mxu0 0.0
        %7839 = vmatprep.subr.mxu0 0.0
        %7840 = vmatpush1.msra.mxu0 0.0
        %7841 = vmatprep.subr.mxu0 0.0
        %7842 = vmatpush1.msra.mxu0 0.0
        %7843 = vmatprep.subr.mxu0 0.0
        %7844 = vmatpush1.msra.mxu0 0.0
        %7845 = vmatprep.subr.mxu0 0.0
        %7846 = vmatpush1.msra.mxu0 0.0
        %7847 = vmatprep.subr.mxu0 0.0
        %7848 = vmatpush1.msra.mxu0 0.0
        %7849 = vmatprep.subr.mxu0 0.0
        %7850 = vmatpush1.msra.mxu0 0.0
        %7851 = vmatprep.subr.mxu0 0.0
        %7852 = vmatpush1.msra.mxu0 0.0
        %7853 = vmatprep.subr.mxu0 0.0
        %7854 = vmatpush1.msra.mxu0 0.0
        %7855 = vmatprep.subr.mxu0 0.0
        %7856 = vmatpush1.msra.mxu0 0.0
        %7857 = vmatprep.subr.mxu0 0.0
        %7858 = vmatpush1.msra.mxu0 %v7832
        %7859 = vmatprep.subr.mxu0 0.0
        %7860 = vmatpush1.msra.mxu0 %v7831
        %7861 = vmatprep.subr.mxu0 0.0
        %7862 = vmatpush1.msra.mxu0 %v7830
        %7863 = vmatprep.subr.mxu0 0.0
        %7864 = vmatpush1.msra.mxu0 %v7829
        %7865 = vmatprep.subr.mxu0 0.0
        %7866 = vmatpush1.msra.mxu0 %v7828
        %7867 = vmatprep.subr.mxu0 0.0
        %7868 = vmatpush1.msra.mxu0 %v7827
        %7869 = vmatprep.subr.mxu0 0.0
        %7870 = vmatpush2.msra.mxu0 0.0
        %7871 = vmatprep.subr.mxu0 0.0
        %7872 = vmatpush2.msra.mxu0 0.0
        %7873 = vmatprep.subr.mxu0 0.0
        %7874 = vmatpush2.msra.mxu0 0.0
        %7875 = vmatprep.subr.mxu0 0.0
        %7876 = vmatpush2.msra.mxu0 0.0
        %7877 = vmatprep.subr.mxu0 0.0
        %7878 = vmatpush2.msra.mxu0 0.0
        %7879 = vmatprep.subr.mxu0 0.0
        %7880 = vmatpush2.msra.mxu0 0.0
        %7881 = vmatprep.subr.mxu0 0.0
        %7882 = vmatpush2.msra.mxu0 0.0
        %7883 = vmatprep.subr.mxu0 0.0
        %7884 = vmatpush2.msra.mxu0 0.0
        %7885 = vmatprep.subr.mxu0 0.0
        %7886 = vmatpush2.msra.mxu0 0.0
        %7887 = vmatprep.subr.mxu0 0.0
        %7888 = vmatpush2.msra.mxu0 0.0
        %7889 = vmatprep.subr.mxu0 0.0
        %7890 = vmatpush2.msra.mxu0 0.0
        %7891 = vmatprep.subr.mxu0 0.0
        %7892 = vmatpush2.msra.mxu0 0.0
        %7893 = vmatprep.subr.mxu0 0.0
        %7894 = vmatpush2.msra.mxu0 0.0
        %7895 = vmatprep.subr.mxu0 0.0
        %7896 = vmatpush2.msra.mxu0 0.0
        %7897 = vmatprep.subr.mxu0 0.0
        %7898 = vmatpush2.msra.mxu0 0.0
        %7899 = vmatprep.subr.mxu0 0.0
        %7900 = vmatpush2.msra.mxu0 0.0
        %7901 = vmatprep.mubr.f32.mxu0 0.0
        %7902 = vmatmul.mubr.f32.gmra.mxu0 %v7835
        %v7903 = vpop.f32.mrf.mxu0
        %v7904 = vadd.f32 %v7833, %v7903
        %v7905 = vpop.f32.mrf.mxu0
        %7906 = vdwg.mxu0
        %s7907 = scalar_lea.vmem %s10, 48
        %v7908 = vld [vmem:[%s7907] sm:$0xff]
        %v7909 = vld [vmem:[%s7907 + $0x8] sm:$0xff]
        %v7910 = vld [vmem:[%s7907 + $0x10] sm:$0xff]
        %v7911 = vld [vmem:[%s7907 + $0x18] sm:$0xff]
        %v7912 = vld [vmem:[%s7907 + $0x20] sm:$0xff]
        %v7913 = vld [vmem:[%s7907 + $0x28] sm:$0xff]
        %s7914 = scalar_lea.vmem %s11, 1
        %v7915 = vld [vmem:[%s7914] sm:$0x1]
        %7916 = vmatprep.subr.mxu0 0.0
        %7917 = vmatpush1.msra.mxu0 0.0
        %7918 = vmatprep.subr.mxu0 0.0
        %7919 = vmatpush1.msra.mxu0 0.0
        %7920 = vmatprep.subr.mxu0 0.0
        %7921 = vmatpush1.msra.mxu0 0.0
        %7922 = vmatprep.subr.mxu0 0.0
        %7923 = vmatpush1.msra.mxu0 0.0
        %7924 = vmatprep.subr.mxu0 0.0
        %7925 = vmatpush1.msra.mxu0 0.0
        %7926 = vmatprep.subr.mxu0 0.0
        %7927 = vmatpush1.msra.mxu0 0.0
        %7928 = vmatprep.subr.mxu0 0.0
        %7929 = vmatpush1.msra.mxu0 0.0
        %7930 = vmatprep.subr.mxu0 0.0
        %7931 = vmatpush1.msra.mxu0 0.0
        %7932 = vmatprep.subr.mxu0 0.0
        %7933 = vmatpush1.msra.mxu0 0.0
        %7934 = vmatprep.subr.mxu0 0.0
        %7935 = vmatpush1.msra.mxu0 0.0
        %7936 = vmatprep.subr.mxu0 0.0
        %7937 = vmatpush1.msra.mxu0 %v7913
        %7938 = vmatprep.subr.mxu0 0.0
        %7939 = vmatpush1.msra.mxu0 %v7912
        %7940 = vmatprep.subr.mxu0 0.0
        %7941 = vmatpush1.msra.mxu0 %v7911
        %7942 = vmatprep.subr.mxu0 0.0
        %7943 = vmatpush1.msra.mxu0 %v7910
        %7944 = vmatprep.subr.mxu0 0.0
        %7945 = vmatpush1.msra.mxu0 %v7909
        %7946 = vmatprep.subr.mxu0 0.0
        %7947 = vmatpush1.msra.mxu0 %v7908
        %7948 = vmatprep.subr.mxu0 0.0
        %7949 = vmatpush2.msra.mxu0 0.0
        %7950 = vmatprep.subr.mxu0 0.0
        %7951 = vmatpush2.msra.mxu0 0.0
        %7952 = vmatprep.subr.mxu0 0.0
        %7953 = vmatpush2.msra.mxu0 0.0
        %7954 = vmatprep.subr.mxu0 0.0
        %7955 = vmatpush2.msra.mxu0 0.0
        %7956 = vmatprep.subr.mxu0 0.0
        %7957 = vmatpush2.msra.mxu0 0.0
        %7958 = vmatprep.subr.mxu0 0.0
        %7959 = vmatpush2.msra.mxu0 0.0
        %7960 = vmatprep.subr.mxu0 0.0
        %7961 = vmatpush2.msra.mxu0 0.0
        %7962 = vmatprep.subr.mxu0 0.0
        %7963 = vmatpush2.msra.mxu0 0.0
        %7964 = vmatprep.subr.mxu0 0.0
        %7965 = vmatpush2.msra.mxu0 0.0
        %7966 = vmatprep.subr.mxu0 0.0
        %7967 = vmatpush2.msra.mxu0 0.0
        %7968 = vmatprep.subr.mxu0 0.0
        %7969 = vmatpush2.msra.mxu0 0.0
        %7970 = vmatprep.subr.mxu0 0.0
        %7971 = vmatpush2.msra.mxu0 0.0
        %7972 = vmatprep.subr.mxu0 0.0
        %7973 = vmatpush2.msra.mxu0 0.0
        %7974 = vmatprep.subr.mxu0 0.0
        %7975 = vmatpush2.msra.mxu0 0.0
        %7976 = vmatprep.subr.mxu0 0.0
        %7977 = vmatpush2.msra.mxu0 0.0
        %7978 = vmatprep.subr.mxu0 0.0
        %7979 = vmatpush2.msra.mxu0 0.0
        %7980 = vmatprep.mubr.f32.mxu0 0.0
        %7981 = vmatmul.mubr.f32.gmra.mxu0 %v7835
        %v7982 = vpop.f32.mrf.mxu0
        %v7983 = vadd.f32 %v7915, %v7982
        %v7984 = vpop.f32.mrf.mxu0
        %7985 = vdwg.mxu0
        %s7986 = scalar_lea.vmem %s10, 96
        %v7987 = vld [vmem:[%s7986] sm:$0xff]
        %v7988 = vld [vmem:[%s7986 + $0x8] sm:$0xff]
        %v7989 = vld [vmem:[%s7986 + $0x10] sm:$0xff]
        %v7990 = vld [vmem:[%s7986 + $0x18] sm:$0xff]
        %v7991 = vld [vmem:[%s7986 + $0x20] sm:$0xff]
        %v7992 = vld [vmem:[%s7986 + $0x28] sm:$0xff]
        %s7993 = scalar_lea.vmem %s11, 2
        %v7994 = vld [vmem:[%s7993] sm:$0x1]
        %7995 = vmatprep.subr.mxu0 0.0
        %7996 = vmatpush1.msra.mxu0 0.0
        %7997 = vmatprep.subr.mxu0 0.0
        %7998 = vmatpush1.msra.mxu0 0.0
        %7999 = vmatprep.subr.mxu0 0.0
        %8000 = vmatpush1.msra.mxu0 0.0
        %8001 = vmatprep.subr.mxu0 0.0
        %8002 = vmatpush1.msra.mxu0 0.0
        %8003 = vmatprep.subr.mxu0 0.0
        %8004 = vmatpush1.msra.mxu0 0.0
        %8005 = vmatprep.subr.mxu0 0.0
        %8006 = vmatpush1.msra.mxu0 0.0
        %8007 = vmatprep.subr.mxu0 0.0
        %8008 = vmatpush1.msra.mxu0 0.0
        %8009 = vmatprep.subr.mxu0 0.0
        %8010 = vmatpush1.msra.mxu0 0.0
        %8011 = vmatprep.subr.mxu0 0.0
        %8012 = vmatpush1.msra.mxu0 0.0
        %8013 = vmatprep.subr.mxu0 0.0
        %8014 = vmatpush1.msra.mxu0 0.0
        %8015 = vmatprep.subr.mxu0 0.0
        %8016 = vmatpush1.msra.mxu0 %v7992
        %8017 = vmatprep.subr.mxu0 0.0
        %8018 = vmatpush1.msra.mxu0 %v7991
        %8019 = vmatprep.subr.mxu0 0.0
        %8020 = vmatpush1.msra.mxu0 %v7990
        %8021 = vmatprep.subr.mxu0 0.0
        %8022 = vmatpush1.msra.mxu0 %v7989
        %8023 = vmatprep.subr.mxu0 0.0
        %8024 = vmatpush1.msra.mxu0 %v7988
        %8025 = vmatprep.subr.mxu0 0.0
        %8026 = vmatpush1.msra.mxu0 %v7987
        %8027 = vmatprep.subr.mxu0 0.0
        %8028 = vmatpush2.msra.mxu0 0.0
        %8029 = vmatprep.subr.mxu0 0.0
        %8030 = vmatpush2.msra.mxu0 0.0
        %8031 = vmatprep.subr.mxu0 0.0
        %8032 = vmatpush2.msra.mxu0 0.0
        %8033 = vmatprep.subr.mxu0 0.0
        %8034 = vmatpush2.msra.mxu0 0.0
        %8035 = vmatprep.subr.mxu0 0.0
        %8036 = vmatpush2.msra.mxu0 0.0
        %8037 = vmatprep.subr.mxu0 0.0
        %8038 = vmatpush2.msra.mxu0 0.0
        %8039 = vmatprep.subr.mxu0 0.0
        %8040 = vmatpush2.msra.mxu0 0.0
        %8041 = vmatprep.subr.mxu0 0.0
        %8042 = vmatpush2.msra.mxu0 0.0
        %8043 = vmatprep.subr.mxu0 0.0
        %8044 = vmatpush2.msra.mxu0 0.0
        %8045 = vmatprep.subr.mxu0 0.0
        %8046 = vmatpush2.msra.mxu0 0.0
        %8047 = vmatprep.subr.mxu0 0.0
        %8048 = vmatpush2.msra.mxu0 0.0
        %8049 = vmatprep.subr.mxu0 0.0
        %8050 = vmatpush2.msra.mxu0 0.0
        %8051 = vmatprep.subr.mxu0 0.0
        %8052 = vmatpush2.msra.mxu0 0.0
        %8053 = vmatprep.subr.mxu0 0.0
        %8054 = vmatpush2.msra.mxu0 0.0
        %8055 = vmatprep.subr.mxu0 0.0
        %8056 = vmatpush2.msra.mxu0 0.0
        %8057 = vmatprep.subr.mxu0 0.0
        %8058 = vmatpush2.msra.mxu0 0.0
        %8059 = vmatprep.mubr.f32.mxu0 0.0
        %8060 = vmatmul.mubr.f32.gmra.mxu0 %v7835
        %v8061 = vpop.f32.mrf.mxu0
        %v8062 = vadd.f32 %v7994, %v8061
        %v8063 = vpop.f32.mrf.mxu0
        %8064 = vdwg.mxu0
        %8065 = vxpose.xlu0.b32.start [1/16] %v7983, 128
        %8066 = vxpose.xlu0.b32.cont [2/16] 0.0, 128
        %8067 = vxpose.xlu0.b32.cont [3/16] 0.0, 128
        %8068 = vxpose.xlu0.b32.cont [4/16] 0.0, 128
        %8069 = vxpose.xlu0.b32.cont [5/16] 0.0, 128
        %8070 = vxpose.xlu0.b32.cont [6/16] 0.0, 128
        %8071 = vxpose.xlu0.b32.cont [7/16] 0.0, 128
        %8072 = vxpose.xlu0.b32.cont [8/16] 0.0, 128
        %8073 = vxpose.xlu0.b32.cont [9/16] 0.0, 128
        %8074 = vxpose.xlu0.b32.cont [10/16] 0.0, 128
        %8075 = vxpose.xlu0.b32.cont [11/16] 0.0, 128
        %8076 = vxpose.xlu0.b32.cont [12/16] 0.0, 128
        %8077 = vxpose.xlu0.b32.cont [13/16] 0.0, 128
        %8078 = vxpose.xlu0.b32.cont [14/16] 0.0, 128
        %8079 = vxpose.xlu0.b32.cont [15/16] 0.0, 128
        %8080 = vxpose.xlu0.b32.end [16/16] 0.0, 128
        %v8081 = vpop.trf.xlu0
        %v8082 = vpop.trf.xlu0
        %v8083 = vpop.trf.xlu0
        %v8084 = vpop.trf.xlu0
        %v8085 = vpop.trf.xlu0
        %v8086 = vpop.trf.xlu0
        %v8087 = vpop.trf.xlu0
        %v8088 = vpop.trf.xlu0
        %v8089 = vpop.trf.xlu0
        %v8090 = vpop.trf.xlu0
        %v8091 = vpop.trf.xlu0
        %v8092 = vpop.trf.xlu0
        %v8093 = vpop.trf.xlu0
        %v8094 = vpop.trf.xlu0
        %v8095 = vpop.trf.xlu0
        %v8096 = vpop.trf.xlu0
        %8098 = vset.pattern.permute.xlu0 0
        %8099 = vperm.xlu0 %8098, %v8081
        %v8100 = vpop.permute.xlu0 %8099
        %v8102 = vlaneseq
        %v8103 = vshrl.u32 %v8102, 7
        %v8104 = vsub.s32 0, %v8103
        %v8105 = vrot.slane %v7904, %v8104
        %v8106 = vmul.f32 %v8100, %v8105
        %vm8107 = vcmask 64512
        %v8108 = vsel %vm8107, %v8106, -inf
        %v8109 = vrot.slane %v8108, 4
        %v8110 = vmax.f32 %v8108, %v8109
        %v8111 = vrot.slane %v8110, 2
        %v8112 = vmax.f32 %v8110, %v8111
        %v8113 = vrot.slane %v8112, 1
        %v8114 = vmax.f32 %v8112, %v8113
        %v8115 = vsub.f32 %v8106, %v8114
        %v8116 = vmul.f32 %v8115, 1.442695
        %v8117 = vpow.pop %v8116
        %v8118 = vsel %vm8107, %v8117, 0.0
        %v8119 = vrot.slane %v8118, 4
        %v8120 = vadd.f32 %v8118, %v8119
        %v8121 = vrot.slane %v8120, 2
        %v8122 = vadd.f32 %v8120, %v8121
        %v8123 = vrot.slane %v8122, 1
        %v8124 = vadd.f32 %v8122, %v8123
        %v8125 = vrcp.pop %v8124
        %v8126 = vmul.f32 %v8117, %v8125
        %v8128 = vsel %vm8107, %v8062, 0
        %8130 = vmatprep.subr.mxu0 0.0
        %8131 = vmatpush1.msra.mxu0 0.0
        %8132 = vmatprep.subr.mxu0 0.0
        %8133 = vmatpush1.msra.mxu0 0.0
        %8134 = vmatprep.subr.mxu0 0.0
        %8135 = vmatpush1.msra.mxu0 0.0
        %8136 = vmatprep.subr.mxu0 0.0
        %8137 = vmatpush1.msra.mxu0 0.0
        %8138 = vmatprep.subr.mxu0 0.0
        %8139 = vmatpush1.msra.mxu0 0.0
        %8140 = vmatprep.subr.mxu0 0.0
        %8141 = vmatpush1.msra.mxu0 0.0
        %8142 = vmatprep.subr.mxu0 0.0
        %8143 = vmatpush1.msra.mxu0 0.0
        %8144 = vmatprep.subr.mxu0 0.0
        %8145 = vmatpush1.msra.mxu0 0.0
        %8146 = vmatprep.subr.mxu0 0.0
        %8147 = vmatpush1.msra.mxu0 0.0
        %8148 = vmatprep.subr.mxu0 0.0
        %8149 = vmatpush1.msra.mxu0 0.0
        %8150 = vmatprep.subr.mxu0 0.0
        %8151 = vmatpush1.msra.mxu0 0.0
        %8152 = vmatprep.subr.mxu0 0.0
        %8153 = vmatpush1.msra.mxu0 0.0
        %8154 = vmatprep.subr.mxu0 0.0
        %8155 = vmatpush1.msra.mxu0 0.0
        %8156 = vmatprep.subr.mxu0 0.0
        %8157 = vmatpush1.msra.mxu0 0.0
        %8158 = vmatprep.subr.mxu0 0.0
        %8159 = vmatpush1.msra.mxu0 0.0
        %8160 = vmatprep.subr.mxu0 0.0
        %8161 = vmatpush1.msra.mxu0 %v8126
        %8162 = vmatprep.subr.mxu0 0.0
        %8163 = vmatpush2.msra.mxu0 0.0
        %8164 = vmatprep.subr.mxu0 0.0
        %8165 = vmatpush2.msra.mxu0 0.0
        %8166 = vmatprep.subr.mxu0 0.0
        %8167 = vmatpush2.msra.mxu0 0.0
        %8168 = vmatprep.subr.mxu0 0.0
        %8169 = vmatpush2.msra.mxu0 0.0
        %8170 = vmatprep.subr.mxu0 0.0
        %8171 = vmatpush2.msra.mxu0 0.0
        %8172 = vmatprep.subr.mxu0 0.0
        %8173 = vmatpush2.msra.mxu0 0.0
        %8174 = vmatprep.subr.mxu0 0.0
        %8175 = vmatpush2.msra.mxu0 0.0
        %8176 = vmatprep.subr.mxu0 0.0
        %8177 = vmatpush2.msra.mxu0 0.0
        %8178 = vmatprep.subr.mxu0 0.0
        %8179 = vmatpush2.msra.mxu0 0.0
        %8180 = vmatprep.subr.mxu0 0.0
        %8181 = vmatpush2.msra.mxu0 0.0
        %8182 = vmatprep.subr.mxu0 0.0
        %8183 = vmatpush2.msra.mxu0 0.0
        %8184 = vmatprep.subr.mxu0 0.0
        %8185 = vmatpush2.msra.mxu0 0.0
        %8186 = vmatprep.subr.mxu0 0.0
        %8187 = vmatpush2.msra.mxu0 0.0
        %8188 = vmatprep.subr.mxu0 0.0
        %8189 = vmatpush2.msra.mxu0 0.0
        %8190 = vmatprep.subr.mxu0 0.0
        %8191 = vmatpush2.msra.mxu0 0.0
        %8192 = vmatprep.subr.mxu0 0.0
        %8193 = vmatpush2.msra.mxu0 0.0
        %8194 = vmatprep.mubr.f32.mxu0 0.0
        %8195 = vmatmul.mubr.f32.gmra.mxu0 %v8128
        %v8196 = vpop.f32.mrf.mxu0
        %v8197 = vadd.f32 0.0, %v8196
        %v8198 = vpop.f32.mrf.mxu0
        %8199 = vdwg.mxu0
        %v8200 = vld [vmem:[%s12] sm:$0xff]
        %v8201 = vld [vmem:[%s13] sm:$0x1]
        %v8203 = vsel %vm8107, %v8197, 0
        %8205 = vmatprep.subr.mxu0 0.0
        %8206 = vmatpush1.msra.mxu0 0.0
        %8207 = vmatprep.subr.mxu0 0.0
        %8208 = vmatpush1.msra.mxu0 0.0
        %8209 = vmatprep.subr.mxu0 0.0
        %8210 = vmatpush1.msra.mxu0 0.0
        %8211 = vmatprep.subr.mxu0 0.0
        %8212 = vmatpush1.msra.mxu0 0.0
        %8213 = vmatprep.subr.mxu0 0.0
        %8214 = vmatpush1.msra.mxu0 0.0
        %8215 = vmatprep.subr.mxu0 0.0
        %8216 = vmatpush1.msra.mxu0 0.0
        %8217 = vmatprep.subr.mxu0 0.0
        %8218 = vmatpush1.msra.mxu0 0.0
        %8219 = vmatprep.subr.mxu0 0.0
        %8220 = vmatpush1.msra.mxu0 0.0
        %8221 = vmatprep.subr.mxu0 0.0
        %8222 = vmatpush1.msra.mxu0 0.0
        %8223 = vmatprep.subr.mxu0 0.0
        %8224 = vmatpush1.msra.mxu0 0.0
        %8225 = vmatprep.subr.mxu0 0.0
        %8226 = vmatpush1.msra.mxu0 0.0
        %8227 = vmatprep.subr.mxu0 0.0
        %8228 = vmatpush1.msra.mxu0 0.0
        %8229 = vmatprep.subr.mxu0 0.0
        %8230 = vmatpush1.msra.mxu0 0.0
        %8231 = vmatprep.subr.mxu0 0.0
        %8232 = vmatpush1.msra.mxu0 0.0
        %8233 = vmatprep.subr.mxu0 0.0
        %8234 = vmatpush1.msra.mxu0 0.0
        %8235 = vmatprep.subr.mxu0 0.0
        %8236 = vmatpush1.msra.mxu0 %v8200
        %8237 = vmatprep.subr.mxu0 0.0
        %8238 = vmatpush2.msra.mxu0 0.0
        %8239 = vmatprep.subr.mxu0 0.0
        %8240 = vmatpush2.msra.mxu0 0.0
        %8241 = vmatprep.subr.mxu0 0.0
        %8242 = vmatpush2.msra.mxu0 0.0
        %8243 = vmatprep.subr.mxu0 0.0
        %8244 = vmatpush2.msra.mxu0 0.0
        %8245 = vmatprep.subr.mxu0 0.0
        %8246 = vmatpush2.msra.mxu0 0.0
        %8247 = vmatprep.subr.mxu0 0.0
        %8248 = vmatpush2.msra.mxu0 0.0
        %8249 = vmatprep.subr.mxu0 0.0
        %8250 = vmatpush2.msra.mxu0 0.0
        %8251 = vmatprep.subr.mxu0 0.0
        %8252 = vmatpush2.msra.mxu0 0.0
        %8253 = vmatprep.subr.mxu0 0.0
        %8254 = vmatpush2.msra.mxu0 0.0
        %8255 = vmatprep.subr.mxu0 0.0
        %8256 = vmatpush2.msra.mxu0 0.0
        %8257 = vmatprep.subr.mxu0 0.0
        %8258 = vmatpush2.msra.mxu0 0.0
        %8259 = vmatprep.subr.mxu0 0.0
        %8260 = vmatpush2.msra.mxu0 0.0
        %8261 = vmatprep.subr.mxu0 0.0
        %8262 = vmatpush2.msra.mxu0 0.0
        %8263 = vmatprep.subr.mxu0 0.0
        %8264 = vmatpush2.msra.mxu0 0.0
        %8265 = vmatprep.subr.mxu0 0.0
        %8266 = vmatpush2.msra.mxu0 0.0
        %8267 = vmatprep.subr.mxu0 0.0
        %8268 = vmatpush2.msra.mxu0 0.0
        %8269 = vmatprep.mubr.f32.mxu0 0.0
        %8270 = vmatmul.mubr.f32.gmra.mxu0 %v8203
        %v8271 = vpop.f32.mrf.mxu0
        %v8272 = vadd.f32 %v8201, %v8271
        %v8273 = vpop.f32.mrf.mxu0
        %8274 = vdwg.mxu0
        %s8275 = scalar_lea.vmem %s10, 144
        %v8276 = vld [vmem:[%s8275] sm:$0xff]
        %v8277 = vld [vmem:[%s8275 + $0x8] sm:$0xff]
        %v8278 = vld [vmem:[%s8275 + $0x10] sm:$0xff]
        %v8279 = vld [vmem:[%s8275 + $0x18] sm:$0xff]
        %v8280 = vld [vmem:[%s8275 + $0x20] sm:$0xff]
        %v8281 = vld [vmem:[%s8275 + $0x28] sm:$0xff]
        %s8282 = scalar_lea.vmem %s11, 3
        %v8283 = vld [vmem:[%s8282] sm:$0x1]
        %v8285 = vsel %vm7756, %v8272, 0
        %8287 = vmatprep.subr.mxu0 0.0
        %8288 = vmatpush1.msra.mxu0 0.0
        %8289 = vmatprep.subr.mxu0 0.0
        %8290 = vmatpush1.msra.mxu0 0.0
        %8291 = vmatprep.subr.mxu0 0.0
        %8292 = vmatpush1.msra.mxu0 0.0
        %8293 = vmatprep.subr.mxu0 0.0
        %8294 = vmatpush1.msra.mxu0 0.0
        %8295 = vmatprep.subr.mxu0 0.0
        %8296 = vmatpush1.msra.mxu0 0.0
        %8297 = vmatprep.subr.mxu0 0.0
        %8298 = vmatpush1.msra.mxu0 0.0
        %8299 = vmatprep.subr.mxu0 0.0
        %8300 = vmatpush1.msra.mxu0 0.0
        %8301 = vmatprep.subr.mxu0 0.0
        %8302 = vmatpush1.msra.mxu0 0.0
        %8303 = vmatprep.subr.mxu0 0.0
        %8304 = vmatpush1.msra.mxu0 0.0
        %8305 = vmatprep.subr.mxu0 0.0
        %8306 = vmatpush1.msra.mxu0 0.0
        %8307 = vmatprep.subr.mxu0 0.0
        %8308 = vmatpush1.msra.mxu0 %v8281
        %8309 = vmatprep.subr.mxu0 0.0
        %8310 = vmatpush1.msra.mxu0 %v8280
        %8311 = vmatprep.subr.mxu0 0.0
        %8312 = vmatpush1.msra.mxu0 %v8279
        %8313 = vmatprep.subr.mxu0 0.0
        %8314 = vmatpush1.msra.mxu0 %v8278
        %8315 = vmatprep.subr.mxu0 0.0
        %8316 = vmatpush1.msra.mxu0 %v8277
        %8317 = vmatprep.subr.mxu0 0.0
        %8318 = vmatpush1.msra.mxu0 %v8276
        %8319 = vmatprep.subr.mxu0 0.0
        %8320 = vmatpush2.msra.mxu0 0.0
        %8321 = vmatprep.subr.mxu0 0.0
        %8322 = vmatpush2.msra.mxu0 0.0
        %8323 = vmatprep.subr.mxu0 0.0
        %8324 = vmatpush2.msra.mxu0 0.0
        %8325 = vmatprep.subr.mxu0 0.0
        %8326 = vmatpush2.msra.mxu0 0.0
        %8327 = vmatprep.subr.mxu0 0.0
        %8328 = vmatpush2.msra.mxu0 0.0
        %8329 = vmatprep.subr.mxu0 0.0
        %8330 = vmatpush2.msra.mxu0 0.0
        %8331 = vmatprep.subr.mxu0 0.0
        %8332 = vmatpush2.msra.mxu0 0.0
        %8333 = vmatprep.subr.mxu0 0.0
        %8334 = vmatpush2.msra.mxu0 0.0
        %8335 = vmatprep.subr.mxu0 0.0
        %8336 = vmatpush2.msra.mxu0 0.0
        %8337 = vmatprep.subr.mxu0 0.0
        %8338 = vmatpush2.msra.mxu0 0.0
        %8339 = vmatprep.subr.mxu0 0.0
        %8340 = vmatpush2.msra.mxu0 0.0
        %8341 = vmatprep.subr.mxu0 0.0
        %8342 = vmatpush2.msra.mxu0 0.0
        %8343 = vmatprep.subr.mxu0 0.0
        %8344 = vmatpush2.msra.mxu0 0.0
        %8345 = vmatprep.subr.mxu0 0.0
        %8346 = vmatpush2.msra.mxu0 0.0
        %8347 = vmatprep.subr.mxu0 0.0
        %8348 = vmatpush2.msra.mxu0 0.0
        %8349 = vmatprep.subr.mxu0 0.0
        %8350 = vmatpush2.msra.mxu0 0.0
        %8351 = vmatprep.mubr.f32.mxu0 0.0
        %8352 = vmatmul.mubr.f32.gmra.mxu0 %v8285
        %v8353 = vpop.f32.mrf.mxu0
        %v8354 = vadd.f32 %v8283, %v8353
        %v8355 = vpop.f32.mrf.mxu0
        %8356 = vdwg.mxu0
        %s8357 = scalar_lea.vmem %s10, 192
        %v8358 = vld [vmem:[%s8357] sm:$0xff]
        %v8359 = vld [vmem:[%s8357 + $0x8] sm:$0xff]
        %v8360 = vld [vmem:[%s8357 + $0x10] sm:$0xff]
        %v8361 = vld [vmem:[%s8357 + $0x18] sm:$0xff]
        %v8362 = vld [vmem:[%s8357 + $0x20] sm:$0xff]
        %v8363 = vld [vmem:[%s8357 + $0x28] sm:$0xff]
        %s8364 = scalar_lea.vmem %s11, 4
        %v8365 = vld [vmem:[%s8364] sm:$0x1]
        %8366 = vmatprep.subr.mxu0 0.0
        %8367 = vmatpush1.msra.mxu0 0.0
        %8368 = vmatprep.subr.mxu0 0.0
        %8369 = vmatpush1.msra.mxu0 0.0
        %8370 = vmatprep.subr.mxu0 0.0
        %8371 = vmatpush1.msra.mxu0 0.0
        %8372 = vmatprep.subr.mxu0 0.0
        %8373 = vmatpush1.msra.mxu0 0.0
        %8374 = vmatprep.subr.mxu0 0.0
        %8375 = vmatpush1.msra.mxu0 0.0
        %8376 = vmatprep.subr.mxu0 0.0
        %8377 = vmatpush1.msra.mxu0 0.0
        %8378 = vmatprep.subr.mxu0 0.0
        %8379 = vmatpush1.msra.mxu0 0.0
        %8380 = vmatprep.subr.mxu0 0.0
        %8381 = vmatpush1.msra.mxu0 0.0
        %8382 = vmatprep.subr.mxu0 0.0
        %8383 = vmatpush1.msra.mxu0 0.0
        %8384 = vmatprep.subr.mxu0 0.0
        %8385 = vmatpush1.msra.mxu0 0.0
        %8386 = vmatprep.subr.mxu0 0.0
        %8387 = vmatpush1.msra.mxu0 %v8363
        %8388 = vmatprep.subr.mxu0 0.0
        %8389 = vmatpush1.msra.mxu0 %v8362
        %8390 = vmatprep.subr.mxu0 0.0
        %8391 = vmatpush1.msra.mxu0 %v8361
        %8392 = vmatprep.subr.mxu0 0.0
        %8393 = vmatpush1.msra.mxu0 %v8360
        %8394 = vmatprep.subr.mxu0 0.0
        %8395 = vmatpush1.msra.mxu0 %v8359
        %8396 = vmatprep.subr.mxu0 0.0
        %8397 = vmatpush1.msra.mxu0 %v8358
        %8398 = vmatprep.subr.mxu0 0.0
        %8399 = vmatpush2.msra.mxu0 0.0
        %8400 = vmatprep.subr.mxu0 0.0
        %8401 = vmatpush2.msra.mxu0 0.0
        %8402 = vmatprep.subr.mxu0 0.0
        %8403 = vmatpush2.msra.mxu0 0.0
        %8404 = vmatprep.subr.mxu0 0.0
        %8405 = vmatpush2.msra.mxu0 0.0
        %8406 = vmatprep.subr.mxu0 0.0
        %8407 = vmatpush2.msra.mxu0 0.0
        %8408 = vmatprep.subr.mxu0 0.0
        %8409 = vmatpush2.msra.mxu0 0.0
        %8410 = vmatprep.subr.mxu0 0.0
        %8411 = vmatpush2.msra.mxu0 0.0
        %8412 = vmatprep.subr.mxu0 0.0
        %8413 = vmatpush2.msra.mxu0 0.0
        %8414 = vmatprep.subr.mxu0 0.0
        %8415 = vmatpush2.msra.mxu0 0.0
        %8416 = vmatprep.subr.mxu0 0.0
        %8417 = vmatpush2.msra.mxu0 0.0
        %8418 = vmatprep.subr.mxu0 0.0
        %8419 = vmatpush2.msra.mxu0 0.0
        %8420 = vmatprep.subr.mxu0 0.0
        %8421 = vmatpush2.msra.mxu0 0.0
        %8422 = vmatprep.subr.mxu0 0.0
        %8423 = vmatpush2.msra.mxu0 0.0
        %8424 = vmatprep.subr.mxu0 0.0
        %8425 = vmatpush2.msra.mxu0 0.0
        %8426 = vmatprep.subr.mxu0 0.0
        %8427 = vmatpush2.msra.mxu0 0.0
        %8428 = vmatprep.subr.mxu0 0.0
        %8429 = vmatpush2.msra.mxu0 0.0
        %8430 = vmatprep.mubr.f32.mxu0 0.0
        %8431 = vmatmul.mubr.f32.gmra.mxu0 %v8285
        %v8432 = vpop.f32.mrf.mxu0
        %v8433 = vadd.f32 %v8365, %v8432
        %v8434 = vpop.f32.mrf.mxu0
        %8435 = vdwg.mxu0
        %s8436 = scalar_lea.vmem %s10, 240
        %v8437 = vld [vmem:[%s8436] sm:$0xff]
        %v8438 = vld [vmem:[%s8436 + $0x8] sm:$0xff]
        %v8439 = vld [vmem:[%s8436 + $0x10] sm:$0xff]
        %v8440 = vld [vmem:[%s8436 + $0x18] sm:$0xff]
        %v8441 = vld [vmem:[%s8436 + $0x20] sm:$0xff]
        %v8442 = vld [vmem:[%s8436 + $0x28] sm:$0xff]
        %s8443 = scalar_lea.vmem %s11, 5
        %v8444 = vld [vmem:[%s8443] sm:$0x1]
        %8445 = vmatprep.subr.mxu0 0.0
        %8446 = vmatpush1.msra.mxu0 0.0
        %8447 = vmatprep.subr.mxu0 0.0
        %8448 = vmatpush1.msra.mxu0 0.0
        %8449 = vmatprep.subr.mxu0 0.0
        %8450 = vmatpush1.msra.mxu0 0.0
        %8451 = vmatprep.subr.mxu0 0.0
        %8452 = vmatpush1.msra.mxu0 0.0
        %8453 = vmatprep.subr.mxu0 0.0
        %8454 = vmatpush1.msra.mxu0 0.0
        %8455 = vmatprep.subr.mxu0 0.0
        %8456 = vmatpush1.msra.mxu0 0.0
        %8457 = vmatprep.subr.mxu0 0.0
        %8458 = vmatpush1.msra.mxu0 0.0
        %8459 = vmatprep.subr.mxu0 0.0
        %8460 = vmatpush1.msra.mxu0 0.0
        %8461 = vmatprep.subr.mxu0 0.0
        %8462 = vmatpush1.msra.mxu0 0.0
        %8463 = vmatprep.subr.mxu0 0.0
        %8464 = vmatpush1.msra.mxu0 0.0
        %8465 = vmatprep.subr.mxu0 0.0
        %8466 = vmatpush1.msra.mxu0 %v8442
        %8467 = vmatprep.subr.mxu0 0.0
        %8468 = vmatpush1.msra.mxu0 %v8441
        %8469 = vmatprep.subr.mxu0 0.0
        %8470 = vmatpush1.msra.mxu0 %v8440
        %8471 = vmatprep.subr.mxu0 0.0
        %8472 = vmatpush1.msra.mxu0 %v8439
        %8473 = vmatprep.subr.mxu0 0.0
        %8474 = vmatpush1.msra.mxu0 %v8438
        %8475 = vmatprep.subr.mxu0 0.0
        %8476 = vmatpush1.msra.mxu0 %v8437
        %8477 = vmatprep.subr.mxu0 0.0
        %8478 = vmatpush2.msra.mxu0 0.0
        %8479 = vmatprep.subr.mxu0 0.0
        %8480 = vmatpush2.msra.mxu0 0.0
        %8481 = vmatprep.subr.mxu0 0.0
        %8482 = vmatpush2.msra.mxu0 0.0
        %8483 = vmatprep.subr.mxu0 0.0
        %8484 = vmatpush2.msra.mxu0 0.0
        %8485 = vmatprep.subr.mxu0 0.0
        %8486 = vmatpush2.msra.mxu0 0.0
        %8487 = vmatprep.subr.mxu0 0.0
        %8488 = vmatpush2.msra.mxu0 0.0
        %8489 = vmatprep.subr.mxu0 0.0
        %8490 = vmatpush2.msra.mxu0 0.0
        %8491 = vmatprep.subr.mxu0 0.0
        %8492 = vmatpush2.msra.mxu0 0.0
        %8493 = vmatprep.subr.mxu0 0.0
        %8494 = vmatpush2.msra.mxu0 0.0
        %8495 = vmatprep.subr.mxu0 0.0
        %8496 = vmatpush2.msra.mxu0 0.0
        %8497 = vmatprep.subr.mxu0 0.0
        %8498 = vmatpush2.msra.mxu0 0.0
        %8499 = vmatprep.subr.mxu0 0.0
        %8500 = vmatpush2.msra.mxu0 0.0
        %8501 = vmatprep.subr.mxu0 0.0
        %8502 = vmatpush2.msra.mxu0 0.0
        %8503 = vmatprep.subr.mxu0 0.0
        %8504 = vmatpush2.msra.mxu0 0.0
        %8505 = vmatprep.subr.mxu0 0.0
        %8506 = vmatpush2.msra.mxu0 0.0
        %8507 = vmatprep.subr.mxu0 0.0
        %8508 = vmatpush2.msra.mxu0 0.0
        %8509 = vmatprep.mubr.f32.mxu0 0.0
        %8510 = vmatmul.mubr.f32.gmra.mxu0 %v8285
        %v8511 = vpop.f32.mrf.mxu0
        %v8512 = vadd.f32 %v8444, %v8511
        %v8513 = vpop.f32.mrf.mxu0
        %8514 = vdwg.mxu0
        %8515 = vxpose.xlu0.b32.start [1/16] %v8433, 128
        %8516 = vxpose.xlu0.b32.cont [2/16] 0.0, 128
        %8517 = vxpose.xlu0.b32.cont [3/16] 0.0, 128
        %8518 = vxpose.xlu0.b32.cont [4/16] 0.0, 128
        %8519 = vxpose.xlu0.b32.cont [5/16] 0.0, 128
        %8520 = vxpose.xlu0.b32.cont [6/16] 0.0, 128
        %8521 = vxpose.xlu0.b32.cont [7/16] 0.0, 128
        %8522 = vxpose.xlu0.b32.cont [8/16] 0.0, 128
        %8523 = vxpose.xlu0.b32.cont [9/16] 0.0, 128
        %8524 = vxpose.xlu0.b32.cont [10/16] 0.0, 128
        %8525 = vxpose.xlu0.b32.cont [11/16] 0.0, 128
        %8526 = vxpose.xlu0.b32.cont [12/16] 0.0, 128
        %8527 = vxpose.xlu0.b32.cont [13/16] 0.0, 128
        %8528 = vxpose.xlu0.b32.cont [14/16] 0.0, 128
        %8529 = vxpose.xlu0.b32.cont [15/16] 0.0, 128
        %8530 = vxpose.xlu0.b32.end [16/16] 0.0, 128
        %v8531 = vpop.trf.xlu0
        %v8532 = vpop.trf.xlu0
        %v8533 = vpop.trf.xlu0
        %v8534 = vpop.trf.xlu0
        %v8535 = vpop.trf.xlu0
        %v8536 = vpop.trf.xlu0
        %v8537 = vpop.trf.xlu0
        %v8538 = vpop.trf.xlu0
        %v8539 = vpop.trf.xlu0
        %v8540 = vpop.trf.xlu0
        %v8541 = vpop.trf.xlu0
        %v8542 = vpop.trf.xlu0
        %v8543 = vpop.trf.xlu0
        %v8544 = vpop.trf.xlu0
        %v8545 = vpop.trf.xlu0
        %v8546 = vpop.trf.xlu0
        %8548 = vset.pattern.permute.xlu0 0
        %8549 = vperm.xlu0 %8548, %v8531
        %v8550 = vpop.permute.xlu0 %8549
        %v8552 = vlaneseq
        %v8553 = vshrl.u32 %v8552, 7
        %v8554 = vsub.s32 0, %v8553
        %v8555 = vrot.slane %v8354, %v8554
        %v8556 = vmul.f32 %v8550, %v8555
        %v8557 = vsel %vm8107, %v8556, -inf
        %v8558 = vrot.slane %v8557, 4
        %v8559 = vmax.f32 %v8557, %v8558
        %v8560 = vrot.slane %v8559, 2
        %v8561 = vmax.f32 %v8559, %v8560
        %v8562 = vrot.slane %v8561, 1
        %v8563 = vmax.f32 %v8561, %v8562
        %v8564 = vsub.f32 %v8556, %v8563
        %v8565 = vmul.f32 %v8564, 1.442695
        %v8566 = vpow.pop %v8565
        %v8567 = vsel %vm8107, %v8566, 0.0
        %v8568 = vrot.slane %v8567, 4
        %v8569 = vadd.f32 %v8567, %v8568
        %v8570 = vrot.slane %v8569, 2
        %v8571 = vadd.f32 %v8569, %v8570
        %v8572 = vrot.slane %v8571, 1
        %v8573 = vadd.f32 %v8571, %v8572
        %v8574 = vrcp.pop %v8573
        %v8575 = vmul.f32 %v8566, %v8574
        %v8577 = vsel %vm8107, %v8512, 0
        %8579 = vmatprep.subr.mxu0 0.0
        %8580 = vmatpush1.msra.mxu0 0.0
        %8581 = vmatprep.subr.mxu0 0.0
        %8582 = vmatpush1.msra.mxu0 0.0
        %8583 = vmatprep.subr.mxu0 0.0
        %8584 = vmatpush1.msra.mxu0 0.0
        %8585 = vmatprep.subr.mxu0 0.0
        %8586 = vmatpush1.msra.mxu0 0.0
        %8587 = vmatprep.subr.mxu0 0.0
        %8588 = vmatpush1.msra.mxu0 0.0
        %8589 = vmatprep.subr.mxu0 0.0
        %8590 = vmatpush1.msra.mxu0 0.0
        %8591 = vmatprep.subr.mxu0 0.0
        %8592 = vmatpush1.msra.mxu0 0.0
        %8593 = vmatprep.subr.mxu0 0.0
        %8594 = vmatpush1.msra.mxu0 0.0
        %8595 = vmatprep.subr.mxu0 0.0
        %8596 = vmatpush1.msra.mxu0 0.0
        %8597 = vmatprep.subr.mxu0 0.0
        %8598 = vmatpush1.msra.mxu0 0.0
        %8599 = vmatprep.subr.mxu0 0.0
        %8600 = vmatpush1.msra.mxu0 0.0
        %8601 = vmatprep.subr.mxu0 0.0
        %8602 = vmatpush1.msra.mxu0 0.0
        %8603 = vmatprep.subr.mxu0 0.0
        %8604 = vmatpush1.msra.mxu0 0.0
        %8605 = vmatprep.subr.mxu0 0.0
        %8606 = vmatpush1.msra.mxu0 0.0
        %8607 = vmatprep.subr.mxu0 0.0
        %8608 = vmatpush1.msra.mxu0 0.0
        %8609 = vmatprep.subr.mxu0 0.0
        %8610 = vmatpush1.msra.mxu0 %v8575
        %8611 = vmatprep.subr.mxu0 0.0
        %8612 = vmatpush2.msra.mxu0 0.0
        %8613 = vmatprep.subr.mxu0 0.0
        %8614 = vmatpush2.msra.mxu0 0.0
        %8615 = vmatprep.subr.mxu0 0.0
        %8616 = vmatpush2.msra.mxu0 0.0
        %8617 = vmatprep.subr.mxu0 0.0
        %8618 = vmatpush2.msra.mxu0 0.0
        %8619 = vmatprep.subr.mxu0 0.0
        %8620 = vmatpush2.msra.mxu0 0.0
        %8621 = vmatprep.subr.mxu0 0.0
        %8622 = vmatpush2.msra.mxu0 0.0
        %8623 = vmatprep.subr.mxu0 0.0
        %8624 = vmatpush2.msra.mxu0 0.0
        %8625 = vmatprep.subr.mxu0 0.0
        %8626 = vmatpush2.msra.mxu0 0.0
        %8627 = vmatprep.subr.mxu0 0.0
        %8628 = vmatpush2.msra.mxu0 0.0
        %8629 = vmatprep.subr.mxu0 0.0
        %8630 = vmatpush2.msra.mxu0 0.0
        %8631 = vmatprep.subr.mxu0 0.0
        %8632 = vmatpush2.msra.mxu0 0.0
        %8633 = vmatprep.subr.mxu0 0.0
        %8634 = vmatpush2.msra.mxu0 0.0
        %8635 = vmatprep.subr.mxu0 0.0
        %8636 = vmatpush2.msra.mxu0 0.0
        %8637 = vmatprep.subr.mxu0 0.0
        %8638 = vmatpush2.msra.mxu0 0.0
        %8639 = vmatprep.subr.mxu0 0.0
        %8640 = vmatpush2.msra.mxu0 0.0
        %8641 = vmatprep.subr.mxu0 0.0
        %8642 = vmatpush2.msra.mxu0 0.0
        %8643 = vmatprep.mubr.f32.mxu0 0.0
        %8644 = vmatmul.mubr.f32.gmra.mxu0 %v8577
        %v8645 = vpop.f32.mrf.mxu0
        %v8646 = vadd.f32 0.0, %v8645
        %v8647 = vpop.f32.mrf.mxu0
        %8648 = vdwg.mxu0
        %s8649 = scalar_lea.vmem %s12, 8
        %v8650 = vld [vmem:[%s8649] sm:$0xff]
        %s8651 = scalar_lea.vmem %s13, 1
        %v8652 = vld [vmem:[%s8651] sm:$0x1]
        %v8654 = vsel %vm8107, %v8646, 0
        %8656 = vmatprep.subr.mxu0 0.0
        %8657 = vmatpush1.msra.mxu0 0.0
        %8658 = vmatprep.subr.mxu0 0.0
        %8659 = vmatpush1.msra.mxu0 0.0
        %8660 = vmatprep.subr.mxu0 0.0
        %8661 = vmatpush1.msra.mxu0 0.0
        %8662 = vmatprep.subr.mxu0 0.0
        %8663 = vmatpush1.msra.mxu0 0.0
        %8664 = vmatprep.subr.mxu0 0.0
        %8665 = vmatpush1.msra.mxu0 0.0
        %8666 = vmatprep.subr.mxu0 0.0
        %8667 = vmatpush1.msra.mxu0 0.0
        %8668 = vmatprep.subr.mxu0 0.0
        %8669 = vmatpush1.msra.mxu0 0.0
        %8670 = vmatprep.subr.mxu0 0.0
        %8671 = vmatpush1.msra.mxu0 0.0
        %8672 = vmatprep.subr.mxu0 0.0
        %8673 = vmatpush1.msra.mxu0 0.0
        %8674 = vmatprep.subr.mxu0 0.0
        %8675 = vmatpush1.msra.mxu0 0.0
        %8676 = vmatprep.subr.mxu0 0.0
        %8677 = vmatpush1.msra.mxu0 0.0
        %8678 = vmatprep.subr.mxu0 0.0
        %8679 = vmatpush1.msra.mxu0 0.0
        %8680 = vmatprep.subr.mxu0 0.0
        %8681 = vmatpush1.msra.mxu0 0.0
        %8682 = vmatprep.subr.mxu0 0.0
        %8683 = vmatpush1.msra.mxu0 0.0
        %8684 = vmatprep.subr.mxu0 0.0
        %8685 = vmatpush1.msra.mxu0 0.0
        %8686 = vmatprep.subr.mxu0 0.0
        %8687 = vmatpush1.msra.mxu0 %v8650
        %8688 = vmatprep.subr.mxu0 0.0
        %8689 = vmatpush2.msra.mxu0 0.0
        %8690 = vmatprep.subr.mxu0 0.0
        %8691 = vmatpush2.msra.mxu0 0.0
        %8692 = vmatprep.subr.mxu0 0.0
        %8693 = vmatpush2.msra.mxu0 0.0
        %8694 = vmatprep.subr.mxu0 0.0
        %8695 = vmatpush2.msra.mxu0 0.0
        %8696 = vmatprep.subr.mxu0 0.0
        %8697 = vmatpush2.msra.mxu0 0.0
        %8698 = vmatprep.subr.mxu0 0.0
        %8699 = vmatpush2.msra.mxu0 0.0
        %8700 = vmatprep.subr.mxu0 0.0
        %8701 = vmatpush2.msra.mxu0 0.0
        %8702 = vmatprep.subr.mxu0 0.0
        %8703 = vmatpush2.msra.mxu0 0.0
        %8704 = vmatprep.subr.mxu0 0.0
        %8705 = vmatpush2.msra.mxu0 0.0
        %8706 = vmatprep.subr.mxu0 0.0
        %8707 = vmatpush2.msra.mxu0 0.0
        %8708 = vmatprep.subr.mxu0 0.0
        %8709 = vmatpush2.msra.mxu0 0.0
        %8710 = vmatprep.subr.mxu0 0.0
        %8711 = vmatpush2.msra.mxu0 0.0
        %8712 = vmatprep.subr.mxu0 0.0
        %8713 = vmatpush2.msra.mxu0 0.0
        %8714 = vmatprep.subr.mxu0 0.0
        %8715 = vmatpush2.msra.mxu0 0.0
        %8716 = vmatprep.subr.mxu0 0.0
        %8717 = vmatpush2.msra.mxu0 0.0
        %8718 = vmatprep.subr.mxu0 0.0
        %8719 = vmatpush2.msra.mxu0 0.0
        %8720 = vmatprep.mubr.f32.mxu0 0.0
        %8721 = vmatmul.mubr.f32.gmra.mxu0 %v8654
        %v8722 = vpop.f32.mrf.mxu0
        %v8723 = vadd.f32 %v8652, %v8722
        %v8724 = vpop.f32.mrf.mxu0
        %8725 = vdwg.mxu0
        %s8726 = scalar_lea.vmem %s10, 288
        %v8727 = vld [vmem:[%s8726] sm:$0xff]
        %v8728 = vld [vmem:[%s8726 + $0x8] sm:$0xff]
        %v8729 = vld [vmem:[%s8726 + $0x10] sm:$0xff]
        %v8730 = vld [vmem:[%s8726 + $0x18] sm:$0xff]
        %v8731 = vld [vmem:[%s8726 + $0x20] sm:$0xff]
        %v8732 = vld [vmem:[%s8726 + $0x28] sm:$0xff]
        %s8733 = scalar_lea.vmem %s11, 6
        %v8734 = vld [vmem:[%s8733] sm:$0x1]
        %v8736 = vsel %vm7756, %v8723, 0
        %8738 = vmatprep.subr.mxu0 0.0
        %8739 = vmatpush1.msra.mxu0 0.0
        %8740 = vmatprep.subr.mxu0 0.0
        %8741 = vmatpush1.msra.mxu0 0.0
        %8742 = vmatprep.subr.mxu0 0.0
        %8743 = vmatpush1.msra.mxu0 0.0
        %8744 = vmatprep.subr.mxu0 0.0
        %8745 = vmatpush1.msra.mxu0 0.0
        %8746 = vmatprep.subr.mxu0 0.0
        %8747 = vmatpush1.msra.mxu0 0.0
        %8748 = vmatprep.subr.mxu0 0.0
        %8749 = vmatpush1.msra.mxu0 0.0
        %8750 = vmatprep.subr.mxu0 0.0
        %8751 = vmatpush1.msra.mxu0 0.0
        %8752 = vmatprep.subr.mxu0 0.0
        %8753 = vmatpush1.msra.mxu0 0.0
        %8754 = vmatprep.subr.mxu0 0.0
        %8755 = vmatpush1.msra.mxu0 0.0
        %8756 = vmatprep.subr.mxu0 0.0
        %8757 = vmatpush1.msra.mxu0 0.0
        %8758 = vmatprep.subr.mxu0 0.0
        %8759 = vmatpush1.msra.mxu0 %v8732
        %8760 = vmatprep.subr.mxu0 0.0
        %8761 = vmatpush1.msra.mxu0 %v8731
        %8762 = vmatprep.subr.mxu0 0.0
        %8763 = vmatpush1.msra.mxu0 %v8730
        %8764 = vmatprep.subr.mxu0 0.0
        %8765 = vmatpush1.msra.mxu0 %v8729
        %8766 = vmatprep.subr.mxu0 0.0
        %8767 = vmatpush1.msra.mxu0 %v8728
        %8768 = vmatprep.subr.mxu0 0.0
        %8769 = vmatpush1.msra.mxu0 %v8727
        %8770 = vmatprep.subr.mxu0 0.0
        %8771 = vmatpush2.msra.mxu0 0.0
        %8772 = vmatprep.subr.mxu0 0.0
        %8773 = vmatpush2.msra.mxu0 0.0
        %8774 = vmatprep.subr.mxu0 0.0
        %8775 = vmatpush2.msra.mxu0 0.0
        %8776 = vmatprep.subr.mxu0 0.0
        %8777 = vmatpush2.msra.mxu0 0.0
        %8778 = vmatprep.subr.mxu0 0.0
        %8779 = vmatpush2.msra.mxu0 0.0
        %8780 = vmatprep.subr.mxu0 0.0
        %8781 = vmatpush2.msra.mxu0 0.0
        %8782 = vmatprep.subr.mxu0 0.0
        %8783 = vmatpush2.msra.mxu0 0.0
        %8784 = vmatprep.subr.mxu0 0.0
        %8785 = vmatpush2.msra.mxu0 0.0
        %8786 = vmatprep.subr.mxu0 0.0
        %8787 = vmatpush2.msra.mxu0 0.0
        %8788 = vmatprep.subr.mxu0 0.0
        %8789 = vmatpush2.msra.mxu0 0.0
        %8790 = vmatprep.subr.mxu0 0.0
        %8791 = vmatpush2.msra.mxu0 0.0
        %8792 = vmatprep.subr.mxu0 0.0
        %8793 = vmatpush2.msra.mxu0 0.0
        %8794 = vmatprep.subr.mxu0 0.0
        %8795 = vmatpush2.msra.mxu0 0.0
        %8796 = vmatprep.subr.mxu0 0.0
        %8797 = vmatpush2.msra.mxu0 0.0
        %8798 = vmatprep.subr.mxu0 0.0
        %8799 = vmatpush2.msra.mxu0 0.0
        %8800 = vmatprep.subr.mxu0 0.0
        %8801 = vmatpush2.msra.mxu0 0.0
        %8802 = vmatprep.mubr.f32.mxu0 0.0
        %8803 = vmatmul.mubr.f32.gmra.mxu0 %v8736
        %v8804 = vpop.f32.mrf.mxu0
        %v8805 = vadd.f32 %v8734, %v8804
        %v8806 = vpop.f32.mrf.mxu0
        %8807 = vdwg.mxu0
        %s8808 = scalar_lea.vmem %s10, 336
        %v8809 = vld [vmem:[%s8808] sm:$0xff]
        %v8810 = vld [vmem:[%s8808 + $0x8] sm:$0xff]
        %v8811 = vld [vmem:[%s8808 + $0x10] sm:$0xff]
        %v8812 = vld [vmem:[%s8808 + $0x18] sm:$0xff]
        %v8813 = vld [vmem:[%s8808 + $0x20] sm:$0xff]
        %v8814 = vld [vmem:[%s8808 + $0x28] sm:$0xff]
        %s8815 = scalar_lea.vmem %s11, 7
        %v8816 = vld [vmem:[%s8815] sm:$0x1]
        %8817 = vmatprep.subr.mxu0 0.0
        %8818 = vmatpush1.msra.mxu0 0.0
        %8819 = vmatprep.subr.mxu0 0.0
        %8820 = vmatpush1.msra.mxu0 0.0
        %8821 = vmatprep.subr.mxu0 0.0
        %8822 = vmatpush1.msra.mxu0 0.0
        %8823 = vmatprep.subr.mxu0 0.0
        %8824 = vmatpush1.msra.mxu0 0.0
        %8825 = vmatprep.subr.mxu0 0.0
        %8826 = vmatpush1.msra.mxu0 0.0
        %8827 = vmatprep.subr.mxu0 0.0
        %8828 = vmatpush1.msra.mxu0 0.0
        %8829 = vmatprep.subr.mxu0 0.0
        %8830 = vmatpush1.msra.mxu0 0.0
        %8831 = vmatprep.subr.mxu0 0.0
        %8832 = vmatpush1.msra.mxu0 0.0
        %8833 = vmatprep.subr.mxu0 0.0
        %8834 = vmatpush1.msra.mxu0 0.0
        %8835 = vmatprep.subr.mxu0 0.0
        %8836 = vmatpush1.msra.mxu0 0.0
        %8837 = vmatprep.subr.mxu0 0.0
        %8838 = vmatpush1.msra.mxu0 %v8814
        %8839 = vmatprep.subr.mxu0 0.0
        %8840 = vmatpush1.msra.mxu0 %v8813
        %8841 = vmatprep.subr.mxu0 0.0
        %8842 = vmatpush1.msra.mxu0 %v8812
        %8843 = vmatprep.subr.mxu0 0.0
        %8844 = vmatpush1.msra.mxu0 %v8811
        %8845 = vmatprep.subr.mxu0 0.0
        %8846 = vmatpush1.msra.mxu0 %v8810
        %8847 = vmatprep.subr.mxu0 0.0
        %8848 = vmatpush1.msra.mxu0 %v8809
        %8849 = vmatprep.subr.mxu0 0.0
        %8850 = vmatpush2.msra.mxu0 0.0
        %8851 = vmatprep.subr.mxu0 0.0
        %8852 = vmatpush2.msra.mxu0 0.0
        %8853 = vmatprep.subr.mxu0 0.0
        %8854 = vmatpush2.msra.mxu0 0.0
        %8855 = vmatprep.subr.mxu0 0.0
        %8856 = vmatpush2.msra.mxu0 0.0
        %8857 = vmatprep.subr.mxu0 0.0
        %8858 = vmatpush2.msra.mxu0 0.0
        %8859 = vmatprep.subr.mxu0 0.0
        %8860 = vmatpush2.msra.mxu0 0.0
        %8861 = vmatprep.subr.mxu0 0.0
        %8862 = vmatpush2.msra.mxu0 0.0
        %8863 = vmatprep.subr.mxu0 0.0
        %8864 = vmatpush2.msra.mxu0 0.0
        %8865 = vmatprep.subr.mxu0 0.0
        %8866 = vmatpush2.msra.mxu0 0.0
        %8867 = vmatprep.subr.mxu0 0.0
        %8868 = vmatpush2.msra.mxu0 0.0
        %8869 = vmatprep.subr.mxu0 0.0
        %8870 = vmatpush2.msra.mxu0 0.0
        %8871 = vmatprep.subr.mxu0 0.0
        %8872 = vmatpush2.msra.mxu0 0.0
        %8873 = vmatprep.subr.mxu0 0.0
        %8874 = vmatpush2.msra.mxu0 0.0
        %8875 = vmatprep.subr.mxu0 0.0
        %8876 = vmatpush2.msra.mxu0 0.0
        %8877 = vmatprep.subr.mxu0 0.0
        %8878 = vmatpush2.msra.mxu0 0.0
        %8879 = vmatprep.subr.mxu0 0.0
        %8880 = vmatpush2.msra.mxu0 0.0
        %8881 = vmatprep.mubr.f32.mxu0 0.0
        %8882 = vmatmul.mubr.f32.gmra.mxu0 %v8736
        %v8883 = vpop.f32.mrf.mxu0
        %v8884 = vadd.f32 %v8816, %v8883
        %v8885 = vpop.f32.mrf.mxu0
        %8886 = vdwg.mxu0
        %s8887 = scalar_lea.vmem %s10, 384
        %v8888 = vld [vmem:[%s8887] sm:$0xff]
        %v8889 = vld [vmem:[%s8887 + $0x8] sm:$0xff]
        %v8890 = vld [vmem:[%s8887 + $0x10] sm:$0xff]
        %v8891 = vld [vmem:[%s8887 + $0x18] sm:$0xff]
        %v8892 = vld [vmem:[%s8887 + $0x20] sm:$0xff]
        %v8893 = vld [vmem:[%s8887 + $0x28] sm:$0xff]
        %s8894 = scalar_lea.vmem %s11, 8
        %v8895 = vld [vmem:[%s8894] sm:$0x1]
        %8896 = vmatprep.subr.mxu0 0.0
        %8897 = vmatpush1.msra.mxu0 0.0
        %8898 = vmatprep.subr.mxu0 0.0
        %8899 = vmatpush1.msra.mxu0 0.0
        %8900 = vmatprep.subr.mxu0 0.0
        %8901 = vmatpush1.msra.mxu0 0.0
        %8902 = vmatprep.subr.mxu0 0.0
        %8903 = vmatpush1.msra.mxu0 0.0
        %8904 = vmatprep.subr.mxu0 0.0
        %8905 = vmatpush1.msra.mxu0 0.0
        %8906 = vmatprep.subr.mxu0 0.0
        %8907 = vmatpush1.msra.mxu0 0.0
        %8908 = vmatprep.subr.mxu0 0.0
        %8909 = vmatpush1.msra.mxu0 0.0
        %8910 = vmatprep.subr.mxu0 0.0
        %8911 = vmatpush1.msra.mxu0 0.0
        %8912 = vmatprep.subr.mxu0 0.0
        %8913 = vmatpush1.msra.mxu0 0.0
        %8914 = vmatprep.subr.mxu0 0.0
        %8915 = vmatpush1.msra.mxu0 0.0
        %8916 = vmatprep.subr.mxu0 0.0
        %8917 = vmatpush1.msra.mxu0 %v8893
        %8918 = vmatprep.subr.mxu0 0.0
        %8919 = vmatpush1.msra.mxu0 %v8892
        %8920 = vmatprep.subr.mxu0 0.0
        %8921 = vmatpush1.msra.mxu0 %v8891
        %8922 = vmatprep.subr.mxu0 0.0
        %8923 = vmatpush1.msra.mxu0 %v8890
        %8924 = vmatprep.subr.mxu0 0.0
        %8925 = vmatpush1.msra.mxu0 %v8889
        %8926 = vmatprep.subr.mxu0 0.0
        %8927 = vmatpush1.msra.mxu0 %v8888
        %8928 = vmatprep.subr.mxu0 0.0
        %8929 = vmatpush2.msra.mxu0 0.0
        %8930 = vmatprep.subr.mxu0 0.0
        %8931 = vmatpush2.msra.mxu0 0.0
        %8932 = vmatprep.subr.mxu0 0.0
        %8933 = vmatpush2.msra.mxu0 0.0
        %8934 = vmatprep.subr.mxu0 0.0
        %8935 = vmatpush2.msra.mxu0 0.0
        %8936 = vmatprep.subr.mxu0 0.0
        %8937 = vmatpush2.msra.mxu0 0.0
        %8938 = vmatprep.subr.mxu0 0.0
        %8939 = vmatpush2.msra.mxu0 0.0
        %8940 = vmatprep.subr.mxu0 0.0
        %8941 = vmatpush2.msra.mxu0 0.0
        %8942 = vmatprep.subr.mxu0 0.0
        %8943 = vmatpush2.msra.mxu0 0.0
        %8944 = vmatprep.subr.mxu0 0.0
        %8945 = vmatpush2.msra.mxu0 0.0
        %8946 = vmatprep.subr.mxu0 0.0
        %8947 = vmatpush2.msra.mxu0 0.0
        %8948 = vmatprep.subr.mxu0 0.0
        %8949 = vmatpush2.msra.mxu0 0.0
        %8950 = vmatprep.subr.mxu0 0.0
        %8951 = vmatpush2.msra.mxu0 0.0
        %8952 = vmatprep.subr.mxu0 0.0
        %8953 = vmatpush2.msra.mxu0 0.0
        %8954 = vmatprep.subr.mxu0 0.0
        %8955 = vmatpush2.msra.mxu0 0.0
        %8956 = vmatprep.subr.mxu0 0.0
        %8957 = vmatpush2.msra.mxu0 0.0
        %8958 = vmatprep.subr.mxu0 0.0
        %8959 = vmatpush2.msra.mxu0 0.0
        %8960 = vmatprep.mubr.f32.mxu0 0.0
        %8961 = vmatmul.mubr.f32.gmra.mxu0 %v8736
        %v8962 = vpop.f32.mrf.mxu0
        %v8963 = vadd.f32 %v8895, %v8962
        %v8964 = vpop.f32.mrf.mxu0
        %8965 = vdwg.mxu0
        %8966 = vxpose.xlu0.b32.start [1/16] %v8884, 128
        %8967 = vxpose.xlu0.b32.cont [2/16] 0.0, 128
        %8968 = vxpose.xlu0.b32.cont [3/16] 0.0, 128
        %8969 = vxpose.xlu0.b32.cont [4/16] 0.0, 128
        %8970 = vxpose.xlu0.b32.cont [5/16] 0.0, 128
        %8971 = vxpose.xlu0.b32.cont [6/16] 0.0, 128
        %8972 = vxpose.xlu0.b32.cont [7/16] 0.0, 128
        %8973 = vxpose.xlu0.b32.cont [8/16] 0.0, 128
        %8974 = vxpose.xlu0.b32.cont [9/16] 0.0, 128
        %8975 = vxpose.xlu0.b32.cont [10/16] 0.0, 128
        %8976 = vxpose.xlu0.b32.cont [11/16] 0.0, 128
        %8977 = vxpose.xlu0.b32.cont [12/16] 0.0, 128
        %8978 = vxpose.xlu0.b32.cont [13/16] 0.0, 128
        %8979 = vxpose.xlu0.b32.cont [14/16] 0.0, 128
        %8980 = vxpose.xlu0.b32.cont [15/16] 0.0, 128
        %8981 = vxpose.xlu0.b32.end [16/16] 0.0, 128
        %v8982 = vpop.trf.xlu0
        %v8983 = vpop.trf.xlu0
        %v8984 = vpop.trf.xlu0
        %v8985 = vpop.trf.xlu0
        %v8986 = vpop.trf.xlu0
        %v8987 = vpop.trf.xlu0
        %v8988 = vpop.trf.xlu0
        %v8989 = vpop.trf.xlu0
        %v8990 = vpop.trf.xlu0
        %v8991 = vpop.trf.xlu0
        %v8992 = vpop.trf.xlu0
        %v8993 = vpop.trf.xlu0
        %v8994 = vpop.trf.xlu0
        %v8995 = vpop.trf.xlu0
        %v8996 = vpop.trf.xlu0
        %v8997 = vpop.trf.xlu0
        %8999 = vset.pattern.permute.xlu0 0
        %9000 = vperm.xlu0 %8999, %v8982
        %v9001 = vpop.permute.xlu0 %9000
        %v9003 = vlaneseq
        %v9004 = vshrl.u32 %v9003, 7
        %v9005 = vsub.s32 0, %v9004
        %v9006 = vrot.slane %v8805, %v9005
        %v9007 = vmul.f32 %v9001, %v9006
        %v9008 = vsel %vm8107, %v9007, -inf
        %v9009 = vrot.slane %v9008, 4
        %v9010 = vmax.f32 %v9008, %v9009
        %v9011 = vrot.slane %v9010, 2
        %v9012 = vmax.f32 %v9010, %v9011
        %v9013 = vrot.slane %v9012, 1
        %v9014 = vmax.f32 %v9012, %v9013
        %v9015 = vsub.f32 %v9007, %v9014
        %v9016 = vmul.f32 %v9015, 1.442695
        %v9017 = vpow.pop %v9016
        %v9018 = vsel %vm8107, %v9017, 0.0
        %v9019 = vrot.slane %v9018, 4
        %v9020 = vadd.f32 %v9018, %v9019
        %v9021 = vrot.slane %v9020, 2
        %v9022 = vadd.f32 %v9020, %v9021
        %v9023 = vrot.slane %v9022, 1
        %v9024 = vadd.f32 %v9022, %v9023
        %v9025 = vrcp.pop %v9024
        %v9026 = vmul.f32 %v9017, %v9025
        %v9028 = vsel %vm8107, %v8963, 0
        %9030 = vmatprep.subr.mxu0 0.0
        %9031 = vmatpush1.msra.mxu0 0.0
        %9032 = vmatprep.subr.mxu0 0.0
        %9033 = vmatpush1.msra.mxu0 0.0
        %9034 = vmatprep.subr.mxu0 0.0
        %9035 = vmatpush1.msra.mxu0 0.0
        %9036 = vmatprep.subr.mxu0 0.0
        %9037 = vmatpush1.msra.mxu0 0.0
        %9038 = vmatprep.subr.mxu0 0.0
        %9039 = vmatpush1.msra.mxu0 0.0
        %9040 = vmatprep.subr.mxu0 0.0
        %9041 = vmatpush1.msra.mxu0 0.0
        %9042 = vmatprep.subr.mxu0 0.0
        %9043 = vmatpush1.msra.mxu0 0.0
        %9044 = vmatprep.subr.mxu0 0.0
        %9045 = vmatpush1.msra.mxu0 0.0
        %9046 = vmatprep.subr.mxu0 0.0
        %9047 = vmatpush1.msra.mxu0 0.0
        %9048 = vmatprep.subr.mxu0 0.0
        %9049 = vmatpush1.msra.mxu0 0.0
        %9050 = vmatprep.subr.mxu0 0.0
        %9051 = vmatpush1.msra.mxu0 0.0
        %9052 = vmatprep.subr.mxu0 0.0
        %9053 = vmatpush1.msra.mxu0 0.0
        %9054 = vmatprep.subr.mxu0 0.0
        %9055 = vmatpush1.msra.mxu0 0.0
        %9056 = vmatprep.subr.mxu0 0.0
        %9057 = vmatpush1.msra.mxu0 0.0
        %9058 = vmatprep.subr.mxu0 0.0
        %9059 = vmatpush1.msra.mxu0 0.0
        %9060 = vmatprep.subr.mxu0 0.0
        %9061 = vmatpush1.msra.mxu0 %v9026
        %9062 = vmatprep.subr.mxu0 0.0
        %9063 = vmatpush2.msra.mxu0 0.0
        %9064 = vmatprep.subr.mxu0 0.0
        %9065 = vmatpush2.msra.mxu0 0.0
        %9066 = vmatprep.subr.mxu0 0.0
        %9067 = vmatpush2.msra.mxu0 0.0
        %9068 = vmatprep.subr.mxu0 0.0
        %9069 = vmatpush2.msra.mxu0 0.0
        %9070 = vmatprep.subr.mxu0 0.0
        %9071 = vmatpush2.msra.mxu0 0.0
        %9072 = vmatprep.subr.mxu0 0.0
        %9073 = vmatpush2.msra.mxu0 0.0
        %9074 = vmatprep.subr.mxu0 0.0
        %9075 = vmatpush2.msra.mxu0 0.0
        %9076 = vmatprep.subr.mxu0 0.0
        %9077 = vmatpush2.msra.mxu0 0.0
        %9078 = vmatprep.subr.mxu0 0.0
        %9079 = vmatpush2.msra.mxu0 0.0
        %9080 = vmatprep.subr.mxu0 0.0
        %9081 = vmatpush2.msra.mxu0 0.0
        %9082 = vmatprep.subr.mxu0 0.0
        %9083 = vmatpush2.msra.mxu0 0.0
        %9084 = vmatprep.subr.mxu0 0.0
        %9085 = vmatpush2.msra.mxu0 0.0
        %9086 = vmatprep.subr.mxu0 0.0
        %9087 = vmatpush2.msra.mxu0 0.0
        %9088 = vmatprep.subr.mxu0 0.0
        %9089 = vmatpush2.msra.mxu0 0.0
        %9090 = vmatprep.subr.mxu0 0.0
        %9091 = vmatpush2.msra.mxu0 0.0
        %9092 = vmatprep.subr.mxu0 0.0
        %9093 = vmatpush2.msra.mxu0 0.0
        %9094 = vmatprep.mubr.f32.mxu0 0.0
        %9095 = vmatmul.mubr.f32.gmra.mxu0 %v9028
        %v9096 = vpop.f32.mrf.mxu0
        %v9097 = vadd.f32 0.0, %v9096
        %v9098 = vpop.f32.mrf.mxu0
        %9099 = vdwg.mxu0
        %s9100 = scalar_lea.vmem %s12, 16
        %v9101 = vld [vmem:[%s9100] sm:$0xff]
        %s9102 = scalar_lea.vmem %s13, 2
        %v9103 = vld [vmem:[%s9102] sm:$0x1]
        %v9105 = vsel %vm8107, %v9097, 0
        %9107 = vmatprep.subr.mxu0 0.0
        %9108 = vmatpush1.msra.mxu0 0.0
        %9109 = vmatprep.subr.mxu0 0.0
        %9110 = vmatpush1.msra.mxu0 0.0
        %9111 = vmatprep.subr.mxu0 0.0
        %9112 = vmatpush1.msra.mxu0 0.0
        %9113 = vmatprep.subr.mxu0 0.0
        %9114 = vmatpush1.msra.mxu0 0.0
        %9115 = vmatprep.subr.mxu0 0.0
        %9116 = vmatpush1.msra.mxu0 0.0
        %9117 = vmatprep.subr.mxu0 0.0
        %9118 = vmatpush1.msra.mxu0 0.0
        %9119 = vmatprep.subr.mxu0 0.0
        %9120 = vmatpush1.msra.mxu0 0.0
        %9121 = vmatprep.subr.mxu0 0.0
        %9122 = vmatpush1.msra.mxu0 0.0
        %9123 = vmatprep.subr.mxu0 0.0
        %9124 = vmatpush1.msra.mxu0 0.0
        %9125 = vmatprep.subr.mxu0 0.0
        %9126 = vmatpush1.msra.mxu0 0.0
        %9127 = vmatprep.subr.mxu0 0.0
        %9128 = vmatpush1.msra.mxu0 0.0
        %9129 = vmatprep.subr.mxu0 0.0
        %9130 = vmatpush1.msra.mxu0 0.0
        %9131 = vmatprep.subr.mxu0 0.0
        %9132 = vmatpush1.msra.mxu0 0.0
        %9133 = vmatprep.subr.mxu0 0.0
        %9134 = vmatpush1.msra.mxu0 0.0
        %9135 = vmatprep.subr.mxu0 0.0
        %9136 = vmatpush1.msra.mxu0 0.0
        %9137 = vmatprep.subr.mxu0 0.0
        %9138 = vmatpush1.msra.mxu0 %v9101
        %9139 = vmatprep.subr.mxu0 0.0
        %9140 = vmatpush2.msra.mxu0 0.0
        %9141 = vmatprep.subr.mxu0 0.0
        %9142 = vmatpush2.msra.mxu0 0.0
        %9143 = vmatprep.subr.mxu0 0.0
        %9144 = vmatpush2.msra.mxu0 0.0
        %9145 = vmatprep.subr.mxu0 0.0
        %9146 = vmatpush2.msra.mxu0 0.0
        %9147 = vmatprep.subr.mxu0 0.0
        %9148 = vmatpush2.msra.mxu0 0.0
        %9149 = vmatprep.subr.mxu0 0.0
        %9150 = vmatpush2.msra.mxu0 0.0
        %9151 = vmatprep.subr.mxu0 0.0
        %9152 = vmatpush2.msra.mxu0 0.0
        %9153 = vmatprep.subr.mxu0 0.0
        %9154 = vmatpush2.msra.mxu0 0.0
        %9155 = vmatprep.subr.mxu0 0.0
        %9156 = vmatpush2.msra.mxu0 0.0
        %9157 = vmatprep.subr.mxu0 0.0
        %9158 = vmatpush2.msra.mxu0 0.0
        %9159 = vmatprep.subr.mxu0 0.0
        %9160 = vmatpush2.msra.mxu0 0.0
        %9161 = vmatprep.subr.mxu0 0.0
        %9162 = vmatpush2.msra.mxu0 0.0
        %9163 = vmatprep.subr.mxu0 0.0
        %9164 = vmatpush2.msra.mxu0 0.0
        %9165 = vmatprep.subr.mxu0 0.0
        %9166 = vmatpush2.msra.mxu0 0.0
        %9167 = vmatprep.subr.mxu0 0.0
        %9168 = vmatpush2.msra.mxu0 0.0
        %9169 = vmatprep.subr.mxu0 0.0
        %9170 = vmatpush2.msra.mxu0 0.0
        %9171 = vmatprep.mubr.f32.mxu0 0.0
        %9172 = vmatmul.mubr.f32.gmra.mxu0 %v9105
        %v9173 = vpop.f32.mrf.mxu0
        %v9174 = vadd.f32 %v9103, %v9173
        %v9175 = vpop.f32.mrf.mxu0
        %9176 = vdwg.mxu0
        %s9177 = scalar_lea.vmem %s10, 432
        %v9178 = vld [vmem:[%s9177] sm:$0xff]
        %v9179 = vld [vmem:[%s9177 + $0x8] sm:$0xff]
        %v9180 = vld [vmem:[%s9177 + $0x10] sm:$0xff]
        %v9181 = vld [vmem:[%s9177 + $0x18] sm:$0xff]
        %v9182 = vld [vmem:[%s9177 + $0x20] sm:$0xff]
        %v9183 = vld [vmem:[%s9177 + $0x28] sm:$0xff]
        %s9184 = scalar_lea.vmem %s11, 9
        %v9185 = vld [vmem:[%s9184] sm:$0x1]
        %v9187 = vsel %vm7756, %v9174, 0
        %9189 = vmatprep.subr.mxu0 0.0
        %9190 = vmatpush1.msra.mxu0 0.0
        %9191 = vmatprep.subr.mxu0 0.0
        %9192 = vmatpush1.msra.mxu0 0.0
        %9193 = vmatprep.subr.mxu0 0.0
        %9194 = vmatpush1.msra.mxu0 0.0
        %9195 = vmatprep.subr.mxu0 0.0
        %9196 = vmatpush1.msra.mxu0 0.0
        %9197 = vmatprep.subr.mxu0 0.0
        %9198 = vmatpush1.msra.mxu0 0.0
        %9199 = vmatprep.subr.mxu0 0.0
        %9200 = vmatpush1.msra.mxu0 0.0
        %9201 = vmatprep.subr.mxu0 0.0
        %9202 = vmatpush1.msra.mxu0 0.0
        %9203 = vmatprep.subr.mxu0 0.0
        %9204 = vmatpush1.msra.mxu0 0.0
        %9205 = vmatprep.subr.mxu0 0.0
        %9206 = vmatpush1.msra.mxu0 0.0
        %9207 = vmatprep.subr.mxu0 0.0
        %9208 = vmatpush1.msra.mxu0 0.0
        %9209 = vmatprep.subr.mxu0 0.0
        %9210 = vmatpush1.msra.mxu0 %v9183
        %9211 = vmatprep.subr.mxu0 0.0
        %9212 = vmatpush1.msra.mxu0 %v9182
        %9213 = vmatprep.subr.mxu0 0.0
        %9214 = vmatpush1.msra.mxu0 %v9181
        %9215 = vmatprep.subr.mxu0 0.0
        %9216 = vmatpush1.msra.mxu0 %v9180
        %9217 = vmatprep.subr.mxu0 0.0
        %9218 = vmatpush1.msra.mxu0 %v9179
        %9219 = vmatprep.subr.mxu0 0.0
        %9220 = vmatpush1.msra.mxu0 %v9178
        %9221 = vmatprep.subr.mxu0 0.0
        %9222 = vmatpush2.msra.mxu0 0.0
        %9223 = vmatprep.subr.mxu0 0.0
        %9224 = vmatpush2.msra.mxu0 0.0
        %9225 = vmatprep.subr.mxu0 0.0
        %9226 = vmatpush2.msra.mxu0 0.0
        %9227 = vmatprep.subr.mxu0 0.0
        %9228 = vmatpush2.msra.mxu0 0.0
        %9229 = vmatprep.subr.mxu0 0.0
        %9230 = vmatpush2.msra.mxu0 0.0
        %9231 = vmatprep.subr.mxu0 0.0
        %9232 = vmatpush2.msra.mxu0 0.0
        %9233 = vmatprep.subr.mxu0 0.0
        %9234 = vmatpush2.msra.mxu0 0.0
        %9235 = vmatprep.subr.mxu0 0.0
        %9236 = vmatpush2.msra.mxu0 0.0
        %9237 = vmatprep.subr.mxu0 0.0
        %9238 = vmatpush2.msra.mxu0 0.0
        %9239 = vmatprep.subr.mxu0 0.0
        %9240 = vmatpush2.msra.mxu0 0.0
        %9241 = vmatprep.subr.mxu0 0.0
        %9242 = vmatpush2.msra.mxu0 0.0
        %9243 = vmatprep.subr.mxu0 0.0
        %9244 = vmatpush2.msra.mxu0 0.0
        %9245 = vmatprep.subr.mxu0 0.0
        %9246 = vmatpush2.msra.mxu0 0.0
        %9247 = vmatprep.subr.mxu0 0.0
        %9248 = vmatpush2.msra.mxu0 0.0
        %9249 = vmatprep.subr.mxu0 0.0
        %9250 = vmatpush2.msra.mxu0 0.0
        %9251 = vmatprep.subr.mxu0 0.0
        %9252 = vmatpush2.msra.mxu0 0.0
        %9253 = vmatprep.mubr.f32.mxu0 0.0
        %9254 = vmatmul.mubr.f32.gmra.mxu0 %v9187
        %v9255 = vpop.f32.mrf.mxu0
        %v9256 = vadd.f32 %v9185, %v9255
        %v9257 = vpop.f32.mrf.mxu0
        %9258 = vdwg.mxu0
        %s9259 = scalar_lea.vmem %s10, 480
        %v9260 = vld [vmem:[%s9259] sm:$0xff]
        %v9261 = vld [vmem:[%s9259 + $0x8] sm:$0xff]
        %v9262 = vld [vmem:[%s9259 + $0x10] sm:$0xff]
        %v9263 = vld [vmem:[%s9259 + $0x18] sm:$0xff]
        %v9264 = vld [vmem:[%s9259 + $0x20] sm:$0xff]
        %v9265 = vld [vmem:[%s9259 + $0x28] sm:$0xff]
        %s9266 = scalar_lea.vmem %s11, 10
        %v9267 = vld [vmem:[%s9266] sm:$0x1]
        %9268 = vmatprep.subr.mxu0 0.0
        %9269 = vmatpush1.msra.mxu0 0.0
        %9270 = vmatprep.subr.mxu0 0.0
        %9271 = vmatpush1.msra.mxu0 0.0
        %9272 = vmatprep.subr.mxu0 0.0
        %9273 = vmatpush1.msra.mxu0 0.0
        %9274 = vmatprep.subr.mxu0 0.0
        %9275 = vmatpush1.msra.mxu0 0.0
        %9276 = vmatprep.subr.mxu0 0.0
        %9277 = vmatpush1.msra.mxu0 0.0
        %9278 = vmatprep.subr.mxu0 0.0
        %9279 = vmatpush1.msra.mxu0 0.0
        %9280 = vmatprep.subr.mxu0 0.0
        %9281 = vmatpush1.msra.mxu0 0.0
        %9282 = vmatprep.subr.mxu0 0.0
        %9283 = vmatpush1.msra.mxu0 0.0
        %9284 = vmatprep.subr.mxu0 0.0
        %9285 = vmatpush1.msra.mxu0 0.0
        %9286 = vmatprep.subr.mxu0 0.0
        %9287 = vmatpush1.msra.mxu0 0.0
        %9288 = vmatprep.subr.mxu0 0.0
        %9289 = vmatpush1.msra.mxu0 %v9265
        %9290 = vmatprep.subr.mxu0 0.0
        %9291 = vmatpush1.msra.mxu0 %v9264
        %9292 = vmatprep.subr.mxu0 0.0
        %9293 = vmatpush1.msra.mxu0 %v9263
        %9294 = vmatprep.subr.mxu0 0.0
        %9295 = vmatpush1.msra.mxu0 %v9262
        %9296 = vmatprep.subr.mxu0 0.0
        %9297 = vmatpush1.msra.mxu0 %v9261
        %9298 = vmatprep.subr.mxu0 0.0
        %9299 = vmatpush1.msra.mxu0 %v9260
        %9300 = vmatprep.subr.mxu0 0.0
        %9301 = vmatpush2.msra.mxu0 0.0
        %9302 = vmatprep.subr.mxu0 0.0
        %9303 = vmatpush2.msra.mxu0 0.0
        %9304 = vmatprep.subr.mxu0 0.0
        %9305 = vmatpush2.msra.mxu0 0.0
        %9306 = vmatprep.subr.mxu0 0.0
        %9307 = vmatpush2.msra.mxu0 0.0
        %9308 = vmatprep.subr.mxu0 0.0
        %9309 = vmatpush2.msra.mxu0 0.0
        %9310 = vmatprep.subr.mxu0 0.0
        %9311 = vmatpush2.msra.mxu0 0.0
        %9312 = vmatprep.subr.mxu0 0.0
        %9313 = vmatpush2.msra.mxu0 0.0
        %9314 = vmatprep.subr.mxu0 0.0
        %9315 = vmatpush2.msra.mxu0 0.0
        %9316 = vmatprep.subr.mxu0 0.0
        %9317 = vmatpush2.msra.mxu0 0.0
        %9318 = vmatprep.subr.mxu0 0.0
        %9319 = vmatpush2.msra.mxu0 0.0
        %9320 = vmatprep.subr.mxu0 0.0
        %9321 = vmatpush2.msra.mxu0 0.0
        %9322 = vmatprep.subr.mxu0 0.0
        %9323 = vmatpush2.msra.mxu0 0.0
        %9324 = vmatprep.subr.mxu0 0.0
        %9325 = vmatpush2.msra.mxu0 0.0
        %9326 = vmatprep.subr.mxu0 0.0
        %9327 = vmatpush2.msra.mxu0 0.0
        %9328 = vmatprep.subr.mxu0 0.0
        %9329 = vmatpush2.msra.mxu0 0.0
        %9330 = vmatprep.subr.mxu0 0.0
        %9331 = vmatpush2.msra.mxu0 0.0
        %9332 = vmatprep.mubr.f32.mxu0 0.0
        %9333 = vmatmul.mubr.f32.gmra.mxu0 %v9187
        %v9334 = vpop.f32.mrf.mxu0
        %v9335 = vadd.f32 %v9267, %v9334
        %v9336 = vpop.f32.mrf.mxu0
        %9337 = vdwg.mxu0
        %s9338 = scalar_lea.vmem %s10, 528
        %v9339 = vld [vmem:[%s9338] sm:$0xff]
        %v9340 = vld [vmem:[%s9338 + $0x8] sm:$0xff]
        %v9341 = vld [vmem:[%s9338 + $0x10] sm:$0xff]
        %v9342 = vld [vmem:[%s9338 + $0x18] sm:$0xff]
        %v9343 = vld [vmem:[%s9338 + $0x20] sm:$0xff]
        %v9344 = vld [vmem:[%s9338 + $0x28] sm:$0xff]
        %s9345 = scalar_lea.vmem %s11, 11
        %v9346 = vld [vmem:[%s9345] sm:$0x1]
        %9347 = vmatprep.subr.mxu0 0.0
        %9348 = vmatpush1.msra.mxu0 0.0
        %9349 = vmatprep.subr.mxu0 0.0
        %9350 = vmatpush1.msra.mxu0 0.0
        %9351 = vmatprep.subr.mxu0 0.0
        %9352 = vmatpush1.msra.mxu0 0.0
        %9353 = vmatprep.subr.mxu0 0.0
        %9354 = vmatpush1.msra.mxu0 0.0
        %9355 = vmatprep.subr.mxu0 0.0
        %9356 = vmatpush1.msra.mxu0 0.0
        %9357 = vmatprep.subr.mxu0 0.0
        %9358 = vmatpush1.msra.mxu0 0.0
        %9359 = vmatprep.subr.mxu0 0.0
        %9360 = vmatpush1.msra.mxu0 0.0
        %9361 = vmatprep.subr.mxu0 0.0
        %9362 = vmatpush1.msra.mxu0 0.0
        %9363 = vmatprep.subr.mxu0 0.0
        %9364 = vmatpush1.msra.mxu0 0.0
        %9365 = vmatprep.subr.mxu0 0.0
        %9366 = vmatpush1.msra.mxu0 0.0
        %9367 = vmatprep.subr.mxu0 0.0
        %9368 = vmatpush1.msra.mxu0 %v9344
        %9369 = vmatprep.subr.mxu0 0.0
        %9370 = vmatpush1.msra.mxu0 %v9343
        %9371 = vmatprep.subr.mxu0 0.0
        %9372 = vmatpush1.msra.mxu0 %v9342
        %9373 = vmatprep.subr.mxu0 0.0
        %9374 = vmatpush1.msra.mxu0 %v9341
        %9375 = vmatprep.subr.mxu0 0.0
        %9376 = vmatpush1.msra.mxu0 %v9340
        %9377 = vmatprep.subr.mxu0 0.0
        %9378 = vmatpush1.msra.mxu0 %v9339
        %9379 = vmatprep.subr.mxu0 0.0
        %9380 = vmatpush2.msra.mxu0 0.0
        %9381 = vmatprep.subr.mxu0 0.0
        %9382 = vmatpush2.msra.mxu0 0.0
        %9383 = vmatprep.subr.mxu0 0.0
        %9384 = vmatpush2.msra.mxu0 0.0
        %9385 = vmatprep.subr.mxu0 0.0
        %9386 = vmatpush2.msra.mxu0 0.0
        %9387 = vmatprep.subr.mxu0 0.0
        %9388 = vmatpush2.msra.mxu0 0.0
        %9389 = vmatprep.subr.mxu0 0.0
        %9390 = vmatpush2.msra.mxu0 0.0
        %9391 = vmatprep.subr.mxu0 0.0
        %9392 = vmatpush2.msra.mxu0 0.0
        %9393 = vmatprep.subr.mxu0 0.0
        %9394 = vmatpush2.msra.mxu0 0.0
        %9395 = vmatprep.subr.mxu0 0.0
        %9396 = vmatpush2.msra.mxu0 0.0
        %9397 = vmatprep.subr.mxu0 0.0
        %9398 = vmatpush2.msra.mxu0 0.0
        %9399 = vmatprep.subr.mxu0 0.0
        %9400 = vmatpush2.msra.mxu0 0.0
        %9401 = vmatprep.subr.mxu0 0.0
        %9402 = vmatpush2.msra.mxu0 0.0
        %9403 = vmatprep.subr.mxu0 0.0
        %9404 = vmatpush2.msra.mxu0 0.0
        %9405 = vmatprep.subr.mxu0 0.0
        %9406 = vmatpush2.msra.mxu0 0.0
        %9407 = vmatprep.subr.mxu0 0.0
        %9408 = vmatpush2.msra.mxu0 0.0
        %9409 = vmatprep.subr.mxu0 0.0
        %9410 = vmatpush2.msra.mxu0 0.0
        %9411 = vmatprep.mubr.f32.mxu0 0.0
        %9412 = vmatmul.mubr.f32.gmra.mxu0 %v9187
        %v9413 = vpop.f32.mrf.mxu0
        %v9414 = vadd.f32 %v9346, %v9413
        %v9415 = vpop.f32.mrf.mxu0
        %9416 = vdwg.mxu0
        %9417 = vxpose.xlu0.b32.start [1/16] %v9335, 128
        %9418 = vxpose.xlu0.b32.cont [2/16] 0.0, 128
        %9419 = vxpose.xlu0.b32.cont [3/16] 0.0, 128
        %9420 = vxpose.xlu0.b32.cont [4/16] 0.0, 128
        %9421 = vxpose.xlu0.b32.cont [5/16] 0.0, 128
        %9422 = vxpose.xlu0.b32.cont [6/16] 0.0, 128
        %9423 = vxpose.xlu0.b32.cont [7/16] 0.0, 128
        %9424 = vxpose.xlu0.b32.cont [8/16] 0.0, 128
        %9425 = vxpose.xlu0.b32.cont [9/16] 0.0, 128
        %9426 = vxpose.xlu0.b32.cont [10/16] 0.0, 128
        %9427 = vxpose.xlu0.b32.cont [11/16] 0.0, 128
        %9428 = vxpose.xlu0.b32.cont [12/16] 0.0, 128
        %9429 = vxpose.xlu0.b32.cont [13/16] 0.0, 128
        %9430 = vxpose.xlu0.b32.cont [14/16] 0.0, 128
        %9431 = vxpose.xlu0.b32.cont [15/16] 0.0, 128
        %9432 = vxpose.xlu0.b32.end [16/16] 0.0, 128
        %v9433 = vpop.trf.xlu0
        %v9434 = vpop.trf.xlu0
        %v9435 = vpop.trf.xlu0
        %v9436 = vpop.trf.xlu0
        %v9437 = vpop.trf.xlu0
        %v9438 = vpop.trf.xlu0
        %v9439 = vpop.trf.xlu0
        %v9440 = vpop.trf.xlu0
        %v9441 = vpop.trf.xlu0
        %v9442 = vpop.trf.xlu0
        %v9443 = vpop.trf.xlu0
        %v9444 = vpop.trf.xlu0
        %v9445 = vpop.trf.xlu0
        %v9446 = vpop.trf.xlu0
        %v9447 = vpop.trf.xlu0
        %v9448 = vpop.trf.xlu0
        %9450 = vset.pattern.permute.xlu0 0
        %9451 = vperm.xlu0 %9450, %v9433
        %v9452 = vpop.permute.xlu0 %9451
        %v9454 = vlaneseq
        %v9455 = vshrl.u32 %v9454, 7
        %v9456 = vsub.s32 0, %v9455
        %v9457 = vrot.slane %v9256, %v9456
        %v9458 = vmul.f32 %v9452, %v9457
        %v9459 = vsel %vm8107, %v9458, -inf
        %v9460 = vrot.slane %v9459, 4
        %v9461 = vmax.f32 %v9459, %v9460
        %v9462 = vrot.slane %v9461, 2
        %v9463 = vmax.f32 %v9461, %v9462
        %v9464 = vrot.slane %v9463, 1
        %v9465 = vmax.f32 %v9463, %v9464
        %v9466 = vsub.f32 %v9458, %v9465
        %v9467 = vmul.f32 %v9466, 1.442695
        %v9468 = vpow.pop %v9467
        %v9469 = vsel %vm8107, %v9468, 0.0
        %v9470 = vrot.slane %v9469, 4
        %v9471 = vadd.f32 %v9469, %v9470
        %v9472 = vrot.slane %v9471, 2
        %v9473 = vadd.f32 %v9471, %v9472
        %v9474 = vrot.slane %v9473, 1
        %v9475 = vadd.f32 %v9473, %v9474
        %v9476 = vrcp.pop %v9475
        %v9477 = vmul.f32 %v9468, %v9476
        %v9479 = vsel %vm8107, %v9414, 0
        %9481 = vmatprep.subr.mxu0 0.0
        %9482 = vmatpush1.msra.mxu0 0.0
        %9483 = vmatprep.subr.mxu0 0.0
        %9484 = vmatpush1.msra.mxu0 0.0
        %9485 = vmatprep.subr.mxu0 0.0
        %9486 = vmatpush1.msra.mxu0 0.0
        %9487 = vmatprep.subr.mxu0 0.0
        %9488 = vmatpush1.msra.mxu0 0.0
        %9489 = vmatprep.subr.mxu0 0.0
        %9490 = vmatpush1.msra.mxu0 0.0
        %9491 = vmatprep.subr.mxu0 0.0
        %9492 = vmatpush1.msra.mxu0 0.0
        %9493 = vmatprep.subr.mxu0 0.0
        %9494 = vmatpush1.msra.mxu0 0.0
        %9495 = vmatprep.subr.mxu0 0.0
        %9496 = vmatpush1.msra.mxu0 0.0
        %9497 = vmatprep.subr.mxu0 0.0
        %9498 = vmatpush1.msra.mxu0 0.0
        %9499 = vmatprep.subr.mxu0 0.0
        %9500 = vmatpush1.msra.mxu0 0.0
        %9501 = vmatprep.subr.mxu0 0.0
        %9502 = vmatpush1.msra.mxu0 0.0
        %9503 = vmatprep.subr.mxu0 0.0
        %9504 = vmatpush1.msra.mxu0 0.0
        %9505 = vmatprep.subr.mxu0 0.0
        %9506 = vmatpush1.msra.mxu0 0.0
        %9507 = vmatprep.subr.mxu0 0.0
        %9508 = vmatpush1.msra.mxu0 0.0
        %9509 = vmatprep.subr.mxu0 0.0
        %9510 = vmatpush1.msra.mxu0 0.0
        %9511 = vmatprep.subr.mxu0 0.0
        %9512 = vmatpush1.msra.mxu0 %v9477
        %9513 = vmatprep.subr.mxu0 0.0
        %9514 = vmatpush2.msra.mxu0 0.0
        %9515 = vmatprep.subr.mxu0 0.0
        %9516 = vmatpush2.msra.mxu0 0.0
        %9517 = vmatprep.subr.mxu0 0.0
        %9518 = vmatpush2.msra.mxu0 0.0
        %9519 = vmatprep.subr.mxu0 0.0
        %9520 = vmatpush2.msra.mxu0 0.0
        %9521 = vmatprep.subr.mxu0 0.0
        %9522 = vmatpush2.msra.mxu0 0.0
        %9523 = vmatprep.subr.mxu0 0.0
        %9524 = vmatpush2.msra.mxu0 0.0
        %9525 = vmatprep.subr.mxu0 0.0
        %9526 = vmatpush2.msra.mxu0 0.0
        %9527 = vmatprep.subr.mxu0 0.0
        %9528 = vmatpush2.msra.mxu0 0.0
        %9529 = vmatprep.subr.mxu0 0.0
        %9530 = vmatpush2.msra.mxu0 0.0
        %9531 = vmatprep.subr.mxu0 0.0
        %9532 = vmatpush2.msra.mxu0 0.0
        %9533 = vmatprep.subr.mxu0 0.0
        %9534 = vmatpush2.msra.mxu0 0.0
        %9535 = vmatprep.subr.mxu0 0.0
        %9536 = vmatpush2.msra.mxu0 0.0
        %9537 = vmatprep.subr.mxu0 0.0
        %9538 = vmatpush2.msra.mxu0 0.0
        %9539 = vmatprep.subr.mxu0 0.0
        %9540 = vmatpush2.msra.mxu0 0.0
        %9541 = vmatprep.subr.mxu0 0.0
        %9542 = vmatpush2.msra.mxu0 0.0
        %9543 = vmatprep.subr.mxu0 0.0
        %9544 = vmatpush2.msra.mxu0 0.0
        %9545 = vmatprep.mubr.f32.mxu0 0.0
        %9546 = vmatmul.mubr.f32.gmra.mxu0 %v9479
        %v9547 = vpop.f32.mrf.mxu0
        %v9548 = vadd.f32 0.0, %v9547
        %v9549 = vpop.f32.mrf.mxu0
        %9550 = vdwg.mxu0
        %s9551 = scalar_lea.vmem %s12, 24
        %v9552 = vld [vmem:[%s9551] sm:$0xff]
        %s9553 = scalar_lea.vmem %s13, 3
        %v9554 = vld [vmem:[%s9553] sm:$0x1]
        %v9556 = vsel %vm8107, %v9548, 0
        %9558 = vmatprep.subr.mxu0 0.0
        %9559 = vmatpush1.msra.mxu0 0.0
        %9560 = vmatprep.subr.mxu0 0.0
        %9561 = vmatpush1.msra.mxu0 0.0
        %9562 = vmatprep.subr.mxu0 0.0
        %9563 = vmatpush1.msra.mxu0 0.0
        %9564 = vmatprep.subr.mxu0 0.0
        %9565 = vmatpush1.msra.mxu0 0.0
        %9566 = vmatprep.subr.mxu0 0.0
        %9567 = vmatpush1.msra.mxu0 0.0
        %9568 = vmatprep.subr.mxu0 0.0
        %9569 = vmatpush1.msra.mxu0 0.0
        %9570 = vmatprep.subr.mxu0 0.0
        %9571 = vmatpush1.msra.mxu0 0.0
        %9572 = vmatprep.subr.mxu0 0.0
        %9573 = vmatpush1.msra.mxu0 0.0
        %9574 = vmatprep.subr.mxu0 0.0
        %9575 = vmatpush1.msra.mxu0 0.0
        %9576 = vmatprep.subr.mxu0 0.0
        %9577 = vmatpush1.msra.mxu0 0.0
        %9578 = vmatprep.subr.mxu0 0.0
        %9579 = vmatpush1.msra.mxu0 0.0
        %9580 = vmatprep.subr.mxu0 0.0
        %9581 = vmatpush1.msra.mxu0 0.0
        %9582 = vmatprep.subr.mxu0 0.0
        %9583 = vmatpush1.msra.mxu0 0.0
        %9584 = vmatprep.subr.mxu0 0.0
        %9585 = vmatpush1.msra.mxu0 0.0
        %9586 = vmatprep.subr.mxu0 0.0
        %9587 = vmatpush1.msra.mxu0 0.0
        %9588 = vmatprep.subr.mxu0 0.0
        %9589 = vmatpush1.msra.mxu0 %v9552
        %9590 = vmatprep.subr.mxu0 0.0
        %9591 = vmatpush2.msra.mxu0 0.0
        %9592 = vmatprep.subr.mxu0 0.0
        %9593 = vmatpush2.msra.mxu0 0.0
        %9594 = vmatprep.subr.mxu0 0.0
        %9595 = vmatpush2.msra.mxu0 0.0
        %9596 = vmatprep.subr.mxu0 0.0
        %9597 = vmatpush2.msra.mxu0 0.0
        %9598 = vmatprep.subr.mxu0 0.0
        %9599 = vmatpush2.msra.mxu0 0.0
        %9600 = vmatprep.subr.mxu0 0.0
        %9601 = vmatpush2.msra.mxu0 0.0
        %9602 = vmatprep.subr.mxu0 0.0
        %9603 = vmatpush2.msra.mxu0 0.0
        %9604 = vmatprep.subr.mxu0 0.0
        %9605 = vmatpush2.msra.mxu0 0.0
        %9606 = vmatprep.subr.mxu0 0.0
        %9607 = vmatpush2.msra.mxu0 0.0
        %9608 = vmatprep.subr.mxu0 0.0
        %9609 = vmatpush2.msra.mxu0 0.0
        %9610 = vmatprep.subr.mxu0 0.0
        %9611 = vmatpush2.msra.mxu0 0.0
        %9612 = vmatprep.subr.mxu0 0.0
        %9613 = vmatpush2.msra.mxu0 0.0
        %9614 = vmatprep.subr.mxu0 0.0
        %9615 = vmatpush2.msra.mxu0 0.0
        %9616 = vmatprep.subr.mxu0 0.0
        %9617 = vmatpush2.msra.mxu0 0.0
        %9618 = vmatprep.subr.mxu0 0.0
        %9619 = vmatpush2.msra.mxu0 0.0
        %9620 = vmatprep.subr.mxu0 0.0
        %9621 = vmatpush2.msra.mxu0 0.0
        %9622 = vmatprep.mubr.f32.mxu0 0.0
        %9623 = vmatmul.mubr.f32.gmra.mxu0 %v9556
        %v9624 = vpop.f32.mrf.mxu0
        %v9625 = vadd.f32 %v9554, %v9624
        %v9626 = vpop.f32.mrf.mxu0
        %9627 = vdwg.mxu0
        %v9628 = vld [vmem:[%s14] sm:$0xff]
        %v9629 = vld [vmem:[%s14 + $0x8] sm:$0xff]
        %v9630 = vld [vmem:[%s14 + $0x10] sm:$0xff]
        %v9631 = vld [vmem:[%s14 + $0x18] sm:$0xff]
        %v9632 = vld [vmem:[%s14 + $0x20] sm:$0xff]
        %v9633 = vld [vmem:[%s14 + $0x28] sm:$0xff]
        %v9634 = vld [vmem:[%s15] sm:$0x1]
        %v9636 = vsel %vm7756, %v9625, 0
        %9638 = vmatprep.subr.mxu0 0.0
        %9639 = vmatpush1.msra.mxu0 0.0
        %9640 = vmatprep.subr.mxu0 0.0
        %9641 = vmatpush1.msra.mxu0 0.0
        %9642 = vmatprep.subr.mxu0 0.0
        %9643 = vmatpush1.msra.mxu0 0.0
        %9644 = vmatprep.subr.mxu0 0.0
        %9645 = vmatpush1.msra.mxu0 0.0
        %9646 = vmatprep.subr.mxu0 0.0
        %9647 = vmatpush1.msra.mxu0 0.0
        %9648 = vmatprep.subr.mxu0 0.0
        %9649 = vmatpush1.msra.mxu0 0.0
        %9650 = vmatprep.subr.mxu0 0.0
        %9651 = vmatpush1.msra.mxu0 0.0
        %9652 = vmatprep.subr.mxu0 0.0
        %9653 = vmatpush1.msra.mxu0 0.0
        %9654 = vmatprep.subr.mxu0 0.0
        %9655 = vmatpush1.msra.mxu0 0.0
        %9656 = vmatprep.subr.mxu0 0.0
        %9657 = vmatpush1.msra.mxu0 0.0
        %9658 = vmatprep.subr.mxu0 0.0
        %9659 = vmatpush1.msra.mxu0 %v9633
        %9660 = vmatprep.subr.mxu0 0.0
        %9661 = vmatpush1.msra.mxu0 %v9632
        %9662 = vmatprep.subr.mxu0 0.0
        %9663 = vmatpush1.msra.mxu0 %v9631
        %9664 = vmatprep.subr.mxu0 0.0
        %9665 = vmatpush1.msra.mxu0 %v9630
        %9666 = vmatprep.subr.mxu0 0.0
        %9667 = vmatpush1.msra.mxu0 %v9629
        %9668 = vmatprep.subr.mxu0 0.0
        %9669 = vmatpush1.msra.mxu0 %v9628
        %9670 = vmatprep.subr.mxu0 0.0
        %9671 = vmatpush2.msra.mxu0 0.0
        %9672 = vmatprep.subr.mxu0 0.0
        %9673 = vmatpush2.msra.mxu0 0.0
        %9674 = vmatprep.subr.mxu0 0.0
        %9675 = vmatpush2.msra.mxu0 0.0
        %9676 = vmatprep.subr.mxu0 0.0
        %9677 = vmatpush2.msra.mxu0 0.0
        %9678 = vmatprep.subr.mxu0 0.0
        %9679 = vmatpush2.msra.mxu0 0.0
        %9680 = vmatprep.subr.mxu0 0.0
        %9681 = vmatpush2.msra.mxu0 0.0
        %9682 = vmatprep.subr.mxu0 0.0
        %9683 = vmatpush2.msra.mxu0 0.0
        %9684 = vmatprep.subr.mxu0 0.0
        %9685 = vmatpush2.msra.mxu0 0.0
        %9686 = vmatprep.subr.mxu0 0.0
        %9687 = vmatpush2.msra.mxu0 0.0
        %9688 = vmatprep.subr.mxu0 0.0
        %9689 = vmatpush2.msra.mxu0 0.0
        %9690 = vmatprep.subr.mxu0 0.0
        %9691 = vmatpush2.msra.mxu0 0.0
        %9692 = vmatprep.subr.mxu0 0.0
        %9693 = vmatpush2.msra.mxu0 0.0
        %9694 = vmatprep.subr.mxu0 0.0
        %9695 = vmatpush2.msra.mxu0 0.0
        %9696 = vmatprep.subr.mxu0 0.0
        %9697 = vmatpush2.msra.mxu0 0.0
        %9698 = vmatprep.subr.mxu0 0.0
        %9699 = vmatpush2.msra.mxu0 0.0
        %9700 = vmatprep.subr.mxu0 0.0
        %9701 = vmatpush2.msra.mxu0 0.0
        %9702 = vmatprep.mubr.f32.mxu0 0.0
        %9703 = vmatmul.mubr.f32.gmra.mxu0 %v9636
        %v9704 = vpop.f32.mrf.mxu0
        %v9705 = vadd.f32 %v9634, %v9704
        %v9706 = vpop.f32.mrf.mxu0
        %9707 = vdwg.mxu0
        %vm9708 = vcmask 73728
        %9709 = vst.msk [vmem:[%s513] sm:$0x1] %vm9708, %v9705
        %s9710 = sand.u32 %s379, 1
        %s9711 = scalar_lea.sflag [#allocation5], %s9710
        %s9712 = sand.u32 %s379, 1
        %s9713 = scalar_lea.vmem [#allocation4], %s9712
        // Predicated region
        $region85: #{basic_transformer.1} parent=83 // pred_check
          %p9714 = pneg %p389
        $region86: #{basic_transformer.1} parent=83 // pred_check_branch
          %9716 = sbr.rel (%p9714) target = $region88
        $region87: #{basic_transformer.1} parent=83 // pred_region
          %s9718 = ssub.s32 16, 16
          %9719 = vsyncadd %s9711, %s9718
          %s9720 = smul.addr %s30, 16
          %s9721 = scalar_lea.hbm %s16, %s9720
          %s9723 = sshll.u32 %s9713, 4
          %s9724 = int_to_ptr.vmem [resolvable:$true] %s9723
          %9726 = dma.vmem_to_hbm [thread:$0]  %s9724, 16, %s9721, %s9711
        $region88: #{basic_transformer.1} parent=83 // pred_fallthru
          _
      $region84: #{basic_transformer.1} parent=5 // pred_fallthru
        _
      %p9727 = scmp.le.s32.totalorder 2, %s25
      // Predicated region
      $region89: #{basic_transformer.1} parent=5 // pred_check
        %p9728 = pneg %p9727
      $region90: #{basic_transformer.1} parent=5 // pred_check_branch
        %9730 = sbr.rel (%p9728) target = $region92
      $region91: #{basic_transformer.1} parent=5 // pred_region
        %s9731 = ssub.s32 %s25, 2
        // Predicated region
        $region93: #{basic_transformer.1} parent=91 // pred_check
          %p9732 = pneg %p395
        $region94: #{basic_transformer.1} parent=91 // pred_check_branch
          %9734 = sbr.rel (%p9732) target = $region96
        $region95: #{basic_transformer.1} parent=91 // pred_region
          %s9735 = sand.u32 %s380, 1
          %s9736 = scalar_lea.sflag [#allocation5], %s9735
          %s9737 = sand.u32 %s380, 1
          %s9738 = scalar_lea.vmem [#allocation4], %s9737
          %9739 = dma.done %s9736, 16
        $region96: #{basic_transformer.1} parent=91 // pred_fallthru
          _
      $region92: #{basic_transformer.1} parent=5 // pred_fallthru
        _
    $region6: #{basic_transformer.1} parent=1 // loop_footer
      %s29 = sadd.s32 1, %s25
    $region7: #{basic_transformer.1} parent=1 // loop_footer_branch
      %24 = sbr.rel target = $region3
    $region8: #{basic_transformer.1} parent=1 // loop_exit
      _
    %9740 = vsyncpa [#allocation5], 1
    %s9741 = scalar_lea.sflag [#allocation5], 1
    %9742 = vsyncpa %s9741, 1

</llo_original>
